<compile_context>
chip_gen: v6e
topology: v6e:2x2x1
jax: 0.10.0
libtpu: 0.0.40
codegen_flags: <defaults>
</compile_context>

<pallas_src>
import jax
import jax.numpy as jnp
from jax.experimental import pallas as pl
from jax.experimental.pallas import tpu as pltpu

WINDOW = 320
STRIDE = 160
WPAD = 384                      # 320 padded to a multiple of 128 (lane-dense)
ENC_DIM = 2048
HID = 512
EPS = 1e-5
TM_CAP = 256                    # row-tile cap (fits v7x's smaller VMEM)
TT_CAP = 256                    # LSTM "batch" (T) tile cap
VMEM_LIMIT = 48 * 1024 * 1024   # explicit scoped-VMEM ceiling


# --------------------------------------------------------------------------- in-kernel helpers (f32 math)
def _layernorm(x, gamma, beta):
    mu = jnp.mean(x, axis=-1, keepdims=True)
    xc = x - mu
    var = jnp.mean(xc * xc, axis=-1, keepdims=True)
    return xc * jax.lax.rsqrt(var + EPS) * gamma + beta


def _prelu(x, alpha):
    return jnp.where(x >= 0, x, alpha * x)


def _bf16(x):
    return x.astype(jnp.bfloat16)


# --------------------------------------------------------------------------- Pallas kernels
def encoder_proj_kernel(fr_ref, ew_ref, eb_ref, a1_ref, g1_ref, b1_ref,
                        pw_ref, pb_ref, pa_ref, pg_ref, pbe_ref,
                        enc_ref, ax_ref):
    # enc = frames @ enc_w + b  (Conv1d(1,2048,320,160) as matmul, K padded to 384)
    enc = jnp.dot(fr_ref[...], ew_ref[...],
                  preferred_element_type=jnp.float32) + eb_ref[...]
    enc_ref[...] = enc.astype(jnp.bfloat16)          # kept in bf16 for mask stage
    # l1: PReLU + LayerNorm (f32), then audio projection 2048->512 + PReLU + LN
    a = _layernorm(_prelu(enc, a1_ref[...]), g1_ref[...], b1_ref[...])
    y = jnp.dot(_bf16(a), pw_ref[...],
                preferred_element_type=jnp.float32) + pb_ref[...]
    # stored bf16: downstream only uses it as a bf16 matmul operand
    ax_ref[...] = _layernorm(_prelu(y, pa_ref[...]),
                             pg_ref[...], pbe_ref[...]).astype(jnp.bfloat16)


def lstm_block_kernel(x_ref, w1_ref, b1_ref, a1_ref,
                      w2_ref, b2_ref, a2_ref, g2_ref, be2_ref,
                      wih_ref, whh_ref, lb_ref,
                      ln1g_ref, ln1b_ref, ln2g_ref, ln2b_ref,
                      h0_ref, c0_ref,
                      out_ref, hT_ref, cT_ref):
    # x_ref: (S=B, TT, 512) bf16 tile.  Whole LSTMBlock fused:
    #   map_to_high_dim_a -> x@W_ih (hoisted, one big matmul) -> recurrence
    #   over the short static seq axis S -> LN1 + residual + LN2.
    S, TT, H = x_ref.shape

    # ---- map_to_high_dim_a over the whole (S*TT) tile ----
    x = x_ref[...].reshape(S * TT, H)
    y = jnp.dot(x, w1_ref[...], preferred_element_type=jnp.float32) + b1_ref[...]
    y = _prelu(y, a1_ref[...])
    y = jnp.dot(_bf16(y), w2_ref[...],
                preferred_element_type=jnp.float32) + b2_ref[...]
    pre = _layernorm(_prelu(y, a2_ref[...]), g2_ref[...], be2_ref[...])   # (S*TT, H)

    # ---- gate input projection hoisted out of the recurrence ----
    xg = (jnp.dot(_bf16(pre), wih_ref[...],
                  preferred_element_type=jnp.float32) + lb_ref[...]).reshape(S, TT, 4 * H)
    pre3 = pre.reshape(S, TT, H)

    whh = whh_ref[...]
    ln1g, ln1b = ln1g_ref[...], ln1b_ref[...]
    ln2g, ln2b = ln2g_ref[...], ln2b_ref[...]
    h = h0_ref[...]
    c = c0_ref[...]
    for t in range(S):  # static, tiny trip count (= audio batch size)
        gates = xg[t] + jnp.dot(_bf16(h), whh, preferred_element_type=jnp.float32)
        i = jax.nn.sigmoid(gates[:, 0:H])
        f = jax.nn.sigmoid(gates[:, H:2 * H])
        g = jnp.tanh(gates[:, 2 * H:3 * H])
        o = jax.nn.sigmoid(gates[:, 3 * H:4 * H])
        c = f * c + i * g
        h = o * jnp.tanh(c)
        # layer_norm1(lstm_out) + residual(pre), then layer_norm2
        y2 = _layernorm(h, ln1g, ln1b) + pre3[t]
        out_ref[t] = _layernorm(y2, ln2g, ln2b).astype(out_ref.dtype)
    hT_ref[...] = h
    cT_ref[...] = c


def mask_decode_kernel(x_ref, enc_ref, wm_ref, bm_ref, wd_ref, o_ref):
    # mask = sigmoid(x @ Wm + bm); masked = mask * encoder; frames = masked @ Wd
    m = jax.nn.sigmoid(jnp.dot(x_ref[...], wm_ref[...],
                               preferred_element_type=jnp.float32) + bm_ref[...])
    masked = m * enc_ref[...].astype(jnp.float32)
    o_ref[...] = jnp.dot(_bf16(masked), wd_ref[...],
                         preferred_element_type=jnp.float32)


# --------------------------------------------------------------------------- pallas_call wrappers
def _full_spec(shape):
    nd = len(shape)
    return pl.BlockSpec(tuple(shape), lambda i, _nd=nd: (0,) * _nd)


def _row_spec(shape, tm):
    nd = len(shape)
    blk = (tm,) + tuple(shape[1:])
    return pl.BlockSpec(blk, lambda i, _nd=nd: (i,) + (0,) * (_nd - 1))


def _cparams():
    return pltpu.CompilerParams(dimension_semantics=("parallel",),
                                vmem_limit_bytes=VMEM_LIMIT)


def row_call(kernel, args, tiled, out_shapes, tm):
    """Run `kernel` on a 1-D row grid. `tiled[k]` -> args[k] is tiled along axis 0."""
    rows = args[list(tiled).index(True)].shape[0]
    grid = (pl.cdiv(rows, tm),)
    in_specs = [_row_spec(a.shape, tm) if t else _full_spec(a.shape)
                for a, t in zip(args, tiled)]
    multi = isinstance(out_shapes, (tuple, list))
    outs = tuple(out_shapes) if multi else (out_shapes,)
    out_specs = tuple(_row_spec(o.shape, tm) for o in outs)
    fn = pl.pallas_call(
        kernel,
        grid=grid,
        in_specs=in_specs,
        out_specs=out_specs if multi else out_specs[0],
        out_shape=tuple(outs) if multi else out_shapes,
        compiler_params=_cparams(),
    )
    return fn(*args)


def lstm_block_call(ax3, blk, h0, c0, tt):
    """Fused LSTMBlock, tiled over the (independent) T axis; seq axis is B."""
    B, T, H = ax3.shape
    grid = (pl.cdiv(T, tt),)
    in_specs = [
        pl.BlockSpec((B, tt, H), lambda j: (0, j, 0)),
        _full_spec(blk["m1_w"].shape), _full_spec(blk["m1_b"].shape),
        _full_spec(blk["m1_alpha"].shape),
        _full_spec(blk["m2_w"].shape), _full_spec(blk["m2_b"].shape),
        _full_spec(blk["m2_alpha"].shape),
        _full_spec(blk["m2_gamma"].shape), _full_spec(blk["m2_beta"].shape),
        _full_spec(blk["wih"].shape), _full_spec(blk["whh"].shape),
        _full_spec(blk["lstm_b"].shape),
        _full_spec(blk["ln1_g"].shape), _full_spec(blk["ln1_b"].shape),
        _full_spec(blk["ln2_g"].shape), _full_spec(blk["ln2_b"].shape),
        pl.BlockSpec((tt, H), lambda j: (j, 0)),
        pl.BlockSpec((tt, H), lambda j: (j, 0)),
    ]
    out_specs = (pl.BlockSpec((B, tt, H), lambda j: (0, j, 0)),
                 pl.BlockSpec((tt, H), lambda j: (j, 0)),
                 pl.BlockSpec((tt, H), lambda j: (j, 0)))
    out_shape = (jax.ShapeDtypeStruct((B, T, H), jnp.bfloat16),
                 jax.ShapeDtypeStruct((T, H), jnp.float32),
                 jax.ShapeDtypeStruct((T, H), jnp.float32))
    fn = pl.pallas_call(
        lstm_block_kernel,
        grid=grid,
        in_specs=in_specs,
        out_specs=out_specs,
        out_shape=out_shape,
        compiler_params=_cparams(),
    )
    return fn(ax3, blk["m1_w"], blk["m1_b"], blk["m1_alpha"],
              blk["m2_w"], blk["m2_b"], blk["m2_alpha"],
              blk["m2_gamma"], blk["m2_beta"],
              blk["wih"], blk["whh"], blk["lstm_b"],
              blk["ln1_g"], blk["ln1_b"], blk["ln2_g"], blk["ln2_b"], h0, c0)


# --------------------------------------------------------------------------- parameters (deterministic, synthetic)
def init_params(key, n_lstm=4):
    keys = iter(jax.random.split(key, 160))

    def nrm(shape, scale=0.05):
        return scale * jax.random.normal(next(keys), shape, jnp.float32)

    def w(shape):  # matmul weight -> bf16
        return nrm(shape).astype(jnp.bfloat16)

    def gamma(d):
        return 1.0 + 0.02 * jax.random.normal(next(keys), (1, d), jnp.float32)

    def beta(d):
        return 0.02 * jax.random.normal(next(keys), (1, d), jnp.float32)

    def alpha(d):
        return jnp.full((1, d), 0.25, jnp.float32)  # nn.PReLU() default

    # encoder weight (Conv1d(1,2048,320,160)^T) zero-padded K: 320 -> 384
    enc_w = jnp.pad(nrm((WINDOW, ENC_DIM)),
                    ((0, WPAD - WINDOW), (0, 0))).astype(jnp.bfloat16)
    # decoder weight (ConvTranspose1d(2048,1,320,160)) zero-padded out cols: 320 -> 384
    dec_w = jnp.pad(nrm((ENC_DIM, WINDOW)),
                    ((0, 0), (0, WPAD - WINDOW))).astype(jnp.bfloat16)

    p = {
        "enc_w": enc_w, "enc_b": nrm((1, ENC_DIM)),
        "l1_alpha": alpha(ENC_DIM), "l1_gamma": gamma(ENC_DIM), "l1_beta": beta(ENC_DIM),
        "proj_w": w((ENC_DIM, HID)), "proj_b": nrm((1, HID)),
        "proj_alpha": alpha(HID), "proj_gamma": gamma(HID), "proj_beta": beta(HID),
        "mask_w": w((HID, ENC_DIM)), "mask_b": nrm((1, ENC_DIM)),
        "dec_w": dec_w,
        "dec_bias": nrm((1,))[0],
        "lstm_blocks": [],
    }
    for _ in range(n_lstm):
        blk = {
            "m1_w": w((HID, 2 * HID)), "m1_b": nrm((1, 2 * HID)), "m1_alpha": alpha(2 * HID),
            "m2_w": w((2 * HID, HID)), "m2_b": nrm((1, HID)), "m2_alpha": alpha(HID),
            "m2_gamma": gamma(HID), "m2_beta": beta(HID),
            "wih": w((HID, 4 * HID)),                         # W_ih^T
            "whh": w((HID, 4 * HID)),                         # W_hh^T
            "lstm_b": nrm((1, 4 * HID)) + nrm((1, 4 * HID)),  # b_ih + b_hh (f32)
            "ln1_g": gamma(HID), "ln1_b": beta(HID),
            "ln2_g": gamma(HID), "ln2_b": beta(HID),
        }
        p["lstm_blocks"].append(blk)
    return p


# --------------------------------------------------------------------------- forward pass
def e3net_forward(p, x):
    # x: (B, 1, nsample) float32  (PyTorch NCW)
    B, C, nsample = x.shape
    assert C == 1

    # pad_signal (glue, all shapes static)
    rest = WINDOW - (STRIDE + nsample % WINDOW) % WINDOW
    sig = x[:, 0, :]
    if rest > 0:
        sig = jnp.concatenate([sig, jnp.zeros((B, rest), sig.dtype)], axis=1)
    zpad = jnp.zeros((B, STRIDE), sig.dtype)
    sig = jnp.concatenate([zpad, sig, zpad], axis=1)
    L = sig.shape[1]
    T = (L - WINDOW) // STRIDE + 1

    # frame extraction (glue): Conv1d with in_channels=1 == framing + matmul.
    # TODO(synk): could be done with strided pl.ds loads inside the encoder kernel
    # to avoid materializing the 2x-overlapped frame tensor in HBM.
    idx = STRIDE * jnp.arange(T)[:, None] + jnp.arange(WINDOW)[None, :]
    frames = sig[:, idx].reshape(B * T, WINDOW)
    frames = jnp.pad(frames, ((0, 0), (0, WPAD - WINDOW))).astype(jnp.bfloat16)

    R = B * T
    tm = min(TM_CAP, R)
    tt = min(TT_CAP, T)

    # encoder + l1 (PReLU+LN) + audio projection (Linear+PReLU+LN), fused & row-tiled
    enc_bf, ax = row_call(
        encoder_proj_kernel,
        (frames, p["enc_w"], p["enc_b"], p["l1_alpha"], p["l1_gamma"], p["l1_beta"],
         p["proj_w"], p["proj_b"], p["proj_alpha"], p["proj_gamma"], p["proj_beta"]),
        (True,) + (False,) * 10,
        (jax.ShapeDtypeStruct((R, ENC_DIM), jnp.bfloat16),
         jax.ShapeDtypeStruct((R, HID), jnp.bfloat16)),
        tm)

    # LSTM blocks. nn.LSTM (batch_first=False) sees (seq=B, batch=T, feat=512);
    # hidden state is threaded between blocks (zeros on the first block).
    # TODO(synk): PyTorch stores self.ha across forward calls; state here is functional.
    h = jnp.zeros((T, HID), jnp.float32)
    c = jnp.zeros((T, HID), jnp.float32)
    ax3 = ax.reshape(B, T, HID)
    for blk in p["lstm_blocks"]:
        ax3, h, c = lstm_block_call(ax3, blk, h, c, tt)
    ax = ax3.reshape(B * T, HID)

    # mask prediction (Linear+Sigmoid) * encoder + decoder frame matmul, fused
    dec_full = row_call(
        mask_decode_kernel,
        (ax, enc_bf, p["mask_w"], p["mask_b"], p["dec_w"]),
        (True, True, False, False, False),
        jax.ShapeDtypeStruct((R, WPAD), jnp.float32),
        tm)
    dec_frames = dec_full.reshape(B, T, WPAD)[:, :, :WINDOW]

    # ConvTranspose1d(2048,1,320,160) == overlap-add of per-frame rows (glue)
    first = dec_frames[:, :, :STRIDE]
    second = dec_frames[:, :, STRIDE:]
    zseg = jnp.zeros((B, 1, STRIDE), jnp.float32)
    segs = (jnp.concatenate([first, zseg], axis=1)
            + jnp.concatenate([zseg, second], axis=1))
    out = segs.reshape(B, (T + 1) * STRIDE) + p["dec_bias"]

    # final crop: [:, :, stride : -(rest + stride)]
    out = out[:, STRIDE:-(rest + STRIDE)]
    return out[:, None, :]  # (B, 1, nsample)


# --------------------------------------------------------------------------- main
if __name__ == "__main__":
    key = jax.random.PRNGKey(0)
    pkey, xkey = jax.random.split(key)
    params = init_params(pkey, n_lstm=4)

    B, nsample = 2, 800  # -> T = 8 encoder frames after padding
    x = 0.1 * jax.random.normal(xkey, (B, 1, nsample), jnp.float32)

    y = e3net_forward(params, x)
    y = jax.block_until_ready(y)
    assert y.shape == (B, 1, nsample), y.shape
    assert jnp.all(jnp.isfinite(y))
    print("KERNEL_OK")
</pallas_src>

<mosaic_0001>
module attributes {stable_mosaic.version = 11 : i64} {
  func.func @encoder_proj_kernel(%arg0: i32, %arg1: memref<16x384xbf16, #tpu.memory_space<vmem>>, %arg2: memref<384x2048xbf16, #tpu.memory_space<vmem>>, %arg3: memref<1x2048xf32, #tpu.memory_space<vmem>>, %arg4: memref<1x2048xf32, #tpu.memory_space<vmem>>, %arg5: memref<1x2048xf32, #tpu.memory_space<vmem>>, %arg6: memref<1x2048xf32, #tpu.memory_space<vmem>>, %arg7: memref<2048x512xbf16, #tpu.memory_space<vmem>>, %arg8: memref<1x512xf32, #tpu.memory_space<vmem>>, %arg9: memref<1x512xf32, #tpu.memory_space<vmem>>, %arg10: memref<1x512xf32, #tpu.memory_space<vmem>>, %arg11: memref<1x512xf32, #tpu.memory_space<vmem>>, %arg12: memref<16x2048xbf16, #tpu.memory_space<vmem>>, %arg13: memref<16x512xbf16, #tpu.memory_space<vmem>>) attributes {dimension_semantics = [#tpu.dimension_semantics<parallel>], iteration_bounds = array<i64: 1>, scalar_prefetch = 0 : i64, scratch_operands = 0 : i64, tpu.core_type = #tpu.core_type<tc>, window_params = [{transform_indices = @transform_0, window_bounds = array<i64: 16, 384>}, {pipeline_mode = #tpu.pipeline_mode<synchronous>, transform_indices = @transform_1, window_bounds = array<i64: 384, 2048>}, {pipeline_mode = #tpu.pipeline_mode<synchronous>, transform_indices = @transform_2, window_bounds = array<i64: 1, 2048>}, {pipeline_mode = #tpu.pipeline_mode<synchronous>, transform_indices = @transform_3, window_bounds = array<i64: 1, 2048>}, {pipeline_mode = #tpu.pipeline_mode<synchronous>, transform_indices = @transform_4, window_bounds = array<i64: 1, 2048>}, {pipeline_mode = #tpu.pipeline_mode<synchronous>, transform_indices = @transform_5, window_bounds = array<i64: 1, 2048>}, {pipeline_mode = #tpu.pipeline_mode<synchronous>, transform_indices = @transform_6, window_bounds = array<i64: 2048, 512>}, {pipeline_mode = #tpu.pipeline_mode<synchronous>, transform_indices = @transform_7, window_bounds = array<i64: 1, 512>}, {pipeline_mode = #tpu.pipeline_mode<synchronous>, transform_indices = @transform_8, window_bounds = array<i64: 1, 512>}, {pipeline_mode = #tpu.pipeline_mode<synchronous>, transform_indices = @transform_9, window_bounds = array<i64: 1, 512>}, {pipeline_mode = #tpu.pipeline_mode<synchronous>, transform_indices = @transform_10, window_bounds = array<i64: 1, 512>}, {transform_indices = @transform_11, window_bounds = array<i64: 16, 2048>}, {transform_indices = @transform_12, window_bounds = array<i64: 16, 512>}]} {
    %c0 = arith.constant 0 : index
    %c0_0 = arith.constant 0 : index
    %0 = vector.load %arg1[%c0, %c0_0] : memref<16x384xbf16, #tpu.memory_space<vmem>>, vector<16x384xbf16>
    %c0_1 = arith.constant 0 : index
    %c0_2 = arith.constant 0 : index
    %1 = vector.load %arg2[%c0_1, %c0_2] : memref<384x2048xbf16, #tpu.memory_space<vmem>>, vector<384x2048xbf16>
    %cst = arith.constant dense<0.000000e+00> : vector<16x2048xf32>
    %2 = tpu.matmul %0, %1, %cst {dimension_numbers = #tpu.dot_dimension_numbers<[1], [0], [0], [1], [0, 0, 1, 1], [], []>} : vector<16x384xbf16>, vector<384x2048xbf16>, vector<16x2048xf32> -> vector<16x2048xf32>
    %c0_3 = arith.constant 0 : index
    %c0_4 = arith.constant 0 : index
    %3 = vector.load %arg3[%c0_3, %c0_4] : memref<1x2048xf32, #tpu.memory_space<vmem>>, vector<1x2048xf32>
    %4 = vector.broadcast %3 : vector<1x2048xf32> to vector<16x2048xf32>
    %5 = arith.addf %2, %4 : vector<16x2048xf32>
    %6 = arith.truncf %5 : vector<16x2048xf32> to vector<16x2048xbf16>
    %c0_5 = arith.constant 0 : index
    %c0_6 = arith.constant 0 : index
    %7 = vector.load %arg12[%c0_5, %c0_6] : memref<16x2048xbf16, #tpu.memory_space<vmem>>, vector<16x2048xbf16>
    tpu.vector_store %arg12[%c0_5, %c0_6], %6 {strides = array<i32>} : memref<16x2048xbf16, #tpu.memory_space<vmem>>, vector<16x2048xbf16>,
    %c0_7 = arith.constant 0 : index
    %c0_8 = arith.constant 0 : index
    %8 = vector.load %arg4[%c0_7, %c0_8] : memref<1x2048xf32, #tpu.memory_space<vmem>>, vector<1x2048xf32>
    %cst_9 = arith.constant 0.000000e+00 : f32
    %9 = vector.broadcast %cst_9 : f32 to vector<16x2048xf32>
    %10 = arith.cmpf oge, %5, %9 : vector<16x2048xf32>
    %11 = vector.broadcast %8 : vector<1x2048xf32> to vector<16x2048xf32>
    %12 = arith.mulf %11, %5 : vector<16x2048xf32>
    %13 = arith.select %10, %5, %12 : vector<16x2048xi1>, vector<16x2048xf32>
    %c0_10 = arith.constant 0 : index
    %c0_11 = arith.constant 0 : index
    %14 = vector.load %arg5[%c0_10, %c0_11] : memref<1x2048xf32, #tpu.memory_space<vmem>>, vector<1x2048xf32>
    %c0_12 = arith.constant 0 : index
    %c0_13 = arith.constant 0 : index
    %15 = vector.load %arg6[%c0_12, %c0_13] : memref<1x2048xf32, #tpu.memory_space<vmem>>, vector<1x2048xf32>
    %cst_14 = arith.constant dense<0.000000e+00> : vector<16xf32>
    %16 = vector.multi_reduction <add>, %13, %cst_14 [1] : vector<16x2048xf32> to vector<16xf32>
    %17 = vector.shape_cast %16 : vector<16xf32> to vector<16x1xf32>
    %cst_15 = arith.constant 2.048000e+03 : f32
    %18 = vector.broadcast %cst_15 : f32 to vector<16x1xf32>
    %19 = arith.divf %17, %18 : vector<16x1xf32>
    %20 = vector.broadcast %19 : vector<16x1xf32> to vector<16x2048xf32>
    %21 = arith.subf %13, %20 : vector<16x2048xf32>
    %22 = arith.mulf %21, %21 : vector<16x2048xf32>
    %cst_16 = arith.constant dense<0.000000e+00> : vector<16xf32>
    %23 = vector.multi_reduction <add>, %22, %cst_16 [1] : vector<16x2048xf32> to vector<16xf32>
    %24 = vector.shape_cast %23 : vector<16xf32> to vector<16x1xf32>
    %cst_17 = arith.constant 2.048000e+03 : f32
    %25 = vector.broadcast %cst_17 : f32 to vector<16x1xf32>
    %26 = arith.divf %24, %25 : vector<16x1xf32>
    %cst_18 = arith.constant 9.99999974E-6 : f32
    %27 = vector.broadcast %cst_18 : f32 to vector<16x1xf32>
    %28 = arith.addf %26, %27 : vector<16x1xf32>
    %29 = math.rsqrt %28 : vector<16x1xf32>
    %30 = vector.broadcast %29 : vector<16x1xf32> to vector<16x2048xf32>
    %31 = arith.mulf %21, %30 : vector<16x2048xf32>
    %32 = vector.broadcast %14 : vector<1x2048xf32> to vector<16x2048xf32>
    %33 = arith.mulf %31, %32 : vector<16x2048xf32>
    %34 = vector.broadcast %15 : vector<1x2048xf32> to vector<16x2048xf32>
    %35 = arith.addf %33, %34 : vector<16x2048xf32>
    %36 = arith.truncf %35 : vector<16x2048xf32> to vector<16x2048xbf16>
    %c0_19 = arith.constant 0 : index
    %c0_20 = arith.constant 0 : index
    %37 = vector.load %arg7[%c0_19, %c0_20] : memref<2048x512xbf16, #tpu.memory_space<vmem>>, vector<2048x512xbf16>
    %cst_21 = arith.constant dense<0.000000e+00> : vector<16x512xf32>
    %38 = tpu.matmul %36, %37, %cst_21 {dimension_numbers = #tpu.dot_dimension_numbers<[1], [0], [0], [1], [0, 0, 1, 1], [], []>} : vector<16x2048xbf16>, vector<2048x512xbf16>, vector<16x512xf32> -> vector<16x512xf32>
    %c0_22 = arith.constant 0 : index
    %c0_23 = arith.constant 0 : index
    %39 = vector.load %arg8[%c0_22, %c0_23] : memref<1x512xf32, #tpu.memory_space<vmem>>, vector<1x512xf32>
    %40 = vector.broadcast %39 : vector<1x512xf32> to vector<16x512xf32>
    %41 = arith.addf %38, %40 : vector<16x512xf32>
    %c0_24 = arith.constant 0 : index
    %c0_25 = arith.constant 0 : index
    %42 = vector.load %arg9[%c0_24, %c0_25] : memref<1x512xf32, #tpu.memory_space<vmem>>, vector<1x512xf32>
    %cst_26 = arith.constant 0.000000e+00 : f32
    %43 = vector.broadcast %cst_26 : f32 to vector<16x512xf32>
    %44 = arith.cmpf oge, %41, %43 : vector<16x512xf32>
    %45 = vector.broadcast %42 : vector<1x512xf32> to vector<16x512xf32>
    %46 = arith.mulf %45, %41 : vector<16x512xf32>
    %47 = arith.select %44, %41, %46 : vector<16x512xi1>, vector<16x512xf32>
    %c0_27 = arith.constant 0 : index
    %c0_28 = arith.constant 0 : index
    %48 = vector.load %arg10[%c0_27, %c0_28] : memref<1x512xf32, #tpu.memory_space<vmem>>, vector<1x512xf32>
    %c0_29 = arith.constant 0 : index
    %c0_30 = arith.constant 0 : index
    %49 = vector.load %arg11[%c0_29, %c0_30] : memref<1x512xf32, #tpu.memory_space<vmem>>, vector<1x512xf32>
    %cst_31 = arith.constant dense<0.000000e+00> : vector<16xf32>
    %50 = vector.multi_reduction <add>, %47, %cst_31 [1] : vector<16x512xf32> to vector<16xf32>
    %51 = vector.shape_cast %50 : vector<16xf32> to vector<16x1xf32>
    %cst_32 = arith.constant 5.120000e+02 : f32
    %52 = vector.broadcast %cst_32 : f32 to vector<16x1xf32>
    %53 = arith.divf %51, %52 : vector<16x1xf32>
    %54 = vector.broadcast %53 : vector<16x1xf32> to vector<16x512xf32>
    %55 = arith.subf %47, %54 : vector<16x512xf32>
    %56 = arith.mulf %55, %55 : vector<16x512xf32>
    %cst_33 = arith.constant dense<0.000000e+00> : vector<16xf32>
    %57 = vector.multi_reduction <add>, %56, %cst_33 [1] : vector<16x512xf32> to vector<16xf32>
    %58 = vector.shape_cast %57 : vector<16xf32> to vector<16x1xf32>
    %cst_34 = arith.constant 5.120000e+02 : f32
    %59 = vector.broadcast %cst_34 : f32 to vector<16x1xf32>
    %60 = arith.divf %58, %59 : vector<16x1xf32>
    %cst_35 = arith.constant 9.99999974E-6 : f32
    %61 = vector.broadcast %cst_35 : f32 to vector<16x1xf32>
    %62 = arith.addf %60, %61 : vector<16x1xf32>
    %63 = math.rsqrt %62 : vector<16x1xf32>
    %64 = vector.broadcast %63 : vector<16x1xf32> to vector<16x512xf32>
    %65 = arith.mulf %55, %64 : vector<16x512xf32>
    %66 = vector.broadcast %48 : vector<1x512xf32> to vector<16x512xf32>
    %67 = arith.mulf %65, %66 : vector<16x512xf32>
    %68 = vector.broadcast %49 : vector<1x512xf32> to vector<16x512xf32>
    %69 = arith.addf %67, %68 : vector<16x512xf32>
    %70 = arith.truncf %69 : vector<16x512xf32> to vector<16x512xbf16>
    %c0_36 = arith.constant 0 : index
    %c0_37 = arith.constant 0 : index
    %71 = vector.load %arg13[%c0_36, %c0_37] : memref<16x512xbf16, #tpu.memory_space<vmem>>, vector<16x512xbf16>
    tpu.vector_store %arg13[%c0_36, %c0_37], %70 {strides = array<i32>} : memref<16x512xbf16, #tpu.memory_space<vmem>>, vector<16x512xbf16>,
    return
  }
  func.func @transform_0(%arg0: i32) -> (i32, i32) {
    %c0_i32 = arith.constant 0 : i32
    %c0_i32_0 = arith.constant 0 : i32
    return %arg0, %c0_i32 : i32, i32
  }
  func.func @transform_1(%arg0: i32) -> (i32, i32) {
    %c0_i32 = arith.constant 0 : i32
    %c0_i32_0 = arith.constant 0 : i32
    %c0_i32_1 = arith.constant 0 : i32
    return %c0_i32, %c0_i32_0 : i32, i32
  }
  func.func @transform_2(%arg0: i32) -> (i32, i32) {
    %c0_i32 = arith.constant 0 : i32
    %c0_i32_0 = arith.constant 0 : i32
    %c0_i32_1 = arith.constant 0 : i32
    return %c0_i32, %c0_i32_0 : i32, i32
  }
  func.func @transform_3(%arg0: i32) -> (i32, i32) {
    %c0_i32 = arith.constant 0 : i32
    %c0_i32_0 = arith.constant 0 : i32
    %c0_i32_1 = arith.constant 0 : i32
    return %c0_i32, %c0_i32_0 : i32, i32
  }
  func.func @transform_4(%arg0: i32) -> (i32, i32) {
    %c0_i32 = arith.constant 0 : i32
    %c0_i32_0 = arith.constant 0 : i32
    %c0_i32_1 = arith.constant 0 : i32
    return %c0_i32, %c0_i32_0 : i32, i32
  }
  func.func @transform_5(%arg0: i32) -> (i32, i32) {
    %c0_i32 = arith.constant 0 : i32
    %c0_i32_0 = arith.constant 0 : i32
    %c0_i32_1 = arith.constant 0 : i32
    return %c0_i32, %c0_i32_0 : i32, i32
  }
  func.func @transform_6(%arg0: i32) -> (i32, i32) {
    %c0_i32 = arith.constant 0 : i32
    %c0_i32_0 = arith.constant 0 : i32
    %c0_i32_1 = arith.constant 0 : i32
    return %c0_i32, %c0_i32_0 : i32, i32
  }
  func.func @transform_7(%arg0: i32) -> (i32, i32) {
    %c0_i32 = arith.constant 0 : i32
    %c0_i32_0 = arith.constant 0 : i32
    %c0_i32_1 = arith.constant 0 : i32
    return %c0_i32, %c0_i32_0 : i32, i32
  }
  func.func @transform_8(%arg0: i32) -> (i32, i32) {
    %c0_i32 = arith.constant 0 : i32
    %c0_i32_0 = arith.constant 0 : i32
    %c0_i32_1 = arith.constant 0 : i32
    return %c0_i32, %c0_i32_0 : i32, i32
  }
  func.func @transform_9(%arg0: i32) -> (i32, i32) {
    %c0_i32 = arith.constant 0 : i32
    %c0_i32_0 = arith.constant 0 : i32
    %c0_i32_1 = arith.constant 0 : i32
    return %c0_i32, %c0_i32_0 : i32, i32
  }
  func.func @transform_10(%arg0: i32) -> (i32, i32) {
    %c0_i32 = arith.constant 0 : i32
    %c0_i32_0 = arith.constant 0 : i32
    %c0_i32_1 = arith.constant 0 : i32
    return %c0_i32, %c0_i32_0 : i32, i32
  }
  func.func @transform_11(%arg0: i32) -> (i32, i32) {
    %c0_i32 = arith.constant 0 : i32
    %c0_i32_0 = arith.constant 0 : i32
    return %arg0, %c0_i32 : i32, i32
  }
  func.func @transform_12(%arg0: i32) -> (i32, i32) {
    %c0_i32 = arith.constant 0 : i32
    %c0_i32_0 = arith.constant 0 : i32
    return %arg0, %c0_i32 : i32, i32
  }
}

</mosaic_0001>

<llo_original>
// kernel: tpu_custom_call.1
$region0: #{tpu_custom_call.1}
  #allocation0 [shape = 'u32[]', space=smem, size = 0x4, offset = 0x4, fixed_abs, tag = 'smem constant byte address 0x4 - core index']
  #allocation1 [shape = 'u32[144,128]{1,0:T(1,128)}', space=vmem, size = 0x12000, scoped, tag = 'internal scratch']
  %s0 = inlined_call_operand.hbm [shape: bf16[16,384], index: 0, kind: input, shape index: {}]
  %s1 = inlined_call_operand.hbm [shape: bf16[384,2048], index: 1, kind: input, shape index: {}]
  %s2 = inlined_call_operand.hbm [shape: f32[1,2048], index: 2, kind: input, shape index: {}]
  %s3 = inlined_call_operand.hbm [shape: f32[1,2048], index: 3, kind: input, shape index: {}]
  %s4 = inlined_call_operand.hbm [shape: f32[1,2048], index: 4, kind: input, shape index: {}]
  %s5 = inlined_call_operand.hbm [shape: f32[1,2048], index: 5, kind: input, shape index: {}]
  %s6 = inlined_call_operand.hbm [shape: bf16[2048,512], index: 6, kind: input, shape index: {}]
  %s7 = inlined_call_operand.hbm [shape: f32[1,512], index: 7, kind: input, shape index: {}]
  %s8 = inlined_call_operand.hbm [shape: f32[1,512], index: 8, kind: input, shape index: {}]
  %s9 = inlined_call_operand.hbm [shape: f32[1,512], index: 9, kind: input, shape index: {}]
  %s10 = inlined_call_operand.hbm [shape: f32[1,512], index: 10, kind: input, shape index: {}]
  %s11 = inlined_call_operand.hbm [shape: bf16[16,2048], index: 11, kind: output, shape index: {0}]
  %s12 = inlined_call_operand.hbm [shape: bf16[16,512], index: 12, kind: output, shape index: {1}]
  %13 = xla_tuple %s11, %s12
  %s14 = sld [smem:[#allocation0]]
  $region106: #{tpu_custom_call.1} parent=0
    _
  %s16 = ssub.s32 1, %s14
  %s17 = scalar_select 0, %s16, %s14
  $region1: #{tpu_custom_call.1} parent=0
    #allocation2 [shape = 'u8[12288]{0}', space=vmem, size = 0x3000, scoped, tag = 'input window, operand 0, single buffered']
    #allocation3 [shape = 's32[1]{0}', space=sflag, size = 0x4, scoped, tag = 'scoped memory for tpu_custom_call.1']
    #allocation4 [shape = 's32[1]{0}', space=sflag, size = 0x4, scoped, tag = 'scoped memory for tpu_custom_call.1']
    #allocation5 [shape = 'u8[1572864]{0}', space=vmem, size = 0x180000, scoped, tag = 'input window, operand 1, single buffered']
    #allocation6 [shape = 's32[1]{0}', space=sflag, size = 0x4, scoped, tag = 'scoped memory for tpu_custom_call.1']
    #allocation7 [shape = 'u8[8192]{0}', space=vmem, size = 0x2000, scoped, tag = 'input window, operand 2, single buffered']
    #allocation8 [shape = 'u8[8192]{0}', space=vmem, size = 0x2000, scoped, tag = 'input window, operand 3, single buffered']
    #allocation9 [shape = 's32[1]{0}', space=sflag, size = 0x4, scoped, tag = 'scoped memory for tpu_custom_call.1']
    #allocation10 [shape = 'u8[8192]{0}', space=vmem, size = 0x2000, scoped, tag = 'input window, operand 4, single buffered']
    #allocation11 [shape = 'u8[8192]{0}', space=vmem, size = 0x2000, scoped, tag = 'input window, operand 5, single buffered']
    #allocation12 [shape = 's32[1]{0}', space=sflag, size = 0x4, scoped, tag = 'scoped memory for tpu_custom_call.1']
    #allocation13 [shape = 'u8[2097152]{0}', space=vmem, size = 0x200000, scoped, tag = 'input window, operand 6, single buffered']
    #allocation14 [shape = 'u8[2048]{0}', space=vmem, size = 0x800, scoped, tag = 'input window, operand 7, single buffered']
    #allocation15 [shape = 's32[1]{0}', space=sflag, size = 0x4, scoped, tag = 'scoped memory for tpu_custom_call.1']
    #allocation16 [shape = 'u8[2048]{0}', space=vmem, size = 0x800, scoped, tag = 'input window, operand 8, single buffered']
    #allocation17 [shape = 'u8[2048]{0}', space=vmem, size = 0x800, scoped, tag = 'input window, operand 9, single buffered']
    #allocation18 [shape = 's32[1]{0}', space=sflag, size = 0x4, scoped, tag = 'scoped memory for tpu_custom_call.1']
    #allocation19 [shape = 'u8[2048]{0}', space=vmem, size = 0x800, scoped, tag = 'input window, operand 10, single buffered']
    #allocation20 [shape = 'u8[65536]{0}', space=vmem, size = 0x10000, scoped, tag = 'output window, operand 0, single buffered']
    #allocation21 [shape = 'u8[16384]{0}', space=vmem, size = 0x4000, scoped, tag = 'output window, operand 1, single buffered']
    #allocation22 [shape = 's32[1]{0}', space=sflag, size = 0x4, scoped, tag = 'scoped memory for tpu_custom_call.1']
    %18 = vsyncpa [#allocation3], 0
    %19 = vsyncpa [#allocation6], 0
    %20 = vsyncpa [#allocation9], 0
    %21 = vsyncpa [#allocation12], 0
    %22 = vsyncpa [#allocation15], 0
    %23 = vsyncpa [#allocation18], 0
    %24 = vsyncpa [#allocation4], 0
    %25 = vsyncpa [#allocation22], 0
    // Predicated region
    $region2: #{tpu_custom_call.1} parent=1 // pred_check
      _
    $region3: #{tpu_custom_call.1} parent=1 // pred_check_branch
      %27 = sbr.rel (0) target = $region5
    $region4: #{tpu_custom_call.1} parent=1 // pred_region
      %s29 = ssub.s32 384, 384
      %30 = vsyncadd [#allocation3], %s29
      %s31 = sshll.u32 [#allocation2], 4
      %s32 = int_to_ptr.vmem [resolvable:$true] %s31
      %37 = dma.hbm_to_vmem [thread:$0]  %s0, 384, %s32, [#allocation3], 192, 192, 12
    $region5: #{tpu_custom_call.1} parent=1 // pred_fallthru
      _
    // Predicated region
    $region6: #{tpu_custom_call.1} parent=1 // pred_check
      _
    $region7: #{tpu_custom_call.1} parent=1 // pred_check_branch
      %39 = sbr.rel (0) target = $region9
    $region8: #{tpu_custom_call.1} parent=1 // pred_region
      %s41 = ssub.s32 49152, 49152
      %42 = vsyncadd [#allocation6], %s41
      %s43 = sshll.u32 [#allocation5], 4
      %s44 = int_to_ptr.vmem [resolvable:$true] %s43
      %49 = dma.hbm_to_vmem [thread:$0]  %s1, 49152, %s44, [#allocation6], 1024, 1024, 64
    $region9: #{tpu_custom_call.1} parent=1 // pred_fallthru
      _
    // Predicated region
    $region10: #{tpu_custom_call.1} parent=1 // pred_check
      _
    $region11: #{tpu_custom_call.1} parent=1 // pred_check_branch
      %51 = sbr.rel (0) target = $region13
    $region12: #{tpu_custom_call.1} parent=1 // pred_region
      %s53 = ssub.s32 256, 256
      %54 = vsyncadd [#allocation6], %s53
      %s56 = sshll.u32 [#allocation7], 4
      %s57 = int_to_ptr.vmem [resolvable:$true] %s56
      %59 = dma.hbm_to_vmem [thread:$0]  %s2, 256, %s57, [#allocation6]
    $region13: #{tpu_custom_call.1} parent=1 // pred_fallthru
      _
    // Predicated region
    $region14: #{tpu_custom_call.1} parent=1 // pred_check
      _
    $region15: #{tpu_custom_call.1} parent=1 // pred_check_branch
      %61 = sbr.rel (0) target = $region17
    $region16: #{tpu_custom_call.1} parent=1 // pred_region
      %s63 = ssub.s32 256, 256
      %64 = vsyncadd [#allocation9], %s63
      %s66 = sshll.u32 [#allocation8], 4
      %s67 = int_to_ptr.vmem [resolvable:$true] %s66
      %69 = dma.hbm_to_vmem [thread:$0]  %s3, 256, %s67, [#allocation9]
    $region17: #{tpu_custom_call.1} parent=1 // pred_fallthru
      _
    // Predicated region
    $region18: #{tpu_custom_call.1} parent=1 // pred_check
      _
    $region19: #{tpu_custom_call.1} parent=1 // pred_check_branch
      %71 = sbr.rel (0) target = $region21
    $region20: #{tpu_custom_call.1} parent=1 // pred_region
      %s73 = ssub.s32 256, 256
      %74 = vsyncadd [#allocation9], %s73
      %s76 = sshll.u32 [#allocation10], 4
      %s77 = int_to_ptr.vmem [resolvable:$true] %s76
      %79 = dma.hbm_to_vmem [thread:$0]  %s4, 256, %s77, [#allocation9]
    $region21: #{tpu_custom_call.1} parent=1 // pred_fallthru
      _
    // Predicated region
    $region22: #{tpu_custom_call.1} parent=1 // pred_check
      _
    $region23: #{tpu_custom_call.1} parent=1 // pred_check_branch
      %81 = sbr.rel (0) target = $region25
    $region24: #{tpu_custom_call.1} parent=1 // pred_region
      %s83 = ssub.s32 256, 256
      %84 = vsyncadd [#allocation12], %s83
      %s86 = sshll.u32 [#allocation11], 4
      %s87 = int_to_ptr.vmem [resolvable:$true] %s86
      %89 = dma.hbm_to_vmem [thread:$0]  %s5, 256, %s87, [#allocation12]
    $region25: #{tpu_custom_call.1} parent=1 // pred_fallthru
      _
    // Predicated region
    $region26: #{tpu_custom_call.1} parent=1 // pred_check
      _
    $region27: #{tpu_custom_call.1} parent=1 // pred_check_branch
      %91 = sbr.rel (0) target = $region29
    $region28: #{tpu_custom_call.1} parent=1 // pred_region
      %s93 = ssub.s32 65536, 65536
      %94 = vsyncadd [#allocation12], %s93
      %s95 = sshll.u32 [#allocation13], 4
      %s96 = int_to_ptr.vmem [resolvable:$true] %s95
      %101 = dma.hbm_to_vmem [thread:$0]  %s6, 65536, %s96, [#allocation12], 256, 256, 16
    $region29: #{tpu_custom_call.1} parent=1 // pred_fallthru
      _
    // Predicated region
    $region30: #{tpu_custom_call.1} parent=1 // pred_check
      _
    $region31: #{tpu_custom_call.1} parent=1 // pred_check_branch
      %103 = sbr.rel (0) target = $region33
    $region32: #{tpu_custom_call.1} parent=1 // pred_region
      %s105 = ssub.s32 64, 64
      %106 = vsyncadd [#allocation15], %s105
      %s108 = sshll.u32 [#allocation14], 4
      %s109 = int_to_ptr.vmem [resolvable:$true] %s108
      %111 = dma.hbm_to_vmem [thread:$0]  %s7, 64, %s109, [#allocation15]
    $region33: #{tpu_custom_call.1} parent=1 // pred_fallthru
      _
    // Predicated region
    $region34: #{tpu_custom_call.1} parent=1 // pred_check
      _
    $region35: #{tpu_custom_call.1} parent=1 // pred_check_branch
      %113 = sbr.rel (0) target = $region37
    $region36: #{tpu_custom_call.1} parent=1 // pred_region
      %s115 = ssub.s32 64, 64
      %116 = vsyncadd [#allocation15], %s115
      %s118 = sshll.u32 [#allocation16], 4
      %s119 = int_to_ptr.vmem [resolvable:$true] %s118
      %121 = dma.hbm_to_vmem [thread:$0]  %s8, 64, %s119, [#allocation15]
    $region37: #{tpu_custom_call.1} parent=1 // pred_fallthru
      _
    // Predicated region
    $region38: #{tpu_custom_call.1} parent=1 // pred_check
      _
    $region39: #{tpu_custom_call.1} parent=1 // pred_check_branch
      %123 = sbr.rel (0) target = $region41
    $region40: #{tpu_custom_call.1} parent=1 // pred_region
      %s125 = ssub.s32 64, 64
      %126 = vsyncadd [#allocation18], %s125
      %s128 = sshll.u32 [#allocation17], 4
      %s129 = int_to_ptr.vmem [resolvable:$true] %s128
      %131 = dma.hbm_to_vmem [thread:$0]  %s9, 64, %s129, [#allocation18]
    $region41: #{tpu_custom_call.1} parent=1 // pred_fallthru
      _
    // Predicated region
    $region42: #{tpu_custom_call.1} parent=1 // pred_check
      _
    $region43: #{tpu_custom_call.1} parent=1 // pred_check_branch
      %133 = sbr.rel (0) target = $region45
    $region44: #{tpu_custom_call.1} parent=1 // pred_region
      %s135 = ssub.s32 64, 64
      %136 = vsyncadd [#allocation18], %s135
      %s138 = sshll.u32 [#allocation19], 4
      %s139 = int_to_ptr.vmem [resolvable:$true] %s138
      %141 = dma.hbm_to_vmem [thread:$0]  %s10, 64, %s139, [#allocation18]
    $region45: #{tpu_custom_call.1} parent=1 // pred_fallthru
      _
    // Predicated region
    $region46: #{tpu_custom_call.1} parent=1 // pred_check
      _
    $region47: #{tpu_custom_call.1} parent=1 // pred_check_branch
      %143 = sbr.rel (0) target = $region49
    $region48: #{tpu_custom_call.1} parent=1 // pred_region
      %144 = dma.done [#allocation3], 384
    $region49: #{tpu_custom_call.1} parent=1 // pred_fallthru
      _
    // Predicated region
    $region50: #{tpu_custom_call.1} parent=1 // pred_check
      _
    $region51: #{tpu_custom_call.1} parent=1 // pred_check_branch
      %146 = sbr.rel (0) target = $region53
    $region52: #{tpu_custom_call.1} parent=1 // pred_region
      %147 = dma.done [#allocation6], 49152
    $region53: #{tpu_custom_call.1} parent=1 // pred_fallthru
      _
    // Predicated region
    $region54: #{tpu_custom_call.1} parent=1 // pred_check
      _
    $region55: #{tpu_custom_call.1} parent=1 // pred_check_branch
      %149 = sbr.rel (0) target = $region57
    $region56: #{tpu_custom_call.1} parent=1 // pred_region
      %150 = dma.done [#allocation6], 256
    $region57: #{tpu_custom_call.1} parent=1 // pred_fallthru
      _
    // Predicated region
    $region58: #{tpu_custom_call.1} parent=1 // pred_check
      _
    $region59: #{tpu_custom_call.1} parent=1 // pred_check_branch
      %152 = sbr.rel (0) target = $region61
    $region60: #{tpu_custom_call.1} parent=1 // pred_region
      %153 = dma.done [#allocation9], 256
    $region61: #{tpu_custom_call.1} parent=1 // pred_fallthru
      _
    // Predicated region
    $region62: #{tpu_custom_call.1} parent=1 // pred_check
      _
    $region63: #{tpu_custom_call.1} parent=1 // pred_check_branch
      %155 = sbr.rel (0) target = $region65
    $region64: #{tpu_custom_call.1} parent=1 // pred_region
      %156 = dma.done [#allocation9], 256
    $region65: #{tpu_custom_call.1} parent=1 // pred_fallthru
      _
    // Predicated region
    $region66: #{tpu_custom_call.1} parent=1 // pred_check
      _
    $region67: #{tpu_custom_call.1} parent=1 // pred_check_branch
      %158 = sbr.rel (0) target = $region69
    $region68: #{tpu_custom_call.1} parent=1 // pred_region
      %159 = dma.done [#allocation12], 256
    $region69: #{tpu_custom_call.1} parent=1 // pred_fallthru
      _
    // Predicated region
    $region70: #{tpu_custom_call.1} parent=1 // pred_check
      _
    $region71: #{tpu_custom_call.1} parent=1 // pred_check_branch
      %161 = sbr.rel (0) target = $region73
    $region72: #{tpu_custom_call.1} parent=1 // pred_region
      %162 = dma.done [#allocation12], 65536
    $region73: #{tpu_custom_call.1} parent=1 // pred_fallthru
      _
    // Predicated region
    $region74: #{tpu_custom_call.1} parent=1 // pred_check
      _
    $region75: #{tpu_custom_call.1} parent=1 // pred_check_branch
      %164 = sbr.rel (0) target = $region77
    $region76: #{tpu_custom_call.1} parent=1 // pred_region
      %165 = dma.done [#allocation15], 64
    $region77: #{tpu_custom_call.1} parent=1 // pred_fallthru
      _
    // Predicated region
    $region78: #{tpu_custom_call.1} parent=1 // pred_check
      _
    $region79: #{tpu_custom_call.1} parent=1 // pred_check_branch
      %167 = sbr.rel (0) target = $region81
    $region80: #{tpu_custom_call.1} parent=1 // pred_region
      %168 = dma.done [#allocation15], 64
    $region81: #{tpu_custom_call.1} parent=1 // pred_fallthru
      _
    // Predicated region
    $region82: #{tpu_custom_call.1} parent=1 // pred_check
      _
    $region83: #{tpu_custom_call.1} parent=1 // pred_check_branch
      %170 = sbr.rel (0) target = $region85
    $region84: #{tpu_custom_call.1} parent=1 // pred_region
      %171 = dma.done [#allocation18], 64
    $region85: #{tpu_custom_call.1} parent=1 // pred_fallthru
      _
    // Predicated region
    $region86: #{tpu_custom_call.1} parent=1 // pred_check
      _
    $region87: #{tpu_custom_call.1} parent=1 // pred_check_branch
      %173 = sbr.rel (0) target = $region89
    $region88: #{tpu_custom_call.1} parent=1 // pred_region
      %174 = dma.done [#allocation18], 64
    $region89: #{tpu_custom_call.1} parent=1 // pred_fallthru
      _
    %v176 = vld [vmem:[#allocation2] sm:$0xff]
    %v177 = vld [vmem:[#allocation2 + $0x8] sm:$0xf]
    %v178 = vld [vmem:[#allocation2 + $0xc] sm:$0xff]
    %v179 = vld [vmem:[#allocation2 + $0x14] sm:$0xf]
    %v180 = vld [vmem:[#allocation5] sm:$0xff]
    %v181 = vld [vmem:[#allocation5 + $0x8] sm:$0xff]
    %v182 = vld [vmem:[#allocation5 + $0x10] sm:$0xff]
    %v183 = vld [vmem:[#allocation5 + $0x18] sm:$0xff]
    %v184 = vld [vmem:[#allocation5 + $0x20] sm:$0xff]
    %v185 = vld [vmem:[#allocation5 + $0x28] sm:$0xff]
    %v186 = vld [vmem:[#allocation5 + $0x30] sm:$0xff]
    %v187 = vld [vmem:[#allocation5 + $0x38] sm:$0xff]
    %v188 = vld [vmem:[#allocation5 + $0x40] sm:$0xff]
    %v189 = vld [vmem:[#allocation5 + $0x48] sm:$0xff]
    %v190 = vld [vmem:[#allocation5 + $0x50] sm:$0xff]
    %v191 = vld [vmem:[#allocation5 + $0x58] sm:$0xff]
    %v192 = vld [vmem:[#allocation5 + $0x60] sm:$0xff]
    %v193 = vld [vmem:[#allocation5 + $0x68] sm:$0xff]
    %v194 = vld [vmem:[#allocation5 + $0x70] sm:$0xff]
    %v195 = vld [vmem:[#allocation5 + $0x78] sm:$0xff]
    %v196 = vld [vmem:[#allocation5 + $0x80] sm:$0xff]
    %v197 = vld [vmem:[#allocation5 + $0x88] sm:$0xff]
    %v198 = vld [vmem:[#allocation5 + $0x90] sm:$0xff]
    %v199 = vld [vmem:[#allocation5 + $0x98] sm:$0xff]
    %v200 = vld [vmem:[#allocation5 + $0xa0] sm:$0xff]
    %v201 = vld [vmem:[#allocation5 + $0xa8] sm:$0xff]
    %v202 = vld [vmem:[#allocation5 + $0xb0] sm:$0xff]
    %v203 = vld [vmem:[#allocation5 + $0xb8] sm:$0xff]
    %v204 = vld [vmem:[#allocation5 + $0xc0] sm:$0xff]
    %v205 = vld [vmem:[#allocation5 + $0xc8] sm:$0xff]
    %v206 = vld [vmem:[#allocation5 + $0xd0] sm:$0xff]
    %v207 = vld [vmem:[#allocation5 + $0xd8] sm:$0xff]
    %v208 = vld [vmem:[#allocation5 + $0xe0] sm:$0xff]
    %v209 = vld [vmem:[#allocation5 + $0xe8] sm:$0xff]
    %v210 = vld [vmem:[#allocation5 + $0xf0] sm:$0xff]
    %v211 = vld [vmem:[#allocation5 + $0xf8] sm:$0xff]
    %v212 = vld [vmem:[#allocation5 + $0x100] sm:$0xff]
    %v213 = vld [vmem:[#allocation5 + $0x108] sm:$0xff]
    %v214 = vld [vmem:[#allocation5 + $0x110] sm:$0xff]
    %v215 = vld [vmem:[#allocation5 + $0x118] sm:$0xff]
    %v216 = vld [vmem:[#allocation5 + $0x120] sm:$0xff]
    %v217 = vld [vmem:[#allocation5 + $0x128] sm:$0xff]
    %v218 = vld [vmem:[#allocation5 + $0x130] sm:$0xff]
    %v219 = vld [vmem:[#allocation5 + $0x138] sm:$0xff]
    %v220 = vld [vmem:[#allocation5 + $0x140] sm:$0xff]
    %v221 = vld [vmem:[#allocation5 + $0x148] sm:$0xff]
    %v222 = vld [vmem:[#allocation5 + $0x150] sm:$0xff]
    %v223 = vld [vmem:[#allocation5 + $0x158] sm:$0xff]
    %v224 = vld [vmem:[#allocation5 + $0x160] sm:$0xff]
    %v225 = vld [vmem:[#allocation5 + $0x168] sm:$0xff]
    %v226 = vld [vmem:[#allocation5 + $0x170] sm:$0xff]
    %v227 = vld [vmem:[#allocation5 + $0x178] sm:$0xff]
    %v228 = vld [vmem:[#allocation5 + $0x180] sm:$0xff]
    %v229 = vld [vmem:[#allocation5 + $0x188] sm:$0xff]
    %v230 = vld [vmem:[#allocation5 + $0x190] sm:$0xff]
    %v231 = vld [vmem:[#allocation5 + $0x198] sm:$0xff]
    %v232 = vld [vmem:[#allocation5 + $0x1a0] sm:$0xff]
    %v233 = vld [vmem:[#allocation5 + $0x1a8] sm:$0xff]
    %v234 = vld [vmem:[#allocation5 + $0x1b0] sm:$0xff]
    %v235 = vld [vmem:[#allocation5 + $0x1b8] sm:$0xff]
    %v236 = vld [vmem:[#allocation5 + $0x1c0] sm:$0xff]
    %v237 = vld [vmem:[#allocation5 + $0x1c8] sm:$0xff]
    %v238 = vld [vmem:[#allocation5 + $0x1d0] sm:$0xff]
    %v239 = vld [vmem:[#allocation5 + $0x1d8] sm:$0xff]
    %v240 = vld [vmem:[#allocation5 + $0x1e0] sm:$0xff]
    %v241 = vld [vmem:[#allocation5 + $0x1e8] sm:$0xff]
    %v242 = vld [vmem:[#allocation5 + $0x1f0] sm:$0xff]
    %v243 = vld [vmem:[#allocation5 + $0x1f8] sm:$0xff]
    %v244 = vld [vmem:[#allocation5 + $0x200] sm:$0xff]
    %v245 = vld [vmem:[#allocation5 + $0x208] sm:$0xff]
    %v246 = vld [vmem:[#allocation5 + $0x210] sm:$0xff]
    %v247 = vld [vmem:[#allocation5 + $0x218] sm:$0xff]
    %v248 = vld [vmem:[#allocation5 + $0x220] sm:$0xff]
    %v249 = vld [vmem:[#allocation5 + $0x228] sm:$0xff]
    %v250 = vld [vmem:[#allocation5 + $0x230] sm:$0xff]
    %v251 = vld [vmem:[#allocation5 + $0x238] sm:$0xff]
    %v252 = vld [vmem:[#allocation5 + $0x240] sm:$0xff]
    %v253 = vld [vmem:[#allocation5 + $0x248] sm:$0xff]
    %v254 = vld [vmem:[#allocation5 + $0x250] sm:$0xff]
    %v255 = vld [vmem:[#allocation5 + $0x258] sm:$0xff]
    %v256 = vld [vmem:[#allocation5 + $0x260] sm:$0xff]
    %v257 = vld [vmem:[#allocation5 + $0x268] sm:$0xff]
    %v258 = vld [vmem:[#allocation5 + $0x270] sm:$0xff]
    %v259 = vld [vmem:[#allocation5 + $0x278] sm:$0xff]
    %v260 = vld [vmem:[#allocation5 + $0x280] sm:$0xff]
    %v261 = vld [vmem:[#allocation5 + $0x288] sm:$0xff]
    %v262 = vld [vmem:[#allocation5 + $0x290] sm:$0xff]
    %v263 = vld [vmem:[#allocation5 + $0x298] sm:$0xff]
    %v264 = vld [vmem:[#allocation5 + $0x2a0] sm:$0xff]
    %v265 = vld [vmem:[#allocation5 + $0x2a8] sm:$0xff]
    %v266 = vld [vmem:[#allocation5 + $0x2b0] sm:$0xff]
    %v267 = vld [vmem:[#allocation5 + $0x2b8] sm:$0xff]
    %v268 = vld [vmem:[#allocation5 + $0x2c0] sm:$0xff]
    %v269 = vld [vmem:[#allocation5 + $0x2c8] sm:$0xff]
    %v270 = vld [vmem:[#allocation5 + $0x2d0] sm:$0xff]
    %v271 = vld [vmem:[#allocation5 + $0x2d8] sm:$0xff]
    %v272 = vld [vmem:[#allocation5 + $0x2e0] sm:$0xff]
    %v273 = vld [vmem:[#allocation5 + $0x2e8] sm:$0xff]
    %v274 = vld [vmem:[#allocation5 + $0x2f0] sm:$0xff]
    %v275 = vld [vmem:[#allocation5 + $0x2f8] sm:$0xff]
    %v276 = vld [vmem:[#allocation5 + $0x300] sm:$0xff]
    %v277 = vld [vmem:[#allocation5 + $0x308] sm:$0xff]
    %v278 = vld [vmem:[#allocation5 + $0x310] sm:$0xff]
    %v279 = vld [vmem:[#allocation5 + $0x318] sm:$0xff]
    %v280 = vld [vmem:[#allocation5 + $0x320] sm:$0xff]
    %v281 = vld [vmem:[#allocation5 + $0x328] sm:$0xff]
    %v282 = vld [vmem:[#allocation5 + $0x330] sm:$0xff]
    %v283 = vld [vmem:[#allocation5 + $0x338] sm:$0xff]
    %v284 = vld [vmem:[#allocation5 + $0x340] sm:$0xff]
    %v285 = vld [vmem:[#allocation5 + $0x348] sm:$0xff]
    %v286 = vld [vmem:[#allocation5 + $0x350] sm:$0xff]
    %v287 = vld [vmem:[#allocation5 + $0x358] sm:$0xff]
    %v288 = vld [vmem:[#allocation5 + $0x360] sm:$0xff]
    %v289 = vld [vmem:[#allocation5 + $0x368] sm:$0xff]
    %v290 = vld [vmem:[#allocation5 + $0x370] sm:$0xff]
    %v291 = vld [vmem:[#allocation5 + $0x378] sm:$0xff]
    %v292 = vld [vmem:[#allocation5 + $0x380] sm:$0xff]
    %v293 = vld [vmem:[#allocation5 + $0x388] sm:$0xff]
    %v294 = vld [vmem:[#allocation5 + $0x390] sm:$0xff]
    %v295 = vld [vmem:[#allocation5 + $0x398] sm:$0xff]
    %v296 = vld [vmem:[#allocation5 + $0x3a0] sm:$0xff]
    %v297 = vld [vmem:[#allocation5 + $0x3a8] sm:$0xff]
    %v298 = vld [vmem:[#allocation5 + $0x3b0] sm:$0xff]
    %v299 = vld [vmem:[#allocation5 + $0x3b8] sm:$0xff]
    %v300 = vld [vmem:[#allocation5 + $0x3c0] sm:$0xff]
    %v301 = vld [vmem:[#allocation5 + $0x3c8] sm:$0xff]
    %v302 = vld [vmem:[#allocation5 + $0x3d0] sm:$0xff]
    %v303 = vld [vmem:[#allocation5 + $0x3d8] sm:$0xff]
    %v304 = vld [vmem:[#allocation5 + $0x3e0] sm:$0xff]
    %v305 = vld [vmem:[#allocation5 + $0x3e8] sm:$0xff]
    %v306 = vld [vmem:[#allocation5 + $0x3f0] sm:$0xff]
    %v307 = vld [vmem:[#allocation5 + $0x3f8] sm:$0xff]
    %v308 = vld [vmem:[#allocation5 + $0x400] sm:$0xff]
    %v309 = vld [vmem:[#allocation5 + $0x408] sm:$0xff]
    %v310 = vld [vmem:[#allocation5 + $0x410] sm:$0xff]
    %v311 = vld [vmem:[#allocation5 + $0x418] sm:$0xff]
    %v312 = vld [vmem:[#allocation5 + $0x420] sm:$0xff]
    %v313 = vld [vmem:[#allocation5 + $0x428] sm:$0xff]
    %v314 = vld [vmem:[#allocation5 + $0x430] sm:$0xff]
    %v315 = vld [vmem:[#allocation5 + $0x438] sm:$0xff]
    %v316 = vld [vmem:[#allocation5 + $0x440] sm:$0xff]
    %v317 = vld [vmem:[#allocation5 + $0x448] sm:$0xff]
    %v318 = vld [vmem:[#allocation5 + $0x450] sm:$0xff]
    %v319 = vld [vmem:[#allocation5 + $0x458] sm:$0xff]
    %v320 = vld [vmem:[#allocation5 + $0x460] sm:$0xff]
    %v321 = vld [vmem:[#allocation5 + $0x468] sm:$0xff]
    %v322 = vld [vmem:[#allocation5 + $0x470] sm:$0xff]
    %v323 = vld [vmem:[#allocation5 + $0x478] sm:$0xff]
    %v324 = vld [vmem:[#allocation5 + $0x480] sm:$0xff]
    %v325 = vld [vmem:[#allocation5 + $0x488] sm:$0xff]
    %v326 = vld [vmem:[#allocation5 + $0x490] sm:$0xff]
    %v327 = vld [vmem:[#allocation5 + $0x498] sm:$0xff]
    %v328 = vld [vmem:[#allocation5 + $0x4a0] sm:$0xff]
    %v329 = vld [vmem:[#allocation5 + $0x4a8] sm:$0xff]
    %v330 = vld [vmem:[#allocation5 + $0x4b0] sm:$0xff]
    %v331 = vld [vmem:[#allocation5 + $0x4b8] sm:$0xff]
    %v332 = vld [vmem:[#allocation5 + $0x4c0] sm:$0xff]
    %v333 = vld [vmem:[#allocation5 + $0x4c8] sm:$0xff]
    %v334 = vld [vmem:[#allocation5 + $0x4d0] sm:$0xff]
    %v335 = vld [vmem:[#allocation5 + $0x4d8] sm:$0xff]
    %v336 = vld [vmem:[#allocation5 + $0x4e0] sm:$0xff]
    %v337 = vld [vmem:[#allocation5 + $0x4e8] sm:$0xff]
    %v338 = vld [vmem:[#allocation5 + $0x4f0] sm:$0xff]
    %v339 = vld [vmem:[#allocation5 + $0x4f8] sm:$0xff]
    %v340 = vld [vmem:[#allocation5 + $0x500] sm:$0xff]
    %v341 = vld [vmem:[#allocation5 + $0x508] sm:$0xff]
    %v342 = vld [vmem:[#allocation5 + $0x510] sm:$0xff]
    %v343 = vld [vmem:[#allocation5 + $0x518] sm:$0xff]
    %v344 = vld [vmem:[#allocation5 + $0x520] sm:$0xff]
    %v345 = vld [vmem:[#allocation5 + $0x528] sm:$0xff]
    %v346 = vld [vmem:[#allocation5 + $0x530] sm:$0xff]
    %v347 = vld [vmem:[#allocation5 + $0x538] sm:$0xff]
    %v348 = vld [vmem:[#allocation5 + $0x540] sm:$0xff]
    %v349 = vld [vmem:[#allocation5 + $0x548] sm:$0xff]
    %v350 = vld [vmem:[#allocation5 + $0x550] sm:$0xff]
    %v351 = vld [vmem:[#allocation5 + $0x558] sm:$0xff]
    %v352 = vld [vmem:[#allocation5 + $0x560] sm:$0xff]
    %v353 = vld [vmem:[#allocation5 + $0x568] sm:$0xff]
    %v354 = vld [vmem:[#allocation5 + $0x570] sm:$0xff]
    %v355 = vld [vmem:[#allocation5 + $0x578] sm:$0xff]
    %v356 = vld [vmem:[#allocation5 + $0x580] sm:$0xff]
    %v357 = vld [vmem:[#allocation5 + $0x588] sm:$0xff]
    %v358 = vld [vmem:[#allocation5 + $0x590] sm:$0xff]
    %v359 = vld [vmem:[#allocation5 + $0x598] sm:$0xff]
    %v360 = vld [vmem:[#allocation5 + $0x5a0] sm:$0xff]
    %v361 = vld [vmem:[#allocation5 + $0x5a8] sm:$0xff]
    %v362 = vld [vmem:[#allocation5 + $0x5b0] sm:$0xff]
    %v363 = vld [vmem:[#allocation5 + $0x5b8] sm:$0xff]
    %v364 = vld [vmem:[#allocation5 + $0x5c0] sm:$0xff]
    %v365 = vld [vmem:[#allocation5 + $0x5c8] sm:$0xff]
    %v366 = vld [vmem:[#allocation5 + $0x5d0] sm:$0xff]
    %v367 = vld [vmem:[#allocation5 + $0x5d8] sm:$0xff]
    %v368 = vld [vmem:[#allocation5 + $0x5e0] sm:$0xff]
    %v369 = vld [vmem:[#allocation5 + $0x5e8] sm:$0xff]
    %v370 = vld [vmem:[#allocation5 + $0x5f0] sm:$0xff]
    %v371 = vld [vmem:[#allocation5 + $0x5f8] sm:$0xff]
    %v372 = vld [vmem:[#allocation5 + $0x600] sm:$0xff]
    %v373 = vld [vmem:[#allocation5 + $0x608] sm:$0xff]
    %v374 = vld [vmem:[#allocation5 + $0x610] sm:$0xff]
    %v375 = vld [vmem:[#allocation5 + $0x618] sm:$0xff]
    %v376 = vld [vmem:[#allocation5 + $0x620] sm:$0xff]
    %v377 = vld [vmem:[#allocation5 + $0x628] sm:$0xff]
    %v378 = vld [vmem:[#allocation5 + $0x630] sm:$0xff]
    %v379 = vld [vmem:[#allocation5 + $0x638] sm:$0xff]
    %v380 = vld [vmem:[#allocation5 + $0x640] sm:$0xff]
    %v381 = vld [vmem:[#allocation5 + $0x648] sm:$0xff]
    %v382 = vld [vmem:[#allocation5 + $0x650] sm:$0xff]
    %v383 = vld [vmem:[#allocation5 + $0x658] sm:$0xff]
    %v384 = vld [vmem:[#allocation5 + $0x660] sm:$0xff]
    %v385 = vld [vmem:[#allocation5 + $0x668] sm:$0xff]
    %v386 = vld [vmem:[#allocation5 + $0x670] sm:$0xff]
    %v387 = vld [vmem:[#allocation5 + $0x678] sm:$0xff]
    %v388 = vld [vmem:[#allocation5 + $0x680] sm:$0xff]
    %v389 = vld [vmem:[#allocation5 + $0x688] sm:$0xff]
    %v390 = vld [vmem:[#allocation5 + $0x690] sm:$0xff]
    %v391 = vld [vmem:[#allocation5 + $0x698] sm:$0xff]
    %v392 = vld [vmem:[#allocation5 + $0x6a0] sm:$0xff]
    %v393 = vld [vmem:[#allocation5 + $0x6a8] sm:$0xff]
    %v394 = vld [vmem:[#allocation5 + $0x6b0] sm:$0xff]
    %v395 = vld [vmem:[#allocation5 + $0x6b8] sm:$0xff]
    %v396 = vld [vmem:[#allocation5 + $0x6c0] sm:$0xff]
    %v397 = vld [vmem:[#allocation5 + $0x6c8] sm:$0xff]
    %v398 = vld [vmem:[#allocation5 + $0x6d0] sm:$0xff]
    %v399 = vld [vmem:[#allocation5 + $0x6d8] sm:$0xff]
    %v400 = vld [vmem:[#allocation5 + $0x6e0] sm:$0xff]
    %v401 = vld [vmem:[#allocation5 + $0x6e8] sm:$0xff]
    %v402 = vld [vmem:[#allocation5 + $0x6f0] sm:$0xff]
    %v403 = vld [vmem:[#allocation5 + $0x6f8] sm:$0xff]
    %v404 = vld [vmem:[#allocation5 + $0x700] sm:$0xff]
    %v405 = vld [vmem:[#allocation5 + $0x708] sm:$0xff]
    %v406 = vld [vmem:[#allocation5 + $0x710] sm:$0xff]
    %v407 = vld [vmem:[#allocation5 + $0x718] sm:$0xff]
    %v408 = vld [vmem:[#allocation5 + $0x720] sm:$0xff]
    %v409 = vld [vmem:[#allocation5 + $0x728] sm:$0xff]
    %v410 = vld [vmem:[#allocation5 + $0x730] sm:$0xff]
    %v411 = vld [vmem:[#allocation5 + $0x738] sm:$0xff]
    %v412 = vld [vmem:[#allocation5 + $0x740] sm:$0xff]
    %v413 = vld [vmem:[#allocation5 + $0x748] sm:$0xff]
    %v414 = vld [vmem:[#allocation5 + $0x750] sm:$0xff]
    %v415 = vld [vmem:[#allocation5 + $0x758] sm:$0xff]
    %v416 = vld [vmem:[#allocation5 + $0x760] sm:$0xff]
    %v417 = vld [vmem:[#allocation5 + $0x768] sm:$0xff]
    %v418 = vld [vmem:[#allocation5 + $0x770] sm:$0xff]
    %v419 = vld [vmem:[#allocation5 + $0x778] sm:$0xff]
    %v420 = vld [vmem:[#allocation5 + $0x780] sm:$0xff]
    %v421 = vld [vmem:[#allocation5 + $0x788] sm:$0xff]
    %v422 = vld [vmem:[#allocation5 + $0x790] sm:$0xff]
    %v423 = vld [vmem:[#allocation5 + $0x798] sm:$0xff]
    %v424 = vld [vmem:[#allocation5 + $0x7a0] sm:$0xff]
    %v425 = vld [vmem:[#allocation5 + $0x7a8] sm:$0xff]
    %v426 = vld [vmem:[#allocation5 + $0x7b0] sm:$0xff]
    %v427 = vld [vmem:[#allocation5 + $0x7b8] sm:$0xff]
    %v428 = vld [vmem:[#allocation5 + $0x7c0] sm:$0xff]
    %v429 = vld [vmem:[#allocation5 + $0x7c8] sm:$0xff]
    %v430 = vld [vmem:[#allocation5 + $0x7d0] sm:$0xff]
    %v431 = vld [vmem:[#allocation5 + $0x7d8] sm:$0xff]
    %v432 = vld [vmem:[#allocation5 + $0x7e0] sm:$0xff]
    %v433 = vld [vmem:[#allocation5 + $0x7e8] sm:$0xff]
    %v434 = vld [vmem:[#allocation5 + $0x7f0] sm:$0xff]
    %v435 = vld [vmem:[#allocation5 + $0x7f8] sm:$0xff]
    %v436 = vld [vmem:[#allocation5 + $0x800] sm:$0xff]
    %v437 = vld [vmem:[#allocation5 + $0x808] sm:$0xff]
    %v438 = vld [vmem:[#allocation5 + $0x810] sm:$0xff]
    %v439 = vld [vmem:[#allocation5 + $0x818] sm:$0xff]
    %v440 = vld [vmem:[#allocation5 + $0x820] sm:$0xff]
    %v441 = vld [vmem:[#allocation5 + $0x828] sm:$0xff]
    %v442 = vld [vmem:[#allocation5 + $0x830] sm:$0xff]
    %v443 = vld [vmem:[#allocation5 + $0x838] sm:$0xff]
    %v444 = vld [vmem:[#allocation5 + $0x840] sm:$0xff]
    %v445 = vld [vmem:[#allocation5 + $0x848] sm:$0xff]
    %v446 = vld [vmem:[#allocation5 + $0x850] sm:$0xff]
    %v447 = vld [vmem:[#allocation5 + $0x858] sm:$0xff]
    %v448 = vld [vmem:[#allocation5 + $0x860] sm:$0xff]
    %v449 = vld [vmem:[#allocation5 + $0x868] sm:$0xff]
    %v450 = vld [vmem:[#allocation5 + $0x870] sm:$0xff]
    %v451 = vld [vmem:[#allocation5 + $0x878] sm:$0xff]
    %v452 = vld [vmem:[#allocation5 + $0x880] sm:$0xff]
    %v453 = vld [vmem:[#allocation5 + $0x888] sm:$0xff]
    %v454 = vld [vmem:[#allocation5 + $0x890] sm:$0xff]
    %v455 = vld [vmem:[#allocation5 + $0x898] sm:$0xff]
    %v456 = vld [vmem:[#allocation5 + $0x8a0] sm:$0xff]
    %v457 = vld [vmem:[#allocation5 + $0x8a8] sm:$0xff]
    %v458 = vld [vmem:[#allocation5 + $0x8b0] sm:$0xff]
    %v459 = vld [vmem:[#allocation5 + $0x8b8] sm:$0xff]
    %v460 = vld [vmem:[#allocation5 + $0x8c0] sm:$0xff]
    %v461 = vld [vmem:[#allocation5 + $0x8c8] sm:$0xff]
    %v462 = vld [vmem:[#allocation5 + $0x8d0] sm:$0xff]
    %v463 = vld [vmem:[#allocation5 + $0x8d8] sm:$0xff]
    %v464 = vld [vmem:[#allocation5 + $0x8e0] sm:$0xff]
    %v465 = vld [vmem:[#allocation5 + $0x8e8] sm:$0xff]
    %v466 = vld [vmem:[#allocation5 + $0x8f0] sm:$0xff]
    %v467 = vld [vmem:[#allocation5 + $0x8f8] sm:$0xff]
    %v468 = vld [vmem:[#allocation5 + $0x900] sm:$0xff]
    %v469 = vld [vmem:[#allocation5 + $0x908] sm:$0xff]
    %v470 = vld [vmem:[#allocation5 + $0x910] sm:$0xff]
    %v471 = vld [vmem:[#allocation5 + $0x918] sm:$0xff]
    %v472 = vld [vmem:[#allocation5 + $0x920] sm:$0xff]
    %v473 = vld [vmem:[#allocation5 + $0x928] sm:$0xff]
    %v474 = vld [vmem:[#allocation5 + $0x930] sm:$0xff]
    %v475 = vld [vmem:[#allocation5 + $0x938] sm:$0xff]
    %v476 = vld [vmem:[#allocation5 + $0x940] sm:$0xff]
    %v477 = vld [vmem:[#allocation5 + $0x948] sm:$0xff]
    %v478 = vld [vmem:[#allocation5 + $0x950] sm:$0xff]
    %v479 = vld [vmem:[#allocation5 + $0x958] sm:$0xff]
    %v480 = vld [vmem:[#allocation5 + $0x960] sm:$0xff]
    %v481 = vld [vmem:[#allocation5 + $0x968] sm:$0xff]
    %v482 = vld [vmem:[#allocation5 + $0x970] sm:$0xff]
    %v483 = vld [vmem:[#allocation5 + $0x978] sm:$0xff]
    %v484 = vld [vmem:[#allocation5 + $0x980] sm:$0xff]
    %v485 = vld [vmem:[#allocation5 + $0x988] sm:$0xff]
    %v486 = vld [vmem:[#allocation5 + $0x990] sm:$0xff]
    %v487 = vld [vmem:[#allocation5 + $0x998] sm:$0xff]
    %v488 = vld [vmem:[#allocation5 + $0x9a0] sm:$0xff]
    %v489 = vld [vmem:[#allocation5 + $0x9a8] sm:$0xff]
    %v490 = vld [vmem:[#allocation5 + $0x9b0] sm:$0xff]
    %v491 = vld [vmem:[#allocation5 + $0x9b8] sm:$0xff]
    %v492 = vld [vmem:[#allocation5 + $0x9c0] sm:$0xff]
    %v493 = vld [vmem:[#allocation5 + $0x9c8] sm:$0xff]
    %v494 = vld [vmem:[#allocation5 + $0x9d0] sm:$0xff]
    %v495 = vld [vmem:[#allocation5 + $0x9d8] sm:$0xff]
    %v496 = vld [vmem:[#allocation5 + $0x9e0] sm:$0xff]
    %v497 = vld [vmem:[#allocation5 + $0x9e8] sm:$0xff]
    %v498 = vld [vmem:[#allocation5 + $0x9f0] sm:$0xff]
    %v499 = vld [vmem:[#allocation5 + $0x9f8] sm:$0xff]
    %v500 = vld [vmem:[#allocation5 + $0xa00] sm:$0xff]
    %v501 = vld [vmem:[#allocation5 + $0xa08] sm:$0xff]
    %v502 = vld [vmem:[#allocation5 + $0xa10] sm:$0xff]
    %v503 = vld [vmem:[#allocation5 + $0xa18] sm:$0xff]
    %v504 = vld [vmem:[#allocation5 + $0xa20] sm:$0xff]
    %v505 = vld [vmem:[#allocation5 + $0xa28] sm:$0xff]
    %v506 = vld [vmem:[#allocation5 + $0xa30] sm:$0xff]
    %v507 = vld [vmem:[#allocation5 + $0xa38] sm:$0xff]
    %v508 = vld [vmem:[#allocation5 + $0xa40] sm:$0xff]
    %v509 = vld [vmem:[#allocation5 + $0xa48] sm:$0xff]
    %v510 = vld [vmem:[#allocation5 + $0xa50] sm:$0xff]
    %v511 = vld [vmem:[#allocation5 + $0xa58] sm:$0xff]
    %v512 = vld [vmem:[#allocation5 + $0xa60] sm:$0xff]
    %v513 = vld [vmem:[#allocation5 + $0xa68] sm:$0xff]
    %v514 = vld [vmem:[#allocation5 + $0xa70] sm:$0xff]
    %v515 = vld [vmem:[#allocation5 + $0xa78] sm:$0xff]
    %v516 = vld [vmem:[#allocation5 + $0xa80] sm:$0xff]
    %v517 = vld [vmem:[#allocation5 + $0xa88] sm:$0xff]
    %v518 = vld [vmem:[#allocation5 + $0xa90] sm:$0xff]
    %v519 = vld [vmem:[#allocation5 + $0xa98] sm:$0xff]
    %v520 = vld [vmem:[#allocation5 + $0xaa0] sm:$0xff]
    %v521 = vld [vmem:[#allocation5 + $0xaa8] sm:$0xff]
    %v522 = vld [vmem:[#allocation5 + $0xab0] sm:$0xff]
    %v523 = vld [vmem:[#allocation5 + $0xab8] sm:$0xff]
    %v524 = vld [vmem:[#allocation5 + $0xac0] sm:$0xff]
    %v525 = vld [vmem:[#allocation5 + $0xac8] sm:$0xff]
    %v526 = vld [vmem:[#allocation5 + $0xad0] sm:$0xff]
    %v527 = vld [vmem:[#allocation5 + $0xad8] sm:$0xff]
    %v528 = vld [vmem:[#allocation5 + $0xae0] sm:$0xff]
    %v529 = vld [vmem:[#allocation5 + $0xae8] sm:$0xff]
    %v530 = vld [vmem:[#allocation5 + $0xaf0] sm:$0xff]
    %v531 = vld [vmem:[#allocation5 + $0xaf8] sm:$0xff]
    %v532 = vld [vmem:[#allocation5 + $0xb00] sm:$0xff]
    %v533 = vld [vmem:[#allocation5 + $0xb08] sm:$0xff]
    %v534 = vld [vmem:[#allocation5 + $0xb10] sm:$0xff]
    %v535 = vld [vmem:[#allocation5 + $0xb18] sm:$0xff]
    %v536 = vld [vmem:[#allocation5 + $0xb20] sm:$0xff]
    %v537 = vld [vmem:[#allocation5 + $0xb28] sm:$0xff]
    %v538 = vld [vmem:[#allocation5 + $0xb30] sm:$0xff]
    %v539 = vld [vmem:[#allocation5 + $0xb38] sm:$0xff]
    %v540 = vld [vmem:[#allocation5 + $0xb40] sm:$0xff]
    %v541 = vld [vmem:[#allocation5 + $0xb48] sm:$0xff]
    %v542 = vld [vmem:[#allocation5 + $0xb50] sm:$0xff]
    %v543 = vld [vmem:[#allocation5 + $0xb58] sm:$0xff]
    %v544 = vld [vmem:[#allocation5 + $0xb60] sm:$0xff]
    %v545 = vld [vmem:[#allocation5 + $0xb68] sm:$0xff]
    %v546 = vld [vmem:[#allocation5 + $0xb70] sm:$0xff]
    %v547 = vld [vmem:[#allocation5 + $0xb78] sm:$0xff]
    %v548 = vld [vmem:[#allocation5 + $0xb80] sm:$0xff]
    %v549 = vld [vmem:[#allocation5 + $0xb88] sm:$0xff]
    %v550 = vld [vmem:[#allocation5 + $0xb90] sm:$0xff]
    %v551 = vld [vmem:[#allocation5 + $0xb98] sm:$0xff]
    %v552 = vld [vmem:[#allocation5 + $0xba0] sm:$0xff]
    %v553 = vld [vmem:[#allocation5 + $0xba8] sm:$0xff]
    %v554 = vld [vmem:[#allocation5 + $0xbb0] sm:$0xff]
    %v555 = vld [vmem:[#allocation5 + $0xbb8] sm:$0xff]
    %v556 = vld [vmem:[#allocation5 + $0xbc0] sm:$0xff]
    %v557 = vld [vmem:[#allocation5 + $0xbc8] sm:$0xff]
    %v558 = vld [vmem:[#allocation5 + $0xbd0] sm:$0xff]
    %v559 = vld [vmem:[#allocation5 + $0xbd8] sm:$0xff]
    %v560 = vld [vmem:[#allocation5 + $0xbe0] sm:$0xff]
    %v561 = vld [vmem:[#allocation5 + $0xbe8] sm:$0xff]
    %v562 = vld [vmem:[#allocation5 + $0xbf0] sm:$0xff]
    %v563 = vld [vmem:[#allocation5 + $0xbf8] sm:$0xff]
    %v564 = vld [vmem:[#allocation7] sm:$0xff]
    %v565 = vld [vmem:[#allocation7 + $0x8] sm:$0xff]
    %v568 = vlaneseq
    %v569 = vshrl.u32 %v568, 7
    %v570 = vsub.s32 0, %v569
    %v571 = vrot.slane %v564, %v570
    %v572 = vlaneseq
    %v573 = vshrl.u32 %v572, 7
    %v574 = vsub.s32 1, %v573
    %v575 = vrot.slane %v564, %v574
    %v576 = vlaneseq
    %v577 = vshrl.u32 %v576, 7
    %v578 = vsub.s32 2, %v577
    %v579 = vrot.slane %v564, %v578
    %v580 = vlaneseq
    %v581 = vshrl.u32 %v580, 7
    %v582 = vsub.s32 3, %v581
    %v583 = vrot.slane %v564, %v582
    %v584 = vlaneseq
    %v585 = vshrl.u32 %v584, 7
    %v586 = vsub.s32 4, %v585
    %v587 = vrot.slane %v564, %v586
    %v588 = vlaneseq
    %v589 = vshrl.u32 %v588, 7
    %v590 = vsub.s32 5, %v589
    %v591 = vrot.slane %v564, %v590
    %v592 = vlaneseq
    %v593 = vshrl.u32 %v592, 7
    %v594 = vsub.s32 6, %v593
    %v595 = vrot.slane %v564, %v594
    %v596 = vlaneseq
    %v597 = vshrl.u32 %v596, 7
    %v598 = vsub.s32 7, %v597
    %v599 = vrot.slane %v564, %v598
    %v600 = vlaneseq
    %v601 = vshrl.u32 %v600, 7
    %v602 = vsub.s32 0, %v601
    %v603 = vrot.slane %v565, %v602
    %v604 = vlaneseq
    %v605 = vshrl.u32 %v604, 7
    %v606 = vsub.s32 1, %v605
    %v607 = vrot.slane %v565, %v606
    %v608 = vlaneseq
    %v609 = vshrl.u32 %v608, 7
    %v610 = vsub.s32 2, %v609
    %v611 = vrot.slane %v565, %v610
    %v612 = vlaneseq
    %v613 = vshrl.u32 %v612, 7
    %v614 = vsub.s32 3, %v613
    %v615 = vrot.slane %v565, %v614
    %v616 = vlaneseq
    %v617 = vshrl.u32 %v616, 7
    %v618 = vsub.s32 4, %v617
    %v619 = vrot.slane %v565, %v618
    %v620 = vlaneseq
    %v621 = vshrl.u32 %v620, 7
    %v622 = vsub.s32 5, %v621
    %v623 = vrot.slane %v565, %v622
    %v624 = vlaneseq
    %v625 = vshrl.u32 %v624, 7
    %v626 = vsub.s32 6, %v625
    %v627 = vrot.slane %v565, %v626
    %v628 = vlaneseq
    %v629 = vshrl.u32 %v628, 7
    %v630 = vsub.s32 7, %v629
    %v631 = vrot.slane %v565, %v630
    %v652 = vunpack.c.l.b16 %v176
    %v653 = vunpack.c.h.b16 %v176
    %v654 = vunpack.c.l.b16 %v177
    %v655 = vunpack.c.l.b16 %v178
    %v656 = vunpack.c.h.b16 %v178
    %v657 = vunpack.c.l.b16 %v179
    %v658 = vpack.c.b16 %v655, %v652
    %v659 = vpack.c.b16 %v656, %v653
    %v660 = vpack.c.b16 %v657, %v654
    %v1048 = vunpack.c.l.b16 %v180
    %v1049 = vunpack.c.h.b16 %v180
    %v1050 = vunpack.c.l.b16 %v181
    %v1051 = vunpack.c.h.b16 %v181
    %v1052 = vunpack.c.l.b16 %v182
    %v1053 = vunpack.c.h.b16 %v182
    %v1054 = vunpack.c.l.b16 %v183
    %v1055 = vunpack.c.h.b16 %v183
    %v1056 = vunpack.c.l.b16 %v184
    %v1057 = vunpack.c.h.b16 %v184
    %v1058 = vunpack.c.l.b16 %v185
    %v1059 = vunpack.c.h.b16 %v185
    %v1060 = vunpack.c.l.b16 %v186
    %v1061 = vunpack.c.h.b16 %v186
    %v1062 = vunpack.c.l.b16 %v187
    %v1063 = vunpack.c.h.b16 %v187
    %v1064 = vunpack.c.l.b16 %v188
    %v1065 = vunpack.c.h.b16 %v188
    %v1066 = vunpack.c.l.b16 %v189
    %v1067 = vunpack.c.h.b16 %v189
    %v1068 = vunpack.c.l.b16 %v190
    %v1069 = vunpack.c.h.b16 %v190
    %v1070 = vunpack.c.l.b16 %v191
    %v1071 = vunpack.c.h.b16 %v191
    %v1072 = vunpack.c.l.b16 %v192
    %v1073 = vunpack.c.h.b16 %v192
    %v1074 = vunpack.c.l.b16 %v193
    %v1075 = vunpack.c.h.b16 %v193
    %v1076 = vunpack.c.l.b16 %v194
    %v1077 = vunpack.c.h.b16 %v194
    %v1078 = vunpack.c.l.b16 %v195
    %v1079 = vunpack.c.h.b16 %v195
    %v1080 = vunpack.c.l.b16 %v196
    %v1081 = vunpack.c.h.b16 %v196
    %v1082 = vunpack.c.l.b16 %v197
    %v1083 = vunpack.c.h.b16 %v197
    %v1084 = vunpack.c.l.b16 %v198
    %v1085 = vunpack.c.h.b16 %v198
    %v1086 = vunpack.c.l.b16 %v199
    %v1087 = vunpack.c.h.b16 %v199
    %v1088 = vunpack.c.l.b16 %v200
    %v1089 = vunpack.c.h.b16 %v200
    %v1090 = vunpack.c.l.b16 %v201
    %v1091 = vunpack.c.h.b16 %v201
    %v1092 = vunpack.c.l.b16 %v202
    %v1093 = vunpack.c.h.b16 %v202
    %v1094 = vunpack.c.l.b16 %v203
    %v1095 = vunpack.c.h.b16 %v203
    %v1096 = vunpack.c.l.b16 %v204
    %v1097 = vunpack.c.h.b16 %v204
    %v1098 = vunpack.c.l.b16 %v205
    %v1099 = vunpack.c.h.b16 %v205
    %v1100 = vunpack.c.l.b16 %v206
    %v1101 = vunpack.c.h.b16 %v206
    %v1102 = vunpack.c.l.b16 %v207
    %v1103 = vunpack.c.h.b16 %v207
    %v1104 = vunpack.c.l.b16 %v208
    %v1105 = vunpack.c.h.b16 %v208
    %v1106 = vunpack.c.l.b16 %v209
    %v1107 = vunpack.c.h.b16 %v209
    %v1108 = vunpack.c.l.b16 %v210
    %v1109 = vunpack.c.h.b16 %v210
    %v1110 = vunpack.c.l.b16 %v211
    %v1111 = vunpack.c.h.b16 %v211
    %v1112 = vunpack.c.l.b16 %v212
    %v1113 = vunpack.c.h.b16 %v212
    %v1114 = vunpack.c.l.b16 %v213
    %v1115 = vunpack.c.h.b16 %v213
    %v1116 = vunpack.c.l.b16 %v214
    %v1117 = vunpack.c.h.b16 %v214
    %v1118 = vunpack.c.l.b16 %v215
    %v1119 = vunpack.c.h.b16 %v215
    %v1120 = vunpack.c.l.b16 %v216
    %v1121 = vunpack.c.h.b16 %v216
    %v1122 = vunpack.c.l.b16 %v217
    %v1123 = vunpack.c.h.b16 %v217
    %v1124 = vunpack.c.l.b16 %v218
    %v1125 = vunpack.c.h.b16 %v218
    %v1126 = vunpack.c.l.b16 %v219
    %v1127 = vunpack.c.h.b16 %v219
    %v1128 = vunpack.c.l.b16 %v220
    %v1129 = vunpack.c.h.b16 %v220
    %v1130 = vunpack.c.l.b16 %v221
    %v1131 = vunpack.c.h.b16 %v221
    %v1132 = vunpack.c.l.b16 %v222
    %v1133 = vunpack.c.h.b16 %v222
    %v1134 = vunpack.c.l.b16 %v223
    %v1135 = vunpack.c.h.b16 %v223
    %v1136 = vunpack.c.l.b16 %v224
    %v1137 = vunpack.c.h.b16 %v224
    %v1138 = vunpack.c.l.b16 %v225
    %v1139 = vunpack.c.h.b16 %v225
    %v1140 = vunpack.c.l.b16 %v226
    %v1141 = vunpack.c.h.b16 %v226
    %v1142 = vunpack.c.l.b16 %v227
    %v1143 = vunpack.c.h.b16 %v227
    %v1144 = vunpack.c.l.b16 %v228
    %v1145 = vunpack.c.h.b16 %v228
    %v1146 = vunpack.c.l.b16 %v229
    %v1147 = vunpack.c.h.b16 %v229
    %v1148 = vunpack.c.l.b16 %v230
    %v1149 = vunpack.c.h.b16 %v230
    %v1150 = vunpack.c.l.b16 %v231
    %v1151 = vunpack.c.h.b16 %v231
    %v1152 = vunpack.c.l.b16 %v232
    %v1153 = vunpack.c.h.b16 %v232
    %v1154 = vunpack.c.l.b16 %v233
    %v1155 = vunpack.c.h.b16 %v233
    %v1156 = vunpack.c.l.b16 %v234
    %v1157 = vunpack.c.h.b16 %v234
    %v1158 = vunpack.c.l.b16 %v235
    %v1159 = vunpack.c.h.b16 %v235
    %v1160 = vunpack.c.l.b16 %v236
    %v1161 = vunpack.c.h.b16 %v236
    %v1162 = vunpack.c.l.b16 %v237
    %v1163 = vunpack.c.h.b16 %v237
    %v1164 = vunpack.c.l.b16 %v238
    %v1165 = vunpack.c.h.b16 %v238
    %v1166 = vunpack.c.l.b16 %v239
    %v1167 = vunpack.c.h.b16 %v239
    %v1168 = vunpack.c.l.b16 %v240
    %v1169 = vunpack.c.h.b16 %v240
    %v1170 = vunpack.c.l.b16 %v241
    %v1171 = vunpack.c.h.b16 %v241
    %v1172 = vunpack.c.l.b16 %v242
    %v1173 = vunpack.c.h.b16 %v242
    %v1174 = vunpack.c.l.b16 %v243
    %v1175 = vunpack.c.h.b16 %v243
    %v1176 = vunpack.c.l.b16 %v244
    %v1177 = vunpack.c.h.b16 %v244
    %v1178 = vunpack.c.l.b16 %v245
    %v1179 = vunpack.c.h.b16 %v245
    %v1180 = vunpack.c.l.b16 %v246
    %v1181 = vunpack.c.h.b16 %v246
    %v1182 = vunpack.c.l.b16 %v247
    %v1183 = vunpack.c.h.b16 %v247
    %v1184 = vunpack.c.l.b16 %v248
    %v1185 = vunpack.c.h.b16 %v248
    %v1186 = vunpack.c.l.b16 %v249
    %v1187 = vunpack.c.h.b16 %v249
    %v1188 = vunpack.c.l.b16 %v250
    %v1189 = vunpack.c.h.b16 %v250
    %v1190 = vunpack.c.l.b16 %v251
    %v1191 = vunpack.c.h.b16 %v251
    %v1192 = vunpack.c.l.b16 %v252
    %v1193 = vunpack.c.h.b16 %v252
    %v1194 = vunpack.c.l.b16 %v253
    %v1195 = vunpack.c.h.b16 %v253
    %v1196 = vunpack.c.l.b16 %v254
    %v1197 = vunpack.c.h.b16 %v254
    %v1198 = vunpack.c.l.b16 %v255
    %v1199 = vunpack.c.h.b16 %v255
    %v1200 = vunpack.c.l.b16 %v256
    %v1201 = vunpack.c.h.b16 %v256
    %v1202 = vunpack.c.l.b16 %v257
    %v1203 = vunpack.c.h.b16 %v257
    %v1204 = vunpack.c.l.b16 %v258
    %v1205 = vunpack.c.h.b16 %v258
    %v1206 = vunpack.c.l.b16 %v259
    %v1207 = vunpack.c.h.b16 %v259
    %v1208 = vunpack.c.l.b16 %v260
    %v1209 = vunpack.c.h.b16 %v260
    %v1210 = vunpack.c.l.b16 %v261
    %v1211 = vunpack.c.h.b16 %v261
    %v1212 = vunpack.c.l.b16 %v262
    %v1213 = vunpack.c.h.b16 %v262
    %v1214 = vunpack.c.l.b16 %v263
    %v1215 = vunpack.c.h.b16 %v263
    %v1216 = vunpack.c.l.b16 %v264
    %v1217 = vunpack.c.h.b16 %v264
    %v1218 = vunpack.c.l.b16 %v265
    %v1219 = vunpack.c.h.b16 %v265
    %v1220 = vunpack.c.l.b16 %v266
    %v1221 = vunpack.c.h.b16 %v266
    %v1222 = vunpack.c.l.b16 %v267
    %v1223 = vunpack.c.h.b16 %v267
    %v1224 = vunpack.c.l.b16 %v268
    %v1225 = vunpack.c.h.b16 %v268
    %v1226 = vunpack.c.l.b16 %v269
    %v1227 = vunpack.c.h.b16 %v269
    %v1228 = vunpack.c.l.b16 %v270
    %v1229 = vunpack.c.h.b16 %v270
    %v1230 = vunpack.c.l.b16 %v271
    %v1231 = vunpack.c.h.b16 %v271
    %v1232 = vunpack.c.l.b16 %v272
    %v1233 = vunpack.c.h.b16 %v272
    %v1234 = vunpack.c.l.b16 %v273
    %v1235 = vunpack.c.h.b16 %v273
    %v1236 = vunpack.c.l.b16 %v274
    %v1237 = vunpack.c.h.b16 %v274
    %v1238 = vunpack.c.l.b16 %v275
    %v1239 = vunpack.c.h.b16 %v275
    %v1240 = vunpack.c.l.b16 %v276
    %v1241 = vunpack.c.h.b16 %v276
    %v1242 = vunpack.c.l.b16 %v277
    %v1243 = vunpack.c.h.b16 %v277
    %v1244 = vunpack.c.l.b16 %v278
    %v1245 = vunpack.c.h.b16 %v278
    %v1246 = vunpack.c.l.b16 %v279
    %v1247 = vunpack.c.h.b16 %v279
    %v1248 = vunpack.c.l.b16 %v280
    %v1249 = vunpack.c.h.b16 %v280
    %v1250 = vunpack.c.l.b16 %v281
    %v1251 = vunpack.c.h.b16 %v281
    %v1252 = vunpack.c.l.b16 %v282
    %v1253 = vunpack.c.h.b16 %v282
    %v1254 = vunpack.c.l.b16 %v283
    %v1255 = vunpack.c.h.b16 %v283
    %v1256 = vunpack.c.l.b16 %v284
    %v1257 = vunpack.c.h.b16 %v284
    %v1258 = vunpack.c.l.b16 %v285
    %v1259 = vunpack.c.h.b16 %v285
    %v1260 = vunpack.c.l.b16 %v286
    %v1261 = vunpack.c.h.b16 %v286
    %v1262 = vunpack.c.l.b16 %v287
    %v1263 = vunpack.c.h.b16 %v287
    %v1264 = vunpack.c.l.b16 %v288
    %v1265 = vunpack.c.h.b16 %v288
    %v1266 = vunpack.c.l.b16 %v289
    %v1267 = vunpack.c.h.b16 %v289
    %v1268 = vunpack.c.l.b16 %v290
    %v1269 = vunpack.c.h.b16 %v290
    %v1270 = vunpack.c.l.b16 %v291
    %v1271 = vunpack.c.h.b16 %v291
    %v1272 = vunpack.c.l.b16 %v292
    %v1273 = vunpack.c.h.b16 %v292
    %v1274 = vunpack.c.l.b16 %v293
    %v1275 = vunpack.c.h.b16 %v293
    %v1276 = vunpack.c.l.b16 %v294
    %v1277 = vunpack.c.h.b16 %v294
    %v1278 = vunpack.c.l.b16 %v295
    %v1279 = vunpack.c.h.b16 %v295
    %v1280 = vunpack.c.l.b16 %v296
    %v1281 = vunpack.c.h.b16 %v296
    %v1282 = vunpack.c.l.b16 %v297
    %v1283 = vunpack.c.h.b16 %v297
    %v1284 = vunpack.c.l.b16 %v298
    %v1285 = vunpack.c.h.b16 %v298
    %v1286 = vunpack.c.l.b16 %v299
    %v1287 = vunpack.c.h.b16 %v299
    %v1288 = vunpack.c.l.b16 %v300
    %v1289 = vunpack.c.h.b16 %v300
    %v1290 = vunpack.c.l.b16 %v301
    %v1291 = vunpack.c.h.b16 %v301
    %v1292 = vunpack.c.l.b16 %v302
    %v1293 = vunpack.c.h.b16 %v302
    %v1294 = vunpack.c.l.b16 %v303
    %v1295 = vunpack.c.h.b16 %v303
    %v1296 = vunpack.c.l.b16 %v304
    %v1297 = vunpack.c.h.b16 %v304
    %v1298 = vunpack.c.l.b16 %v305
    %v1299 = vunpack.c.h.b16 %v305
    %v1300 = vunpack.c.l.b16 %v306
    %v1301 = vunpack.c.h.b16 %v306
    %v1302 = vunpack.c.l.b16 %v307
    %v1303 = vunpack.c.h.b16 %v307
    %v1304 = vunpack.c.l.b16 %v308
    %v1305 = vunpack.c.h.b16 %v308
    %v1306 = vunpack.c.l.b16 %v309
    %v1307 = vunpack.c.h.b16 %v309
    %v1308 = vunpack.c.l.b16 %v310
    %v1309 = vunpack.c.h.b16 %v310
    %v1310 = vunpack.c.l.b16 %v311
    %v1311 = vunpack.c.h.b16 %v311
    %v1312 = vunpack.c.l.b16 %v312
    %v1313 = vunpack.c.h.b16 %v312
    %v1314 = vunpack.c.l.b16 %v313
    %v1315 = vunpack.c.h.b16 %v313
    %v1316 = vunpack.c.l.b16 %v314
    %v1317 = vunpack.c.h.b16 %v314
    %v1318 = vunpack.c.l.b16 %v315
    %v1319 = vunpack.c.h.b16 %v315
    %v1320 = vunpack.c.l.b16 %v316
    %v1321 = vunpack.c.h.b16 %v316
    %v1322 = vunpack.c.l.b16 %v317
    %v1323 = vunpack.c.h.b16 %v317
    %v1324 = vunpack.c.l.b16 %v318
    %v1325 = vunpack.c.h.b16 %v318
    %v1326 = vunpack.c.l.b16 %v319
    %v1327 = vunpack.c.h.b16 %v319
    %v1328 = vunpack.c.l.b16 %v320
    %v1329 = vunpack.c.h.b16 %v320
    %v1330 = vunpack.c.l.b16 %v321
    %v1331 = vunpack.c.h.b16 %v321
    %v1332 = vunpack.c.l.b16 %v322
    %v1333 = vunpack.c.h.b16 %v322
    %v1334 = vunpack.c.l.b16 %v323
    %v1335 = vunpack.c.h.b16 %v323
    %v1336 = vunpack.c.l.b16 %v324
    %v1337 = vunpack.c.h.b16 %v324
    %v1338 = vunpack.c.l.b16 %v325
    %v1339 = vunpack.c.h.b16 %v325
    %v1340 = vunpack.c.l.b16 %v326
    %v1341 = vunpack.c.h.b16 %v326
    %v1342 = vunpack.c.l.b16 %v327
    %v1343 = vunpack.c.h.b16 %v327
    %v1344 = vunpack.c.l.b16 %v328
    %v1345 = vunpack.c.h.b16 %v328
    %v1346 = vunpack.c.l.b16 %v329
    %v1347 = vunpack.c.h.b16 %v329
    %v1348 = vunpack.c.l.b16 %v330
    %v1349 = vunpack.c.h.b16 %v330
    %v1350 = vunpack.c.l.b16 %v331
    %v1351 = vunpack.c.h.b16 %v331
    %v1352 = vunpack.c.l.b16 %v332
    %v1353 = vunpack.c.h.b16 %v332
    %v1354 = vunpack.c.l.b16 %v333
    %v1355 = vunpack.c.h.b16 %v333
    %v1356 = vunpack.c.l.b16 %v334
    %v1357 = vunpack.c.h.b16 %v334
    %v1358 = vunpack.c.l.b16 %v335
    %v1359 = vunpack.c.h.b16 %v335
    %v1360 = vunpack.c.l.b16 %v336
    %v1361 = vunpack.c.h.b16 %v336
    %v1362 = vunpack.c.l.b16 %v337
    %v1363 = vunpack.c.h.b16 %v337
    %v1364 = vunpack.c.l.b16 %v338
    %v1365 = vunpack.c.h.b16 %v338
    %v1366 = vunpack.c.l.b16 %v339
    %v1367 = vunpack.c.h.b16 %v339
    %v1368 = vunpack.c.l.b16 %v340
    %v1369 = vunpack.c.h.b16 %v340
    %v1370 = vunpack.c.l.b16 %v341
    %v1371 = vunpack.c.h.b16 %v341
    %v1372 = vunpack.c.l.b16 %v342
    %v1373 = vunpack.c.h.b16 %v342
    %v1374 = vunpack.c.l.b16 %v343
    %v1375 = vunpack.c.h.b16 %v343
    %v1376 = vunpack.c.l.b16 %v344
    %v1377 = vunpack.c.h.b16 %v344
    %v1378 = vunpack.c.l.b16 %v345
    %v1379 = vunpack.c.h.b16 %v345
    %v1380 = vunpack.c.l.b16 %v346
    %v1381 = vunpack.c.h.b16 %v346
    %v1382 = vunpack.c.l.b16 %v347
    %v1383 = vunpack.c.h.b16 %v347
    %v1384 = vunpack.c.l.b16 %v348
    %v1385 = vunpack.c.h.b16 %v348
    %v1386 = vunpack.c.l.b16 %v349
    %v1387 = vunpack.c.h.b16 %v349
    %v1388 = vunpack.c.l.b16 %v350
    %v1389 = vunpack.c.h.b16 %v350
    %v1390 = vunpack.c.l.b16 %v351
    %v1391 = vunpack.c.h.b16 %v351
    %v1392 = vunpack.c.l.b16 %v352
    %v1393 = vunpack.c.h.b16 %v352
    %v1394 = vunpack.c.l.b16 %v353
    %v1395 = vunpack.c.h.b16 %v353
    %v1396 = vunpack.c.l.b16 %v354
    %v1397 = vunpack.c.h.b16 %v354
    %v1398 = vunpack.c.l.b16 %v355
    %v1399 = vunpack.c.h.b16 %v355
    %v1400 = vunpack.c.l.b16 %v356
    %v1401 = vunpack.c.h.b16 %v356
    %v1402 = vunpack.c.l.b16 %v357
    %v1403 = vunpack.c.h.b16 %v357
    %v1404 = vunpack.c.l.b16 %v358
    %v1405 = vunpack.c.h.b16 %v358
    %v1406 = vunpack.c.l.b16 %v359
    %v1407 = vunpack.c.h.b16 %v359
    %v1408 = vunpack.c.l.b16 %v360
    %v1409 = vunpack.c.h.b16 %v360
    %v1410 = vunpack.c.l.b16 %v361
    %v1411 = vunpack.c.h.b16 %v361
    %v1412 = vunpack.c.l.b16 %v362
    %v1413 = vunpack.c.h.b16 %v362
    %v1414 = vunpack.c.l.b16 %v363
    %v1415 = vunpack.c.h.b16 %v363
    %v1416 = vunpack.c.l.b16 %v364
    %v1417 = vunpack.c.h.b16 %v364
    %v1418 = vunpack.c.l.b16 %v365
    %v1419 = vunpack.c.h.b16 %v365
    %v1420 = vunpack.c.l.b16 %v366
    %v1421 = vunpack.c.h.b16 %v366
    %v1422 = vunpack.c.l.b16 %v367
    %v1423 = vunpack.c.h.b16 %v367
    %v1424 = vunpack.c.l.b16 %v368
    %v1425 = vunpack.c.h.b16 %v368
    %v1426 = vunpack.c.l.b16 %v369
    %v1427 = vunpack.c.h.b16 %v369
    %v1428 = vunpack.c.l.b16 %v370
    %v1429 = vunpack.c.h.b16 %v370
    %v1430 = vunpack.c.l.b16 %v371
    %v1431 = vunpack.c.h.b16 %v371
    %v1432 = vunpack.c.l.b16 %v372
    %v1433 = vunpack.c.h.b16 %v372
    %v1434 = vunpack.c.l.b16 %v373
    %v1435 = vunpack.c.h.b16 %v373
    %v1436 = vunpack.c.l.b16 %v374
    %v1437 = vunpack.c.h.b16 %v374
    %v1438 = vunpack.c.l.b16 %v375
    %v1439 = vunpack.c.h.b16 %v375
    %v1440 = vunpack.c.l.b16 %v376
    %v1441 = vunpack.c.h.b16 %v376
    %v1442 = vunpack.c.l.b16 %v377
    %v1443 = vunpack.c.h.b16 %v377
    %v1444 = vunpack.c.l.b16 %v378
    %v1445 = vunpack.c.h.b16 %v378
    %v1446 = vunpack.c.l.b16 %v379
    %v1447 = vunpack.c.h.b16 %v379
    %v1448 = vunpack.c.l.b16 %v380
    %v1449 = vunpack.c.h.b16 %v380
    %v1450 = vunpack.c.l.b16 %v381
    %v1451 = vunpack.c.h.b16 %v381
    %v1452 = vunpack.c.l.b16 %v382
    %v1453 = vunpack.c.h.b16 %v382
    %v1454 = vunpack.c.l.b16 %v383
    %v1455 = vunpack.c.h.b16 %v383
    %v1456 = vunpack.c.l.b16 %v384
    %v1457 = vunpack.c.h.b16 %v384
    %v1458 = vunpack.c.l.b16 %v385
    %v1459 = vunpack.c.h.b16 %v385
    %v1460 = vunpack.c.l.b16 %v386
    %v1461 = vunpack.c.h.b16 %v386
    %v1462 = vunpack.c.l.b16 %v387
    %v1463 = vunpack.c.h.b16 %v387
    %v1464 = vunpack.c.l.b16 %v388
    %v1465 = vunpack.c.h.b16 %v388
    %v1466 = vunpack.c.l.b16 %v389
    %v1467 = vunpack.c.h.b16 %v389
    %v1468 = vunpack.c.l.b16 %v390
    %v1469 = vunpack.c.h.b16 %v390
    %v1470 = vunpack.c.l.b16 %v391
    %v1471 = vunpack.c.h.b16 %v391
    %v1472 = vunpack.c.l.b16 %v392
    %v1473 = vunpack.c.h.b16 %v392
    %v1474 = vunpack.c.l.b16 %v393
    %v1475 = vunpack.c.h.b16 %v393
    %v1476 = vunpack.c.l.b16 %v394
    %v1477 = vunpack.c.h.b16 %v394
    %v1478 = vunpack.c.l.b16 %v395
    %v1479 = vunpack.c.h.b16 %v395
    %v1480 = vunpack.c.l.b16 %v396
    %v1481 = vunpack.c.h.b16 %v396
    %v1482 = vunpack.c.l.b16 %v397
    %v1483 = vunpack.c.h.b16 %v397
    %v1484 = vunpack.c.l.b16 %v398
    %v1485 = vunpack.c.h.b16 %v398
    %v1486 = vunpack.c.l.b16 %v399
    %v1487 = vunpack.c.h.b16 %v399
    %v1488 = vunpack.c.l.b16 %v400
    %v1489 = vunpack.c.h.b16 %v400
    %v1490 = vunpack.c.l.b16 %v401
    %v1491 = vunpack.c.h.b16 %v401
    %v1492 = vunpack.c.l.b16 %v402
    %v1493 = vunpack.c.h.b16 %v402
    %v1494 = vunpack.c.l.b16 %v403
    %v1495 = vunpack.c.h.b16 %v403
    %v1496 = vunpack.c.l.b16 %v404
    %v1497 = vunpack.c.h.b16 %v404
    %v1498 = vunpack.c.l.b16 %v405
    %v1499 = vunpack.c.h.b16 %v405
    %v1500 = vunpack.c.l.b16 %v406
    %v1501 = vunpack.c.h.b16 %v406
    %v1502 = vunpack.c.l.b16 %v407
    %v1503 = vunpack.c.h.b16 %v407
    %v1504 = vunpack.c.l.b16 %v408
    %v1505 = vunpack.c.h.b16 %v408
    %v1506 = vunpack.c.l.b16 %v409
    %v1507 = vunpack.c.h.b16 %v409
    %v1508 = vunpack.c.l.b16 %v410
    %v1509 = vunpack.c.h.b16 %v410
    %v1510 = vunpack.c.l.b16 %v411
    %v1511 = vunpack.c.h.b16 %v411
    %v1512 = vunpack.c.l.b16 %v412
    %v1513 = vunpack.c.h.b16 %v412
    %v1514 = vunpack.c.l.b16 %v413
    %v1515 = vunpack.c.h.b16 %v413
    %v1516 = vunpack.c.l.b16 %v414
    %v1517 = vunpack.c.h.b16 %v414
    %v1518 = vunpack.c.l.b16 %v415
    %v1519 = vunpack.c.h.b16 %v415
    %v1520 = vunpack.c.l.b16 %v416
    %v1521 = vunpack.c.h.b16 %v416
    %v1522 = vunpack.c.l.b16 %v417
    %v1523 = vunpack.c.h.b16 %v417
    %v1524 = vunpack.c.l.b16 %v418
    %v1525 = vunpack.c.h.b16 %v418
    %v1526 = vunpack.c.l.b16 %v419
    %v1527 = vunpack.c.h.b16 %v419
    %v1528 = vunpack.c.l.b16 %v420
    %v1529 = vunpack.c.h.b16 %v420
    %v1530 = vunpack.c.l.b16 %v421
    %v1531 = vunpack.c.h.b16 %v421
    %v1532 = vunpack.c.l.b16 %v422
    %v1533 = vunpack.c.h.b16 %v422
    %v1534 = vunpack.c.l.b16 %v423
    %v1535 = vunpack.c.h.b16 %v423
    %v1536 = vunpack.c.l.b16 %v424
    %v1537 = vunpack.c.h.b16 %v424
    %v1538 = vunpack.c.l.b16 %v425
    %v1539 = vunpack.c.h.b16 %v425
    %v1540 = vunpack.c.l.b16 %v426
    %v1541 = vunpack.c.h.b16 %v426
    %v1542 = vunpack.c.l.b16 %v427
    %v1543 = vunpack.c.h.b16 %v427
    %v1544 = vunpack.c.l.b16 %v428
    %v1545 = vunpack.c.h.b16 %v428
    %v1546 = vunpack.c.l.b16 %v429
    %v1547 = vunpack.c.h.b16 %v429
    %v1548 = vunpack.c.l.b16 %v430
    %v1549 = vunpack.c.h.b16 %v430
    %v1550 = vunpack.c.l.b16 %v431
    %v1551 = vunpack.c.h.b16 %v431
    %v1552 = vunpack.c.l.b16 %v432
    %v1553 = vunpack.c.h.b16 %v432
    %v1554 = vunpack.c.l.b16 %v433
    %v1555 = vunpack.c.h.b16 %v433
    %v1556 = vunpack.c.l.b16 %v434
    %v1557 = vunpack.c.h.b16 %v434
    %v1558 = vunpack.c.l.b16 %v435
    %v1559 = vunpack.c.h.b16 %v435
    %v1560 = vunpack.c.l.b16 %v436
    %v1561 = vunpack.c.h.b16 %v436
    %v1562 = vunpack.c.l.b16 %v437
    %v1563 = vunpack.c.h.b16 %v437
    %v1564 = vunpack.c.l.b16 %v438
    %v1565 = vunpack.c.h.b16 %v438
    %v1566 = vunpack.c.l.b16 %v439
    %v1567 = vunpack.c.h.b16 %v439
    %v1568 = vunpack.c.l.b16 %v440
    %v1569 = vunpack.c.h.b16 %v440
    %v1570 = vunpack.c.l.b16 %v441
    %v1571 = vunpack.c.h.b16 %v441
    %v1572 = vunpack.c.l.b16 %v442
    %v1573 = vunpack.c.h.b16 %v442
    %v1574 = vunpack.c.l.b16 %v443
    %v1575 = vunpack.c.h.b16 %v443
    %v1576 = vunpack.c.l.b16 %v444
    %v1577 = vunpack.c.h.b16 %v444
    %v1578 = vunpack.c.l.b16 %v445
    %v1579 = vunpack.c.h.b16 %v445
    %v1580 = vunpack.c.l.b16 %v446
    %v1581 = vunpack.c.h.b16 %v446
    %v1582 = vunpack.c.l.b16 %v447
    %v1583 = vunpack.c.h.b16 %v447
    %v1584 = vunpack.c.l.b16 %v448
    %v1585 = vunpack.c.h.b16 %v448
    %v1586 = vunpack.c.l.b16 %v449
    %v1587 = vunpack.c.h.b16 %v449
    %v1588 = vunpack.c.l.b16 %v450
    %v1589 = vunpack.c.h.b16 %v450
    %v1590 = vunpack.c.l.b16 %v451
    %v1591 = vunpack.c.h.b16 %v451
    %v1592 = vunpack.c.l.b16 %v452
    %v1593 = vunpack.c.h.b16 %v452
    %v1594 = vunpack.c.l.b16 %v453
    %v1595 = vunpack.c.h.b16 %v453
    %v1596 = vunpack.c.l.b16 %v454
    %v1597 = vunpack.c.h.b16 %v454
    %v1598 = vunpack.c.l.b16 %v455
    %v1599 = vunpack.c.h.b16 %v455
    %v1600 = vunpack.c.l.b16 %v456
    %v1601 = vunpack.c.h.b16 %v456
    %v1602 = vunpack.c.l.b16 %v457
    %v1603 = vunpack.c.h.b16 %v457
    %v1604 = vunpack.c.l.b16 %v458
    %v1605 = vunpack.c.h.b16 %v458
    %v1606 = vunpack.c.l.b16 %v459
    %v1607 = vunpack.c.h.b16 %v459
    %v1608 = vunpack.c.l.b16 %v460
    %v1609 = vunpack.c.h.b16 %v460
    %v1610 = vunpack.c.l.b16 %v461
    %v1611 = vunpack.c.h.b16 %v461
    %v1612 = vunpack.c.l.b16 %v462
    %v1613 = vunpack.c.h.b16 %v462
    %v1614 = vunpack.c.l.b16 %v463
    %v1615 = vunpack.c.h.b16 %v463
    %v1616 = vunpack.c.l.b16 %v464
    %v1617 = vunpack.c.h.b16 %v464
    %v1618 = vunpack.c.l.b16 %v465
    %v1619 = vunpack.c.h.b16 %v465
    %v1620 = vunpack.c.l.b16 %v466
    %v1621 = vunpack.c.h.b16 %v466
    %v1622 = vunpack.c.l.b16 %v467
    %v1623 = vunpack.c.h.b16 %v467
    %v1624 = vunpack.c.l.b16 %v468
    %v1625 = vunpack.c.h.b16 %v468
    %v1626 = vunpack.c.l.b16 %v469
    %v1627 = vunpack.c.h.b16 %v469
    %v1628 = vunpack.c.l.b16 %v470
    %v1629 = vunpack.c.h.b16 %v470
    %v1630 = vunpack.c.l.b16 %v471
    %v1631 = vunpack.c.h.b16 %v471
    %v1632 = vunpack.c.l.b16 %v472
    %v1633 = vunpack.c.h.b16 %v472
    %v1634 = vunpack.c.l.b16 %v473
    %v1635 = vunpack.c.h.b16 %v473
    %v1636 = vunpack.c.l.b16 %v474
    %v1637 = vunpack.c.h.b16 %v474
    %v1638 = vunpack.c.l.b16 %v475
    %v1639 = vunpack.c.h.b16 %v475
    %v1640 = vunpack.c.l.b16 %v476
    %v1641 = vunpack.c.h.b16 %v476
    %v1642 = vunpack.c.l.b16 %v477
    %v1643 = vunpack.c.h.b16 %v477
    %v1644 = vunpack.c.l.b16 %v478
    %v1645 = vunpack.c.h.b16 %v478
    %v1646 = vunpack.c.l.b16 %v479
    %v1647 = vunpack.c.h.b16 %v479
    %v1648 = vunpack.c.l.b16 %v480
    %v1649 = vunpack.c.h.b16 %v480
    %v1650 = vunpack.c.l.b16 %v481
    %v1651 = vunpack.c.h.b16 %v481
    %v1652 = vunpack.c.l.b16 %v482
    %v1653 = vunpack.c.h.b16 %v482
    %v1654 = vunpack.c.l.b16 %v483
    %v1655 = vunpack.c.h.b16 %v483
    %v1656 = vunpack.c.l.b16 %v484
    %v1657 = vunpack.c.h.b16 %v484
    %v1658 = vunpack.c.l.b16 %v485
    %v1659 = vunpack.c.h.b16 %v485
    %v1660 = vunpack.c.l.b16 %v486
    %v1661 = vunpack.c.h.b16 %v486
    %v1662 = vunpack.c.l.b16 %v487
    %v1663 = vunpack.c.h.b16 %v487
    %v1664 = vunpack.c.l.b16 %v488
    %v1665 = vunpack.c.h.b16 %v488
    %v1666 = vunpack.c.l.b16 %v489
    %v1667 = vunpack.c.h.b16 %v489
    %v1668 = vunpack.c.l.b16 %v490
    %v1669 = vunpack.c.h.b16 %v490
    %v1670 = vunpack.c.l.b16 %v491
    %v1671 = vunpack.c.h.b16 %v491
    %v1672 = vunpack.c.l.b16 %v492
    %v1673 = vunpack.c.h.b16 %v492
    %v1674 = vunpack.c.l.b16 %v493
    %v1675 = vunpack.c.h.b16 %v493
    %v1676 = vunpack.c.l.b16 %v494
    %v1677 = vunpack.c.h.b16 %v494
    %v1678 = vunpack.c.l.b16 %v495
    %v1679 = vunpack.c.h.b16 %v495
    %v1680 = vunpack.c.l.b16 %v496
    %v1681 = vunpack.c.h.b16 %v496
    %v1682 = vunpack.c.l.b16 %v497
    %v1683 = vunpack.c.h.b16 %v497
    %v1684 = vunpack.c.l.b16 %v498
    %v1685 = vunpack.c.h.b16 %v498
    %v1686 = vunpack.c.l.b16 %v499
    %v1687 = vunpack.c.h.b16 %v499
    %v1688 = vunpack.c.l.b16 %v500
    %v1689 = vunpack.c.h.b16 %v500
    %v1690 = vunpack.c.l.b16 %v501
    %v1691 = vunpack.c.h.b16 %v501
    %v1692 = vunpack.c.l.b16 %v502
    %v1693 = vunpack.c.h.b16 %v502
    %v1694 = vunpack.c.l.b16 %v503
    %v1695 = vunpack.c.h.b16 %v503
    %v1696 = vunpack.c.l.b16 %v504
    %v1697 = vunpack.c.h.b16 %v504
    %v1698 = vunpack.c.l.b16 %v505
    %v1699 = vunpack.c.h.b16 %v505
    %v1700 = vunpack.c.l.b16 %v506
    %v1701 = vunpack.c.h.b16 %v506
    %v1702 = vunpack.c.l.b16 %v507
    %v1703 = vunpack.c.h.b16 %v507
    %v1704 = vunpack.c.l.b16 %v508
    %v1705 = vunpack.c.h.b16 %v508
    %v1706 = vunpack.c.l.b16 %v509
    %v1707 = vunpack.c.h.b16 %v509
    %v1708 = vunpack.c.l.b16 %v510
    %v1709 = vunpack.c.h.b16 %v510
    %v1710 = vunpack.c.l.b16 %v511
    %v1711 = vunpack.c.h.b16 %v511
    %v1712 = vunpack.c.l.b16 %v512
    %v1713 = vunpack.c.h.b16 %v512
    %v1714 = vunpack.c.l.b16 %v513
    %v1715 = vunpack.c.h.b16 %v513
    %v1716 = vunpack.c.l.b16 %v514
    %v1717 = vunpack.c.h.b16 %v514
    %v1718 = vunpack.c.l.b16 %v515
    %v1719 = vunpack.c.h.b16 %v515
    %v1720 = vunpack.c.l.b16 %v516
    %v1721 = vunpack.c.h.b16 %v516
    %v1722 = vunpack.c.l.b16 %v517
    %v1723 = vunpack.c.h.b16 %v517
    %v1724 = vunpack.c.l.b16 %v518
    %v1725 = vunpack.c.h.b16 %v518
    %v1726 = vunpack.c.l.b16 %v519
    %v1727 = vunpack.c.h.b16 %v519
    %v1728 = vunpack.c.l.b16 %v520
    %v1729 = vunpack.c.h.b16 %v520
    %v1730 = vunpack.c.l.b16 %v521
    %v1731 = vunpack.c.h.b16 %v521
    %v1732 = vunpack.c.l.b16 %v522
    %v1733 = vunpack.c.h.b16 %v522
    %v1734 = vunpack.c.l.b16 %v523
    %v1735 = vunpack.c.h.b16 %v523
    %v1736 = vunpack.c.l.b16 %v524
    %v1737 = vunpack.c.h.b16 %v524
    %v1738 = vunpack.c.l.b16 %v525
    %v1739 = vunpack.c.h.b16 %v525
    %v1740 = vunpack.c.l.b16 %v526
    %v1741 = vunpack.c.h.b16 %v526
    %v1742 = vunpack.c.l.b16 %v527
    %v1743 = vunpack.c.h.b16 %v527
    %v1744 = vunpack.c.l.b16 %v528
    %v1745 = vunpack.c.h.b16 %v528
    %v1746 = vunpack.c.l.b16 %v529
    %v1747 = vunpack.c.h.b16 %v529
    %v1748 = vunpack.c.l.b16 %v530
    %v1749 = vunpack.c.h.b16 %v530
    %v1750 = vunpack.c.l.b16 %v531
    %v1751 = vunpack.c.h.b16 %v531
    %v1752 = vunpack.c.l.b16 %v532
    %v1753 = vunpack.c.h.b16 %v532
    %v1754 = vunpack.c.l.b16 %v533
    %v1755 = vunpack.c.h.b16 %v533
    %v1756 = vunpack.c.l.b16 %v534
    %v1757 = vunpack.c.h.b16 %v534
    %v1758 = vunpack.c.l.b16 %v535
    %v1759 = vunpack.c.h.b16 %v535
    %v1760 = vunpack.c.l.b16 %v536
    %v1761 = vunpack.c.h.b16 %v536
    %v1762 = vunpack.c.l.b16 %v537
    %v1763 = vunpack.c.h.b16 %v537
    %v1764 = vunpack.c.l.b16 %v538
    %v1765 = vunpack.c.h.b16 %v538
    %v1766 = vunpack.c.l.b16 %v539
    %v1767 = vunpack.c.h.b16 %v539
    %v1768 = vunpack.c.l.b16 %v540
    %v1769 = vunpack.c.h.b16 %v540
    %v1770 = vunpack.c.l.b16 %v541
    %v1771 = vunpack.c.h.b16 %v541
    %v1772 = vunpack.c.l.b16 %v542
    %v1773 = vunpack.c.h.b16 %v542
    %v1774 = vunpack.c.l.b16 %v543
    %v1775 = vunpack.c.h.b16 %v543
    %v1776 = vunpack.c.l.b16 %v544
    %v1777 = vunpack.c.h.b16 %v544
    %v1778 = vunpack.c.l.b16 %v545
    %v1779 = vunpack.c.h.b16 %v545
    %v1780 = vunpack.c.l.b16 %v546
    %v1781 = vunpack.c.h.b16 %v546
    %v1782 = vunpack.c.l.b16 %v547
    %v1783 = vunpack.c.h.b16 %v547
    %v1784 = vunpack.c.l.b16 %v548
    %v1785 = vunpack.c.h.b16 %v548
    %v1786 = vunpack.c.l.b16 %v549
    %v1787 = vunpack.c.h.b16 %v549
    %v1788 = vunpack.c.l.b16 %v550
    %v1789 = vunpack.c.h.b16 %v550
    %v1790 = vunpack.c.l.b16 %v551
    %v1791 = vunpack.c.h.b16 %v551
    %v1792 = vunpack.c.l.b16 %v552
    %v1793 = vunpack.c.h.b16 %v552
    %v1794 = vunpack.c.l.b16 %v553
    %v1795 = vunpack.c.h.b16 %v553
    %v1796 = vunpack.c.l.b16 %v554
    %v1797 = vunpack.c.h.b16 %v554
    %v1798 = vunpack.c.l.b16 %v555
    %v1799 = vunpack.c.h.b16 %v555
    %v1800 = vunpack.c.l.b16 %v556
    %v1801 = vunpack.c.h.b16 %v556
    %v1802 = vunpack.c.l.b16 %v557
    %v1803 = vunpack.c.h.b16 %v557
    %v1804 = vunpack.c.l.b16 %v558
    %v1805 = vunpack.c.h.b16 %v558
    %v1806 = vunpack.c.l.b16 %v559
    %v1807 = vunpack.c.h.b16 %v559
    %v1808 = vunpack.c.l.b16 %v560
    %v1809 = vunpack.c.h.b16 %v560
    %v1810 = vunpack.c.l.b16 %v561
    %v1811 = vunpack.c.h.b16 %v561
    %v1812 = vunpack.c.l.b16 %v562
    %v1813 = vunpack.c.h.b16 %v562
    %v1814 = vunpack.c.l.b16 %v563
    %v1815 = vunpack.c.h.b16 %v563
    %v1816 = vpack.c.b16 %v1064, %v1048
    %v1817 = vpack.c.b16 %v1065, %v1049
    %v1818 = vpack.c.b16 %v1066, %v1050
    %v1819 = vpack.c.b16 %v1067, %v1051
    %v1820 = vpack.c.b16 %v1068, %v1052
    %v1821 = vpack.c.b16 %v1069, %v1053
    %v1822 = vpack.c.b16 %v1070, %v1054
    %v1823 = vpack.c.b16 %v1071, %v1055
    %v1824 = vpack.c.b16 %v1072, %v1056
    %v1825 = vpack.c.b16 %v1073, %v1057
    %v1826 = vpack.c.b16 %v1074, %v1058
    %v1827 = vpack.c.b16 %v1075, %v1059
    %v1828 = vpack.c.b16 %v1076, %v1060
    %v1829 = vpack.c.b16 %v1077, %v1061
    %v1830 = vpack.c.b16 %v1078, %v1062
    %v1831 = vpack.c.b16 %v1079, %v1063
    %v1832 = vpack.c.b16 %v1096, %v1080
    %v1833 = vpack.c.b16 %v1097, %v1081
    %v1834 = vpack.c.b16 %v1098, %v1082
    %v1835 = vpack.c.b16 %v1099, %v1083
    %v1836 = vpack.c.b16 %v1100, %v1084
    %v1837 = vpack.c.b16 %v1101, %v1085
    %v1838 = vpack.c.b16 %v1102, %v1086
    %v1839 = vpack.c.b16 %v1103, %v1087
    %v1840 = vpack.c.b16 %v1104, %v1088
    %v1841 = vpack.c.b16 %v1105, %v1089
    %v1842 = vpack.c.b16 %v1106, %v1090
    %v1843 = vpack.c.b16 %v1107, %v1091
    %v1844 = vpack.c.b16 %v1108, %v1092
    %v1845 = vpack.c.b16 %v1109, %v1093
    %v1846 = vpack.c.b16 %v1110, %v1094
    %v1847 = vpack.c.b16 %v1111, %v1095
    %v1848 = vpack.c.b16 %v1128, %v1112
    %v1849 = vpack.c.b16 %v1129, %v1113
    %v1850 = vpack.c.b16 %v1130, %v1114
    %v1851 = vpack.c.b16 %v1131, %v1115
    %v1852 = vpack.c.b16 %v1132, %v1116
    %v1853 = vpack.c.b16 %v1133, %v1117
    %v1854 = vpack.c.b16 %v1134, %v1118
    %v1855 = vpack.c.b16 %v1135, %v1119
    %v1856 = vpack.c.b16 %v1136, %v1120
    %v1857 = vpack.c.b16 %v1137, %v1121
    %v1858 = vpack.c.b16 %v1138, %v1122
    %v1859 = vpack.c.b16 %v1139, %v1123
    %v1860 = vpack.c.b16 %v1140, %v1124
    %v1861 = vpack.c.b16 %v1141, %v1125
    %v1862 = vpack.c.b16 %v1142, %v1126
    %v1863 = vpack.c.b16 %v1143, %v1127
    %v1864 = vpack.c.b16 %v1160, %v1144
    %v1865 = vpack.c.b16 %v1161, %v1145
    %v1866 = vpack.c.b16 %v1162, %v1146
    %v1867 = vpack.c.b16 %v1163, %v1147
    %v1868 = vpack.c.b16 %v1164, %v1148
    %v1869 = vpack.c.b16 %v1165, %v1149
    %v1870 = vpack.c.b16 %v1166, %v1150
    %v1871 = vpack.c.b16 %v1167, %v1151
    %v1872 = vpack.c.b16 %v1168, %v1152
    %v1873 = vpack.c.b16 %v1169, %v1153
    %v1874 = vpack.c.b16 %v1170, %v1154
    %v1875 = vpack.c.b16 %v1171, %v1155
    %v1876 = vpack.c.b16 %v1172, %v1156
    %v1877 = vpack.c.b16 %v1173, %v1157
    %v1878 = vpack.c.b16 %v1174, %v1158
    %v1879 = vpack.c.b16 %v1175, %v1159
    %v1880 = vpack.c.b16 %v1192, %v1176
    %v1881 = vpack.c.b16 %v1193, %v1177
    %v1882 = vpack.c.b16 %v1194, %v1178
    %v1883 = vpack.c.b16 %v1195, %v1179
    %v1884 = vpack.c.b16 %v1196, %v1180
    %v1885 = vpack.c.b16 %v1197, %v1181
    %v1886 = vpack.c.b16 %v1198, %v1182
    %v1887 = vpack.c.b16 %v1199, %v1183
    %v1888 = vpack.c.b16 %v1200, %v1184
    %v1889 = vpack.c.b16 %v1201, %v1185
    %v1890 = vpack.c.b16 %v1202, %v1186
    %v1891 = vpack.c.b16 %v1203, %v1187
    %v1892 = vpack.c.b16 %v1204, %v1188
    %v1893 = vpack.c.b16 %v1205, %v1189
    %v1894 = vpack.c.b16 %v1206, %v1190
    %v1895 = vpack.c.b16 %v1207, %v1191
    %v1896 = vpack.c.b16 %v1224, %v1208
    %v1897 = vpack.c.b16 %v1225, %v1209
    %v1898 = vpack.c.b16 %v1226, %v1210
    %v1899 = vpack.c.b16 %v1227, %v1211
    %v1900 = vpack.c.b16 %v1228, %v1212
    %v1901 = vpack.c.b16 %v1229, %v1213
    %v1902 = vpack.c.b16 %v1230, %v1214
    %v1903 = vpack.c.b16 %v1231, %v1215
    %v1904 = vpack.c.b16 %v1232, %v1216
    %v1905 = vpack.c.b16 %v1233, %v1217
    %v1906 = vpack.c.b16 %v1234, %v1218
    %v1907 = vpack.c.b16 %v1235, %v1219
    %v1908 = vpack.c.b16 %v1236, %v1220
    %v1909 = vpack.c.b16 %v1237, %v1221
    %v1910 = vpack.c.b16 %v1238, %v1222
    %v1911 = vpack.c.b16 %v1239, %v1223
    %v1912 = vpack.c.b16 %v1256, %v1240
    %v1913 = vpack.c.b16 %v1257, %v1241
    %v1914 = vpack.c.b16 %v1258, %v1242
    %v1915 = vpack.c.b16 %v1259, %v1243
    %v1916 = vpack.c.b16 %v1260, %v1244
    %v1917 = vpack.c.b16 %v1261, %v1245
    %v1918 = vpack.c.b16 %v1262, %v1246
    %v1919 = vpack.c.b16 %v1263, %v1247
    %v1920 = vpack.c.b16 %v1264, %v1248
    %v1921 = vpack.c.b16 %v1265, %v1249
    %v1922 = vpack.c.b16 %v1266, %v1250
    %v1923 = vpack.c.b16 %v1267, %v1251
    %v1924 = vpack.c.b16 %v1268, %v1252
    %v1925 = vpack.c.b16 %v1269, %v1253
    %v1926 = vpack.c.b16 %v1270, %v1254
    %v1927 = vpack.c.b16 %v1271, %v1255
    %v1928 = vpack.c.b16 %v1288, %v1272
    %v1929 = vpack.c.b16 %v1289, %v1273
    %v1930 = vpack.c.b16 %v1290, %v1274
    %v1931 = vpack.c.b16 %v1291, %v1275
    %v1932 = vpack.c.b16 %v1292, %v1276
    %v1933 = vpack.c.b16 %v1293, %v1277
    %v1934 = vpack.c.b16 %v1294, %v1278
    %v1935 = vpack.c.b16 %v1295, %v1279
    %v1936 = vpack.c.b16 %v1296, %v1280
    %v1937 = vpack.c.b16 %v1297, %v1281
    %v1938 = vpack.c.b16 %v1298, %v1282
    %v1939 = vpack.c.b16 %v1299, %v1283
    %v1940 = vpack.c.b16 %v1300, %v1284
    %v1941 = vpack.c.b16 %v1301, %v1285
    %v1942 = vpack.c.b16 %v1302, %v1286
    %v1943 = vpack.c.b16 %v1303, %v1287
    %v1944 = vpack.c.b16 %v1320, %v1304
    %v1945 = vpack.c.b16 %v1321, %v1305
    %v1946 = vpack.c.b16 %v1322, %v1306
    %v1947 = vpack.c.b16 %v1323, %v1307
    %v1948 = vpack.c.b16 %v1324, %v1308
    %v1949 = vpack.c.b16 %v1325, %v1309
    %v1950 = vpack.c.b16 %v1326, %v1310
    %v1951 = vpack.c.b16 %v1327, %v1311
    %v1952 = vpack.c.b16 %v1328, %v1312
    %v1953 = vpack.c.b16 %v1329, %v1313
    %v1954 = vpack.c.b16 %v1330, %v1314
    %v1955 = vpack.c.b16 %v1331, %v1315
    %v1956 = vpack.c.b16 %v1332, %v1316
    %v1957 = vpack.c.b16 %v1333, %v1317
    %v1958 = vpack.c.b16 %v1334, %v1318
    %v1959 = vpack.c.b16 %v1335, %v1319
    %v1960 = vpack.c.b16 %v1352, %v1336
    %v1961 = vpack.c.b16 %v1353, %v1337
    %v1962 = vpack.c.b16 %v1354, %v1338
    %v1963 = vpack.c.b16 %v1355, %v1339
    %v1964 = vpack.c.b16 %v1356, %v1340
    %v1965 = vpack.c.b16 %v1357, %v1341
    %v1966 = vpack.c.b16 %v1358, %v1342
    %v1967 = vpack.c.b16 %v1359, %v1343
    %v1968 = vpack.c.b16 %v1360, %v1344
    %v1969 = vpack.c.b16 %v1361, %v1345
    %v1970 = vpack.c.b16 %v1362, %v1346
    %v1971 = vpack.c.b16 %v1363, %v1347
    %v1972 = vpack.c.b16 %v1364, %v1348
    %v1973 = vpack.c.b16 %v1365, %v1349
    %v1974 = vpack.c.b16 %v1366, %v1350
    %v1975 = vpack.c.b16 %v1367, %v1351
    %v1976 = vpack.c.b16 %v1384, %v1368
    %v1977 = vpack.c.b16 %v1385, %v1369
    %v1978 = vpack.c.b16 %v1386, %v1370
    %v1979 = vpack.c.b16 %v1387, %v1371
    %v1980 = vpack.c.b16 %v1388, %v1372
    %v1981 = vpack.c.b16 %v1389, %v1373
    %v1982 = vpack.c.b16 %v1390, %v1374
    %v1983 = vpack.c.b16 %v1391, %v1375
    %v1984 = vpack.c.b16 %v1392, %v1376
    %v1985 = vpack.c.b16 %v1393, %v1377
    %v1986 = vpack.c.b16 %v1394, %v1378
    %v1987 = vpack.c.b16 %v1395, %v1379
    %v1988 = vpack.c.b16 %v1396, %v1380
    %v1989 = vpack.c.b16 %v1397, %v1381
    %v1990 = vpack.c.b16 %v1398, %v1382
    %v1991 = vpack.c.b16 %v1399, %v1383
    %v1992 = vpack.c.b16 %v1416, %v1400
    %v1993 = vpack.c.b16 %v1417, %v1401
    %v1994 = vpack.c.b16 %v1418, %v1402
    %v1995 = vpack.c.b16 %v1419, %v1403
    %v1996 = vpack.c.b16 %v1420, %v1404
    %v1997 = vpack.c.b16 %v1421, %v1405
    %v1998 = vpack.c.b16 %v1422, %v1406
    %v1999 = vpack.c.b16 %v1423, %v1407
    %v2000 = vpack.c.b16 %v1424, %v1408
    %v2001 = vpack.c.b16 %v1425, %v1409
    %v2002 = vpack.c.b16 %v1426, %v1410
    %v2003 = vpack.c.b16 %v1427, %v1411
    %v2004 = vpack.c.b16 %v1428, %v1412
    %v2005 = vpack.c.b16 %v1429, %v1413
    %v2006 = vpack.c.b16 %v1430, %v1414
    %v2007 = vpack.c.b16 %v1431, %v1415
    %v2008 = vpack.c.b16 %v1448, %v1432
    %v2009 = vpack.c.b16 %v1449, %v1433
    %v2010 = vpack.c.b16 %v1450, %v1434
    %v2011 = vpack.c.b16 %v1451, %v1435
    %v2012 = vpack.c.b16 %v1452, %v1436
    %v2013 = vpack.c.b16 %v1453, %v1437
    %v2014 = vpack.c.b16 %v1454, %v1438
    %v2015 = vpack.c.b16 %v1455, %v1439
    %v2016 = vpack.c.b16 %v1456, %v1440
    %v2017 = vpack.c.b16 %v1457, %v1441
    %v2018 = vpack.c.b16 %v1458, %v1442
    %v2019 = vpack.c.b16 %v1459, %v1443
    %v2020 = vpack.c.b16 %v1460, %v1444
    %v2021 = vpack.c.b16 %v1461, %v1445
    %v2022 = vpack.c.b16 %v1462, %v1446
    %v2023 = vpack.c.b16 %v1463, %v1447
    %v2024 = vpack.c.b16 %v1480, %v1464
    %v2025 = vpack.c.b16 %v1481, %v1465
    %v2026 = vpack.c.b16 %v1482, %v1466
    %v2027 = vpack.c.b16 %v1483, %v1467
    %v2028 = vpack.c.b16 %v1484, %v1468
    %v2029 = vpack.c.b16 %v1485, %v1469
    %v2030 = vpack.c.b16 %v1486, %v1470
    %v2031 = vpack.c.b16 %v1487, %v1471
    %v2032 = vpack.c.b16 %v1488, %v1472
    %v2033 = vpack.c.b16 %v1489, %v1473
    %v2034 = vpack.c.b16 %v1490, %v1474
    %v2035 = vpack.c.b16 %v1491, %v1475
    %v2036 = vpack.c.b16 %v1492, %v1476
    %v2037 = vpack.c.b16 %v1493, %v1477
    %v2038 = vpack.c.b16 %v1494, %v1478
    %v2039 = vpack.c.b16 %v1495, %v1479
    %v2040 = vpack.c.b16 %v1512, %v1496
    %v2041 = vpack.c.b16 %v1513, %v1497
    %v2042 = vpack.c.b16 %v1514, %v1498
    %v2043 = vpack.c.b16 %v1515, %v1499
    %v2044 = vpack.c.b16 %v1516, %v1500
    %v2045 = vpack.c.b16 %v1517, %v1501
    %v2046 = vpack.c.b16 %v1518, %v1502
    %v2047 = vpack.c.b16 %v1519, %v1503
    %v2048 = vpack.c.b16 %v1520, %v1504
    %v2049 = vpack.c.b16 %v1521, %v1505
    %v2050 = vpack.c.b16 %v1522, %v1506
    %v2051 = vpack.c.b16 %v1523, %v1507
    %v2052 = vpack.c.b16 %v1524, %v1508
    %v2053 = vpack.c.b16 %v1525, %v1509
    %v2054 = vpack.c.b16 %v1526, %v1510
    %v2055 = vpack.c.b16 %v1527, %v1511
    %v2056 = vpack.c.b16 %v1544, %v1528
    %v2057 = vpack.c.b16 %v1545, %v1529
    %v2058 = vpack.c.b16 %v1546, %v1530
    %v2059 = vpack.c.b16 %v1547, %v1531
    %v2060 = vpack.c.b16 %v1548, %v1532
    %v2061 = vpack.c.b16 %v1549, %v1533
    %v2062 = vpack.c.b16 %v1550, %v1534
    %v2063 = vpack.c.b16 %v1551, %v1535
    %v2064 = vpack.c.b16 %v1552, %v1536
    %v2065 = vpack.c.b16 %v1553, %v1537
    %v2066 = vpack.c.b16 %v1554, %v1538
    %v2067 = vpack.c.b16 %v1555, %v1539
    %v2068 = vpack.c.b16 %v1556, %v1540
    %v2069 = vpack.c.b16 %v1557, %v1541
    %v2070 = vpack.c.b16 %v1558, %v1542
    %v2071 = vpack.c.b16 %v1559, %v1543
    %v2072 = vpack.c.b16 %v1576, %v1560
    %v2073 = vpack.c.b16 %v1577, %v1561
    %v2074 = vpack.c.b16 %v1578, %v1562
    %v2075 = vpack.c.b16 %v1579, %v1563
    %v2076 = vpack.c.b16 %v1580, %v1564
    %v2077 = vpack.c.b16 %v1581, %v1565
    %v2078 = vpack.c.b16 %v1582, %v1566
    %v2079 = vpack.c.b16 %v1583, %v1567
    %v2080 = vpack.c.b16 %v1584, %v1568
    %v2081 = vpack.c.b16 %v1585, %v1569
    %v2082 = vpack.c.b16 %v1586, %v1570
    %v2083 = vpack.c.b16 %v1587, %v1571
    %v2084 = vpack.c.b16 %v1588, %v1572
    %v2085 = vpack.c.b16 %v1589, %v1573
    %v2086 = vpack.c.b16 %v1590, %v1574
    %v2087 = vpack.c.b16 %v1591, %v1575
    %v2088 = vpack.c.b16 %v1608, %v1592
    %v2089 = vpack.c.b16 %v1609, %v1593
    %v2090 = vpack.c.b16 %v1610, %v1594
    %v2091 = vpack.c.b16 %v1611, %v1595
    %v2092 = vpack.c.b16 %v1612, %v1596
    %v2093 = vpack.c.b16 %v1613, %v1597
    %v2094 = vpack.c.b16 %v1614, %v1598
    %v2095 = vpack.c.b16 %v1615, %v1599
    %v2096 = vpack.c.b16 %v1616, %v1600
    %v2097 = vpack.c.b16 %v1617, %v1601
    %v2098 = vpack.c.b16 %v1618, %v1602
    %v2099 = vpack.c.b16 %v1619, %v1603
    %v2100 = vpack.c.b16 %v1620, %v1604
    %v2101 = vpack.c.b16 %v1621, %v1605
    %v2102 = vpack.c.b16 %v1622, %v1606
    %v2103 = vpack.c.b16 %v1623, %v1607
    %v2104 = vpack.c.b16 %v1640, %v1624
    %v2105 = vpack.c.b16 %v1641, %v1625
    %v2106 = vpack.c.b16 %v1642, %v1626
    %v2107 = vpack.c.b16 %v1643, %v1627
    %v2108 = vpack.c.b16 %v1644, %v1628
    %v2109 = vpack.c.b16 %v1645, %v1629
    %v2110 = vpack.c.b16 %v1646, %v1630
    %v2111 = vpack.c.b16 %v1647, %v1631
    %v2112 = vpack.c.b16 %v1648, %v1632
    %v2113 = vpack.c.b16 %v1649, %v1633
    %v2114 = vpack.c.b16 %v1650, %v1634
    %v2115 = vpack.c.b16 %v1651, %v1635
    %v2116 = vpack.c.b16 %v1652, %v1636
    %v2117 = vpack.c.b16 %v1653, %v1637
    %v2118 = vpack.c.b16 %v1654, %v1638
    %v2119 = vpack.c.b16 %v1655, %v1639
    %v2120 = vpack.c.b16 %v1672, %v1656
    %v2121 = vpack.c.b16 %v1673, %v1657
    %v2122 = vpack.c.b16 %v1674, %v1658
    %v2123 = vpack.c.b16 %v1675, %v1659
    %v2124 = vpack.c.b16 %v1676, %v1660
    %v2125 = vpack.c.b16 %v1677, %v1661
    %v2126 = vpack.c.b16 %v1678, %v1662
    %v2127 = vpack.c.b16 %v1679, %v1663
    %v2128 = vpack.c.b16 %v1680, %v1664
    %v2129 = vpack.c.b16 %v1681, %v1665
    %v2130 = vpack.c.b16 %v1682, %v1666
    %v2131 = vpack.c.b16 %v1683, %v1667
    %v2132 = vpack.c.b16 %v1684, %v1668
    %v2133 = vpack.c.b16 %v1685, %v1669
    %v2134 = vpack.c.b16 %v1686, %v1670
    %v2135 = vpack.c.b16 %v1687, %v1671
    %v2136 = vpack.c.b16 %v1704, %v1688
    %v2137 = vpack.c.b16 %v1705, %v1689
    %v2138 = vpack.c.b16 %v1706, %v1690
    %v2139 = vpack.c.b16 %v1707, %v1691
    %v2140 = vpack.c.b16 %v1708, %v1692
    %v2141 = vpack.c.b16 %v1709, %v1693
    %v2142 = vpack.c.b16 %v1710, %v1694
    %v2143 = vpack.c.b16 %v1711, %v1695
    %v2144 = vpack.c.b16 %v1712, %v1696
    %v2145 = vpack.c.b16 %v1713, %v1697
    %v2146 = vpack.c.b16 %v1714, %v1698
    %v2147 = vpack.c.b16 %v1715, %v1699
    %v2148 = vpack.c.b16 %v1716, %v1700
    %v2149 = vpack.c.b16 %v1717, %v1701
    %v2150 = vpack.c.b16 %v1718, %v1702
    %v2151 = vpack.c.b16 %v1719, %v1703
    %v2152 = vpack.c.b16 %v1736, %v1720
    %v2153 = vpack.c.b16 %v1737, %v1721
    %v2154 = vpack.c.b16 %v1738, %v1722
    %v2155 = vpack.c.b16 %v1739, %v1723
    %v2156 = vpack.c.b16 %v1740, %v1724
    %v2157 = vpack.c.b16 %v1741, %v1725
    %v2158 = vpack.c.b16 %v1742, %v1726
    %v2159 = vpack.c.b16 %v1743, %v1727
    %v2160 = vpack.c.b16 %v1744, %v1728
    %v2161 = vpack.c.b16 %v1745, %v1729
    %v2162 = vpack.c.b16 %v1746, %v1730
    %v2163 = vpack.c.b16 %v1747, %v1731
    %v2164 = vpack.c.b16 %v1748, %v1732
    %v2165 = vpack.c.b16 %v1749, %v1733
    %v2166 = vpack.c.b16 %v1750, %v1734
    %v2167 = vpack.c.b16 %v1751, %v1735
    %v2168 = vpack.c.b16 %v1768, %v1752
    %v2169 = vpack.c.b16 %v1769, %v1753
    %v2170 = vpack.c.b16 %v1770, %v1754
    %v2171 = vpack.c.b16 %v1771, %v1755
    %v2172 = vpack.c.b16 %v1772, %v1756
    %v2173 = vpack.c.b16 %v1773, %v1757
    %v2174 = vpack.c.b16 %v1774, %v1758
    %v2175 = vpack.c.b16 %v1775, %v1759
    %v2176 = vpack.c.b16 %v1776, %v1760
    %v2177 = vpack.c.b16 %v1777, %v1761
    %v2178 = vpack.c.b16 %v1778, %v1762
    %v2179 = vpack.c.b16 %v1779, %v1763
    %v2180 = vpack.c.b16 %v1780, %v1764
    %v2181 = vpack.c.b16 %v1781, %v1765
    %v2182 = vpack.c.b16 %v1782, %v1766
    %v2183 = vpack.c.b16 %v1783, %v1767
    %v2184 = vpack.c.b16 %v1800, %v1784
    %v2185 = vpack.c.b16 %v1801, %v1785
    %v2186 = vpack.c.b16 %v1802, %v1786
    %v2187 = vpack.c.b16 %v1803, %v1787
    %v2188 = vpack.c.b16 %v1804, %v1788
    %v2189 = vpack.c.b16 %v1805, %v1789
    %v2190 = vpack.c.b16 %v1806, %v1790
    %v2191 = vpack.c.b16 %v1807, %v1791
    %v2192 = vpack.c.b16 %v1808, %v1792
    %v2193 = vpack.c.b16 %v1809, %v1793
    %v2194 = vpack.c.b16 %v1810, %v1794
    %v2195 = vpack.c.b16 %v1811, %v1795
    %v2196 = vpack.c.b16 %v1812, %v1796
    %v2197 = vpack.c.b16 %v1813, %v1797
    %v2198 = vpack.c.b16 %v1814, %v1798
    %v2199 = vpack.c.b16 %v1815, %v1799
    %2584 = vmatprep.subr.bf16.mxu0 %v1929
    %2585 = vmatpush1.bf16.msra.mxu0 %v1928
    %2586 = vmatprep.subr.bf16.mxu0 %v1913
    %2587 = vmatpush1.bf16.msra.mxu0 %v1912
    %2588 = vmatprep.subr.bf16.mxu0 %v1897
    %2589 = vmatpush1.bf16.msra.mxu0 %v1896
    %2590 = vmatprep.subr.bf16.mxu0 %v1881
    %2591 = vmatpush1.bf16.msra.mxu0 %v1880
    %2592 = vmatprep.subr.bf16.mxu0 %v1865
    %2593 = vmatpush1.bf16.msra.mxu0 %v1864
    %2594 = vmatprep.subr.bf16.mxu0 %v1849
    %2595 = vmatpush1.bf16.msra.mxu0 %v1848
    %2596 = vmatprep.subr.bf16.mxu0 %v1833
    %2597 = vmatpush1.bf16.msra.mxu0 %v1832
    %2598 = vmatprep.subr.bf16.mxu0 %v1817
    %2599 = vmatpush1.bf16.msra.mxu0 %v1816
    %2600 = vmatprep.subr.bf16.mxu0 %v2057
    %2601 = vmatpush2.bf16.msra.mxu0 %v2056
    %2602 = vmatprep.subr.bf16.mxu0 %v2041
    %2603 = vmatpush2.bf16.msra.mxu0 %v2040
    %2604 = vmatprep.subr.bf16.mxu0 %v2025
    %2605 = vmatpush2.bf16.msra.mxu0 %v2024
    %2606 = vmatprep.subr.bf16.mxu0 %v2009
    %2607 = vmatpush2.bf16.msra.mxu0 %v2008
    %2608 = vmatprep.subr.bf16.mxu0 %v1993
    %2609 = vmatpush2.bf16.msra.mxu0 %v1992
    %2610 = vmatprep.subr.bf16.mxu0 %v1977
    %2611 = vmatpush2.bf16.msra.mxu0 %v1976
    %2612 = vmatprep.subr.bf16.mxu0 %v1961
    %2613 = vmatpush2.bf16.msra.mxu0 %v1960
    %2614 = vmatprep.subr.bf16.mxu0 %v1945
    %2615 = vmatpush2.bf16.msra.mxu0 %v1944
    %2616 = vmatprep.mubr.bf16.mxu0 %v659
    %2617 = vmatmul.mubr.bf16.gmra.mxu0 %v658
    %v2618 = vpop.f32.mrf.mxu0
    %v2619 = vadd.f32 %v571, %v2618
    %v2620 = vpop.f32.mrf.mxu0
    %v2621 = vadd.f32 %v575, %v2620
    %v2622 = vpop.f32.mrf.mxu0
    %v2623 = vadd.f32 %v571, %v2622
    %v2624 = vpop.f32.mrf.mxu0
    %v2625 = vadd.f32 %v575, %v2624
    %2626 = vdwg.mxu0
    %2627 = vmatprep.subr.bf16.mxu0 %v2185
    %2628 = vmatpush1.bf16.msra.mxu0 %v2184
    %2629 = vmatprep.subr.bf16.mxu0 %v2169
    %2630 = vmatpush1.bf16.msra.mxu0 %v2168
    %2631 = vmatprep.subr.bf16.mxu0 %v2153
    %2632 = vmatpush1.bf16.msra.mxu0 %v2152
    %2633 = vmatprep.subr.bf16.mxu0 %v2137
    %2634 = vmatpush1.bf16.msra.mxu0 %v2136
    %2635 = vmatprep.subr.bf16.mxu0 %v2121
    %2636 = vmatpush1.bf16.msra.mxu0 %v2120
    %2637 = vmatprep.subr.bf16.mxu0 %v2105
    %2638 = vmatpush1.bf16.msra.mxu0 %v2104
    %2639 = vmatprep.subr.bf16.mxu0 %v2089
    %2640 = vmatpush1.bf16.msra.mxu0 %v2088
    %2641 = vmatprep.subr.bf16.mxu0 %v2073
    %2642 = vmatpush1.bf16.msra.mxu0 %v2072
    %2643 = vmatprep.subr.bf16.mxu0 0
    %2644 = vmatpush2.bf16.msra.mxu0 0
    %2645 = vmatprep.subr.bf16.mxu0 0
    %2646 = vmatpush2.bf16.msra.mxu0 0
    %2647 = vmatprep.subr.bf16.mxu0 0
    %2648 = vmatpush2.bf16.msra.mxu0 0
    %2649 = vmatprep.subr.bf16.mxu0 0
    %2650 = vmatpush2.bf16.msra.mxu0 0
    %2651 = vmatprep.subr.bf16.mxu0 0
    %2652 = vmatpush2.bf16.msra.mxu0 0
    %2653 = vmatprep.subr.bf16.mxu0 0
    %2654 = vmatpush2.bf16.msra.mxu0 0
    %2655 = vmatprep.subr.bf16.mxu0 0
    %2656 = vmatpush2.bf16.msra.mxu0 0
    %2657 = vmatprep.subr.bf16.mxu0 0
    %2658 = vmatpush2.bf16.msra.mxu0 0
    %2659 = vmatprep.mubr.bf16.mxu0 0
    %2660 = vmatmul.mubr.bf16.gmra.mxu0 %v660
    %v2661 = vpop.f32.mrf.mxu0
    %v2662 = vadd.f32 %v2619, %v2661
    %v2663 = vpop.f32.mrf.mxu0
    %v2664 = vadd.f32 %v2621, %v2663
    %v2665 = vpop.f32.mrf.mxu0
    %v2666 = vadd.f32 %v2623, %v2665
    %v2667 = vpop.f32.mrf.mxu0
    %v2668 = vadd.f32 %v2625, %v2667
    %2669 = vdwg.mxu0
    %2670 = vmatprep.subr.bf16.mxu0 %v1931
    %2671 = vmatpush1.bf16.msra.mxu0 %v1930
    %2672 = vmatprep.subr.bf16.mxu0 %v1915
    %2673 = vmatpush1.bf16.msra.mxu0 %v1914
    %2674 = vmatprep.subr.bf16.mxu0 %v1899
    %2675 = vmatpush1.bf16.msra.mxu0 %v1898
    %2676 = vmatprep.subr.bf16.mxu0 %v1883
    %2677 = vmatpush1.bf16.msra.mxu0 %v1882
    %2678 = vmatprep.subr.bf16.mxu0 %v1867
    %2679 = vmatpush1.bf16.msra.mxu0 %v1866
    %2680 = vmatprep.subr.bf16.mxu0 %v1851
    %2681 = vmatpush1.bf16.msra.mxu0 %v1850
    %2682 = vmatprep.subr.bf16.mxu0 %v1835
    %2683 = vmatpush1.bf16.msra.mxu0 %v1834
    %2684 = vmatprep.subr.bf16.mxu0 %v1819
    %2685 = vmatpush1.bf16.msra.mxu0 %v1818
    %2686 = vmatprep.subr.bf16.mxu0 %v2059
    %2687 = vmatpush2.bf16.msra.mxu0 %v2058
    %2688 = vmatprep.subr.bf16.mxu0 %v2043
    %2689 = vmatpush2.bf16.msra.mxu0 %v2042
    %2690 = vmatprep.subr.bf16.mxu0 %v2027
    %2691 = vmatpush2.bf16.msra.mxu0 %v2026
    %2692 = vmatprep.subr.bf16.mxu0 %v2011
    %2693 = vmatpush2.bf16.msra.mxu0 %v2010
    %2694 = vmatprep.subr.bf16.mxu0 %v1995
    %2695 = vmatpush2.bf16.msra.mxu0 %v1994
    %2696 = vmatprep.subr.bf16.mxu0 %v1979
    %2697 = vmatpush2.bf16.msra.mxu0 %v1978
    %2698 = vmatprep.subr.bf16.mxu0 %v1963
    %2699 = vmatpush2.bf16.msra.mxu0 %v1962
    %2700 = vmatprep.subr.bf16.mxu0 %v1947
    %2701 = vmatpush2.bf16.msra.mxu0 %v1946
    %2702 = vmatprep.mubr.bf16.mxu0 %v659
    %2703 = vmatmul.mubr.bf16.gmra.mxu0 %v658
    %v2704 = vpop.f32.mrf.mxu0
    %v2705 = vadd.f32 %v579, %v2704
    %v2706 = vpop.f32.mrf.mxu0
    %v2707 = vadd.f32 %v583, %v2706
    %v2708 = vpop.f32.mrf.mxu0
    %v2709 = vadd.f32 %v579, %v2708
    %v2710 = vpop.f32.mrf.mxu0
    %v2711 = vadd.f32 %v583, %v2710
    %2712 = vdwg.mxu0
    %2713 = vmatprep.subr.bf16.mxu0 %v2187
    %2714 = vmatpush1.bf16.msra.mxu0 %v2186
    %2715 = vmatprep.subr.bf16.mxu0 %v2171
    %2716 = vmatpush1.bf16.msra.mxu0 %v2170
    %2717 = vmatprep.subr.bf16.mxu0 %v2155
    %2718 = vmatpush1.bf16.msra.mxu0 %v2154
    %2719 = vmatprep.subr.bf16.mxu0 %v2139
    %2720 = vmatpush1.bf16.msra.mxu0 %v2138
    %2721 = vmatprep.subr.bf16.mxu0 %v2123
    %2722 = vmatpush1.bf16.msra.mxu0 %v2122
    %2723 = vmatprep.subr.bf16.mxu0 %v2107
    %2724 = vmatpush1.bf16.msra.mxu0 %v2106
    %2725 = vmatprep.subr.bf16.mxu0 %v2091
    %2726 = vmatpush1.bf16.msra.mxu0 %v2090
    %2727 = vmatprep.subr.bf16.mxu0 %v2075
    %2728 = vmatpush1.bf16.msra.mxu0 %v2074
    %2729 = vmatprep.subr.bf16.mxu0 0
    %2730 = vmatpush2.bf16.msra.mxu0 0
    %2731 = vmatprep.subr.bf16.mxu0 0
    %2732 = vmatpush2.bf16.msra.mxu0 0
    %2733 = vmatprep.subr.bf16.mxu0 0
    %2734 = vmatpush2.bf16.msra.mxu0 0
    %2735 = vmatprep.subr.bf16.mxu0 0
    %2736 = vmatpush2.bf16.msra.mxu0 0
    %2737 = vmatprep.subr.bf16.mxu0 0
    %2738 = vmatpush2.bf16.msra.mxu0 0
    %2739 = vmatprep.subr.bf16.mxu0 0
    %2740 = vmatpush2.bf16.msra.mxu0 0
    %2741 = vmatprep.subr.bf16.mxu0 0
    %2742 = vmatpush2.bf16.msra.mxu0 0
    %2743 = vmatprep.subr.bf16.mxu0 0
    %2744 = vmatpush2.bf16.msra.mxu0 0
    %2745 = vmatprep.mubr.bf16.mxu0 0
    %2746 = vmatmul.mubr.bf16.gmra.mxu0 %v660
    %v2747 = vpop.f32.mrf.mxu0
    %v2748 = vadd.f32 %v2705, %v2747
    %v2749 = vpop.f32.mrf.mxu0
    %v2750 = vadd.f32 %v2707, %v2749
    %v2751 = vpop.f32.mrf.mxu0
    %v2752 = vadd.f32 %v2709, %v2751
    %v2753 = vpop.f32.mrf.mxu0
    %v2754 = vadd.f32 %v2711, %v2753
    %2755 = vdwg.mxu0
    %2756 = vmatprep.subr.bf16.mxu0 %v1933
    %2757 = vmatpush1.bf16.msra.mxu0 %v1932
    %2758 = vmatprep.subr.bf16.mxu0 %v1917
    %2759 = vmatpush1.bf16.msra.mxu0 %v1916
    %2760 = vmatprep.subr.bf16.mxu0 %v1901
    %2761 = vmatpush1.bf16.msra.mxu0 %v1900
    %2762 = vmatprep.subr.bf16.mxu0 %v1885
    %2763 = vmatpush1.bf16.msra.mxu0 %v1884
    %2764 = vmatprep.subr.bf16.mxu0 %v1869
    %2765 = vmatpush1.bf16.msra.mxu0 %v1868
    %2766 = vmatprep.subr.bf16.mxu0 %v1853
    %2767 = vmatpush1.bf16.msra.mxu0 %v1852
    %2768 = vmatprep.subr.bf16.mxu0 %v1837
    %2769 = vmatpush1.bf16.msra.mxu0 %v1836
    %2770 = vmatprep.subr.bf16.mxu0 %v1821
    %2771 = vmatpush1.bf16.msra.mxu0 %v1820
    %2772 = vmatprep.subr.bf16.mxu0 %v2061
    %2773 = vmatpush2.bf16.msra.mxu0 %v2060
    %2774 = vmatprep.subr.bf16.mxu0 %v2045
    %2775 = vmatpush2.bf16.msra.mxu0 %v2044
    %2776 = vmatprep.subr.bf16.mxu0 %v2029
    %2777 = vmatpush2.bf16.msra.mxu0 %v2028
    %2778 = vmatprep.subr.bf16.mxu0 %v2013
    %2779 = vmatpush2.bf16.msra.mxu0 %v2012
    %2780 = vmatprep.subr.bf16.mxu0 %v1997
    %2781 = vmatpush2.bf16.msra.mxu0 %v1996
    %2782 = vmatprep.subr.bf16.mxu0 %v1981
    %2783 = vmatpush2.bf16.msra.mxu0 %v1980
    %2784 = vmatprep.subr.bf16.mxu0 %v1965
    %2785 = vmatpush2.bf16.msra.mxu0 %v1964
    %2786 = vmatprep.subr.bf16.mxu0 %v1949
    %2787 = vmatpush2.bf16.msra.mxu0 %v1948
    %2788 = vmatprep.mubr.bf16.mxu0 %v659
    %2789 = vmatmul.mubr.bf16.gmra.mxu0 %v658
    %v2790 = vpop.f32.mrf.mxu0
    %v2791 = vadd.f32 %v587, %v2790
    %v2792 = vpop.f32.mrf.mxu0
    %v2793 = vadd.f32 %v591, %v2792
    %v2794 = vpop.f32.mrf.mxu0
    %v2795 = vadd.f32 %v587, %v2794
    %v2796 = vpop.f32.mrf.mxu0
    %v2797 = vadd.f32 %v591, %v2796
    %2798 = vdwg.mxu0
    %2799 = vmatprep.subr.bf16.mxu0 %v2189
    %2800 = vmatpush1.bf16.msra.mxu0 %v2188
    %2801 = vmatprep.subr.bf16.mxu0 %v2173
    %2802 = vmatpush1.bf16.msra.mxu0 %v2172
    %2803 = vmatprep.subr.bf16.mxu0 %v2157
    %2804 = vmatpush1.bf16.msra.mxu0 %v2156
    %2805 = vmatprep.subr.bf16.mxu0 %v2141
    %2806 = vmatpush1.bf16.msra.mxu0 %v2140
    %2807 = vmatprep.subr.bf16.mxu0 %v2125
    %2808 = vmatpush1.bf16.msra.mxu0 %v2124
    %2809 = vmatprep.subr.bf16.mxu0 %v2109
    %2810 = vmatpush1.bf16.msra.mxu0 %v2108
    %2811 = vmatprep.subr.bf16.mxu0 %v2093
    %2812 = vmatpush1.bf16.msra.mxu0 %v2092
    %2813 = vmatprep.subr.bf16.mxu0 %v2077
    %2814 = vmatpush1.bf16.msra.mxu0 %v2076
    %2815 = vmatprep.subr.bf16.mxu0 0
    %2816 = vmatpush2.bf16.msra.mxu0 0
    %2817 = vmatprep.subr.bf16.mxu0 0
    %2818 = vmatpush2.bf16.msra.mxu0 0
    %2819 = vmatprep.subr.bf16.mxu0 0
    %2820 = vmatpush2.bf16.msra.mxu0 0
    %2821 = vmatprep.subr.bf16.mxu0 0
    %2822 = vmatpush2.bf16.msra.mxu0 0
    %2823 = vmatprep.subr.bf16.mxu0 0
    %2824 = vmatpush2.bf16.msra.mxu0 0
    %2825 = vmatprep.subr.bf16.mxu0 0
    %2826 = vmatpush2.bf16.msra.mxu0 0
    %2827 = vmatprep.subr.bf16.mxu0 0
    %2828 = vmatpush2.bf16.msra.mxu0 0
    %2829 = vmatprep.subr.bf16.mxu0 0
    %2830 = vmatpush2.bf16.msra.mxu0 0
    %2831 = vmatprep.mubr.bf16.mxu0 0
    %2832 = vmatmul.mubr.bf16.gmra.mxu0 %v660
    %v2833 = vpop.f32.mrf.mxu0
    %v2834 = vadd.f32 %v2791, %v2833
    %v2835 = vpop.f32.mrf.mxu0
    %v2836 = vadd.f32 %v2793, %v2835
    %v2837 = vpop.f32.mrf.mxu0
    %v2838 = vadd.f32 %v2795, %v2837
    %v2839 = vpop.f32.mrf.mxu0
    %v2840 = vadd.f32 %v2797, %v2839
    %2841 = vdwg.mxu0
    %2842 = vmatprep.subr.bf16.mxu0 %v1935
    %2843 = vmatpush1.bf16.msra.mxu0 %v1934
    %2844 = vmatprep.subr.bf16.mxu0 %v1919
    %2845 = vmatpush1.bf16.msra.mxu0 %v1918
    %2846 = vmatprep.subr.bf16.mxu0 %v1903
    %2847 = vmatpush1.bf16.msra.mxu0 %v1902
    %2848 = vmatprep.subr.bf16.mxu0 %v1887
    %2849 = vmatpush1.bf16.msra.mxu0 %v1886
    %2850 = vmatprep.subr.bf16.mxu0 %v1871
    %2851 = vmatpush1.bf16.msra.mxu0 %v1870
    %2852 = vmatprep.subr.bf16.mxu0 %v1855
    %2853 = vmatpush1.bf16.msra.mxu0 %v1854
    %2854 = vmatprep.subr.bf16.mxu0 %v1839
    %2855 = vmatpush1.bf16.msra.mxu0 %v1838
    %2856 = vmatprep.subr.bf16.mxu0 %v1823
    %2857 = vmatpush1.bf16.msra.mxu0 %v1822
    %2858 = vmatprep.subr.bf16.mxu0 %v2063
    %2859 = vmatpush2.bf16.msra.mxu0 %v2062
    %2860 = vmatprep.subr.bf16.mxu0 %v2047
    %2861 = vmatpush2.bf16.msra.mxu0 %v2046
    %2862 = vmatprep.subr.bf16.mxu0 %v2031
    %2863 = vmatpush2.bf16.msra.mxu0 %v2030
    %2864 = vmatprep.subr.bf16.mxu0 %v2015
    %2865 = vmatpush2.bf16.msra.mxu0 %v2014
    %2866 = vmatprep.subr.bf16.mxu0 %v1999
    %2867 = vmatpush2.bf16.msra.mxu0 %v1998
    %2868 = vmatprep.subr.bf16.mxu0 %v1983
    %2869 = vmatpush2.bf16.msra.mxu0 %v1982
    %2870 = vmatprep.subr.bf16.mxu0 %v1967
    %2871 = vmatpush2.bf16.msra.mxu0 %v1966
    %2872 = vmatprep.subr.bf16.mxu0 %v1951
    %2873 = vmatpush2.bf16.msra.mxu0 %v1950
    %2874 = vmatprep.mubr.bf16.mxu0 %v659
    %2875 = vmatmul.mubr.bf16.gmra.mxu0 %v658
    %v2876 = vpop.f32.mrf.mxu0
    %v2877 = vadd.f32 %v595, %v2876
    %v2878 = vpop.f32.mrf.mxu0
    %v2879 = vadd.f32 %v599, %v2878
    %v2880 = vpop.f32.mrf.mxu0
    %v2881 = vadd.f32 %v595, %v2880
    %v2882 = vpop.f32.mrf.mxu0
    %v2883 = vadd.f32 %v599, %v2882
    %2884 = vdwg.mxu0
    %2885 = vmatprep.subr.bf16.mxu0 %v2191
    %2886 = vmatpush1.bf16.msra.mxu0 %v2190
    %2887 = vmatprep.subr.bf16.mxu0 %v2175
    %2888 = vmatpush1.bf16.msra.mxu0 %v2174
    %2889 = vmatprep.subr.bf16.mxu0 %v2159
    %2890 = vmatpush1.bf16.msra.mxu0 %v2158
    %2891 = vmatprep.subr.bf16.mxu0 %v2143
    %2892 = vmatpush1.bf16.msra.mxu0 %v2142
    %2893 = vmatprep.subr.bf16.mxu0 %v2127
    %2894 = vmatpush1.bf16.msra.mxu0 %v2126
    %2895 = vmatprep.subr.bf16.mxu0 %v2111
    %2896 = vmatpush1.bf16.msra.mxu0 %v2110
    %2897 = vmatprep.subr.bf16.mxu0 %v2095
    %2898 = vmatpush1.bf16.msra.mxu0 %v2094
    %2899 = vmatprep.subr.bf16.mxu0 %v2079
    %2900 = vmatpush1.bf16.msra.mxu0 %v2078
    %2901 = vmatprep.subr.bf16.mxu0 0
    %2902 = vmatpush2.bf16.msra.mxu0 0
    %2903 = vmatprep.subr.bf16.mxu0 0
    %2904 = vmatpush2.bf16.msra.mxu0 0
    %2905 = vmatprep.subr.bf16.mxu0 0
    %2906 = vmatpush2.bf16.msra.mxu0 0
    %2907 = vmatprep.subr.bf16.mxu0 0
    %2908 = vmatpush2.bf16.msra.mxu0 0
    %2909 = vmatprep.subr.bf16.mxu0 0
    %2910 = vmatpush2.bf16.msra.mxu0 0
    %2911 = vmatprep.subr.bf16.mxu0 0
    %2912 = vmatpush2.bf16.msra.mxu0 0
    %2913 = vmatprep.subr.bf16.mxu0 0
    %2914 = vmatpush2.bf16.msra.mxu0 0
    %2915 = vmatprep.subr.bf16.mxu0 0
    %2916 = vmatpush2.bf16.msra.mxu0 0
    %2917 = vmatprep.mubr.bf16.mxu0 0
    %2918 = vmatmul.mubr.bf16.gmra.mxu0 %v660
    %v2919 = vpop.f32.mrf.mxu0
    %v2920 = vadd.f32 %v2877, %v2919
    %v2921 = vpop.f32.mrf.mxu0
    %v2922 = vadd.f32 %v2879, %v2921
    %v2923 = vpop.f32.mrf.mxu0
    %v2924 = vadd.f32 %v2881, %v2923
    %v2925 = vpop.f32.mrf.mxu0
    %v2926 = vadd.f32 %v2883, %v2925
    %2927 = vdwg.mxu0
    %2928 = vmatprep.subr.bf16.mxu0 %v1937
    %2929 = vmatpush1.bf16.msra.mxu0 %v1936
    %2930 = vmatprep.subr.bf16.mxu0 %v1921
    %2931 = vmatpush1.bf16.msra.mxu0 %v1920
    %2932 = vmatprep.subr.bf16.mxu0 %v1905
    %2933 = vmatpush1.bf16.msra.mxu0 %v1904
    %2934 = vmatprep.subr.bf16.mxu0 %v1889
    %2935 = vmatpush1.bf16.msra.mxu0 %v1888
    %2936 = vmatprep.subr.bf16.mxu0 %v1873
    %2937 = vmatpush1.bf16.msra.mxu0 %v1872
    %2938 = vmatprep.subr.bf16.mxu0 %v1857
    %2939 = vmatpush1.bf16.msra.mxu0 %v1856
    %2940 = vmatprep.subr.bf16.mxu0 %v1841
    %2941 = vmatpush1.bf16.msra.mxu0 %v1840
    %2942 = vmatprep.subr.bf16.mxu0 %v1825
    %2943 = vmatpush1.bf16.msra.mxu0 %v1824
    %2944 = vmatprep.subr.bf16.mxu0 %v2065
    %2945 = vmatpush2.bf16.msra.mxu0 %v2064
    %2946 = vmatprep.subr.bf16.mxu0 %v2049
    %2947 = vmatpush2.bf16.msra.mxu0 %v2048
    %2948 = vmatprep.subr.bf16.mxu0 %v2033
    %2949 = vmatpush2.bf16.msra.mxu0 %v2032
    %2950 = vmatprep.subr.bf16.mxu0 %v2017
    %2951 = vmatpush2.bf16.msra.mxu0 %v2016
    %2952 = vmatprep.subr.bf16.mxu0 %v2001
    %2953 = vmatpush2.bf16.msra.mxu0 %v2000
    %2954 = vmatprep.subr.bf16.mxu0 %v1985
    %2955 = vmatpush2.bf16.msra.mxu0 %v1984
    %2956 = vmatprep.subr.bf16.mxu0 %v1969
    %2957 = vmatpush2.bf16.msra.mxu0 %v1968
    %2958 = vmatprep.subr.bf16.mxu0 %v1953
    %2959 = vmatpush2.bf16.msra.mxu0 %v1952
    %2960 = vmatprep.mubr.bf16.mxu0 %v659
    %2961 = vmatmul.mubr.bf16.gmra.mxu0 %v658
    %v2962 = vpop.f32.mrf.mxu0
    %v2963 = vadd.f32 %v603, %v2962
    %v2964 = vpop.f32.mrf.mxu0
    %v2965 = vadd.f32 %v607, %v2964
    %v2966 = vpop.f32.mrf.mxu0
    %v2967 = vadd.f32 %v603, %v2966
    %v2968 = vpop.f32.mrf.mxu0
    %v2969 = vadd.f32 %v607, %v2968
    %2970 = vdwg.mxu0
    %2971 = vmatprep.subr.bf16.mxu0 %v2193
    %2972 = vmatpush1.bf16.msra.mxu0 %v2192
    %2973 = vmatprep.subr.bf16.mxu0 %v2177
    %2974 = vmatpush1.bf16.msra.mxu0 %v2176
    %2975 = vmatprep.subr.bf16.mxu0 %v2161
    %2976 = vmatpush1.bf16.msra.mxu0 %v2160
    %2977 = vmatprep.subr.bf16.mxu0 %v2145
    %2978 = vmatpush1.bf16.msra.mxu0 %v2144
    %2979 = vmatprep.subr.bf16.mxu0 %v2129
    %2980 = vmatpush1.bf16.msra.mxu0 %v2128
    %2981 = vmatprep.subr.bf16.mxu0 %v2113
    %2982 = vmatpush1.bf16.msra.mxu0 %v2112
    %2983 = vmatprep.subr.bf16.mxu0 %v2097
    %2984 = vmatpush1.bf16.msra.mxu0 %v2096
    %2985 = vmatprep.subr.bf16.mxu0 %v2081
    %2986 = vmatpush1.bf16.msra.mxu0 %v2080
    %2987 = vmatprep.subr.bf16.mxu0 0
    %2988 = vmatpush2.bf16.msra.mxu0 0
    %2989 = vmatprep.subr.bf16.mxu0 0
    %2990 = vmatpush2.bf16.msra.mxu0 0
    %2991 = vmatprep.subr.bf16.mxu0 0
    %2992 = vmatpush2.bf16.msra.mxu0 0
    %2993 = vmatprep.subr.bf16.mxu0 0
    %2994 = vmatpush2.bf16.msra.mxu0 0
    %2995 = vmatprep.subr.bf16.mxu0 0
    %2996 = vmatpush2.bf16.msra.mxu0 0
    %2997 = vmatprep.subr.bf16.mxu0 0
    %2998 = vmatpush2.bf16.msra.mxu0 0
    %2999 = vmatprep.subr.bf16.mxu0 0
    %3000 = vmatpush2.bf16.msra.mxu0 0
    %3001 = vmatprep.subr.bf16.mxu0 0
    %3002 = vmatpush2.bf16.msra.mxu0 0
    %3003 = vmatprep.mubr.bf16.mxu0 0
    %3004 = vmatmul.mubr.bf16.gmra.mxu0 %v660
    %v3005 = vpop.f32.mrf.mxu0
    %v3006 = vadd.f32 %v2963, %v3005
    %v3007 = vpop.f32.mrf.mxu0
    %v3008 = vadd.f32 %v2965, %v3007
    %v3009 = vpop.f32.mrf.mxu0
    %v3010 = vadd.f32 %v2967, %v3009
    %v3011 = vpop.f32.mrf.mxu0
    %v3012 = vadd.f32 %v2969, %v3011
    %3013 = vdwg.mxu0
    %3014 = vmatprep.subr.bf16.mxu0 %v1939
    %3015 = vmatpush1.bf16.msra.mxu0 %v1938
    %3016 = vmatprep.subr.bf16.mxu0 %v1923
    %3017 = vmatpush1.bf16.msra.mxu0 %v1922
    %3018 = vmatprep.subr.bf16.mxu0 %v1907
    %3019 = vmatpush1.bf16.msra.mxu0 %v1906
    %3020 = vmatprep.subr.bf16.mxu0 %v1891
    %3021 = vmatpush1.bf16.msra.mxu0 %v1890
    %3022 = vmatprep.subr.bf16.mxu0 %v1875
    %3023 = vmatpush1.bf16.msra.mxu0 %v1874
    %3024 = vmatprep.subr.bf16.mxu0 %v1859
    %3025 = vmatpush1.bf16.msra.mxu0 %v1858
    %3026 = vmatprep.subr.bf16.mxu0 %v1843
    %3027 = vmatpush1.bf16.msra.mxu0 %v1842
    %3028 = vmatprep.subr.bf16.mxu0 %v1827
    %3029 = vmatpush1.bf16.msra.mxu0 %v1826
    %3030 = vmatprep.subr.bf16.mxu0 %v2067
    %3031 = vmatpush2.bf16.msra.mxu0 %v2066
    %3032 = vmatprep.subr.bf16.mxu0 %v2051
    %3033 = vmatpush2.bf16.msra.mxu0 %v2050
    %3034 = vmatprep.subr.bf16.mxu0 %v2035
    %3035 = vmatpush2.bf16.msra.mxu0 %v2034
    %3036 = vmatprep.subr.bf16.mxu0 %v2019
    %3037 = vmatpush2.bf16.msra.mxu0 %v2018
    %3038 = vmatprep.subr.bf16.mxu0 %v2003
    %3039 = vmatpush2.bf16.msra.mxu0 %v2002
    %3040 = vmatprep.subr.bf16.mxu0 %v1987
    %3041 = vmatpush2.bf16.msra.mxu0 %v1986
    %3042 = vmatprep.subr.bf16.mxu0 %v1971
    %3043 = vmatpush2.bf16.msra.mxu0 %v1970
    %3044 = vmatprep.subr.bf16.mxu0 %v1955
    %3045 = vmatpush2.bf16.msra.mxu0 %v1954
    %3046 = vmatprep.mubr.bf16.mxu0 %v659
    %3047 = vmatmul.mubr.bf16.gmra.mxu0 %v658
    %v3048 = vpop.f32.mrf.mxu0
    %v3049 = vadd.f32 %v611, %v3048
    %v3050 = vpop.f32.mrf.mxu0
    %v3051 = vadd.f32 %v615, %v3050
    %v3052 = vpop.f32.mrf.mxu0
    %v3053 = vadd.f32 %v611, %v3052
    %v3054 = vpop.f32.mrf.mxu0
    %v3055 = vadd.f32 %v615, %v3054
    %3056 = vdwg.mxu0
    %3057 = vmatprep.subr.bf16.mxu0 %v2195
    %3058 = vmatpush1.bf16.msra.mxu0 %v2194
    %3059 = vmatprep.subr.bf16.mxu0 %v2179
    %3060 = vmatpush1.bf16.msra.mxu0 %v2178
    %3061 = vmatprep.subr.bf16.mxu0 %v2163
    %3062 = vmatpush1.bf16.msra.mxu0 %v2162
    %3063 = vmatprep.subr.bf16.mxu0 %v2147
    %3064 = vmatpush1.bf16.msra.mxu0 %v2146
    %3065 = vmatprep.subr.bf16.mxu0 %v2131
    %3066 = vmatpush1.bf16.msra.mxu0 %v2130
    %3067 = vmatprep.subr.bf16.mxu0 %v2115
    %3068 = vmatpush1.bf16.msra.mxu0 %v2114
    %3069 = vmatprep.subr.bf16.mxu0 %v2099
    %3070 = vmatpush1.bf16.msra.mxu0 %v2098
    %3071 = vmatprep.subr.bf16.mxu0 %v2083
    %3072 = vmatpush1.bf16.msra.mxu0 %v2082
    %3073 = vmatprep.subr.bf16.mxu0 0
    %3074 = vmatpush2.bf16.msra.mxu0 0
    %3075 = vmatprep.subr.bf16.mxu0 0
    %3076 = vmatpush2.bf16.msra.mxu0 0
    %3077 = vmatprep.subr.bf16.mxu0 0
    %3078 = vmatpush2.bf16.msra.mxu0 0
    %3079 = vmatprep.subr.bf16.mxu0 0
    %3080 = vmatpush2.bf16.msra.mxu0 0
    %3081 = vmatprep.subr.bf16.mxu0 0
    %3082 = vmatpush2.bf16.msra.mxu0 0
    %3083 = vmatprep.subr.bf16.mxu0 0
    %3084 = vmatpush2.bf16.msra.mxu0 0
    %3085 = vmatprep.subr.bf16.mxu0 0
    %3086 = vmatpush2.bf16.msra.mxu0 0
    %3087 = vmatprep.subr.bf16.mxu0 0
    %3088 = vmatpush2.bf16.msra.mxu0 0
    %3089 = vmatprep.mubr.bf16.mxu0 0
    %3090 = vmatmul.mubr.bf16.gmra.mxu0 %v660
    %v3091 = vpop.f32.mrf.mxu0
    %v3092 = vadd.f32 %v3049, %v3091
    %v3093 = vpop.f32.mrf.mxu0
    %v3094 = vadd.f32 %v3051, %v3093
    %v3095 = vpop.f32.mrf.mxu0
    %v3096 = vadd.f32 %v3053, %v3095
    %v3097 = vpop.f32.mrf.mxu0
    %v3098 = vadd.f32 %v3055, %v3097
    %3099 = vdwg.mxu0
    %3100 = vmatprep.subr.bf16.mxu0 %v1941
    %3101 = vmatpush1.bf16.msra.mxu0 %v1940
    %3102 = vmatprep.subr.bf16.mxu0 %v1925
    %3103 = vmatpush1.bf16.msra.mxu0 %v1924
    %3104 = vmatprep.subr.bf16.mxu0 %v1909
    %3105 = vmatpush1.bf16.msra.mxu0 %v1908
    %3106 = vmatprep.subr.bf16.mxu0 %v1893
    %3107 = vmatpush1.bf16.msra.mxu0 %v1892
    %3108 = vmatprep.subr.bf16.mxu0 %v1877
    %3109 = vmatpush1.bf16.msra.mxu0 %v1876
    %3110 = vmatprep.subr.bf16.mxu0 %v1861
    %3111 = vmatpush1.bf16.msra.mxu0 %v1860
    %3112 = vmatprep.subr.bf16.mxu0 %v1845
    %3113 = vmatpush1.bf16.msra.mxu0 %v1844
    %3114 = vmatprep.subr.bf16.mxu0 %v1829
    %3115 = vmatpush1.bf16.msra.mxu0 %v1828
    %3116 = vmatprep.subr.bf16.mxu0 %v2069
    %3117 = vmatpush2.bf16.msra.mxu0 %v2068
    %3118 = vmatprep.subr.bf16.mxu0 %v2053
    %3119 = vmatpush2.bf16.msra.mxu0 %v2052
    %3120 = vmatprep.subr.bf16.mxu0 %v2037
    %3121 = vmatpush2.bf16.msra.mxu0 %v2036
    %3122 = vmatprep.subr.bf16.mxu0 %v2021
    %3123 = vmatpush2.bf16.msra.mxu0 %v2020
    %3124 = vmatprep.subr.bf16.mxu0 %v2005
    %3125 = vmatpush2.bf16.msra.mxu0 %v2004
    %3126 = vmatprep.subr.bf16.mxu0 %v1989
    %3127 = vmatpush2.bf16.msra.mxu0 %v1988
    %3128 = vmatprep.subr.bf16.mxu0 %v1973
    %3129 = vmatpush2.bf16.msra.mxu0 %v1972
    %3130 = vmatprep.subr.bf16.mxu0 %v1957
    %3131 = vmatpush2.bf16.msra.mxu0 %v1956
    %3132 = vmatprep.mubr.bf16.mxu0 %v659
    %3133 = vmatmul.mubr.bf16.gmra.mxu0 %v658
    %v3134 = vpop.f32.mrf.mxu0
    %v3135 = vadd.f32 %v619, %v3134
    %v3136 = vpop.f32.mrf.mxu0
    %v3137 = vadd.f32 %v623, %v3136
    %v3138 = vpop.f32.mrf.mxu0
    %v3139 = vadd.f32 %v619, %v3138
    %v3140 = vpop.f32.mrf.mxu0
    %v3141 = vadd.f32 %v623, %v3140
    %3142 = vdwg.mxu0
    %3143 = vmatprep.subr.bf16.mxu0 %v2197
    %3144 = vmatpush1.bf16.msra.mxu0 %v2196
    %3145 = vmatprep.subr.bf16.mxu0 %v2181
    %3146 = vmatpush1.bf16.msra.mxu0 %v2180
    %3147 = vmatprep.subr.bf16.mxu0 %v2165
    %3148 = vmatpush1.bf16.msra.mxu0 %v2164
    %3149 = vmatprep.subr.bf16.mxu0 %v2149
    %3150 = vmatpush1.bf16.msra.mxu0 %v2148
    %3151 = vmatprep.subr.bf16.mxu0 %v2133
    %3152 = vmatpush1.bf16.msra.mxu0 %v2132
    %3153 = vmatprep.subr.bf16.mxu0 %v2117
    %3154 = vmatpush1.bf16.msra.mxu0 %v2116
    %3155 = vmatprep.subr.bf16.mxu0 %v2101
    %3156 = vmatpush1.bf16.msra.mxu0 %v2100
    %3157 = vmatprep.subr.bf16.mxu0 %v2085
    %3158 = vmatpush1.bf16.msra.mxu0 %v2084
    %3159 = vmatprep.subr.bf16.mxu0 0
    %3160 = vmatpush2.bf16.msra.mxu0 0
    %3161 = vmatprep.subr.bf16.mxu0 0
    %3162 = vmatpush2.bf16.msra.mxu0 0
    %3163 = vmatprep.subr.bf16.mxu0 0
    %3164 = vmatpush2.bf16.msra.mxu0 0
    %3165 = vmatprep.subr.bf16.mxu0 0
    %3166 = vmatpush2.bf16.msra.mxu0 0
    %3167 = vmatprep.subr.bf16.mxu0 0
    %3168 = vmatpush2.bf16.msra.mxu0 0
    %3169 = vmatprep.subr.bf16.mxu0 0
    %3170 = vmatpush2.bf16.msra.mxu0 0
    %3171 = vmatprep.subr.bf16.mxu0 0
    %3172 = vmatpush2.bf16.msra.mxu0 0
    %3173 = vmatprep.subr.bf16.mxu0 0
    %3174 = vmatpush2.bf16.msra.mxu0 0
    %3175 = vmatprep.mubr.bf16.mxu0 0
    %3176 = vmatmul.mubr.bf16.gmra.mxu0 %v660
    %v3177 = vpop.f32.mrf.mxu0
    %v3178 = vadd.f32 %v3135, %v3177
    %v3179 = vpop.f32.mrf.mxu0
    %v3180 = vadd.f32 %v3137, %v3179
    %v3181 = vpop.f32.mrf.mxu0
    %v3182 = vadd.f32 %v3139, %v3181
    %v3183 = vpop.f32.mrf.mxu0
    %v3184 = vadd.f32 %v3141, %v3183
    %3185 = vdwg.mxu0
    %3186 = vmatprep.subr.bf16.mxu0 %v1943
    %3187 = vmatpush1.bf16.msra.mxu0 %v1942
    %3188 = vmatprep.subr.bf16.mxu0 %v1927
    %3189 = vmatpush1.bf16.msra.mxu0 %v1926
    %3190 = vmatprep.subr.bf16.mxu0 %v1911
    %3191 = vmatpush1.bf16.msra.mxu0 %v1910
    %3192 = vmatprep.subr.bf16.mxu0 %v1895
    %3193 = vmatpush1.bf16.msra.mxu0 %v1894
    %3194 = vmatprep.subr.bf16.mxu0 %v1879
    %3195 = vmatpush1.bf16.msra.mxu0 %v1878
    %3196 = vmatprep.subr.bf16.mxu0 %v1863
    %3197 = vmatpush1.bf16.msra.mxu0 %v1862
    %3198 = vmatprep.subr.bf16.mxu0 %v1847
    %3199 = vmatpush1.bf16.msra.mxu0 %v1846
    %3200 = vmatprep.subr.bf16.mxu0 %v1831
    %3201 = vmatpush1.bf16.msra.mxu0 %v1830
    %3202 = vmatprep.subr.bf16.mxu0 %v2071
    %3203 = vmatpush2.bf16.msra.mxu0 %v2070
    %3204 = vmatprep.subr.bf16.mxu0 %v2055
    %3205 = vmatpush2.bf16.msra.mxu0 %v2054
    %3206 = vmatprep.subr.bf16.mxu0 %v2039
    %3207 = vmatpush2.bf16.msra.mxu0 %v2038
    %3208 = vmatprep.subr.bf16.mxu0 %v2023
    %3209 = vmatpush2.bf16.msra.mxu0 %v2022
    %3210 = vmatprep.subr.bf16.mxu0 %v2007
    %3211 = vmatpush2.bf16.msra.mxu0 %v2006
    %3212 = vmatprep.subr.bf16.mxu0 %v1991
    %3213 = vmatpush2.bf16.msra.mxu0 %v1990
    %3214 = vmatprep.subr.bf16.mxu0 %v1975
    %3215 = vmatpush2.bf16.msra.mxu0 %v1974
    %3216 = vmatprep.subr.bf16.mxu0 %v1959
    %3217 = vmatpush2.bf16.msra.mxu0 %v1958
    %3218 = vmatprep.mubr.bf16.mxu0 %v659
    %3219 = vmatmul.mubr.bf16.gmra.mxu0 %v658
    %v3220 = vpop.f32.mrf.mxu0
    %v3221 = vadd.f32 %v627, %v3220
    %v3222 = vpop.f32.mrf.mxu0
    %v3223 = vadd.f32 %v631, %v3222
    %v3224 = vpop.f32.mrf.mxu0
    %v3225 = vadd.f32 %v627, %v3224
    %v3226 = vpop.f32.mrf.mxu0
    %v3227 = vadd.f32 %v631, %v3226
    %3228 = vdwg.mxu0
    %3229 = vmatprep.subr.bf16.mxu0 %v2199
    %3230 = vmatpush1.bf16.msra.mxu0 %v2198
    %3231 = vmatprep.subr.bf16.mxu0 %v2183
    %3232 = vmatpush1.bf16.msra.mxu0 %v2182
    %3233 = vmatprep.subr.bf16.mxu0 %v2167
    %3234 = vmatpush1.bf16.msra.mxu0 %v2166
    %3235 = vmatprep.subr.bf16.mxu0 %v2151
    %3236 = vmatpush1.bf16.msra.mxu0 %v2150
    %3237 = vmatprep.subr.bf16.mxu0 %v2135
    %3238 = vmatpush1.bf16.msra.mxu0 %v2134
    %3239 = vmatprep.subr.bf16.mxu0 %v2119
    %3240 = vmatpush1.bf16.msra.mxu0 %v2118
    %3241 = vmatprep.subr.bf16.mxu0 %v2103
    %3242 = vmatpush1.bf16.msra.mxu0 %v2102
    %3243 = vmatprep.subr.bf16.mxu0 %v2087
    %3244 = vmatpush1.bf16.msra.mxu0 %v2086
    %3245 = vmatprep.subr.bf16.mxu0 0
    %3246 = vmatpush2.bf16.msra.mxu0 0
    %3247 = vmatprep.subr.bf16.mxu0 0
    %3248 = vmatpush2.bf16.msra.mxu0 0
    %3249 = vmatprep.subr.bf16.mxu0 0
    %3250 = vmatpush2.bf16.msra.mxu0 0
    %3251 = vmatprep.subr.bf16.mxu0 0
    %3252 = vmatpush2.bf16.msra.mxu0 0
    %3253 = vmatprep.subr.bf16.mxu0 0
    %3254 = vmatpush2.bf16.msra.mxu0 0
    %3255 = vmatprep.subr.bf16.mxu0 0
    %3256 = vmatpush2.bf16.msra.mxu0 0
    %3257 = vmatprep.subr.bf16.mxu0 0
    %3258 = vmatpush2.bf16.msra.mxu0 0
    %3259 = vmatprep.subr.bf16.mxu0 0
    %3260 = vmatpush2.bf16.msra.mxu0 0
    %3261 = vmatprep.mubr.bf16.mxu0 0
    %3262 = vmatmul.mubr.bf16.gmra.mxu0 %v660
    %v3263 = vpop.f32.mrf.mxu0
    %v3264 = vadd.f32 %v3221, %v3263
    %v3265 = vpop.f32.mrf.mxu0
    %v3266 = vadd.f32 %v3223, %v3265
    %v3267 = vpop.f32.mrf.mxu0
    %v3268 = vadd.f32 %v3225, %v3267
    %v3269 = vpop.f32.mrf.mxu0
    %v3270 = vadd.f32 %v3227, %v3269
    %3271 = vdwg.mxu0
    %v3272 = vpack.c.bf16 %v2666, %v2662
    %v3273 = vpack.c.bf16 %v2668, %v2664
    %v3274 = vpack.c.bf16 %v2752, %v2748
    %v3275 = vpack.c.bf16 %v2754, %v2750
    %v3276 = vpack.c.bf16 %v2838, %v2834
    %v3277 = vpack.c.bf16 %v2840, %v2836
    %v3278 = vpack.c.bf16 %v2924, %v2920
    %v3279 = vpack.c.bf16 %v2926, %v2922
    %v3280 = vpack.c.bf16 %v3010, %v3006
    %v3281 = vpack.c.bf16 %v3012, %v3008
    %v3282 = vpack.c.bf16 %v3096, %v3092
    %v3283 = vpack.c.bf16 %v3098, %v3094
    %v3284 = vpack.c.bf16 %v3182, %v3178
    %v3285 = vpack.c.bf16 %v3184, %v3180
    %v3286 = vpack.c.bf16 %v3268, %v3264
    %v3287 = vpack.c.bf16 %v3270, %v3266
    %v3304 = vunpack.c.l.b16 %v3272
    %v3305 = vunpack.c.l.b16 %v3273
    %v3306 = vunpack.c.l.b16 %v3274
    %v3307 = vunpack.c.l.b16 %v3275
    %v3308 = vunpack.c.l.b16 %v3276
    %v3309 = vunpack.c.l.b16 %v3277
    %v3310 = vunpack.c.l.b16 %v3278
    %v3311 = vunpack.c.l.b16 %v3279
    %v3312 = vunpack.c.l.b16 %v3280
    %v3313 = vunpack.c.l.b16 %v3281
    %v3314 = vunpack.c.l.b16 %v3282
    %v3315 = vunpack.c.l.b16 %v3283
    %v3316 = vunpack.c.l.b16 %v3284
    %v3317 = vunpack.c.l.b16 %v3285
    %v3318 = vunpack.c.l.b16 %v3286
    %v3319 = vunpack.c.l.b16 %v3287
    %v3320 = vunpack.c.h.b16 %v3272
    %v3321 = vunpack.c.h.b16 %v3273
    %v3322 = vunpack.c.h.b16 %v3274
    %v3323 = vunpack.c.h.b16 %v3275
    %v3324 = vunpack.c.h.b16 %v3276
    %v3325 = vunpack.c.h.b16 %v3277
    %v3326 = vunpack.c.h.b16 %v3278
    %v3327 = vunpack.c.h.b16 %v3279
    %v3328 = vunpack.c.h.b16 %v3280
    %v3329 = vunpack.c.h.b16 %v3281
    %v3330 = vunpack.c.h.b16 %v3282
    %v3331 = vunpack.c.h.b16 %v3283
    %v3332 = vunpack.c.h.b16 %v3284
    %v3333 = vunpack.c.h.b16 %v3285
    %v3334 = vunpack.c.h.b16 %v3286
    %v3335 = vunpack.c.h.b16 %v3287
    %v3336 = vpack.c.b16 %v3305, %v3304
    %v3337 = vpack.c.b16 %v3307, %v3306
    %v3338 = vpack.c.b16 %v3309, %v3308
    %v3339 = vpack.c.b16 %v3311, %v3310
    %v3340 = vpack.c.b16 %v3313, %v3312
    %v3341 = vpack.c.b16 %v3315, %v3314
    %v3342 = vpack.c.b16 %v3317, %v3316
    %v3343 = vpack.c.b16 %v3319, %v3318
    %v3344 = vpack.c.b16 %v3321, %v3320
    %v3345 = vpack.c.b16 %v3323, %v3322
    %v3346 = vpack.c.b16 %v3325, %v3324
    %v3347 = vpack.c.b16 %v3327, %v3326
    %v3348 = vpack.c.b16 %v3329, %v3328
    %v3349 = vpack.c.b16 %v3331, %v3330
    %v3350 = vpack.c.b16 %v3333, %v3332
    %v3351 = vpack.c.b16 %v3335, %v3334
    %3368 = vst [vmem:[#allocation20] sm:$0xff] %v3336
    %3369 = vst [vmem:[#allocation20 + $0x8] sm:$0xff] %v3337
    %3370 = vst [vmem:[#allocation20 + $0x10] sm:$0xff] %v3338
    %3371 = vst [vmem:[#allocation20 + $0x18] sm:$0xff] %v3339
    %3372 = vst [vmem:[#allocation20 + $0x20] sm:$0xff] %v3340
    %3373 = vst [vmem:[#allocation20 + $0x28] sm:$0xff] %v3341
    %3374 = vst [vmem:[#allocation20 + $0x30] sm:$0xff] %v3342
    %3375 = vst [vmem:[#allocation20 + $0x38] sm:$0xff] %v3343
    %3376 = vst [vmem:[#allocation20 + $0x40] sm:$0xff] %v3344
    %3377 = vst [vmem:[#allocation20 + $0x48] sm:$0xff] %v3345
    %3378 = vst [vmem:[#allocation20 + $0x50] sm:$0xff] %v3346
    %3379 = vst [vmem:[#allocation20 + $0x58] sm:$0xff] %v3347
    %3380 = vst [vmem:[#allocation20 + $0x60] sm:$0xff] %v3348
    %3381 = vst [vmem:[#allocation20 + $0x68] sm:$0xff] %v3349
    %3382 = vst [vmem:[#allocation20 + $0x70] sm:$0xff] %v3350
    %3383 = vst [vmem:[#allocation20 + $0x78] sm:$0xff] %v3351
    %v3384 = vld [vmem:[#allocation8] sm:$0xff]
    %v3385 = vld [vmem:[#allocation8 + $0x8] sm:$0xff]
    %vm3386 = vcmp.ge.f32.partialorder %v2662, 0.0
    %vm3387 = vcmp.ge.f32.partialorder %v2664, 0.0
    %vm3388 = vcmp.ge.f32.partialorder %v2748, 0.0
    %vm3389 = vcmp.ge.f32.partialorder %v2750, 0.0
    %vm3390 = vcmp.ge.f32.partialorder %v2834, 0.0
    %vm3391 = vcmp.ge.f32.partialorder %v2836, 0.0
    %vm3392 = vcmp.ge.f32.partialorder %v2920, 0.0
    %vm3393 = vcmp.ge.f32.partialorder %v2922, 0.0
    %vm3394 = vcmp.ge.f32.partialorder %v3006, 0.0
    %vm3395 = vcmp.ge.f32.partialorder %v3008, 0.0
    %vm3396 = vcmp.ge.f32.partialorder %v3092, 0.0
    %vm3397 = vcmp.ge.f32.partialorder %v3094, 0.0
    %vm3398 = vcmp.ge.f32.partialorder %v3178, 0.0
    %vm3399 = vcmp.ge.f32.partialorder %v3180, 0.0
    %vm3400 = vcmp.ge.f32.partialorder %v3264, 0.0
    %vm3401 = vcmp.ge.f32.partialorder %v3266, 0.0
    %vm3402 = vcmp.ge.f32.partialorder %v2666, 0.0
    %vm3403 = vcmp.ge.f32.partialorder %v2668, 0.0
    %vm3404 = vcmp.ge.f32.partialorder %v2752, 0.0
    %vm3405 = vcmp.ge.f32.partialorder %v2754, 0.0
    %vm3406 = vcmp.ge.f32.partialorder %v2838, 0.0
    %vm3407 = vcmp.ge.f32.partialorder %v2840, 0.0
    %vm3408 = vcmp.ge.f32.partialorder %v2924, 0.0
    %vm3409 = vcmp.ge.f32.partialorder %v2926, 0.0
    %vm3410 = vcmp.ge.f32.partialorder %v3010, 0.0
    %vm3411 = vcmp.ge.f32.partialorder %v3012, 0.0
    %vm3412 = vcmp.ge.f32.partialorder %v3096, 0.0
    %vm3413 = vcmp.ge.f32.partialorder %v3098, 0.0
    %vm3414 = vcmp.ge.f32.partialorder %v3182, 0.0
    %vm3415 = vcmp.ge.f32.partialorder %v3184, 0.0
    %vm3416 = vcmp.ge.f32.partialorder %v3268, 0.0
    %vm3417 = vcmp.ge.f32.partialorder %v3270, 0.0
    %v3420 = vlaneseq
    %v3421 = vshrl.u32 %v3420, 7
    %v3422 = vsub.s32 0, %v3421
    %v3423 = vrot.slane %v3384, %v3422
    %v3424 = vlaneseq
    %v3425 = vshrl.u32 %v3424, 7
    %v3426 = vsub.s32 1, %v3425
    %v3427 = vrot.slane %v3384, %v3426
    %v3428 = vlaneseq
    %v3429 = vshrl.u32 %v3428, 7
    %v3430 = vsub.s32 2, %v3429
    %v3431 = vrot.slane %v3384, %v3430
    %v3432 = vlaneseq
    %v3433 = vshrl.u32 %v3432, 7
    %v3434 = vsub.s32 3, %v3433
    %v3435 = vrot.slane %v3384, %v3434
    %v3436 = vlaneseq
    %v3437 = vshrl.u32 %v3436, 7
    %v3438 = vsub.s32 4, %v3437
    %v3439 = vrot.slane %v3384, %v3438
    %v3440 = vlaneseq
    %v3441 = vshrl.u32 %v3440, 7
    %v3442 = vsub.s32 5, %v3441
    %v3443 = vrot.slane %v3384, %v3442
    %v3444 = vlaneseq
    %v3445 = vshrl.u32 %v3444, 7
    %v3446 = vsub.s32 6, %v3445
    %v3447 = vrot.slane %v3384, %v3446
    %v3448 = vlaneseq
    %v3449 = vshrl.u32 %v3448, 7
    %v3450 = vsub.s32 7, %v3449
    %v3451 = vrot.slane %v3384, %v3450
    %v3452 = vlaneseq
    %v3453 = vshrl.u32 %v3452, 7
    %v3454 = vsub.s32 0, %v3453
    %v3455 = vrot.slane %v3385, %v3454
    %v3456 = vlaneseq
    %v3457 = vshrl.u32 %v3456, 7
    %v3458 = vsub.s32 1, %v3457
    %v3459 = vrot.slane %v3385, %v3458
    %v3460 = vlaneseq
    %v3461 = vshrl.u32 %v3460, 7
    %v3462 = vsub.s32 2, %v3461
    %v3463 = vrot.slane %v3385, %v3462
    %v3464 = vlaneseq
    %v3465 = vshrl.u32 %v3464, 7
    %v3466 = vsub.s32 3, %v3465
    %v3467 = vrot.slane %v3385, %v3466
    %v3468 = vlaneseq
    %v3469 = vshrl.u32 %v3468, 7
    %v3470 = vsub.s32 4, %v3469
    %v3471 = vrot.slane %v3385, %v3470
    %v3472 = vlaneseq
    %v3473 = vshrl.u32 %v3472, 7
    %v3474 = vsub.s32 5, %v3473
    %v3475 = vrot.slane %v3385, %v3474
    %v3476 = vlaneseq
    %v3477 = vshrl.u32 %v3476, 7
    %v3478 = vsub.s32 6, %v3477
    %v3479 = vrot.slane %v3385, %v3478
    %v3480 = vlaneseq
    %v3481 = vshrl.u32 %v3480, 7
    %v3482 = vsub.s32 7, %v3481
    %v3483 = vrot.slane %v3385, %v3482
    %v3500 = vmul.f32 %v3423, %v2662
    %v3501 = vmul.f32 %v3427, %v2664
    %v3502 = vmul.f32 %v3431, %v2748
    %v3503 = vmul.f32 %v3435, %v2750
    %v3504 = vmul.f32 %v3439, %v2834
    %v3505 = vmul.f32 %v3443, %v2836
    %v3506 = vmul.f32 %v3447, %v2920
    %v3507 = vmul.f32 %v3451, %v2922
    %v3508 = vmul.f32 %v3455, %v3006
    %v3509 = vmul.f32 %v3459, %v3008
    %v3510 = vmul.f32 %v3463, %v3092
    %v3511 = vmul.f32 %v3467, %v3094
    %v3512 = vmul.f32 %v3471, %v3178
    %v3513 = vmul.f32 %v3475, %v3180
    %v3514 = vmul.f32 %v3479, %v3264
    %v3515 = vmul.f32 %v3483, %v3266
    %v3516 = vmul.f32 %v3423, %v2666
    %v3517 = vmul.f32 %v3427, %v2668
    %v3518 = vmul.f32 %v3431, %v2752
    %v3519 = vmul.f32 %v3435, %v2754
    %v3520 = vmul.f32 %v3439, %v2838
    %v3521 = vmul.f32 %v3443, %v2840
    %v3522 = vmul.f32 %v3447, %v2924
    %v3523 = vmul.f32 %v3451, %v2926
    %v3524 = vmul.f32 %v3455, %v3010
    %v3525 = vmul.f32 %v3459, %v3012
    %v3526 = vmul.f32 %v3463, %v3096
    %v3527 = vmul.f32 %v3467, %v3098
    %v3528 = vmul.f32 %v3471, %v3182
    %v3529 = vmul.f32 %v3475, %v3184
    %v3530 = vmul.f32 %v3479, %v3268
    %v3531 = vmul.f32 %v3483, %v3270
    %v3532 = vsel %vm3386, %v2662, %v3500
    %v3533 = vsel %vm3387, %v2664, %v3501
    %v3534 = vsel %vm3388, %v2748, %v3502
    %v3535 = vsel %vm3389, %v2750, %v3503
    %v3536 = vsel %vm3390, %v2834, %v3504
    %v3537 = vsel %vm3391, %v2836, %v3505
    %v3538 = vsel %vm3392, %v2920, %v3506
    %v3539 = vsel %vm3393, %v2922, %v3507
    %v3540 = vsel %vm3394, %v3006, %v3508
    %v3541 = vsel %vm3395, %v3008, %v3509
    %v3542 = vsel %vm3396, %v3092, %v3510
    %v3543 = vsel %vm3397, %v3094, %v3511
    %v3544 = vsel %vm3398, %v3178, %v3512
    %v3545 = vsel %vm3399, %v3180, %v3513
    %v3546 = vsel %vm3400, %v3264, %v3514
    %v3547 = vsel %vm3401, %v3266, %v3515
    %v3548 = vsel %vm3402, %v2666, %v3516
    %v3549 = vsel %vm3403, %v2668, %v3517
    %v3550 = vsel %vm3404, %v2752, %v3518
    %v3551 = vsel %vm3405, %v2754, %v3519
    %v3552 = vsel %vm3406, %v2838, %v3520
    %v3553 = vsel %vm3407, %v2840, %v3521
    %v3554 = vsel %vm3408, %v2924, %v3522
    %v3555 = vsel %vm3409, %v2926, %v3523
    %v3556 = vsel %vm3410, %v3010, %v3524
    %v3557 = vsel %vm3411, %v3012, %v3525
    %v3558 = vsel %vm3412, %v3096, %v3526
    %v3559 = vsel %vm3413, %v3098, %v3527
    %v3560 = vsel %vm3414, %v3182, %v3528
    %v3561 = vsel %vm3415, %v3184, %v3529
    %v3562 = vsel %vm3416, %v3268, %v3530
    %v3563 = vsel %vm3417, %v3270, %v3531
    %v3564 = vld [vmem:[#allocation10] sm:$0xff]
    %v3565 = vld [vmem:[#allocation10 + $0x8] sm:$0xff]
    %v3566 = vld [vmem:[#allocation11] sm:$0xff]
    %v3567 = vld [vmem:[#allocation11 + $0x8] sm:$0xff]
    %v3568 = vadd.f32 %v3532, %v3533
    %v3569 = vadd.f32 %v3568, %v3534
    %v3570 = vadd.f32 %v3569, %v3535
    %v3571 = vadd.f32 %v3570, %v3536
    %v3572 = vadd.f32 %v3571, %v3537
    %v3573 = vadd.f32 %v3572, %v3538
    %v3574 = vadd.f32 %v3573, %v3539
    %v3575 = vadd.f32 %v3574, %v3540
    %v3576 = vadd.f32 %v3575, %v3541
    %v3577 = vadd.f32 %v3576, %v3542
    %v3578 = vadd.f32 %v3577, %v3543
    %v3579 = vadd.f32 %v3578, %v3544
    %v3580 = vadd.f32 %v3579, %v3545
    %v3581 = vadd.f32 %v3580, %v3546
    %v3582 = vadd.f32 %v3581, %v3547
    %3583 = vadd.xlane.f32.xlu0 %v3582
    %v3584 = vpop.xlane.xlu0 %3583
    %v3585 = vadd.f32 %v3548, %v3549
    %v3586 = vadd.f32 %v3585, %v3550
    %v3587 = vadd.f32 %v3586, %v3551
    %v3588 = vadd.f32 %v3587, %v3552
    %v3589 = vadd.f32 %v3588, %v3553
    %v3590 = vadd.f32 %v3589, %v3554
    %v3591 = vadd.f32 %v3590, %v3555
    %v3592 = vadd.f32 %v3591, %v3556
    %v3593 = vadd.f32 %v3592, %v3557
    %v3594 = vadd.f32 %v3593, %v3558
    %v3595 = vadd.f32 %v3594, %v3559
    %v3596 = vadd.f32 %v3595, %v3560
    %v3597 = vadd.f32 %v3596, %v3561
    %v3598 = vadd.f32 %v3597, %v3562
    %v3599 = vadd.f32 %v3598, %v3563
    %3600 = vadd.xlane.f32.xlu0 %v3599
    %v3601 = vpop.xlane.xlu0 %3600
    %v3602 = vrcp.pop 2048.0
    %v3603 = vmul.f32 %v3584, %v3602
    %v3604 = vmul.f32 %v3601, %v3602
    %v3605 = vsub.f32 %v3532, %v3603
    %v3606 = vsub.f32 %v3533, %v3603
    %v3607 = vsub.f32 %v3534, %v3603
    %v3608 = vsub.f32 %v3535, %v3603
    %v3609 = vsub.f32 %v3536, %v3603
    %v3610 = vsub.f32 %v3537, %v3603
    %v3611 = vsub.f32 %v3538, %v3603
    %v3612 = vsub.f32 %v3539, %v3603
    %v3613 = vsub.f32 %v3540, %v3603
    %v3614 = vsub.f32 %v3541, %v3603
    %v3615 = vsub.f32 %v3542, %v3603
    %v3616 = vsub.f32 %v3543, %v3603
    %v3617 = vsub.f32 %v3544, %v3603
    %v3618 = vsub.f32 %v3545, %v3603
    %v3619 = vsub.f32 %v3546, %v3603
    %v3620 = vsub.f32 %v3547, %v3603
    %v3621 = vsub.f32 %v3548, %v3604
    %v3622 = vsub.f32 %v3549, %v3604
    %v3623 = vsub.f32 %v3550, %v3604
    %v3624 = vsub.f32 %v3551, %v3604
    %v3625 = vsub.f32 %v3552, %v3604
    %v3626 = vsub.f32 %v3553, %v3604
    %v3627 = vsub.f32 %v3554, %v3604
    %v3628 = vsub.f32 %v3555, %v3604
    %v3629 = vsub.f32 %v3556, %v3604
    %v3630 = vsub.f32 %v3557, %v3604
    %v3631 = vsub.f32 %v3558, %v3604
    %v3632 = vsub.f32 %v3559, %v3604
    %v3633 = vsub.f32 %v3560, %v3604
    %v3634 = vsub.f32 %v3561, %v3604
    %v3635 = vsub.f32 %v3562, %v3604
    %v3636 = vsub.f32 %v3563, %v3604
    %v3637 = vmul.f32 %v3605, %v3605
    %v3638 = vmul.f32 %v3606, %v3606
    %v3639 = vmul.f32 %v3607, %v3607
    %v3640 = vmul.f32 %v3608, %v3608
    %v3641 = vmul.f32 %v3609, %v3609
    %v3642 = vmul.f32 %v3610, %v3610
    %v3643 = vmul.f32 %v3611, %v3611
    %v3644 = vmul.f32 %v3612, %v3612
    %v3645 = vmul.f32 %v3613, %v3613
    %v3646 = vmul.f32 %v3614, %v3614
    %v3647 = vmul.f32 %v3615, %v3615
    %v3648 = vmul.f32 %v3616, %v3616
    %v3649 = vmul.f32 %v3617, %v3617
    %v3650 = vmul.f32 %v3618, %v3618
    %v3651 = vmul.f32 %v3619, %v3619
    %v3652 = vmul.f32 %v3620, %v3620
    %v3653 = vmul.f32 %v3621, %v3621
    %v3654 = vmul.f32 %v3622, %v3622
    %v3655 = vmul.f32 %v3623, %v3623
    %v3656 = vmul.f32 %v3624, %v3624
    %v3657 = vmul.f32 %v3625, %v3625
    %v3658 = vmul.f32 %v3626, %v3626
    %v3659 = vmul.f32 %v3627, %v3627
    %v3660 = vmul.f32 %v3628, %v3628
    %v3661 = vmul.f32 %v3629, %v3629
    %v3662 = vmul.f32 %v3630, %v3630
    %v3663 = vmul.f32 %v3631, %v3631
    %v3664 = vmul.f32 %v3632, %v3632
    %v3665 = vmul.f32 %v3633, %v3633
    %v3666 = vmul.f32 %v3634, %v3634
    %v3667 = vmul.f32 %v3635, %v3635
    %v3668 = vmul.f32 %v3636, %v3636
    %v3669 = vadd.f32 %v3637, %v3638
    %v3670 = vadd.f32 %v3669, %v3639
    %v3671 = vadd.f32 %v3670, %v3640
    %v3672 = vadd.f32 %v3671, %v3641
    %v3673 = vadd.f32 %v3672, %v3642
    %v3674 = vadd.f32 %v3673, %v3643
    %v3675 = vadd.f32 %v3674, %v3644
    %v3676 = vadd.f32 %v3675, %v3645
    %v3677 = vadd.f32 %v3676, %v3646
    %v3678 = vadd.f32 %v3677, %v3647
    %v3679 = vadd.f32 %v3678, %v3648
    %v3680 = vadd.f32 %v3679, %v3649
    %v3681 = vadd.f32 %v3680, %v3650
    %v3682 = vadd.f32 %v3681, %v3651
    %v3683 = vadd.f32 %v3682, %v3652
    %3684 = vadd.xlane.f32.xlu0 %v3683
    %v3685 = vpop.xlane.xlu0 %3684
    %v3686 = vadd.f32 %v3653, %v3654
    %v3687 = vadd.f32 %v3686, %v3655
    %v3688 = vadd.f32 %v3687, %v3656
    %v3689 = vadd.f32 %v3688, %v3657
    %v3690 = vadd.f32 %v3689, %v3658
    %v3691 = vadd.f32 %v3690, %v3659
    %v3692 = vadd.f32 %v3691, %v3660
    %v3693 = vadd.f32 %v3692, %v3661
    %v3694 = vadd.f32 %v3693, %v3662
    %v3695 = vadd.f32 %v3694, %v3663
    %v3696 = vadd.f32 %v3695, %v3664
    %v3697 = vadd.f32 %v3696, %v3665
    %v3698 = vadd.f32 %v3697, %v3666
    %v3699 = vadd.f32 %v3698, %v3667
    %v3700 = vadd.f32 %v3699, %v3668
    %3701 = vadd.xlane.f32.xlu0 %v3700
    %v3702 = vpop.xlane.xlu0 %3701
    %v3703 = vmul.f32 %v3685, %v3602
    %v3704 = vmul.f32 %v3702, %v3602
    %v3705 = vadd.f32 %v3703, 1e-05
    %v3706 = vadd.f32 %v3704, 1e-05
    %v3707 = vrsqrt.pop %v3705
    %v3708 = vrsqrt.pop %v3706
    %v3709 = vmul.f32 %v3605, %v3707
    %v3710 = vmul.f32 %v3606, %v3707
    %v3711 = vmul.f32 %v3607, %v3707
    %v3712 = vmul.f32 %v3608, %v3707
    %v3713 = vmul.f32 %v3609, %v3707
    %v3714 = vmul.f32 %v3610, %v3707
    %v3715 = vmul.f32 %v3611, %v3707
    %v3716 = vmul.f32 %v3612, %v3707
    %v3717 = vmul.f32 %v3613, %v3707
    %v3718 = vmul.f32 %v3614, %v3707
    %v3719 = vmul.f32 %v3615, %v3707
    %v3720 = vmul.f32 %v3616, %v3707
    %v3721 = vmul.f32 %v3617, %v3707
    %v3722 = vmul.f32 %v3618, %v3707
    %v3723 = vmul.f32 %v3619, %v3707
    %v3724 = vmul.f32 %v3620, %v3707
    %v3725 = vmul.f32 %v3621, %v3708
    %v3726 = vmul.f32 %v3622, %v3708
    %v3727 = vmul.f32 %v3623, %v3708
    %v3728 = vmul.f32 %v3624, %v3708
    %v3729 = vmul.f32 %v3625, %v3708
    %v3730 = vmul.f32 %v3626, %v3708
    %v3731 = vmul.f32 %v3627, %v3708
    %v3732 = vmul.f32 %v3628, %v3708
    %v3733 = vmul.f32 %v3629, %v3708
    %v3734 = vmul.f32 %v3630, %v3708
    %v3735 = vmul.f32 %v3631, %v3708
    %v3736 = vmul.f32 %v3632, %v3708
    %v3737 = vmul.f32 %v3633, %v3708
    %v3738 = vmul.f32 %v3634, %v3708
    %v3739 = vmul.f32 %v3635, %v3708
    %v3740 = vmul.f32 %v3636, %v3708
    %v3743 = vlaneseq
    %v3744 = vshrl.u32 %v3743, 7
    %v3745 = vsub.s32 0, %v3744
    %v3746 = vrot.slane %v3564, %v3745
    %v3747 = vlaneseq
    %v3748 = vshrl.u32 %v3747, 7
    %v3749 = vsub.s32 1, %v3748
    %v3750 = vrot.slane %v3564, %v3749
    %v3751 = vlaneseq
    %v3752 = vshrl.u32 %v3751, 7
    %v3753 = vsub.s32 2, %v3752
    %v3754 = vrot.slane %v3564, %v3753
    %v3755 = vlaneseq
    %v3756 = vshrl.u32 %v3755, 7
    %v3757 = vsub.s32 3, %v3756
    %v3758 = vrot.slane %v3564, %v3757
    %v3759 = vlaneseq
    %v3760 = vshrl.u32 %v3759, 7
    %v3761 = vsub.s32 4, %v3760
    %v3762 = vrot.slane %v3564, %v3761
    %v3763 = vlaneseq
    %v3764 = vshrl.u32 %v3763, 7
    %v3765 = vsub.s32 5, %v3764
    %v3766 = vrot.slane %v3564, %v3765
    %v3767 = vlaneseq
    %v3768 = vshrl.u32 %v3767, 7
    %v3769 = vsub.s32 6, %v3768
    %v3770 = vrot.slane %v3564, %v3769
    %v3771 = vlaneseq
    %v3772 = vshrl.u32 %v3771, 7
    %v3773 = vsub.s32 7, %v3772
    %v3774 = vrot.slane %v3564, %v3773
    %v3775 = vlaneseq
    %v3776 = vshrl.u32 %v3775, 7
    %v3777 = vsub.s32 0, %v3776
    %v3778 = vrot.slane %v3565, %v3777
    %v3779 = vlaneseq
    %v3780 = vshrl.u32 %v3779, 7
    %v3781 = vsub.s32 1, %v3780
    %v3782 = vrot.slane %v3565, %v3781
    %v3783 = vlaneseq
    %v3784 = vshrl.u32 %v3783, 7
    %v3785 = vsub.s32 2, %v3784
    %v3786 = vrot.slane %v3565, %v3785
    %v3787 = vlaneseq
    %v3788 = vshrl.u32 %v3787, 7
    %v3789 = vsub.s32 3, %v3788
    %v3790 = vrot.slane %v3565, %v3789
    %v3791 = vlaneseq
    %v3792 = vshrl.u32 %v3791, 7
    %v3793 = vsub.s32 4, %v3792
    %v3794 = vrot.slane %v3565, %v3793
    %v3795 = vlaneseq
    %v3796 = vshrl.u32 %v3795, 7
    %v3797 = vsub.s32 5, %v3796
    %v3798 = vrot.slane %v3565, %v3797
    %v3799 = vlaneseq
    %v3800 = vshrl.u32 %v3799, 7
    %v3801 = vsub.s32 6, %v3800
    %v3802 = vrot.slane %v3565, %v3801
    %v3803 = vlaneseq
    %v3804 = vshrl.u32 %v3803, 7
    %v3805 = vsub.s32 7, %v3804
    %v3806 = vrot.slane %v3565, %v3805
    %v3823 = vmul.f32 %v3709, %v3746
    %v3824 = vmul.f32 %v3710, %v3750
    %v3825 = vmul.f32 %v3711, %v3754
    %v3826 = vmul.f32 %v3712, %v3758
    %v3827 = vmul.f32 %v3713, %v3762
    %v3828 = vmul.f32 %v3714, %v3766
    %v3829 = vmul.f32 %v3715, %v3770
    %v3830 = vmul.f32 %v3716, %v3774
    %v3831 = vmul.f32 %v3717, %v3778
    %v3832 = vmul.f32 %v3718, %v3782
    %v3833 = vmul.f32 %v3719, %v3786
    %v3834 = vmul.f32 %v3720, %v3790
    %v3835 = vmul.f32 %v3721, %v3794
    %v3836 = vmul.f32 %v3722, %v3798
    %v3837 = vmul.f32 %v3723, %v3802
    %v3838 = vmul.f32 %v3724, %v3806
    %v3839 = vmul.f32 %v3725, %v3746
    %v3840 = vmul.f32 %v3726, %v3750
    %v3841 = vmul.f32 %v3727, %v3754
    %v3842 = vmul.f32 %v3728, %v3758
    %v3843 = vmul.f32 %v3729, %v3762
    %v3844 = vmul.f32 %v3730, %v3766
    %v3845 = vmul.f32 %v3731, %v3770
    %v3846 = vmul.f32 %v3732, %v3774
    %v3847 = vmul.f32 %v3733, %v3778
    %v3848 = vmul.f32 %v3734, %v3782
    %v3849 = vmul.f32 %v3735, %v3786
    %v3850 = vmul.f32 %v3736, %v3790
    %v3851 = vmul.f32 %v3737, %v3794
    %v3852 = vmul.f32 %v3738, %v3798
    %v3853 = vmul.f32 %v3739, %v3802
    %v3854 = vmul.f32 %v3740, %v3806
    %v3857 = vlaneseq
    %v3858 = vshrl.u32 %v3857, 7
    %v3859 = vsub.s32 0, %v3858
    %v3860 = vrot.slane %v3566, %v3859
    %v3861 = vlaneseq
    %v3862 = vshrl.u32 %v3861, 7
    %v3863 = vsub.s32 1, %v3862
    %v3864 = vrot.slane %v3566, %v3863
    %v3865 = vlaneseq
    %v3866 = vshrl.u32 %v3865, 7
    %v3867 = vsub.s32 2, %v3866
    %v3868 = vrot.slane %v3566, %v3867
    %v3869 = vlaneseq
    %v3870 = vshrl.u32 %v3869, 7
    %v3871 = vsub.s32 3, %v3870
    %v3872 = vrot.slane %v3566, %v3871
    %v3873 = vlaneseq
    %v3874 = vshrl.u32 %v3873, 7
    %v3875 = vsub.s32 4, %v3874
    %v3876 = vrot.slane %v3566, %v3875
    %v3877 = vlaneseq
    %v3878 = vshrl.u32 %v3877, 7
    %v3879 = vsub.s32 5, %v3878
    %v3880 = vrot.slane %v3566, %v3879
    %v3881 = vlaneseq
    %v3882 = vshrl.u32 %v3881, 7
    %v3883 = vsub.s32 6, %v3882
    %v3884 = vrot.slane %v3566, %v3883
    %v3885 = vlaneseq
    %v3886 = vshrl.u32 %v3885, 7
    %v3887 = vsub.s32 7, %v3886
    %v3888 = vrot.slane %v3566, %v3887
    %v3889 = vlaneseq
    %v3890 = vshrl.u32 %v3889, 7
    %v3891 = vsub.s32 0, %v3890
    %v3892 = vrot.slane %v3567, %v3891
    %v3893 = vlaneseq
    %v3894 = vshrl.u32 %v3893, 7
    %v3895 = vsub.s32 1, %v3894
    %v3896 = vrot.slane %v3567, %v3895
    %v3897 = vlaneseq
    %v3898 = vshrl.u32 %v3897, 7
    %v3899 = vsub.s32 2, %v3898
    %v3900 = vrot.slane %v3567, %v3899
    %v3901 = vlaneseq
    %v3902 = vshrl.u32 %v3901, 7
    %v3903 = vsub.s32 3, %v3902
    %v3904 = vrot.slane %v3567, %v3903
    %v3905 = vlaneseq
    %v3906 = vshrl.u32 %v3905, 7
    %v3907 = vsub.s32 4, %v3906
    %v3908 = vrot.slane %v3567, %v3907
    %v3909 = vlaneseq
    %v3910 = vshrl.u32 %v3909, 7
    %v3911 = vsub.s32 5, %v3910
    %v3912 = vrot.slane %v3567, %v3911
    %v3913 = vlaneseq
    %v3914 = vshrl.u32 %v3913, 7
    %v3915 = vsub.s32 6, %v3914
    %v3916 = vrot.slane %v3567, %v3915
    %v3917 = vlaneseq
    %v3918 = vshrl.u32 %v3917, 7
    %v3919 = vsub.s32 7, %v3918
    %v3920 = vrot.slane %v3567, %v3919
    %v3937 = vadd.f32 %v3823, %v3860
    %v3938 = vadd.f32 %v3824, %v3864
    %v3939 = vadd.f32 %v3825, %v3868
    %v3940 = vadd.f32 %v3826, %v3872
    %v3941 = vadd.f32 %v3827, %v3876
    %v3942 = vadd.f32 %v3828, %v3880
    %v3943 = vadd.f32 %v3829, %v3884
    %v3944 = vadd.f32 %v3830, %v3888
    %v3945 = vadd.f32 %v3831, %v3892
    %v3946 = vadd.f32 %v3832, %v3896
    %v3947 = vadd.f32 %v3833, %v3900
    %v3948 = vadd.f32 %v3834, %v3904
    %v3949 = vadd.f32 %v3835, %v3908
    %v3950 = vadd.f32 %v3836, %v3912
    %v3951 = vadd.f32 %v3837, %v3916
    %v3952 = vadd.f32 %v3838, %v3920
    %v3953 = vadd.f32 %v3839, %v3860
    %v3954 = vadd.f32 %v3840, %v3864
    %v3955 = vadd.f32 %v3841, %v3868
    %v3956 = vadd.f32 %v3842, %v3872
    %v3957 = vadd.f32 %v3843, %v3876
    %v3958 = vadd.f32 %v3844, %v3880
    %v3959 = vadd.f32 %v3845, %v3884
    %v3960 = vadd.f32 %v3846, %v3888
    %v3961 = vadd.f32 %v3847, %v3892
    %v3962 = vadd.f32 %v3848, %v3896
    %v3963 = vadd.f32 %v3849, %v3900
    %v3964 = vadd.f32 %v3850, %v3904
    %v3965 = vadd.f32 %v3851, %v3908
    %v3966 = vadd.f32 %v3852, %v3912
    %v3967 = vadd.f32 %v3853, %v3916
    %v3968 = vadd.f32 %v3854, %v3920
    %v3969 = vpack.c.bf16 %v3953, %v3937
    %v3970 = vpack.c.bf16 %v3954, %v3938
    %v3971 = vpack.c.bf16 %v3955, %v3939
    %v3972 = vpack.c.bf16 %v3956, %v3940
    %v3973 = vpack.c.bf16 %v3957, %v3941
    %v3974 = vpack.c.bf16 %v3958, %v3942
    %v3975 = vpack.c.bf16 %v3959, %v3943
    %v3976 = vpack.c.bf16 %v3960, %v3944
    %v3977 = vpack.c.bf16 %v3961, %v3945
    %v3978 = vpack.c.bf16 %v3962, %v3946
    %v3979 = vpack.c.bf16 %v3963, %v3947
    %v3980 = vpack.c.bf16 %v3964, %v3948
    %v3981 = vpack.c.bf16 %v3965, %v3949
    %v3982 = vpack.c.bf16 %v3966, %v3950
    %v3983 = vpack.c.bf16 %v3967, %v3951
    %v3984 = vpack.c.bf16 %v3968, %v3952
    %v3985 = vld [vmem:[#allocation13] sm:$0xff]
    %v3986 = vld [vmem:[#allocation13 + $0x8] sm:$0xff]
    %v3987 = vld [vmem:[#allocation13 + $0x10] sm:$0xff]
    %v3988 = vld [vmem:[#allocation13 + $0x18] sm:$0xff]
    %v3989 = vld [vmem:[#allocation13 + $0x20] sm:$0xff]
    %v3990 = vld [vmem:[#allocation13 + $0x28] sm:$0xff]
    %v3991 = vld [vmem:[#allocation13 + $0x30] sm:$0xff]
    %v3992 = vld [vmem:[#allocation13 + $0x38] sm:$0xff]
    %v3993 = vld [vmem:[#allocation13 + $0x40] sm:$0xff]
    %v3994 = vld [vmem:[#allocation13 + $0x48] sm:$0xff]
    %v3995 = vld [vmem:[#allocation13 + $0x50] sm:$0xff]
    %v3996 = vld [vmem:[#allocation13 + $0x58] sm:$0xff]
    %v3997 = vld [vmem:[#allocation13 + $0x60] sm:$0xff]
    %v3998 = vld [vmem:[#allocation13 + $0x68] sm:$0xff]
    %v3999 = vld [vmem:[#allocation13 + $0x70] sm:$0xff]
    %v4000 = vld [vmem:[#allocation13 + $0x78] sm:$0xff]
    %v4001 = vld [vmem:[#allocation13 + $0x80] sm:$0xff]
    %v4002 = vld [vmem:[#allocation13 + $0x88] sm:$0xff]
    %v4003 = vld [vmem:[#allocation13 + $0x90] sm:$0xff]
    %v4004 = vld [vmem:[#allocation13 + $0x98] sm:$0xff]
    %v4005 = vld [vmem:[#allocation13 + $0xa0] sm:$0xff]
    %v4006 = vld [vmem:[#allocation13 + $0xa8] sm:$0xff]
    %v4007 = vld [vmem:[#allocation13 + $0xb0] sm:$0xff]
    %v4008 = vld [vmem:[#allocation13 + $0xb8] sm:$0xff]
    %v4009 = vld [vmem:[#allocation13 + $0xc0] sm:$0xff]
    %v4010 = vld [vmem:[#allocation13 + $0xc8] sm:$0xff]
    %v4011 = vld [vmem:[#allocation13 + $0xd0] sm:$0xff]
    %v4012 = vld [vmem:[#allocation13 + $0xd8] sm:$0xff]
    %v4013 = vld [vmem:[#allocation13 + $0xe0] sm:$0xff]
    %v4014 = vld [vmem:[#allocation13 + $0xe8] sm:$0xff]
    %v4015 = vld [vmem:[#allocation13 + $0xf0] sm:$0xff]
    %v4016 = vld [vmem:[#allocation13 + $0xf8] sm:$0xff]
    %v4017 = vld [vmem:[#allocation13 + $0x100] sm:$0xff]
    %v4018 = vld [vmem:[#allocation13 + $0x108] sm:$0xff]
    %v4019 = vld [vmem:[#allocation13 + $0x110] sm:$0xff]
    %v4020 = vld [vmem:[#allocation13 + $0x118] sm:$0xff]
    %v4021 = vld [vmem:[#allocation13 + $0x120] sm:$0xff]
    %v4022 = vld [vmem:[#allocation13 + $0x128] sm:$0xff]
    %v4023 = vld [vmem:[#allocation13 + $0x130] sm:$0xff]
    %v4024 = vld [vmem:[#allocation13 + $0x138] sm:$0xff]
    %v4025 = vld [vmem:[#allocation13 + $0x140] sm:$0xff]
    %v4026 = vld [vmem:[#allocation13 + $0x148] sm:$0xff]
    %v4027 = vld [vmem:[#allocation13 + $0x150] sm:$0xff]
    %v4028 = vld [vmem:[#allocation13 + $0x158] sm:$0xff]
    %v4029 = vld [vmem:[#allocation13 + $0x160] sm:$0xff]
    %v4030 = vld [vmem:[#allocation13 + $0x168] sm:$0xff]
    %v4031 = vld [vmem:[#allocation13 + $0x170] sm:$0xff]
    %v4032 = vld [vmem:[#allocation13 + $0x178] sm:$0xff]
    %v4033 = vld [vmem:[#allocation13 + $0x180] sm:$0xff]
    %v4034 = vld [vmem:[#allocation13 + $0x188] sm:$0xff]
    %v4035 = vld [vmem:[#allocation13 + $0x190] sm:$0xff]
    %v4036 = vld [vmem:[#allocation13 + $0x198] sm:$0xff]
    %v4037 = vld [vmem:[#allocation13 + $0x1a0] sm:$0xff]
    %v4038 = vld [vmem:[#allocation13 + $0x1a8] sm:$0xff]
    %v4039 = vld [vmem:[#allocation13 + $0x1b0] sm:$0xff]
    %v4040 = vld [vmem:[#allocation13 + $0x1b8] sm:$0xff]
    %v4041 = vld [vmem:[#allocation13 + $0x1c0] sm:$0xff]
    %v4042 = vld [vmem:[#allocation13 + $0x1c8] sm:$0xff]
    %v4043 = vld [vmem:[#allocation13 + $0x1d0] sm:$0xff]
    %v4044 = vld [vmem:[#allocation13 + $0x1d8] sm:$0xff]
    %v4045 = vld [vmem:[#allocation13 + $0x1e0] sm:$0xff]
    %v4046 = vld [vmem:[#allocation13 + $0x1e8] sm:$0xff]
    %v4047 = vld [vmem:[#allocation13 + $0x1f0] sm:$0xff]
    %v4048 = vld [vmem:[#allocation13 + $0x1f8] sm:$0xff]
    %v4049 = vld [vmem:[#allocation13 + $0x200] sm:$0xff]
    %v4050 = vld [vmem:[#allocation13 + $0x208] sm:$0xff]
    %v4051 = vld [vmem:[#allocation13 + $0x210] sm:$0xff]
    %v4052 = vld [vmem:[#allocation13 + $0x218] sm:$0xff]
    %v4053 = vld [vmem:[#allocation13 + $0x220] sm:$0xff]
    %v4054 = vld [vmem:[#allocation13 + $0x228] sm:$0xff]
    %v4055 = vld [vmem:[#allocation13 + $0x230] sm:$0xff]
    %v4056 = vld [vmem:[#allocation13 + $0x238] sm:$0xff]
    %v4057 = vld [vmem:[#allocation13 + $0x240] sm:$0xff]
    %v4058 = vld [vmem:[#allocation13 + $0x248] sm:$0xff]
    %v4059 = vld [vmem:[#allocation13 + $0x250] sm:$0xff]
    %v4060 = vld [vmem:[#allocation13 + $0x258] sm:$0xff]
    %v4061 = vld [vmem:[#allocation13 + $0x260] sm:$0xff]
    %v4062 = vld [vmem:[#allocation13 + $0x268] sm:$0xff]
    %v4063 = vld [vmem:[#allocation13 + $0x270] sm:$0xff]
    %v4064 = vld [vmem:[#allocation13 + $0x278] sm:$0xff]
    %v4065 = vld [vmem:[#allocation13 + $0x280] sm:$0xff]
    %v4066 = vld [vmem:[#allocation13 + $0x288] sm:$0xff]
    %v4067 = vld [vmem:[#allocation13 + $0x290] sm:$0xff]
    %v4068 = vld [vmem:[#allocation13 + $0x298] sm:$0xff]
    %v4069 = vld [vmem:[#allocation13 + $0x2a0] sm:$0xff]
    %v4070 = vld [vmem:[#allocation13 + $0x2a8] sm:$0xff]
    %v4071 = vld [vmem:[#allocation13 + $0x2b0] sm:$0xff]
    %v4072 = vld [vmem:[#allocation13 + $0x2b8] sm:$0xff]
    %v4073 = vld [vmem:[#allocation13 + $0x2c0] sm:$0xff]
    %v4074 = vld [vmem:[#allocation13 + $0x2c8] sm:$0xff]
    %v4075 = vld [vmem:[#allocation13 + $0x2d0] sm:$0xff]
    %v4076 = vld [vmem:[#allocation13 + $0x2d8] sm:$0xff]
    %v4077 = vld [vmem:[#allocation13 + $0x2e0] sm:$0xff]
    %v4078 = vld [vmem:[#allocation13 + $0x2e8] sm:$0xff]
    %v4079 = vld [vmem:[#allocation13 + $0x2f0] sm:$0xff]
    %v4080 = vld [vmem:[#allocation13 + $0x2f8] sm:$0xff]
    %v4081 = vld [vmem:[#allocation13 + $0x300] sm:$0xff]
    %v4082 = vld [vmem:[#allocation13 + $0x308] sm:$0xff]
    %v4083 = vld [vmem:[#allocation13 + $0x310] sm:$0xff]
    %v4084 = vld [vmem:[#allocation13 + $0x318] sm:$0xff]
    %v4085 = vld [vmem:[#allocation13 + $0x320] sm:$0xff]
    %v4086 = vld [vmem:[#allocation13 + $0x328] sm:$0xff]
    %v4087 = vld [vmem:[#allocation13 + $0x330] sm:$0xff]
    %v4088 = vld [vmem:[#allocation13 + $0x338] sm:$0xff]
    %v4089 = vld [vmem:[#allocation13 + $0x340] sm:$0xff]
    %v4090 = vld [vmem:[#allocation13 + $0x348] sm:$0xff]
    %v4091 = vld [vmem:[#allocation13 + $0x350] sm:$0xff]
    %v4092 = vld [vmem:[#allocation13 + $0x358] sm:$0xff]
    %v4093 = vld [vmem:[#allocation13 + $0x360] sm:$0xff]
    %v4094 = vld [vmem:[#allocation13 + $0x368] sm:$0xff]
    %v4095 = vld [vmem:[#allocation13 + $0x370] sm:$0xff]
    %v4096 = vld [vmem:[#allocation13 + $0x378] sm:$0xff]
    %v4097 = vld [vmem:[#allocation13 + $0x380] sm:$0xff]
    %v4098 = vld [vmem:[#allocation13 + $0x388] sm:$0xff]
    %v4099 = vld [vmem:[#allocation13 + $0x390] sm:$0xff]
    %v4100 = vld [vmem:[#allocation13 + $0x398] sm:$0xff]
    %v4101 = vld [vmem:[#allocation13 + $0x3a0] sm:$0xff]
    %v4102 = vld [vmem:[#allocation13 + $0x3a8] sm:$0xff]
    %v4103 = vld [vmem:[#allocation13 + $0x3b0] sm:$0xff]
    %v4104 = vld [vmem:[#allocation13 + $0x3b8] sm:$0xff]
    %v4105 = vld [vmem:[#allocation13 + $0x3c0] sm:$0xff]
    %v4106 = vld [vmem:[#allocation13 + $0x3c8] sm:$0xff]
    %v4107 = vld [vmem:[#allocation13 + $0x3d0] sm:$0xff]
    %v4108 = vld [vmem:[#allocation13 + $0x3d8] sm:$0xff]
    %v4109 = vld [vmem:[#allocation13 + $0x3e0] sm:$0xff]
    %v4110 = vld [vmem:[#allocation13 + $0x3e8] sm:$0xff]
    %v4111 = vld [vmem:[#allocation13 + $0x3f0] sm:$0xff]
    %v4112 = vld [vmem:[#allocation13 + $0x3f8] sm:$0xff]
    %v4113 = vld [vmem:[#allocation13 + $0x400] sm:$0xff]
    %v4114 = vld [vmem:[#allocation13 + $0x408] sm:$0xff]
    %v4115 = vld [vmem:[#allocation13 + $0x410] sm:$0xff]
    %v4116 = vld [vmem:[#allocation13 + $0x418] sm:$0xff]
    %v4117 = vld [vmem:[#allocation13 + $0x420] sm:$0xff]
    %v4118 = vld [vmem:[#allocation13 + $0x428] sm:$0xff]
    %v4119 = vld [vmem:[#allocation13 + $0x430] sm:$0xff]
    %v4120 = vld [vmem:[#allocation13 + $0x438] sm:$0xff]
    %v4121 = vld [vmem:[#allocation13 + $0x440] sm:$0xff]
    %v4122 = vld [vmem:[#allocation13 + $0x448] sm:$0xff]
    %v4123 = vld [vmem:[#allocation13 + $0x450] sm:$0xff]
    %v4124 = vld [vmem:[#allocation13 + $0x458] sm:$0xff]
    %v4125 = vld [vmem:[#allocation13 + $0x460] sm:$0xff]
    %v4126 = vld [vmem:[#allocation13 + $0x468] sm:$0xff]
    %v4127 = vld [vmem:[#allocation13 + $0x470] sm:$0xff]
    %v4128 = vld [vmem:[#allocation13 + $0x478] sm:$0xff]
    %v4129 = vld [vmem:[#allocation13 + $0x480] sm:$0xff]
    %v4130 = vld [vmem:[#allocation13 + $0x488] sm:$0xff]
    %v4131 = vld [vmem:[#allocation13 + $0x490] sm:$0xff]
    %v4132 = vld [vmem:[#allocation13 + $0x498] sm:$0xff]
    %v4133 = vld [vmem:[#allocation13 + $0x4a0] sm:$0xff]
    %v4134 = vld [vmem:[#allocation13 + $0x4a8] sm:$0xff]
    %v4135 = vld [vmem:[#allocation13 + $0x4b0] sm:$0xff]
    %v4136 = vld [vmem:[#allocation13 + $0x4b8] sm:$0xff]
    %v4137 = vld [vmem:[#allocation13 + $0x4c0] sm:$0xff]
    %v4138 = vld [vmem:[#allocation13 + $0x4c8] sm:$0xff]
    %v4139 = vld [vmem:[#allocation13 + $0x4d0] sm:$0xff]
    %v4140 = vld [vmem:[#allocation13 + $0x4d8] sm:$0xff]
    %v4141 = vld [vmem:[#allocation13 + $0x4e0] sm:$0xff]
    %v4142 = vld [vmem:[#allocation13 + $0x4e8] sm:$0xff]
    %v4143 = vld [vmem:[#allocation13 + $0x4f0] sm:$0xff]
    %v4144 = vld [vmem:[#allocation13 + $0x4f8] sm:$0xff]
    %v4145 = vld [vmem:[#allocation13 + $0x500] sm:$0xff]
    %v4146 = vld [vmem:[#allocation13 + $0x508] sm:$0xff]
    %v4147 = vld [vmem:[#allocation13 + $0x510] sm:$0xff]
    %v4148 = vld [vmem:[#allocation13 + $0x518] sm:$0xff]
    %v4149 = vld [vmem:[#allocation13 + $0x520] sm:$0xff]
    %v4150 = vld [vmem:[#allocation13 + $0x528] sm:$0xff]
    %v4151 = vld [vmem:[#allocation13 + $0x530] sm:$0xff]
    %v4152 = vld [vmem:[#allocation13 + $0x538] sm:$0xff]
    %v4153 = vld [vmem:[#allocation13 + $0x540] sm:$0xff]
    %v4154 = vld [vmem:[#allocation13 + $0x548] sm:$0xff]
    %v4155 = vld [vmem:[#allocation13 + $0x550] sm:$0xff]
    %v4156 = vld [vmem:[#allocation13 + $0x558] sm:$0xff]
    %v4157 = vld [vmem:[#allocation13 + $0x560] sm:$0xff]
    %v4158 = vld [vmem:[#allocation13 + $0x568] sm:$0xff]
    %v4159 = vld [vmem:[#allocation13 + $0x570] sm:$0xff]
    %v4160 = vld [vmem:[#allocation13 + $0x578] sm:$0xff]
    %v4161 = vld [vmem:[#allocation13 + $0x580] sm:$0xff]
    %v4162 = vld [vmem:[#allocation13 + $0x588] sm:$0xff]
    %v4163 = vld [vmem:[#allocation13 + $0x590] sm:$0xff]
    %v4164 = vld [vmem:[#allocation13 + $0x598] sm:$0xff]
    %v4165 = vld [vmem:[#allocation13 + $0x5a0] sm:$0xff]
    %v4166 = vld [vmem:[#allocation13 + $0x5a8] sm:$0xff]
    %v4167 = vld [vmem:[#allocation13 + $0x5b0] sm:$0xff]
    %v4168 = vld [vmem:[#allocation13 + $0x5b8] sm:$0xff]
    %v4169 = vld [vmem:[#allocation13 + $0x5c0] sm:$0xff]
    %v4170 = vld [vmem:[#allocation13 + $0x5c8] sm:$0xff]
    %v4171 = vld [vmem:[#allocation13 + $0x5d0] sm:$0xff]
    %v4172 = vld [vmem:[#allocation13 + $0x5d8] sm:$0xff]
    %v4173 = vld [vmem:[#allocation13 + $0x5e0] sm:$0xff]
    %v4174 = vld [vmem:[#allocation13 + $0x5e8] sm:$0xff]
    %v4175 = vld [vmem:[#allocation13 + $0x5f0] sm:$0xff]
    %v4176 = vld [vmem:[#allocation13 + $0x5f8] sm:$0xff]
    %v4177 = vld [vmem:[#allocation13 + $0x600] sm:$0xff]
    %v4178 = vld [vmem:[#allocation13 + $0x608] sm:$0xff]
    %v4179 = vld [vmem:[#allocation13 + $0x610] sm:$0xff]
    %v4180 = vld [vmem:[#allocation13 + $0x618] sm:$0xff]
    %v4181 = vld [vmem:[#allocation13 + $0x620] sm:$0xff]
    %v4182 = vld [vmem:[#allocation13 + $0x628] sm:$0xff]
    %v4183 = vld [vmem:[#allocation13 + $0x630] sm:$0xff]
    %v4184 = vld [vmem:[#allocation13 + $0x638] sm:$0xff]
    %v4185 = vld [vmem:[#allocation13 + $0x640] sm:$0xff]
    %v4186 = vld [vmem:[#allocation13 + $0x648] sm:$0xff]
    %v4187 = vld [vmem:[#allocation13 + $0x650] sm:$0xff]
    %v4188 = vld [vmem:[#allocation13 + $0x658] sm:$0xff]
    %v4189 = vld [vmem:[#allocation13 + $0x660] sm:$0xff]
    %v4190 = vld [vmem:[#allocation13 + $0x668] sm:$0xff]
    %v4191 = vld [vmem:[#allocation13 + $0x670] sm:$0xff]
    %v4192 = vld [vmem:[#allocation13 + $0x678] sm:$0xff]
    %v4193 = vld [vmem:[#allocation13 + $0x680] sm:$0xff]
    %v4194 = vld [vmem:[#allocation13 + $0x688] sm:$0xff]
    %v4195 = vld [vmem:[#allocation13 + $0x690] sm:$0xff]
    %v4196 = vld [vmem:[#allocation13 + $0x698] sm:$0xff]
    %v4197 = vld [vmem:[#allocation13 + $0x6a0] sm:$0xff]
    %v4198 = vld [vmem:[#allocation13 + $0x6a8] sm:$0xff]
    %v4199 = vld [vmem:[#allocation13 + $0x6b0] sm:$0xff]
    %v4200 = vld [vmem:[#allocation13 + $0x6b8] sm:$0xff]
    %v4201 = vld [vmem:[#allocation13 + $0x6c0] sm:$0xff]
    %v4202 = vld [vmem:[#allocation13 + $0x6c8] sm:$0xff]
    %v4203 = vld [vmem:[#allocation13 + $0x6d0] sm:$0xff]
    %v4204 = vld [vmem:[#allocation13 + $0x6d8] sm:$0xff]
    %v4205 = vld [vmem:[#allocation13 + $0x6e0] sm:$0xff]
    %v4206 = vld [vmem:[#allocation13 + $0x6e8] sm:$0xff]
    %v4207 = vld [vmem:[#allocation13 + $0x6f0] sm:$0xff]
    %v4208 = vld [vmem:[#allocation13 + $0x6f8] sm:$0xff]
    %v4209 = vld [vmem:[#allocation13 + $0x700] sm:$0xff]
    %v4210 = vld [vmem:[#allocation13 + $0x708] sm:$0xff]
    %v4211 = vld [vmem:[#allocation13 + $0x710] sm:$0xff]
    %v4212 = vld [vmem:[#allocation13 + $0x718] sm:$0xff]
    %v4213 = vld [vmem:[#allocation13 + $0x720] sm:$0xff]
    %v4214 = vld [vmem:[#allocation13 + $0x728] sm:$0xff]
    %v4215 = vld [vmem:[#allocation13 + $0x730] sm:$0xff]
    %v4216 = vld [vmem:[#allocation13 + $0x738] sm:$0xff]
    %v4217 = vld [vmem:[#allocation13 + $0x740] sm:$0xff]
    %v4218 = vld [vmem:[#allocation13 + $0x748] sm:$0xff]
    %v4219 = vld [vmem:[#allocation13 + $0x750] sm:$0xff]
    %v4220 = vld [vmem:[#allocation13 + $0x758] sm:$0xff]
    %v4221 = vld [vmem:[#allocation13 + $0x760] sm:$0xff]
    %v4222 = vld [vmem:[#allocation13 + $0x768] sm:$0xff]
    %v4223 = vld [vmem:[#allocation13 + $0x770] sm:$0xff]
    %v4224 = vld [vmem:[#allocation13 + $0x778] sm:$0xff]
    %v4225 = vld [vmem:[#allocation13 + $0x780] sm:$0xff]
    %v4226 = vld [vmem:[#allocation13 + $0x788] sm:$0xff]
    %v4227 = vld [vmem:[#allocation13 + $0x790] sm:$0xff]
    %v4228 = vld [vmem:[#allocation13 + $0x798] sm:$0xff]
    %v4229 = vld [vmem:[#allocation13 + $0x7a0] sm:$0xff]
    %v4230 = vld [vmem:[#allocation13 + $0x7a8] sm:$0xff]
    %v4231 = vld [vmem:[#allocation13 + $0x7b0] sm:$0xff]
    %v4232 = vld [vmem:[#allocation13 + $0x7b8] sm:$0xff]
    %v4233 = vld [vmem:[#allocation13 + $0x7c0] sm:$0xff]
    %v4234 = vld [vmem:[#allocation13 + $0x7c8] sm:$0xff]
    %v4235 = vld [vmem:[#allocation13 + $0x7d0] sm:$0xff]
    %v4236 = vld [vmem:[#allocation13 + $0x7d8] sm:$0xff]
    %v4237 = vld [vmem:[#allocation13 + $0x7e0] sm:$0xff]
    %v4238 = vld [vmem:[#allocation13 + $0x7e8] sm:$0xff]
    %v4239 = vld [vmem:[#allocation13 + $0x7f0] sm:$0xff]
    %v4240 = vld [vmem:[#allocation13 + $0x7f8] sm:$0xff]
    %v4241 = vld [vmem:[#allocation13 + $0x800] sm:$0xff]
    %v4242 = vld [vmem:[#allocation13 + $0x808] sm:$0xff]
    %v4243 = vld [vmem:[#allocation13 + $0x810] sm:$0xff]
    %v4244 = vld [vmem:[#allocation13 + $0x818] sm:$0xff]
    %v4245 = vld [vmem:[#allocation13 + $0x820] sm:$0xff]
    %v4246 = vld [vmem:[#allocation13 + $0x828] sm:$0xff]
    %v4247 = vld [vmem:[#allocation13 + $0x830] sm:$0xff]
    %v4248 = vld [vmem:[#allocation13 + $0x838] sm:$0xff]
    %v4249 = vld [vmem:[#allocation13 + $0x840] sm:$0xff]
    %v4250 = vld [vmem:[#allocation13 + $0x848] sm:$0xff]
    %v4251 = vld [vmem:[#allocation13 + $0x850] sm:$0xff]
    %v4252 = vld [vmem:[#allocation13 + $0x858] sm:$0xff]
    %v4253 = vld [vmem:[#allocation13 + $0x860] sm:$0xff]
    %v4254 = vld [vmem:[#allocation13 + $0x868] sm:$0xff]
    %v4255 = vld [vmem:[#allocation13 + $0x870] sm:$0xff]
    %v4256 = vld [vmem:[#allocation13 + $0x878] sm:$0xff]
    %v4257 = vld [vmem:[#allocation13 + $0x880] sm:$0xff]
    %v4258 = vld [vmem:[#allocation13 + $0x888] sm:$0xff]
    %v4259 = vld [vmem:[#allocation13 + $0x890] sm:$0xff]
    %v4260 = vld [vmem:[#allocation13 + $0x898] sm:$0xff]
    %v4261 = vld [vmem:[#allocation13 + $0x8a0] sm:$0xff]
    %v4262 = vld [vmem:[#allocation13 + $0x8a8] sm:$0xff]
    %v4263 = vld [vmem:[#allocation13 + $0x8b0] sm:$0xff]
    %v4264 = vld [vmem:[#allocation13 + $0x8b8] sm:$0xff]
    %v4265 = vld [vmem:[#allocation13 + $0x8c0] sm:$0xff]
    %v4266 = vld [vmem:[#allocation13 + $0x8c8] sm:$0xff]
    %v4267 = vld [vmem:[#allocation13 + $0x8d0] sm:$0xff]
    %v4268 = vld [vmem:[#allocation13 + $0x8d8] sm:$0xff]
    %v4269 = vld [vmem:[#allocation13 + $0x8e0] sm:$0xff]
    %v4270 = vld [vmem:[#allocation13 + $0x8e8] sm:$0xff]
    %v4271 = vld [vmem:[#allocation13 + $0x8f0] sm:$0xff]
    %v4272 = vld [vmem:[#allocation13 + $0x8f8] sm:$0xff]
    %v4273 = vld [vmem:[#allocation13 + $0x900] sm:$0xff]
    %v4274 = vld [vmem:[#allocation13 + $0x908] sm:$0xff]
    %v4275 = vld [vmem:[#allocation13 + $0x910] sm:$0xff]
    %v4276 = vld [vmem:[#allocation13 + $0x918] sm:$0xff]
    %v4277 = vld [vmem:[#allocation13 + $0x920] sm:$0xff]
    %v4278 = vld [vmem:[#allocation13 + $0x928] sm:$0xff]
    %v4279 = vld [vmem:[#allocation13 + $0x930] sm:$0xff]
    %v4280 = vld [vmem:[#allocation13 + $0x938] sm:$0xff]
    %v4281 = vld [vmem:[#allocation13 + $0x940] sm:$0xff]
    %v4282 = vld [vmem:[#allocation13 + $0x948] sm:$0xff]
    %v4283 = vld [vmem:[#allocation13 + $0x950] sm:$0xff]
    %v4284 = vld [vmem:[#allocation13 + $0x958] sm:$0xff]
    %v4285 = vld [vmem:[#allocation13 + $0x960] sm:$0xff]
    %v4286 = vld [vmem:[#allocation13 + $0x968] sm:$0xff]
    %v4287 = vld [vmem:[#allocation13 + $0x970] sm:$0xff]
    %v4288 = vld [vmem:[#allocation13 + $0x978] sm:$0xff]
    %v4289 = vld [vmem:[#allocation13 + $0x980] sm:$0xff]
    %v4290 = vld [vmem:[#allocation13 + $0x988] sm:$0xff]
    %v4291 = vld [vmem:[#allocation13 + $0x990] sm:$0xff]
    %v4292 = vld [vmem:[#allocation13 + $0x998] sm:$0xff]
    %v4293 = vld [vmem:[#allocation13 + $0x9a0] sm:$0xff]
    %v4294 = vld [vmem:[#allocation13 + $0x9a8] sm:$0xff]
    %v4295 = vld [vmem:[#allocation13 + $0x9b0] sm:$0xff]
    %v4296 = vld [vmem:[#allocation13 + $0x9b8] sm:$0xff]
    %v4297 = vld [vmem:[#allocation13 + $0x9c0] sm:$0xff]
    %v4298 = vld [vmem:[#allocation13 + $0x9c8] sm:$0xff]
    %v4299 = vld [vmem:[#allocation13 + $0x9d0] sm:$0xff]
    %v4300 = vld [vmem:[#allocation13 + $0x9d8] sm:$0xff]
    %v4301 = vld [vmem:[#allocation13 + $0x9e0] sm:$0xff]
    %v4302 = vld [vmem:[#allocation13 + $0x9e8] sm:$0xff]
    %v4303 = vld [vmem:[#allocation13 + $0x9f0] sm:$0xff]
    %v4304 = vld [vmem:[#allocation13 + $0x9f8] sm:$0xff]
    %v4305 = vld [vmem:[#allocation13 + $0xa00] sm:$0xff]
    %v4306 = vld [vmem:[#allocation13 + $0xa08] sm:$0xff]
    %v4307 = vld [vmem:[#allocation13 + $0xa10] sm:$0xff]
    %v4308 = vld [vmem:[#allocation13 + $0xa18] sm:$0xff]
    %v4309 = vld [vmem:[#allocation13 + $0xa20] sm:$0xff]
    %v4310 = vld [vmem:[#allocation13 + $0xa28] sm:$0xff]
    %v4311 = vld [vmem:[#allocation13 + $0xa30] sm:$0xff]
    %v4312 = vld [vmem:[#allocation13 + $0xa38] sm:$0xff]
    %v4313 = vld [vmem:[#allocation13 + $0xa40] sm:$0xff]
    %v4314 = vld [vmem:[#allocation13 + $0xa48] sm:$0xff]
    %v4315 = vld [vmem:[#allocation13 + $0xa50] sm:$0xff]
    %v4316 = vld [vmem:[#allocation13 + $0xa58] sm:$0xff]
    %v4317 = vld [vmem:[#allocation13 + $0xa60] sm:$0xff]
    %v4318 = vld [vmem:[#allocation13 + $0xa68] sm:$0xff]
    %v4319 = vld [vmem:[#allocation13 + $0xa70] sm:$0xff]
    %v4320 = vld [vmem:[#allocation13 + $0xa78] sm:$0xff]
    %v4321 = vld [vmem:[#allocation13 + $0xa80] sm:$0xff]
    %v4322 = vld [vmem:[#allocation13 + $0xa88] sm:$0xff]
    %v4323 = vld [vmem:[#allocation13 + $0xa90] sm:$0xff]
    %v4324 = vld [vmem:[#allocation13 + $0xa98] sm:$0xff]
    %v4325 = vld [vmem:[#allocation13 + $0xaa0] sm:$0xff]
    %v4326 = vld [vmem:[#allocation13 + $0xaa8] sm:$0xff]
    %v4327 = vld [vmem:[#allocation13 + $0xab0] sm:$0xff]
    %v4328 = vld [vmem:[#allocation13 + $0xab8] sm:$0xff]
    %v4329 = vld [vmem:[#allocation13 + $0xac0] sm:$0xff]
    %v4330 = vld [vmem:[#allocation13 + $0xac8] sm:$0xff]
    %v4331 = vld [vmem:[#allocation13 + $0xad0] sm:$0xff]
    %v4332 = vld [vmem:[#allocation13 + $0xad8] sm:$0xff]
    %v4333 = vld [vmem:[#allocation13 + $0xae0] sm:$0xff]
    %v4334 = vld [vmem:[#allocation13 + $0xae8] sm:$0xff]
    %v4335 = vld [vmem:[#allocation13 + $0xaf0] sm:$0xff]
    %v4336 = vld [vmem:[#allocation13 + $0xaf8] sm:$0xff]
    %v4337 = vld [vmem:[#allocation13 + $0xb00] sm:$0xff]
    %v4338 = vld [vmem:[#allocation13 + $0xb08] sm:$0xff]
    %v4339 = vld [vmem:[#allocation13 + $0xb10] sm:$0xff]
    %v4340 = vld [vmem:[#allocation13 + $0xb18] sm:$0xff]
    %v4341 = vld [vmem:[#allocation13 + $0xb20] sm:$0xff]
    %v4342 = vld [vmem:[#allocation13 + $0xb28] sm:$0xff]
    %v4343 = vld [vmem:[#allocation13 + $0xb30] sm:$0xff]
    %v4344 = vld [vmem:[#allocation13 + $0xb38] sm:$0xff]
    %v4345 = vld [vmem:[#allocation13 + $0xb40] sm:$0xff]
    %v4346 = vld [vmem:[#allocation13 + $0xb48] sm:$0xff]
    %v4347 = vld [vmem:[#allocation13 + $0xb50] sm:$0xff]
    %v4348 = vld [vmem:[#allocation13 + $0xb58] sm:$0xff]
    %v4349 = vld [vmem:[#allocation13 + $0xb60] sm:$0xff]
    %v4350 = vld [vmem:[#allocation13 + $0xb68] sm:$0xff]
    %v4351 = vld [vmem:[#allocation13 + $0xb70] sm:$0xff]
    %v4352 = vld [vmem:[#allocation13 + $0xb78] sm:$0xff]
    %v4353 = vld [vmem:[#allocation13 + $0xb80] sm:$0xff]
    %v4354 = vld [vmem:[#allocation13 + $0xb88] sm:$0xff]
    %v4355 = vld [vmem:[#allocation13 + $0xb90] sm:$0xff]
    %v4356 = vld [vmem:[#allocation13 + $0xb98] sm:$0xff]
    %v4357 = vld [vmem:[#allocation13 + $0xba0] sm:$0xff]
    %v4358 = vld [vmem:[#allocation13 + $0xba8] sm:$0xff]
    %v4359 = vld [vmem:[#allocation13 + $0xbb0] sm:$0xff]
    %v4360 = vld [vmem:[#allocation13 + $0xbb8] sm:$0xff]
    %v4361 = vld [vmem:[#allocation13 + $0xbc0] sm:$0xff]
    %v4362 = vld [vmem:[#allocation13 + $0xbc8] sm:$0xff]
    %v4363 = vld [vmem:[#allocation13 + $0xbd0] sm:$0xff]
    %v4364 = vld [vmem:[#allocation13 + $0xbd8] sm:$0xff]
    %v4365 = vld [vmem:[#allocation13 + $0xbe0] sm:$0xff]
    %v4366 = vld [vmem:[#allocation13 + $0xbe8] sm:$0xff]
    %v4367 = vld [vmem:[#allocation13 + $0xbf0] sm:$0xff]
    %v4368 = vld [vmem:[#allocation13 + $0xbf8] sm:$0xff]
    %v4369 = vld [vmem:[#allocation13 + $0xc00] sm:$0xff]
    %v4370 = vld [vmem:[#allocation13 + $0xc08] sm:$0xff]
    %v4371 = vld [vmem:[#allocation13 + $0xc10] sm:$0xff]
    %v4372 = vld [vmem:[#allocation13 + $0xc18] sm:$0xff]
    %v4373 = vld [vmem:[#allocation13 + $0xc20] sm:$0xff]
    %v4374 = vld [vmem:[#allocation13 + $0xc28] sm:$0xff]
    %v4375 = vld [vmem:[#allocation13 + $0xc30] sm:$0xff]
    %v4376 = vld [vmem:[#allocation13 + $0xc38] sm:$0xff]
    %v4377 = vld [vmem:[#allocation13 + $0xc40] sm:$0xff]
    %v4378 = vld [vmem:[#allocation13 + $0xc48] sm:$0xff]
    %v4379 = vld [vmem:[#allocation13 + $0xc50] sm:$0xff]
    %v4380 = vld [vmem:[#allocation13 + $0xc58] sm:$0xff]
    %v4381 = vld [vmem:[#allocation13 + $0xc60] sm:$0xff]
    %v4382 = vld [vmem:[#allocation13 + $0xc68] sm:$0xff]
    %v4383 = vld [vmem:[#allocation13 + $0xc70] sm:$0xff]
    %v4384 = vld [vmem:[#allocation13 + $0xc78] sm:$0xff]
    %v4385 = vld [vmem:[#allocation13 + $0xc80] sm:$0xff]
    %v4386 = vld [vmem:[#allocation13 + $0xc88] sm:$0xff]
    %v4387 = vld [vmem:[#allocation13 + $0xc90] sm:$0xff]
    %v4388 = vld [vmem:[#allocation13 + $0xc98] sm:$0xff]
    %v4389 = vld [vmem:[#allocation13 + $0xca0] sm:$0xff]
    %v4390 = vld [vmem:[#allocation13 + $0xca8] sm:$0xff]
    %v4391 = vld [vmem:[#allocation13 + $0xcb0] sm:$0xff]
    %v4392 = vld [vmem:[#allocation13 + $0xcb8] sm:$0xff]
    %v4393 = vld [vmem:[#allocation13 + $0xcc0] sm:$0xff]
    %v4394 = vld [vmem:[#allocation13 + $0xcc8] sm:$0xff]
    %v4395 = vld [vmem:[#allocation13 + $0xcd0] sm:$0xff]
    %v4396 = vld [vmem:[#allocation13 + $0xcd8] sm:$0xff]
    %v4397 = vld [vmem:[#allocation13 + $0xce0] sm:$0xff]
    %v4398 = vld [vmem:[#allocation13 + $0xce8] sm:$0xff]
    %v4399 = vld [vmem:[#allocation13 + $0xcf0] sm:$0xff]
    %v4400 = vld [vmem:[#allocation13 + $0xcf8] sm:$0xff]
    %v4401 = vld [vmem:[#allocation13 + $0xd00] sm:$0xff]
    %v4402 = vld [vmem:[#allocation13 + $0xd08] sm:$0xff]
    %v4403 = vld [vmem:[#allocation13 + $0xd10] sm:$0xff]
    %v4404 = vld [vmem:[#allocation13 + $0xd18] sm:$0xff]
    %v4405 = vld [vmem:[#allocation13 + $0xd20] sm:$0xff]
    %v4406 = vld [vmem:[#allocation13 + $0xd28] sm:$0xff]
    %v4407 = vld [vmem:[#allocation13 + $0xd30] sm:$0xff]
    %v4408 = vld [vmem:[#allocation13 + $0xd38] sm:$0xff]
    %v4409 = vld [vmem:[#allocation13 + $0xd40] sm:$0xff]
    %v4410 = vld [vmem:[#allocation13 + $0xd48] sm:$0xff]
    %v4411 = vld [vmem:[#allocation13 + $0xd50] sm:$0xff]
    %v4412 = vld [vmem:[#allocation13 + $0xd58] sm:$0xff]
    %v4413 = vld [vmem:[#allocation13 + $0xd60] sm:$0xff]
    %v4414 = vld [vmem:[#allocation13 + $0xd68] sm:$0xff]
    %v4415 = vld [vmem:[#allocation13 + $0xd70] sm:$0xff]
    %v4416 = vld [vmem:[#allocation13 + $0xd78] sm:$0xff]
    %v4417 = vld [vmem:[#allocation13 + $0xd80] sm:$0xff]
    %v4418 = vld [vmem:[#allocation13 + $0xd88] sm:$0xff]
    %v4419 = vld [vmem:[#allocation13 + $0xd90] sm:$0xff]
    %v4420 = vld [vmem:[#allocation13 + $0xd98] sm:$0xff]
    %v4421 = vld [vmem:[#allocation13 + $0xda0] sm:$0xff]
    %v4422 = vld [vmem:[#allocation13 + $0xda8] sm:$0xff]
    %v4423 = vld [vmem:[#allocation13 + $0xdb0] sm:$0xff]
    %v4424 = vld [vmem:[#allocation13 + $0xdb8] sm:$0xff]
    %v4425 = vld [vmem:[#allocation13 + $0xdc0] sm:$0xff]
    %v4426 = vld [vmem:[#allocation13 + $0xdc8] sm:$0xff]
    %v4427 = vld [vmem:[#allocation13 + $0xdd0] sm:$0xff]
    %v4428 = vld [vmem:[#allocation13 + $0xdd8] sm:$0xff]
    %v4429 = vld [vmem:[#allocation13 + $0xde0] sm:$0xff]
    %v4430 = vld [vmem:[#allocation13 + $0xde8] sm:$0xff]
    %v4431 = vld [vmem:[#allocation13 + $0xdf0] sm:$0xff]
    %v4432 = vld [vmem:[#allocation13 + $0xdf8] sm:$0xff]
    %v4433 = vld [vmem:[#allocation13 + $0xe00] sm:$0xff]
    %v4434 = vld [vmem:[#allocation13 + $0xe08] sm:$0xff]
    %v4435 = vld [vmem:[#allocation13 + $0xe10] sm:$0xff]
    %v4436 = vld [vmem:[#allocation13 + $0xe18] sm:$0xff]
    %v4437 = vld [vmem:[#allocation13 + $0xe20] sm:$0xff]
    %v4438 = vld [vmem:[#allocation13 + $0xe28] sm:$0xff]
    %v4439 = vld [vmem:[#allocation13 + $0xe30] sm:$0xff]
    %v4440 = vld [vmem:[#allocation13 + $0xe38] sm:$0xff]
    %v4441 = vld [vmem:[#allocation13 + $0xe40] sm:$0xff]
    %v4442 = vld [vmem:[#allocation13 + $0xe48] sm:$0xff]
    %v4443 = vld [vmem:[#allocation13 + $0xe50] sm:$0xff]
    %v4444 = vld [vmem:[#allocation13 + $0xe58] sm:$0xff]
    %v4445 = vld [vmem:[#allocation13 + $0xe60] sm:$0xff]
    %v4446 = vld [vmem:[#allocation13 + $0xe68] sm:$0xff]
    %v4447 = vld [vmem:[#allocation13 + $0xe70] sm:$0xff]
    %v4448 = vld [vmem:[#allocation13 + $0xe78] sm:$0xff]
    %v4449 = vld [vmem:[#allocation13 + $0xe80] sm:$0xff]
    %v4450 = vld [vmem:[#allocation13 + $0xe88] sm:$0xff]
    %v4451 = vld [vmem:[#allocation13 + $0xe90] sm:$0xff]
    %v4452 = vld [vmem:[#allocation13 + $0xe98] sm:$0xff]
    %v4453 = vld [vmem:[#allocation13 + $0xea0] sm:$0xff]
    %v4454 = vld [vmem:[#allocation13 + $0xea8] sm:$0xff]
    %v4455 = vld [vmem:[#allocation13 + $0xeb0] sm:$0xff]
    %v4456 = vld [vmem:[#allocation13 + $0xeb8] sm:$0xff]
    %v4457 = vld [vmem:[#allocation13 + $0xec0] sm:$0xff]
    %v4458 = vld [vmem:[#allocation13 + $0xec8] sm:$0xff]
    %v4459 = vld [vmem:[#allocation13 + $0xed0] sm:$0xff]
    %v4460 = vld [vmem:[#allocation13 + $0xed8] sm:$0xff]
    %v4461 = vld [vmem:[#allocation13 + $0xee0] sm:$0xff]
    %v4462 = vld [vmem:[#allocation13 + $0xee8] sm:$0xff]
    %v4463 = vld [vmem:[#allocation13 + $0xef0] sm:$0xff]
    %v4464 = vld [vmem:[#allocation13 + $0xef8] sm:$0xff]
    %v4465 = vld [vmem:[#allocation13 + $0xf00] sm:$0xff]
    %v4466 = vld [vmem:[#allocation13 + $0xf08] sm:$0xff]
    %v4467 = vld [vmem:[#allocation13 + $0xf10] sm:$0xff]
    %v4468 = vld [vmem:[#allocation13 + $0xf18] sm:$0xff]
    %v4469 = vld [vmem:[#allocation13 + $0xf20] sm:$0xff]
    %v4470 = vld [vmem:[#allocation13 + $0xf28] sm:$0xff]
    %v4471 = vld [vmem:[#allocation13 + $0xf30] sm:$0xff]
    %v4472 = vld [vmem:[#allocation13 + $0xf38] sm:$0xff]
    %v4473 = vld [vmem:[#allocation13 + $0xf40] sm:$0xff]
    %v4474 = vld [vmem:[#allocation13 + $0xf48] sm:$0xff]
    %v4475 = vld [vmem:[#allocation13 + $0xf50] sm:$0xff]
    %v4476 = vld [vmem:[#allocation13 + $0xf58] sm:$0xff]
    %v4477 = vld [vmem:[#allocation13 + $0xf60] sm:$0xff]
    %v4478 = vld [vmem:[#allocation13 + $0xf68] sm:$0xff]
    %v4479 = vld [vmem:[#allocation13 + $0xf70] sm:$0xff]
    %v4480 = vld [vmem:[#allocation13 + $0xf78] sm:$0xff]
    %v4481 = vld [vmem:[#allocation13 + $0xf80] sm:$0xff]
    %v4482 = vld [vmem:[#allocation13 + $0xf88] sm:$0xff]
    %v4483 = vld [vmem:[#allocation13 + $0xf90] sm:$0xff]
    %v4484 = vld [vmem:[#allocation13 + $0xf98] sm:$0xff]
    %v4485 = vld [vmem:[#allocation13 + $0xfa0] sm:$0xff]
    %v4486 = vld [vmem:[#allocation13 + $0xfa8] sm:$0xff]
    %v4487 = vld [vmem:[#allocation13 + $0xfb0] sm:$0xff]
    %v4488 = vld [vmem:[#allocation13 + $0xfb8] sm:$0xff]
    %v4489 = vld [vmem:[#allocation13 + $0xfc0] sm:$0xff]
    %v4490 = vld [vmem:[#allocation13 + $0xfc8] sm:$0xff]
    %v4491 = vld [vmem:[#allocation13 + $0xfd0] sm:$0xff]
    %v4492 = vld [vmem:[#allocation13 + $0xfd8] sm:$0xff]
    %v4493 = vld [vmem:[#allocation13 + $0xfe0] sm:$0xff]
    %v4494 = vld [vmem:[#allocation13 + $0xfe8] sm:$0xff]
    %v4495 = vld [vmem:[#allocation13 + $0xff0] sm:$0xff]
    %v4496 = vld [vmem:[#allocation13 + $0xff8] sm:$0xff]
    %v4497 = vld [vmem:[#allocation14] sm:$0xf]
    %v4499 = vlaneseq
    %v4500 = vshrl.u32 %v4499, 7
    %v4501 = vsub.s32 0, %v4500
    %v4502 = vrot.slane %v4497, %v4501
    %v4503 = vlaneseq
    %v4504 = vshrl.u32 %v4503, 7
    %v4505 = vsub.s32 1, %v4504
    %v4506 = vrot.slane %v4497, %v4505
    %v4507 = vlaneseq
    %v4508 = vshrl.u32 %v4507, 7
    %v4509 = vsub.s32 2, %v4508
    %v4510 = vrot.slane %v4497, %v4509
    %v4511 = vlaneseq
    %v4512 = vshrl.u32 %v4511, 7
    %v4513 = vsub.s32 3, %v4512
    %v4514 = vrot.slane %v4497, %v4513
    %v5031 = vunpack.c.l.b16 %v3985
    %v5032 = vunpack.c.h.b16 %v3985
    %v5033 = vunpack.c.l.b16 %v3986
    %v5034 = vunpack.c.h.b16 %v3986
    %v5035 = vunpack.c.l.b16 %v3987
    %v5036 = vunpack.c.h.b16 %v3987
    %v5037 = vunpack.c.l.b16 %v3988
    %v5038 = vunpack.c.h.b16 %v3988
    %v5039 = vunpack.c.l.b16 %v3989
    %v5040 = vunpack.c.h.b16 %v3989
    %v5041 = vunpack.c.l.b16 %v3990
    %v5042 = vunpack.c.h.b16 %v3990
    %v5043 = vunpack.c.l.b16 %v3991
    %v5044 = vunpack.c.h.b16 %v3991
    %v5045 = vunpack.c.l.b16 %v3992
    %v5046 = vunpack.c.h.b16 %v3992
    %v5047 = vunpack.c.l.b16 %v3993
    %v5048 = vunpack.c.h.b16 %v3993
    %v5049 = vunpack.c.l.b16 %v3994
    %v5050 = vunpack.c.h.b16 %v3994
    %v5051 = vunpack.c.l.b16 %v3995
    %v5052 = vunpack.c.h.b16 %v3995
    %v5053 = vunpack.c.l.b16 %v3996
    %v5054 = vunpack.c.h.b16 %v3996
    %v5055 = vunpack.c.l.b16 %v3997
    %v5056 = vunpack.c.h.b16 %v3997
    %v5057 = vunpack.c.l.b16 %v3998
    %v5058 = vunpack.c.h.b16 %v3998
    %v5059 = vunpack.c.l.b16 %v3999
    %v5060 = vunpack.c.h.b16 %v3999
    %v5061 = vunpack.c.l.b16 %v4000
    %v5062 = vunpack.c.h.b16 %v4000
    %v5063 = vunpack.c.l.b16 %v4001
    %v5064 = vunpack.c.h.b16 %v4001
    %v5065 = vunpack.c.l.b16 %v4002
    %v5066 = vunpack.c.h.b16 %v4002
    %v5067 = vunpack.c.l.b16 %v4003
    %v5068 = vunpack.c.h.b16 %v4003
    %v5069 = vunpack.c.l.b16 %v4004
    %v5070 = vunpack.c.h.b16 %v4004
    %v5071 = vunpack.c.l.b16 %v4005
    %v5072 = vunpack.c.h.b16 %v4005
    %v5073 = vunpack.c.l.b16 %v4006
    %v5074 = vunpack.c.h.b16 %v4006
    %v5075 = vunpack.c.l.b16 %v4007
    %v5076 = vunpack.c.h.b16 %v4007
    %v5077 = vunpack.c.l.b16 %v4008
    %v5078 = vunpack.c.h.b16 %v4008
    %v5079 = vunpack.c.l.b16 %v4009
    %v5080 = vunpack.c.h.b16 %v4009
    %v5081 = vunpack.c.l.b16 %v4010
    %v5082 = vunpack.c.h.b16 %v4010
    %v5083 = vunpack.c.l.b16 %v4011
    %v5084 = vunpack.c.h.b16 %v4011
    %v5085 = vunpack.c.l.b16 %v4012
    %v5086 = vunpack.c.h.b16 %v4012
    %v5087 = vunpack.c.l.b16 %v4013
    %v5088 = vunpack.c.h.b16 %v4013
    %v5089 = vunpack.c.l.b16 %v4014
    %v5090 = vunpack.c.h.b16 %v4014
    %v5091 = vunpack.c.l.b16 %v4015
    %v5092 = vunpack.c.h.b16 %v4015
    %v5093 = vunpack.c.l.b16 %v4016
    %v5094 = vunpack.c.h.b16 %v4016
    %v5095 = vunpack.c.l.b16 %v4017
    %v5096 = vunpack.c.h.b16 %v4017
    %v5097 = vunpack.c.l.b16 %v4018
    %v5098 = vunpack.c.h.b16 %v4018
    %v5099 = vunpack.c.l.b16 %v4019
    %v5100 = vunpack.c.h.b16 %v4019
    %v5101 = vunpack.c.l.b16 %v4020
    %v5102 = vunpack.c.h.b16 %v4020
    %v5103 = vunpack.c.l.b16 %v4021
    %v5104 = vunpack.c.h.b16 %v4021
    %v5105 = vunpack.c.l.b16 %v4022
    %v5106 = vunpack.c.h.b16 %v4022
    %v5107 = vunpack.c.l.b16 %v4023
    %v5108 = vunpack.c.h.b16 %v4023
    %v5109 = vunpack.c.l.b16 %v4024
    %v5110 = vunpack.c.h.b16 %v4024
    %v5111 = vunpack.c.l.b16 %v4025
    %v5112 = vunpack.c.h.b16 %v4025
    %v5113 = vunpack.c.l.b16 %v4026
    %v5114 = vunpack.c.h.b16 %v4026
    %v5115 = vunpack.c.l.b16 %v4027
    %v5116 = vunpack.c.h.b16 %v4027
    %v5117 = vunpack.c.l.b16 %v4028
    %v5118 = vunpack.c.h.b16 %v4028
    %v5119 = vunpack.c.l.b16 %v4029
    %v5120 = vunpack.c.h.b16 %v4029
    %v5121 = vunpack.c.l.b16 %v4030
    %v5122 = vunpack.c.h.b16 %v4030
    %v5123 = vunpack.c.l.b16 %v4031
    %v5124 = vunpack.c.h.b16 %v4031
    %v5125 = vunpack.c.l.b16 %v4032
    %v5126 = vunpack.c.h.b16 %v4032
    %v5127 = vunpack.c.l.b16 %v4033
    %v5128 = vunpack.c.h.b16 %v4033
    %v5129 = vunpack.c.l.b16 %v4034
    %v5130 = vunpack.c.h.b16 %v4034
    %v5131 = vunpack.c.l.b16 %v4035
    %v5132 = vunpack.c.h.b16 %v4035
    %v5133 = vunpack.c.l.b16 %v4036
    %v5134 = vunpack.c.h.b16 %v4036
    %v5135 = vunpack.c.l.b16 %v4037
    %v5136 = vunpack.c.h.b16 %v4037
    %v5137 = vunpack.c.l.b16 %v4038
    %v5138 = vunpack.c.h.b16 %v4038
    %v5139 = vunpack.c.l.b16 %v4039
    %v5140 = vunpack.c.h.b16 %v4039
    %v5141 = vunpack.c.l.b16 %v4040
    %v5142 = vunpack.c.h.b16 %v4040
    %v5143 = vunpack.c.l.b16 %v4041
    %v5144 = vunpack.c.h.b16 %v4041
    %v5145 = vunpack.c.l.b16 %v4042
    %v5146 = vunpack.c.h.b16 %v4042
    %v5147 = vunpack.c.l.b16 %v4043
    %v5148 = vunpack.c.h.b16 %v4043
    %v5149 = vunpack.c.l.b16 %v4044
    %v5150 = vunpack.c.h.b16 %v4044
    %v5151 = vunpack.c.l.b16 %v4045
    %v5152 = vunpack.c.h.b16 %v4045
    %v5153 = vunpack.c.l.b16 %v4046
    %v5154 = vunpack.c.h.b16 %v4046
    %v5155 = vunpack.c.l.b16 %v4047
    %v5156 = vunpack.c.h.b16 %v4047
    %v5157 = vunpack.c.l.b16 %v4048
    %v5158 = vunpack.c.h.b16 %v4048
    %v5159 = vunpack.c.l.b16 %v4049
    %v5160 = vunpack.c.h.b16 %v4049
    %v5161 = vunpack.c.l.b16 %v4050
    %v5162 = vunpack.c.h.b16 %v4050
    %v5163 = vunpack.c.l.b16 %v4051
    %v5164 = vunpack.c.h.b16 %v4051
    %v5165 = vunpack.c.l.b16 %v4052
    %v5166 = vunpack.c.h.b16 %v4052
    %v5167 = vunpack.c.l.b16 %v4053
    %v5168 = vunpack.c.h.b16 %v4053
    %v5169 = vunpack.c.l.b16 %v4054
    %v5170 = vunpack.c.h.b16 %v4054
    %v5171 = vunpack.c.l.b16 %v4055
    %v5172 = vunpack.c.h.b16 %v4055
    %v5173 = vunpack.c.l.b16 %v4056
    %v5174 = vunpack.c.h.b16 %v4056
    %v5175 = vunpack.c.l.b16 %v4057
    %v5176 = vunpack.c.h.b16 %v4057
    %v5177 = vunpack.c.l.b16 %v4058
    %v5178 = vunpack.c.h.b16 %v4058
    %v5179 = vunpack.c.l.b16 %v4059
    %v5180 = vunpack.c.h.b16 %v4059
    %v5181 = vunpack.c.l.b16 %v4060
    %v5182 = vunpack.c.h.b16 %v4060
    %v5183 = vunpack.c.l.b16 %v4061
    %v5184 = vunpack.c.h.b16 %v4061
    %v5185 = vunpack.c.l.b16 %v4062
    %v5186 = vunpack.c.h.b16 %v4062
    %v5187 = vunpack.c.l.b16 %v4063
    %v5188 = vunpack.c.h.b16 %v4063
    %v5189 = vunpack.c.l.b16 %v4064
    %v5190 = vunpack.c.h.b16 %v4064
    %v5191 = vunpack.c.l.b16 %v4065
    %v5192 = vunpack.c.h.b16 %v4065
    %v5193 = vunpack.c.l.b16 %v4066
    %v5194 = vunpack.c.h.b16 %v4066
    %v5195 = vunpack.c.l.b16 %v4067
    %v5196 = vunpack.c.h.b16 %v4067
    %v5197 = vunpack.c.l.b16 %v4068
    %v5198 = vunpack.c.h.b16 %v4068
    %v5199 = vunpack.c.l.b16 %v4069
    %v5200 = vunpack.c.h.b16 %v4069
    %v5201 = vunpack.c.l.b16 %v4070
    %v5202 = vunpack.c.h.b16 %v4070
    %v5203 = vunpack.c.l.b16 %v4071
    %v5204 = vunpack.c.h.b16 %v4071
    %v5205 = vunpack.c.l.b16 %v4072
    %v5206 = vunpack.c.h.b16 %v4072
    %v5207 = vunpack.c.l.b16 %v4073
    %v5208 = vunpack.c.h.b16 %v4073
    %v5209 = vunpack.c.l.b16 %v4074
    %v5210 = vunpack.c.h.b16 %v4074
    %v5211 = vunpack.c.l.b16 %v4075
    %v5212 = vunpack.c.h.b16 %v4075
    %v5213 = vunpack.c.l.b16 %v4076
    %v5214 = vunpack.c.h.b16 %v4076
    %v5215 = vunpack.c.l.b16 %v4077
    %v5216 = vunpack.c.h.b16 %v4077
    %v5217 = vunpack.c.l.b16 %v4078
    %v5218 = vunpack.c.h.b16 %v4078
    %v5219 = vunpack.c.l.b16 %v4079
    %v5220 = vunpack.c.h.b16 %v4079
    %v5221 = vunpack.c.l.b16 %v4080
    %v5222 = vunpack.c.h.b16 %v4080
    %v5223 = vunpack.c.l.b16 %v4081
    %v5224 = vunpack.c.h.b16 %v4081
    %v5225 = vunpack.c.l.b16 %v4082
    %v5226 = vunpack.c.h.b16 %v4082
    %v5227 = vunpack.c.l.b16 %v4083
    %v5228 = vunpack.c.h.b16 %v4083
    %v5229 = vunpack.c.l.b16 %v4084
    %v5230 = vunpack.c.h.b16 %v4084
    %v5231 = vunpack.c.l.b16 %v4085
    %v5232 = vunpack.c.h.b16 %v4085
    %v5233 = vunpack.c.l.b16 %v4086
    %v5234 = vunpack.c.h.b16 %v4086
    %v5235 = vunpack.c.l.b16 %v4087
    %v5236 = vunpack.c.h.b16 %v4087
    %v5237 = vunpack.c.l.b16 %v4088
    %v5238 = vunpack.c.h.b16 %v4088
    %v5239 = vunpack.c.l.b16 %v4089
    %v5240 = vunpack.c.h.b16 %v4089
    %v5241 = vunpack.c.l.b16 %v4090
    %v5242 = vunpack.c.h.b16 %v4090
    %v5243 = vunpack.c.l.b16 %v4091
    %v5244 = vunpack.c.h.b16 %v4091
    %v5245 = vunpack.c.l.b16 %v4092
    %v5246 = vunpack.c.h.b16 %v4092
    %v5247 = vunpack.c.l.b16 %v4093
    %v5248 = vunpack.c.h.b16 %v4093
    %v5249 = vunpack.c.l.b16 %v4094
    %v5250 = vunpack.c.h.b16 %v4094
    %v5251 = vunpack.c.l.b16 %v4095
    %v5252 = vunpack.c.h.b16 %v4095
    %v5253 = vunpack.c.l.b16 %v4096
    %v5254 = vunpack.c.h.b16 %v4096
    %v5255 = vunpack.c.l.b16 %v4097
    %v5256 = vunpack.c.h.b16 %v4097
    %v5257 = vunpack.c.l.b16 %v4098
    %v5258 = vunpack.c.h.b16 %v4098
    %v5259 = vunpack.c.l.b16 %v4099
    %v5260 = vunpack.c.h.b16 %v4099
    %v5261 = vunpack.c.l.b16 %v4100
    %v5262 = vunpack.c.h.b16 %v4100
    %v5263 = vunpack.c.l.b16 %v4101
    %v5264 = vunpack.c.h.b16 %v4101
    %v5265 = vunpack.c.l.b16 %v4102
    %v5266 = vunpack.c.h.b16 %v4102
    %v5267 = vunpack.c.l.b16 %v4103
    %v5268 = vunpack.c.h.b16 %v4103
    %v5269 = vunpack.c.l.b16 %v4104
    %v5270 = vunpack.c.h.b16 %v4104
    %v5271 = vunpack.c.l.b16 %v4105
    %v5272 = vunpack.c.h.b16 %v4105
    %v5273 = vunpack.c.l.b16 %v4106
    %v5274 = vunpack.c.h.b16 %v4106
    %v5275 = vunpack.c.l.b16 %v4107
    %v5276 = vunpack.c.h.b16 %v4107
    %v5277 = vunpack.c.l.b16 %v4108
    %v5278 = vunpack.c.h.b16 %v4108
    %v5279 = vunpack.c.l.b16 %v4109
    %v5280 = vunpack.c.h.b16 %v4109
    %v5281 = vunpack.c.l.b16 %v4110
    %v5282 = vunpack.c.h.b16 %v4110
    %v5283 = vunpack.c.l.b16 %v4111
    %v5284 = vunpack.c.h.b16 %v4111
    %v5285 = vunpack.c.l.b16 %v4112
    %v5286 = vunpack.c.h.b16 %v4112
    %v5287 = vunpack.c.l.b16 %v4113
    %v5288 = vunpack.c.h.b16 %v4113
    %v5289 = vunpack.c.l.b16 %v4114
    %v5290 = vunpack.c.h.b16 %v4114
    %v5291 = vunpack.c.l.b16 %v4115
    %v5292 = vunpack.c.h.b16 %v4115
    %v5293 = vunpack.c.l.b16 %v4116
    %v5294 = vunpack.c.h.b16 %v4116
    %v5295 = vunpack.c.l.b16 %v4117
    %v5296 = vunpack.c.h.b16 %v4117
    %v5297 = vunpack.c.l.b16 %v4118
    %v5298 = vunpack.c.h.b16 %v4118
    %v5299 = vunpack.c.l.b16 %v4119
    %v5300 = vunpack.c.h.b16 %v4119
    %v5301 = vunpack.c.l.b16 %v4120
    %v5302 = vunpack.c.h.b16 %v4120
    %v5303 = vunpack.c.l.b16 %v4121
    %v5304 = vunpack.c.h.b16 %v4121
    %v5305 = vunpack.c.l.b16 %v4122
    %v5306 = vunpack.c.h.b16 %v4122
    %v5307 = vunpack.c.l.b16 %v4123
    %v5308 = vunpack.c.h.b16 %v4123
    %v5309 = vunpack.c.l.b16 %v4124
    %v5310 = vunpack.c.h.b16 %v4124
    %v5311 = vunpack.c.l.b16 %v4125
    %v5312 = vunpack.c.h.b16 %v4125
    %v5313 = vunpack.c.l.b16 %v4126
    %v5314 = vunpack.c.h.b16 %v4126
    %v5315 = vunpack.c.l.b16 %v4127
    %v5316 = vunpack.c.h.b16 %v4127
    %v5317 = vunpack.c.l.b16 %v4128
    %v5318 = vunpack.c.h.b16 %v4128
    %v5319 = vunpack.c.l.b16 %v4129
    %v5320 = vunpack.c.h.b16 %v4129
    %v5321 = vunpack.c.l.b16 %v4130
    %v5322 = vunpack.c.h.b16 %v4130
    %v5323 = vunpack.c.l.b16 %v4131
    %v5324 = vunpack.c.h.b16 %v4131
    %v5325 = vunpack.c.l.b16 %v4132
    %v5326 = vunpack.c.h.b16 %v4132
    %v5327 = vunpack.c.l.b16 %v4133
    %v5328 = vunpack.c.h.b16 %v4133
    %v5329 = vunpack.c.l.b16 %v4134
    %v5330 = vunpack.c.h.b16 %v4134
    %v5331 = vunpack.c.l.b16 %v4135
    %v5332 = vunpack.c.h.b16 %v4135
    %v5333 = vunpack.c.l.b16 %v4136
    %v5334 = vunpack.c.h.b16 %v4136
    %v5335 = vunpack.c.l.b16 %v4137
    %v5336 = vunpack.c.h.b16 %v4137
    %v5337 = vunpack.c.l.b16 %v4138
    %v5338 = vunpack.c.h.b16 %v4138
    %v5339 = vunpack.c.l.b16 %v4139
    %v5340 = vunpack.c.h.b16 %v4139
    %v5341 = vunpack.c.l.b16 %v4140
    %v5342 = vunpack.c.h.b16 %v4140
    %v5343 = vunpack.c.l.b16 %v4141
    %v5344 = vunpack.c.h.b16 %v4141
    %v5345 = vunpack.c.l.b16 %v4142
    %v5346 = vunpack.c.h.b16 %v4142
    %v5347 = vunpack.c.l.b16 %v4143
    %v5348 = vunpack.c.h.b16 %v4143
    %v5349 = vunpack.c.l.b16 %v4144
    %v5350 = vunpack.c.h.b16 %v4144
    %v5351 = vunpack.c.l.b16 %v4145
    %v5352 = vunpack.c.h.b16 %v4145
    %v5353 = vunpack.c.l.b16 %v4146
    %v5354 = vunpack.c.h.b16 %v4146
    %v5355 = vunpack.c.l.b16 %v4147
    %v5356 = vunpack.c.h.b16 %v4147
    %v5357 = vunpack.c.l.b16 %v4148
    %v5358 = vunpack.c.h.b16 %v4148
    %v5359 = vunpack.c.l.b16 %v4149
    %v5360 = vunpack.c.h.b16 %v4149
    %v5361 = vunpack.c.l.b16 %v4150
    %v5362 = vunpack.c.h.b16 %v4150
    %v5363 = vunpack.c.l.b16 %v4151
    %v5364 = vunpack.c.h.b16 %v4151
    %v5365 = vunpack.c.l.b16 %v4152
    %v5366 = vunpack.c.h.b16 %v4152
    %v5367 = vunpack.c.l.b16 %v4153
    %v5368 = vunpack.c.h.b16 %v4153
    %v5369 = vunpack.c.l.b16 %v4154
    %v5370 = vunpack.c.h.b16 %v4154
    %v5371 = vunpack.c.l.b16 %v4155
    %v5372 = vunpack.c.h.b16 %v4155
    %v5373 = vunpack.c.l.b16 %v4156
    %v5374 = vunpack.c.h.b16 %v4156
    %v5375 = vunpack.c.l.b16 %v4157
    %v5376 = vunpack.c.h.b16 %v4157
    %v5377 = vunpack.c.l.b16 %v4158
    %v5378 = vunpack.c.h.b16 %v4158
    %v5379 = vunpack.c.l.b16 %v4159
    %v5380 = vunpack.c.h.b16 %v4159
    %v5381 = vunpack.c.l.b16 %v4160
    %v5382 = vunpack.c.h.b16 %v4160
    %v5383 = vunpack.c.l.b16 %v4161
    %v5384 = vunpack.c.h.b16 %v4161
    %v5385 = vunpack.c.l.b16 %v4162
    %v5386 = vunpack.c.h.b16 %v4162
    %v5387 = vunpack.c.l.b16 %v4163
    %v5388 = vunpack.c.h.b16 %v4163
    %v5389 = vunpack.c.l.b16 %v4164
    %v5390 = vunpack.c.h.b16 %v4164
    %v5391 = vunpack.c.l.b16 %v4165
    %v5392 = vunpack.c.h.b16 %v4165
    %v5393 = vunpack.c.l.b16 %v4166
    %v5394 = vunpack.c.h.b16 %v4166
    %v5395 = vunpack.c.l.b16 %v4167
    %v5396 = vunpack.c.h.b16 %v4167
    %v5397 = vunpack.c.l.b16 %v4168
    %v5398 = vunpack.c.h.b16 %v4168
    %v5399 = vunpack.c.l.b16 %v4169
    %v5400 = vunpack.c.h.b16 %v4169
    %v5401 = vunpack.c.l.b16 %v4170
    %v5402 = vunpack.c.h.b16 %v4170
    %v5403 = vunpack.c.l.b16 %v4171
    %v5404 = vunpack.c.h.b16 %v4171
    %v5405 = vunpack.c.l.b16 %v4172
    %v5406 = vunpack.c.h.b16 %v4172
    %v5407 = vunpack.c.l.b16 %v4173
    %v5408 = vunpack.c.h.b16 %v4173
    %v5409 = vunpack.c.l.b16 %v4174
    %v5410 = vunpack.c.h.b16 %v4174
    %v5411 = vunpack.c.l.b16 %v4175
    %v5412 = vunpack.c.h.b16 %v4175
    %v5413 = vunpack.c.l.b16 %v4176
    %v5414 = vunpack.c.h.b16 %v4176
    %v5415 = vunpack.c.l.b16 %v4177
    %v5416 = vunpack.c.h.b16 %v4177
    %v5417 = vunpack.c.l.b16 %v4178
    %v5418 = vunpack.c.h.b16 %v4178
    %v5419 = vunpack.c.l.b16 %v4179
    %v5420 = vunpack.c.h.b16 %v4179
    %v5421 = vunpack.c.l.b16 %v4180
    %v5422 = vunpack.c.h.b16 %v4180
    %v5423 = vunpack.c.l.b16 %v4181
    %v5424 = vunpack.c.h.b16 %v4181
    %v5425 = vunpack.c.l.b16 %v4182
    %v5426 = vunpack.c.h.b16 %v4182
    %v5427 = vunpack.c.l.b16 %v4183
    %v5428 = vunpack.c.h.b16 %v4183
    %v5429 = vunpack.c.l.b16 %v4184
    %v5430 = vunpack.c.h.b16 %v4184
    %v5431 = vunpack.c.l.b16 %v4185
    %v5432 = vunpack.c.h.b16 %v4185
    %v5433 = vunpack.c.l.b16 %v4186
    %v5434 = vunpack.c.h.b16 %v4186
    %v5435 = vunpack.c.l.b16 %v4187
    %v5436 = vunpack.c.h.b16 %v4187
    %v5437 = vunpack.c.l.b16 %v4188
    %v5438 = vunpack.c.h.b16 %v4188
    %v5439 = vunpack.c.l.b16 %v4189
    %v5440 = vunpack.c.h.b16 %v4189
    %v5441 = vunpack.c.l.b16 %v4190
    %v5442 = vunpack.c.h.b16 %v4190
    %v5443 = vunpack.c.l.b16 %v4191
    %v5444 = vunpack.c.h.b16 %v4191
    %v5445 = vunpack.c.l.b16 %v4192
    %v5446 = vunpack.c.h.b16 %v4192
    %v5447 = vunpack.c.l.b16 %v4193
    %v5448 = vunpack.c.h.b16 %v4193
    %v5449 = vunpack.c.l.b16 %v4194
    %v5450 = vunpack.c.h.b16 %v4194
    %v5451 = vunpack.c.l.b16 %v4195
    %v5452 = vunpack.c.h.b16 %v4195
    %v5453 = vunpack.c.l.b16 %v4196
    %v5454 = vunpack.c.h.b16 %v4196
    %v5455 = vunpack.c.l.b16 %v4197
    %v5456 = vunpack.c.h.b16 %v4197
    %v5457 = vunpack.c.l.b16 %v4198
    %v5458 = vunpack.c.h.b16 %v4198
    %v5459 = vunpack.c.l.b16 %v4199
    %v5460 = vunpack.c.h.b16 %v4199
    %v5461 = vunpack.c.l.b16 %v4200
    %v5462 = vunpack.c.h.b16 %v4200
    %v5463 = vunpack.c.l.b16 %v4201
    %v5464 = vunpack.c.h.b16 %v4201
    %v5465 = vunpack.c.l.b16 %v4202
    %v5466 = vunpack.c.h.b16 %v4202
    %v5467 = vunpack.c.l.b16 %v4203
    %v5468 = vunpack.c.h.b16 %v4203
    %v5469 = vunpack.c.l.b16 %v4204
    %v5470 = vunpack.c.h.b16 %v4204
    %v5471 = vunpack.c.l.b16 %v4205
    %v5472 = vunpack.c.h.b16 %v4205
    %v5473 = vunpack.c.l.b16 %v4206
    %v5474 = vunpack.c.h.b16 %v4206
    %v5475 = vunpack.c.l.b16 %v4207
    %v5476 = vunpack.c.h.b16 %v4207
    %v5477 = vunpack.c.l.b16 %v4208
    %v5478 = vunpack.c.h.b16 %v4208
    %v5479 = vunpack.c.l.b16 %v4209
    %v5480 = vunpack.c.h.b16 %v4209
    %v5481 = vunpack.c.l.b16 %v4210
    %v5482 = vunpack.c.h.b16 %v4210
    %v5483 = vunpack.c.l.b16 %v4211
    %v5484 = vunpack.c.h.b16 %v4211
    %v5485 = vunpack.c.l.b16 %v4212
    %v5486 = vunpack.c.h.b16 %v4212
    %v5487 = vunpack.c.l.b16 %v4213
    %v5488 = vunpack.c.h.b16 %v4213
    %v5489 = vunpack.c.l.b16 %v4214
    %v5490 = vunpack.c.h.b16 %v4214
    %v5491 = vunpack.c.l.b16 %v4215
    %v5492 = vunpack.c.h.b16 %v4215
    %v5493 = vunpack.c.l.b16 %v4216
    %v5494 = vunpack.c.h.b16 %v4216
    %v5495 = vunpack.c.l.b16 %v4217
    %v5496 = vunpack.c.h.b16 %v4217
    %v5497 = vunpack.c.l.b16 %v4218
    %v5498 = vunpack.c.h.b16 %v4218
    %v5499 = vunpack.c.l.b16 %v4219
    %v5500 = vunpack.c.h.b16 %v4219
    %v5501 = vunpack.c.l.b16 %v4220
    %v5502 = vunpack.c.h.b16 %v4220
    %v5503 = vunpack.c.l.b16 %v4221
    %v5504 = vunpack.c.h.b16 %v4221
    %v5505 = vunpack.c.l.b16 %v4222
    %v5506 = vunpack.c.h.b16 %v4222
    %v5507 = vunpack.c.l.b16 %v4223
    %v5508 = vunpack.c.h.b16 %v4223
    %v5509 = vunpack.c.l.b16 %v4224
    %v5510 = vunpack.c.h.b16 %v4224
    %v5511 = vunpack.c.l.b16 %v4225
    %v5512 = vunpack.c.h.b16 %v4225
    %v5513 = vunpack.c.l.b16 %v4226
    %v5514 = vunpack.c.h.b16 %v4226
    %v5515 = vunpack.c.l.b16 %v4227
    %v5516 = vunpack.c.h.b16 %v4227
    %v5517 = vunpack.c.l.b16 %v4228
    %v5518 = vunpack.c.h.b16 %v4228
    %v5519 = vunpack.c.l.b16 %v4229
    %v5520 = vunpack.c.h.b16 %v4229
    %v5521 = vunpack.c.l.b16 %v4230
    %v5522 = vunpack.c.h.b16 %v4230
    %v5523 = vunpack.c.l.b16 %v4231
    %v5524 = vunpack.c.h.b16 %v4231
    %v5525 = vunpack.c.l.b16 %v4232
    %v5526 = vunpack.c.h.b16 %v4232
    %v5527 = vunpack.c.l.b16 %v4233
    %v5528 = vunpack.c.h.b16 %v4233
    %v5529 = vunpack.c.l.b16 %v4234
    %v5530 = vunpack.c.h.b16 %v4234
    %v5531 = vunpack.c.l.b16 %v4235
    %v5532 = vunpack.c.h.b16 %v4235
    %v5533 = vunpack.c.l.b16 %v4236
    %v5534 = vunpack.c.h.b16 %v4236
    %v5535 = vunpack.c.l.b16 %v4237
    %v5536 = vunpack.c.h.b16 %v4237
    %v5537 = vunpack.c.l.b16 %v4238
    %v5538 = vunpack.c.h.b16 %v4238
    %v5539 = vunpack.c.l.b16 %v4239
    %v5540 = vunpack.c.h.b16 %v4239
    %v5541 = vunpack.c.l.b16 %v4240
    %v5542 = vunpack.c.h.b16 %v4240
    %v5543 = vunpack.c.l.b16 %v4241
    %v5544 = vunpack.c.h.b16 %v4241
    %v5545 = vunpack.c.l.b16 %v4242
    %v5546 = vunpack.c.h.b16 %v4242
    %v5547 = vunpack.c.l.b16 %v4243
    %v5548 = vunpack.c.h.b16 %v4243
    %v5549 = vunpack.c.l.b16 %v4244
    %v5550 = vunpack.c.h.b16 %v4244
    %v5551 = vunpack.c.l.b16 %v4245
    %v5552 = vunpack.c.h.b16 %v4245
    %v5553 = vunpack.c.l.b16 %v4246
    %v5554 = vunpack.c.h.b16 %v4246
    %v5555 = vunpack.c.l.b16 %v4247
    %v5556 = vunpack.c.h.b16 %v4247
    %v5557 = vunpack.c.l.b16 %v4248
    %v5558 = vunpack.c.h.b16 %v4248
    %v5559 = vunpack.c.l.b16 %v4249
    %v5560 = vunpack.c.h.b16 %v4249
    %v5561 = vunpack.c.l.b16 %v4250
    %v5562 = vunpack.c.h.b16 %v4250
    %v5563 = vunpack.c.l.b16 %v4251
    %v5564 = vunpack.c.h.b16 %v4251
    %v5565 = vunpack.c.l.b16 %v4252
    %v5566 = vunpack.c.h.b16 %v4252
    %v5567 = vunpack.c.l.b16 %v4253
    %v5568 = vunpack.c.h.b16 %v4253
    %v5569 = vunpack.c.l.b16 %v4254
    %v5570 = vunpack.c.h.b16 %v4254
    %v5571 = vunpack.c.l.b16 %v4255
    %v5572 = vunpack.c.h.b16 %v4255
    %v5573 = vunpack.c.l.b16 %v4256
    %v5574 = vunpack.c.h.b16 %v4256
    %v5575 = vunpack.c.l.b16 %v4257
    %v5576 = vunpack.c.h.b16 %v4257
    %v5577 = vunpack.c.l.b16 %v4258
    %v5578 = vunpack.c.h.b16 %v4258
    %v5579 = vunpack.c.l.b16 %v4259
    %v5580 = vunpack.c.h.b16 %v4259
    %v5581 = vunpack.c.l.b16 %v4260
    %v5582 = vunpack.c.h.b16 %v4260
    %v5583 = vunpack.c.l.b16 %v4261
    %v5584 = vunpack.c.h.b16 %v4261
    %v5585 = vunpack.c.l.b16 %v4262
    %v5586 = vunpack.c.h.b16 %v4262
    %v5587 = vunpack.c.l.b16 %v4263
    %v5588 = vunpack.c.h.b16 %v4263
    %v5589 = vunpack.c.l.b16 %v4264
    %v5590 = vunpack.c.h.b16 %v4264
    %v5591 = vunpack.c.l.b16 %v4265
    %v5592 = vunpack.c.h.b16 %v4265
    %v5593 = vunpack.c.l.b16 %v4266
    %v5594 = vunpack.c.h.b16 %v4266
    %v5595 = vunpack.c.l.b16 %v4267
    %v5596 = vunpack.c.h.b16 %v4267
    %v5597 = vunpack.c.l.b16 %v4268
    %v5598 = vunpack.c.h.b16 %v4268
    %v5599 = vunpack.c.l.b16 %v4269
    %v5600 = vunpack.c.h.b16 %v4269
    %v5601 = vunpack.c.l.b16 %v4270
    %v5602 = vunpack.c.h.b16 %v4270
    %v5603 = vunpack.c.l.b16 %v4271
    %v5604 = vunpack.c.h.b16 %v4271
    %v5605 = vunpack.c.l.b16 %v4272
    %v5606 = vunpack.c.h.b16 %v4272
    %v5607 = vunpack.c.l.b16 %v4273
    %v5608 = vunpack.c.h.b16 %v4273
    %v5609 = vunpack.c.l.b16 %v4274
    %v5610 = vunpack.c.h.b16 %v4274
    %v5611 = vunpack.c.l.b16 %v4275
    %v5612 = vunpack.c.h.b16 %v4275
    %v5613 = vunpack.c.l.b16 %v4276
    %v5614 = vunpack.c.h.b16 %v4276
    %v5615 = vunpack.c.l.b16 %v4277
    %v5616 = vunpack.c.h.b16 %v4277
    %v5617 = vunpack.c.l.b16 %v4278
    %v5618 = vunpack.c.h.b16 %v4278
    %v5619 = vunpack.c.l.b16 %v4279
    %v5620 = vunpack.c.h.b16 %v4279
    %v5621 = vunpack.c.l.b16 %v4280
    %v5622 = vunpack.c.h.b16 %v4280
    %v5623 = vunpack.c.l.b16 %v4281
    %v5624 = vunpack.c.h.b16 %v4281
    %v5625 = vunpack.c.l.b16 %v4282
    %v5626 = vunpack.c.h.b16 %v4282
    %v5627 = vunpack.c.l.b16 %v4283
    %v5628 = vunpack.c.h.b16 %v4283
    %v5629 = vunpack.c.l.b16 %v4284
    %v5630 = vunpack.c.h.b16 %v4284
    %v5631 = vunpack.c.l.b16 %v4285
    %v5632 = vunpack.c.h.b16 %v4285
    %v5633 = vunpack.c.l.b16 %v4286
    %v5634 = vunpack.c.h.b16 %v4286
    %v5635 = vunpack.c.l.b16 %v4287
    %v5636 = vunpack.c.h.b16 %v4287
    %v5637 = vunpack.c.l.b16 %v4288
    %v5638 = vunpack.c.h.b16 %v4288
    %v5639 = vunpack.c.l.b16 %v4289
    %v5640 = vunpack.c.h.b16 %v4289
    %v5641 = vunpack.c.l.b16 %v4290
    %v5642 = vunpack.c.h.b16 %v4290
    %v5643 = vunpack.c.l.b16 %v4291
    %v5644 = vunpack.c.h.b16 %v4291
    %v5645 = vunpack.c.l.b16 %v4292
    %v5646 = vunpack.c.h.b16 %v4292
    %v5647 = vunpack.c.l.b16 %v4293
    %v5648 = vunpack.c.h.b16 %v4293
    %v5649 = vunpack.c.l.b16 %v4294
    %v5650 = vunpack.c.h.b16 %v4294
    %v5651 = vunpack.c.l.b16 %v4295
    %v5652 = vunpack.c.h.b16 %v4295
    %v5653 = vunpack.c.l.b16 %v4296
    %v5654 = vunpack.c.h.b16 %v4296
    %v5655 = vunpack.c.l.b16 %v4297
    %v5656 = vunpack.c.h.b16 %v4297
    %v5657 = vunpack.c.l.b16 %v4298
    %v5658 = vunpack.c.h.b16 %v4298
    %v5659 = vunpack.c.l.b16 %v4299
    %v5660 = vunpack.c.h.b16 %v4299
    %v5661 = vunpack.c.l.b16 %v4300
    %v5662 = vunpack.c.h.b16 %v4300
    %v5663 = vunpack.c.l.b16 %v4301
    %v5664 = vunpack.c.h.b16 %v4301
    %v5665 = vunpack.c.l.b16 %v4302
    %v5666 = vunpack.c.h.b16 %v4302
    %v5667 = vunpack.c.l.b16 %v4303
    %v5668 = vunpack.c.h.b16 %v4303
    %v5669 = vunpack.c.l.b16 %v4304
    %v5670 = vunpack.c.h.b16 %v4304
    %v5671 = vunpack.c.l.b16 %v4305
    %v5672 = vunpack.c.h.b16 %v4305
    %v5673 = vunpack.c.l.b16 %v4306
    %v5674 = vunpack.c.h.b16 %v4306
    %v5675 = vunpack.c.l.b16 %v4307
    %v5676 = vunpack.c.h.b16 %v4307
    %v5677 = vunpack.c.l.b16 %v4308
    %v5678 = vunpack.c.h.b16 %v4308
    %v5679 = vunpack.c.l.b16 %v4309
    %v5680 = vunpack.c.h.b16 %v4309
    %v5681 = vunpack.c.l.b16 %v4310
    %v5682 = vunpack.c.h.b16 %v4310
    %v5683 = vunpack.c.l.b16 %v4311
    %v5684 = vunpack.c.h.b16 %v4311
    %v5685 = vunpack.c.l.b16 %v4312
    %v5686 = vunpack.c.h.b16 %v4312
    %v5687 = vunpack.c.l.b16 %v4313
    %v5688 = vunpack.c.h.b16 %v4313
    %v5689 = vunpack.c.l.b16 %v4314
    %v5690 = vunpack.c.h.b16 %v4314
    %v5691 = vunpack.c.l.b16 %v4315
    %v5692 = vunpack.c.h.b16 %v4315
    %v5693 = vunpack.c.l.b16 %v4316
    %v5694 = vunpack.c.h.b16 %v4316
    %v5695 = vunpack.c.l.b16 %v4317
    %v5696 = vunpack.c.h.b16 %v4317
    %v5697 = vunpack.c.l.b16 %v4318
    %v5698 = vunpack.c.h.b16 %v4318
    %v5699 = vunpack.c.l.b16 %v4319
    %v5700 = vunpack.c.h.b16 %v4319
    %v5701 = vunpack.c.l.b16 %v4320
    %v5702 = vunpack.c.h.b16 %v4320
    %v5703 = vunpack.c.l.b16 %v4321
    %v5704 = vunpack.c.h.b16 %v4321
    %v5705 = vunpack.c.l.b16 %v4322
    %v5706 = vunpack.c.h.b16 %v4322
    %v5707 = vunpack.c.l.b16 %v4323
    %v5708 = vunpack.c.h.b16 %v4323
    %v5709 = vunpack.c.l.b16 %v4324
    %v5710 = vunpack.c.h.b16 %v4324
    %v5711 = vunpack.c.l.b16 %v4325
    %v5712 = vunpack.c.h.b16 %v4325
    %v5713 = vunpack.c.l.b16 %v4326
    %v5714 = vunpack.c.h.b16 %v4326
    %v5715 = vunpack.c.l.b16 %v4327
    %v5716 = vunpack.c.h.b16 %v4327
    %v5717 = vunpack.c.l.b16 %v4328
    %v5718 = vunpack.c.h.b16 %v4328
    %v5719 = vunpack.c.l.b16 %v4329
    %v5720 = vunpack.c.h.b16 %v4329
    %v5721 = vunpack.c.l.b16 %v4330
    %v5722 = vunpack.c.h.b16 %v4330
    %v5723 = vunpack.c.l.b16 %v4331
    %v5724 = vunpack.c.h.b16 %v4331
    %v5725 = vunpack.c.l.b16 %v4332
    %v5726 = vunpack.c.h.b16 %v4332
    %v5727 = vunpack.c.l.b16 %v4333
    %v5728 = vunpack.c.h.b16 %v4333
    %v5729 = vunpack.c.l.b16 %v4334
    %v5730 = vunpack.c.h.b16 %v4334
    %v5731 = vunpack.c.l.b16 %v4335
    %v5732 = vunpack.c.h.b16 %v4335
    %v5733 = vunpack.c.l.b16 %v4336
    %v5734 = vunpack.c.h.b16 %v4336
    %v5735 = vunpack.c.l.b16 %v4337
    %v5736 = vunpack.c.h.b16 %v4337
    %v5737 = vunpack.c.l.b16 %v4338
    %v5738 = vunpack.c.h.b16 %v4338
    %v5739 = vunpack.c.l.b16 %v4339
    %v5740 = vunpack.c.h.b16 %v4339
    %v5741 = vunpack.c.l.b16 %v4340
    %v5742 = vunpack.c.h.b16 %v4340
    %v5743 = vunpack.c.l.b16 %v4341
    %v5744 = vunpack.c.h.b16 %v4341
    %v5745 = vunpack.c.l.b16 %v4342
    %v5746 = vunpack.c.h.b16 %v4342
    %v5747 = vunpack.c.l.b16 %v4343
    %v5748 = vunpack.c.h.b16 %v4343
    %v5749 = vunpack.c.l.b16 %v4344
    %v5750 = vunpack.c.h.b16 %v4344
    %v5751 = vunpack.c.l.b16 %v4345
    %v5752 = vunpack.c.h.b16 %v4345
    %v5753 = vunpack.c.l.b16 %v4346
    %v5754 = vunpack.c.h.b16 %v4346
    %v5755 = vunpack.c.l.b16 %v4347
    %v5756 = vunpack.c.h.b16 %v4347
    %v5757 = vunpack.c.l.b16 %v4348
    %v5758 = vunpack.c.h.b16 %v4348
    %v5759 = vunpack.c.l.b16 %v4349
    %v5760 = vunpack.c.h.b16 %v4349
    %v5761 = vunpack.c.l.b16 %v4350
    %v5762 = vunpack.c.h.b16 %v4350
    %v5763 = vunpack.c.l.b16 %v4351
    %v5764 = vunpack.c.h.b16 %v4351
    %v5765 = vunpack.c.l.b16 %v4352
    %v5766 = vunpack.c.h.b16 %v4352
    %v5767 = vunpack.c.l.b16 %v4353
    %v5768 = vunpack.c.h.b16 %v4353
    %v5769 = vunpack.c.l.b16 %v4354
    %v5770 = vunpack.c.h.b16 %v4354
    %v5771 = vunpack.c.l.b16 %v4355
    %v5772 = vunpack.c.h.b16 %v4355
    %v5773 = vunpack.c.l.b16 %v4356
    %v5774 = vunpack.c.h.b16 %v4356
    %v5775 = vunpack.c.l.b16 %v4357
    %v5776 = vunpack.c.h.b16 %v4357
    %v5777 = vunpack.c.l.b16 %v4358
    %v5778 = vunpack.c.h.b16 %v4358
    %v5779 = vunpack.c.l.b16 %v4359
    %v5780 = vunpack.c.h.b16 %v4359
    %v5781 = vunpack.c.l.b16 %v4360
    %v5782 = vunpack.c.h.b16 %v4360
    %v5783 = vunpack.c.l.b16 %v4361
    %v5784 = vunpack.c.h.b16 %v4361
    %v5785 = vunpack.c.l.b16 %v4362
    %v5786 = vunpack.c.h.b16 %v4362
    %v5787 = vunpack.c.l.b16 %v4363
    %v5788 = vunpack.c.h.b16 %v4363
    %v5789 = vunpack.c.l.b16 %v4364
    %v5790 = vunpack.c.h.b16 %v4364
    %v5791 = vunpack.c.l.b16 %v4365
    %v5792 = vunpack.c.h.b16 %v4365
    %v5793 = vunpack.c.l.b16 %v4366
    %v5794 = vunpack.c.h.b16 %v4366
    %v5795 = vunpack.c.l.b16 %v4367
    %v5796 = vunpack.c.h.b16 %v4367
    %v5797 = vunpack.c.l.b16 %v4368
    %v5798 = vunpack.c.h.b16 %v4368
    %v5799 = vunpack.c.l.b16 %v4369
    %v5800 = vunpack.c.h.b16 %v4369
    %v5801 = vunpack.c.l.b16 %v4370
    %v5802 = vunpack.c.h.b16 %v4370
    %v5803 = vunpack.c.l.b16 %v4371
    %v5804 = vunpack.c.h.b16 %v4371
    %v5805 = vunpack.c.l.b16 %v4372
    %v5806 = vunpack.c.h.b16 %v4372
    %v5807 = vunpack.c.l.b16 %v4373
    %v5808 = vunpack.c.h.b16 %v4373
    %v5809 = vunpack.c.l.b16 %v4374
    %v5810 = vunpack.c.h.b16 %v4374
    %v5811 = vunpack.c.l.b16 %v4375
    %v5812 = vunpack.c.h.b16 %v4375
    %v5813 = vunpack.c.l.b16 %v4376
    %v5814 = vunpack.c.h.b16 %v4376
    %v5815 = vunpack.c.l.b16 %v4377
    %v5816 = vunpack.c.h.b16 %v4377
    %v5817 = vunpack.c.l.b16 %v4378
    %v5818 = vunpack.c.h.b16 %v4378
    %v5819 = vunpack.c.l.b16 %v4379
    %v5820 = vunpack.c.h.b16 %v4379
    %v5821 = vunpack.c.l.b16 %v4380
    %v5822 = vunpack.c.h.b16 %v4380
    %v5823 = vunpack.c.l.b16 %v4381
    %v5824 = vunpack.c.h.b16 %v4381
    %v5825 = vunpack.c.l.b16 %v4382
    %v5826 = vunpack.c.h.b16 %v4382
    %v5827 = vunpack.c.l.b16 %v4383
    %v5828 = vunpack.c.h.b16 %v4383
    %v5829 = vunpack.c.l.b16 %v4384
    %v5830 = vunpack.c.h.b16 %v4384
    %v5831 = vunpack.c.l.b16 %v4385
    %v5832 = vunpack.c.h.b16 %v4385
    %v5833 = vunpack.c.l.b16 %v4386
    %v5834 = vunpack.c.h.b16 %v4386
    %v5835 = vunpack.c.l.b16 %v4387
    %v5836 = vunpack.c.h.b16 %v4387
    %v5837 = vunpack.c.l.b16 %v4388
    %v5838 = vunpack.c.h.b16 %v4388
    %v5839 = vunpack.c.l.b16 %v4389
    %v5840 = vunpack.c.h.b16 %v4389
    %v5841 = vunpack.c.l.b16 %v4390
    %v5842 = vunpack.c.h.b16 %v4390
    %v5843 = vunpack.c.l.b16 %v4391
    %v5844 = vunpack.c.h.b16 %v4391
    %v5845 = vunpack.c.l.b16 %v4392
    %v5846 = vunpack.c.h.b16 %v4392
    %v5847 = vunpack.c.l.b16 %v4393
    %v5848 = vunpack.c.h.b16 %v4393
    %v5849 = vunpack.c.l.b16 %v4394
    %v5850 = vunpack.c.h.b16 %v4394
    %v5851 = vunpack.c.l.b16 %v4395
    %v5852 = vunpack.c.h.b16 %v4395
    %v5853 = vunpack.c.l.b16 %v4396
    %v5854 = vunpack.c.h.b16 %v4396
    %v5855 = vunpack.c.l.b16 %v4397
    %v5856 = vunpack.c.h.b16 %v4397
    %v5857 = vunpack.c.l.b16 %v4398
    %v5858 = vunpack.c.h.b16 %v4398
    %v5859 = vunpack.c.l.b16 %v4399
    %v5860 = vunpack.c.h.b16 %v4399
    %v5861 = vunpack.c.l.b16 %v4400
    %v5862 = vunpack.c.h.b16 %v4400
    %v5863 = vunpack.c.l.b16 %v4401
    %v5864 = vunpack.c.h.b16 %v4401
    %v5865 = vunpack.c.l.b16 %v4402
    %v5866 = vunpack.c.h.b16 %v4402
    %v5867 = vunpack.c.l.b16 %v4403
    %v5868 = vunpack.c.h.b16 %v4403
    %v5869 = vunpack.c.l.b16 %v4404
    %v5870 = vunpack.c.h.b16 %v4404
    %v5871 = vunpack.c.l.b16 %v4405
    %v5872 = vunpack.c.h.b16 %v4405
    %v5873 = vunpack.c.l.b16 %v4406
    %v5874 = vunpack.c.h.b16 %v4406
    %v5875 = vunpack.c.l.b16 %v4407
    %v5876 = vunpack.c.h.b16 %v4407
    %v5877 = vunpack.c.l.b16 %v4408
    %v5878 = vunpack.c.h.b16 %v4408
    %v5879 = vunpack.c.l.b16 %v4409
    %v5880 = vunpack.c.h.b16 %v4409
    %v5881 = vunpack.c.l.b16 %v4410
    %v5882 = vunpack.c.h.b16 %v4410
    %v5883 = vunpack.c.l.b16 %v4411
    %v5884 = vunpack.c.h.b16 %v4411
    %v5885 = vunpack.c.l.b16 %v4412
    %v5886 = vunpack.c.h.b16 %v4412
    %v5887 = vunpack.c.l.b16 %v4413
    %v5888 = vunpack.c.h.b16 %v4413
    %v5889 = vunpack.c.l.b16 %v4414
    %v5890 = vunpack.c.h.b16 %v4414
    %v5891 = vunpack.c.l.b16 %v4415
    %v5892 = vunpack.c.h.b16 %v4415
    %v5893 = vunpack.c.l.b16 %v4416
    %v5894 = vunpack.c.h.b16 %v4416
    %v5895 = vunpack.c.l.b16 %v4417
    %v5896 = vunpack.c.h.b16 %v4417
    %v5897 = vunpack.c.l.b16 %v4418
    %v5898 = vunpack.c.h.b16 %v4418
    %v5899 = vunpack.c.l.b16 %v4419
    %v5900 = vunpack.c.h.b16 %v4419
    %v5901 = vunpack.c.l.b16 %v4420
    %v5902 = vunpack.c.h.b16 %v4420
    %v5903 = vunpack.c.l.b16 %v4421
    %v5904 = vunpack.c.h.b16 %v4421
    %v5905 = vunpack.c.l.b16 %v4422
    %v5906 = vunpack.c.h.b16 %v4422
    %v5907 = vunpack.c.l.b16 %v4423
    %v5908 = vunpack.c.h.b16 %v4423
    %v5909 = vunpack.c.l.b16 %v4424
    %v5910 = vunpack.c.h.b16 %v4424
    %v5911 = vunpack.c.l.b16 %v4425
    %v5912 = vunpack.c.h.b16 %v4425
    %v5913 = vunpack.c.l.b16 %v4426
    %v5914 = vunpack.c.h.b16 %v4426
    %v5915 = vunpack.c.l.b16 %v4427
    %v5916 = vunpack.c.h.b16 %v4427
    %v5917 = vunpack.c.l.b16 %v4428
    %v5918 = vunpack.c.h.b16 %v4428
    %v5919 = vunpack.c.l.b16 %v4429
    %v5920 = vunpack.c.h.b16 %v4429
    %v5921 = vunpack.c.l.b16 %v4430
    %v5922 = vunpack.c.h.b16 %v4430
    %v5923 = vunpack.c.l.b16 %v4431
    %v5924 = vunpack.c.h.b16 %v4431
    %v5925 = vunpack.c.l.b16 %v4432
    %v5926 = vunpack.c.h.b16 %v4432
    %v5927 = vunpack.c.l.b16 %v4433
    %v5928 = vunpack.c.h.b16 %v4433
    %v5929 = vunpack.c.l.b16 %v4434
    %v5930 = vunpack.c.h.b16 %v4434
    %v5931 = vunpack.c.l.b16 %v4435
    %v5932 = vunpack.c.h.b16 %v4435
    %v5933 = vunpack.c.l.b16 %v4436
    %v5934 = vunpack.c.h.b16 %v4436
    %v5935 = vunpack.c.l.b16 %v4437
    %v5936 = vunpack.c.h.b16 %v4437
    %v5937 = vunpack.c.l.b16 %v4438
    %v5938 = vunpack.c.h.b16 %v4438
    %v5939 = vunpack.c.l.b16 %v4439
    %v5940 = vunpack.c.h.b16 %v4439
    %v5941 = vunpack.c.l.b16 %v4440
    %v5942 = vunpack.c.h.b16 %v4440
    %v5943 = vunpack.c.l.b16 %v4441
    %v5944 = vunpack.c.h.b16 %v4441
    %v5945 = vunpack.c.l.b16 %v4442
    %v5946 = vunpack.c.h.b16 %v4442
    %v5947 = vunpack.c.l.b16 %v4443
    %v5948 = vunpack.c.h.b16 %v4443
    %v5949 = vunpack.c.l.b16 %v4444
    %v5950 = vunpack.c.h.b16 %v4444
    %v5951 = vunpack.c.l.b16 %v4445
    %v5952 = vunpack.c.h.b16 %v4445
    %v5953 = vunpack.c.l.b16 %v4446
    %v5954 = vunpack.c.h.b16 %v4446
    %v5955 = vunpack.c.l.b16 %v4447
    %v5956 = vunpack.c.h.b16 %v4447
    %v5957 = vunpack.c.l.b16 %v4448
    %v5958 = vunpack.c.h.b16 %v4448
    %v5959 = vunpack.c.l.b16 %v4449
    %v5960 = vunpack.c.h.b16 %v4449
    %v5961 = vunpack.c.l.b16 %v4450
    %v5962 = vunpack.c.h.b16 %v4450
    %v5963 = vunpack.c.l.b16 %v4451
    %v5964 = vunpack.c.h.b16 %v4451
    %v5965 = vunpack.c.l.b16 %v4452
    %v5966 = vunpack.c.h.b16 %v4452
    %v5967 = vunpack.c.l.b16 %v4453
    %v5968 = vunpack.c.h.b16 %v4453
    %v5969 = vunpack.c.l.b16 %v4454
    %v5970 = vunpack.c.h.b16 %v4454
    %v5971 = vunpack.c.l.b16 %v4455
    %v5972 = vunpack.c.h.b16 %v4455
    %v5973 = vunpack.c.l.b16 %v4456
    %v5974 = vunpack.c.h.b16 %v4456
    %v5975 = vunpack.c.l.b16 %v4457
    %v5976 = vunpack.c.h.b16 %v4457
    %v5977 = vunpack.c.l.b16 %v4458
    %v5978 = vunpack.c.h.b16 %v4458
    %v5979 = vunpack.c.l.b16 %v4459
    %v5980 = vunpack.c.h.b16 %v4459
    %v5981 = vunpack.c.l.b16 %v4460
    %v5982 = vunpack.c.h.b16 %v4460
    %v5983 = vunpack.c.l.b16 %v4461
    %v5984 = vunpack.c.h.b16 %v4461
    %v5985 = vunpack.c.l.b16 %v4462
    %v5986 = vunpack.c.h.b16 %v4462
    %v5987 = vunpack.c.l.b16 %v4463
    %v5988 = vunpack.c.h.b16 %v4463
    %v5989 = vunpack.c.l.b16 %v4464
    %v5990 = vunpack.c.h.b16 %v4464
    %v5991 = vunpack.c.l.b16 %v4465
    %v5992 = vunpack.c.h.b16 %v4465
    %v5993 = vunpack.c.l.b16 %v4466
    %v5994 = vunpack.c.h.b16 %v4466
    %v5995 = vunpack.c.l.b16 %v4467
    %v5996 = vunpack.c.h.b16 %v4467
    %v5997 = vunpack.c.l.b16 %v4468
    %v5998 = vunpack.c.h.b16 %v4468
    %v5999 = vunpack.c.l.b16 %v4469
    %v6000 = vunpack.c.h.b16 %v4469
    %v6001 = vunpack.c.l.b16 %v4470
    %v6002 = vunpack.c.h.b16 %v4470
    %v6003 = vunpack.c.l.b16 %v4471
    %v6004 = vunpack.c.h.b16 %v4471
    %v6005 = vunpack.c.l.b16 %v4472
    %v6006 = vunpack.c.h.b16 %v4472
    %v6007 = vunpack.c.l.b16 %v4473
    %v6008 = vunpack.c.h.b16 %v4473
    %v6009 = vunpack.c.l.b16 %v4474
    %v6010 = vunpack.c.h.b16 %v4474
    %v6011 = vunpack.c.l.b16 %v4475
    %v6012 = vunpack.c.h.b16 %v4475
    %v6013 = vunpack.c.l.b16 %v4476
    %v6014 = vunpack.c.h.b16 %v4476
    %v6015 = vunpack.c.l.b16 %v4477
    %v6016 = vunpack.c.h.b16 %v4477
    %v6017 = vunpack.c.l.b16 %v4478
    %v6018 = vunpack.c.h.b16 %v4478
    %v6019 = vunpack.c.l.b16 %v4479
    %v6020 = vunpack.c.h.b16 %v4479
    %v6021 = vunpack.c.l.b16 %v4480
    %v6022 = vunpack.c.h.b16 %v4480
    %v6023 = vunpack.c.l.b16 %v4481
    %v6024 = vunpack.c.h.b16 %v4481
    %v6025 = vunpack.c.l.b16 %v4482
    %v6026 = vunpack.c.h.b16 %v4482
    %v6027 = vunpack.c.l.b16 %v4483
    %v6028 = vunpack.c.h.b16 %v4483
    %v6029 = vunpack.c.l.b16 %v4484
    %v6030 = vunpack.c.h.b16 %v4484
    %v6031 = vunpack.c.l.b16 %v4485
    %v6032 = vunpack.c.h.b16 %v4485
    %v6033 = vunpack.c.l.b16 %v4486
    %v6034 = vunpack.c.h.b16 %v4486
    %v6035 = vunpack.c.l.b16 %v4487
    %v6036 = vunpack.c.h.b16 %v4487
    %v6037 = vunpack.c.l.b16 %v4488
    %v6038 = vunpack.c.h.b16 %v4488
    %v6039 = vunpack.c.l.b16 %v4489
    %v6040 = vunpack.c.h.b16 %v4489
    %v6041 = vunpack.c.l.b16 %v4490
    %v6042 = vunpack.c.h.b16 %v4490
    %v6043 = vunpack.c.l.b16 %v4491
    %v6044 = vunpack.c.h.b16 %v4491
    %v6045 = vunpack.c.l.b16 %v4492
    %v6046 = vunpack.c.h.b16 %v4492
    %v6047 = vunpack.c.l.b16 %v4493
    %v6048 = vunpack.c.h.b16 %v4493
    %v6049 = vunpack.c.l.b16 %v4494
    %v6050 = vunpack.c.h.b16 %v4494
    %v6051 = vunpack.c.l.b16 %v4495
    %v6052 = vunpack.c.h.b16 %v4495
    %v6053 = vunpack.c.l.b16 %v4496
    %v6054 = vunpack.c.h.b16 %v4496
    %v6055 = vpack.c.b16 %v5035, %v5031
    %v6056 = vpack.c.b16 %v5036, %v5032
    %v6057 = vpack.c.b16 %v5037, %v5033
    %v6058 = vpack.c.b16 %v5038, %v5034
    %v6059 = vpack.c.b16 %v5043, %v5039
    %v6060 = vpack.c.b16 %v5044, %v5040
    %v6061 = vpack.c.b16 %v5045, %v5041
    %v6062 = vpack.c.b16 %v5046, %v5042
    %v6063 = vpack.c.b16 %v5051, %v5047
    %v6064 = vpack.c.b16 %v5052, %v5048
    %v6065 = vpack.c.b16 %v5053, %v5049
    %v6066 = vpack.c.b16 %v5054, %v5050
    %v6067 = vpack.c.b16 %v5059, %v5055
    %v6068 = vpack.c.b16 %v5060, %v5056
    %v6069 = vpack.c.b16 %v5061, %v5057
    %v6070 = vpack.c.b16 %v5062, %v5058
    %v6071 = vpack.c.b16 %v5067, %v5063
    %v6072 = vpack.c.b16 %v5068, %v5064
    %v6073 = vpack.c.b16 %v5069, %v5065
    %v6074 = vpack.c.b16 %v5070, %v5066
    %v6075 = vpack.c.b16 %v5075, %v5071
    %v6076 = vpack.c.b16 %v5076, %v5072
    %v6077 = vpack.c.b16 %v5077, %v5073
    %v6078 = vpack.c.b16 %v5078, %v5074
    %v6079 = vpack.c.b16 %v5083, %v5079
    %v6080 = vpack.c.b16 %v5084, %v5080
    %v6081 = vpack.c.b16 %v5085, %v5081
    %v6082 = vpack.c.b16 %v5086, %v5082
    %v6083 = vpack.c.b16 %v5091, %v5087
    %v6084 = vpack.c.b16 %v5092, %v5088
    %v6085 = vpack.c.b16 %v5093, %v5089
    %v6086 = vpack.c.b16 %v5094, %v5090
    %v6087 = vpack.c.b16 %v5099, %v5095
    %v6088 = vpack.c.b16 %v5100, %v5096
    %v6089 = vpack.c.b16 %v5101, %v5097
    %v6090 = vpack.c.b16 %v5102, %v5098
    %v6091 = vpack.c.b16 %v5107, %v5103
    %v6092 = vpack.c.b16 %v5108, %v5104
    %v6093 = vpack.c.b16 %v5109, %v5105
    %v6094 = vpack.c.b16 %v5110, %v5106
    %v6095 = vpack.c.b16 %v5115, %v5111
    %v6096 = vpack.c.b16 %v5116, %v5112
    %v6097 = vpack.c.b16 %v5117, %v5113
    %v6098 = vpack.c.b16 %v5118, %v5114
    %v6099 = vpack.c.b16 %v5123, %v5119
    %v6100 = vpack.c.b16 %v5124, %v5120
    %v6101 = vpack.c.b16 %v5125, %v5121
    %v6102 = vpack.c.b16 %v5126, %v5122
    %v6103 = vpack.c.b16 %v5131, %v5127
    %v6104 = vpack.c.b16 %v5132, %v5128
    %v6105 = vpack.c.b16 %v5133, %v5129
    %v6106 = vpack.c.b16 %v5134, %v5130
    %v6107 = vpack.c.b16 %v5139, %v5135
    %v6108 = vpack.c.b16 %v5140, %v5136
    %v6109 = vpack.c.b16 %v5141, %v5137
    %v6110 = vpack.c.b16 %v5142, %v5138
    %v6111 = vpack.c.b16 %v5147, %v5143
    %v6112 = vpack.c.b16 %v5148, %v5144
    %v6113 = vpack.c.b16 %v5149, %v5145
    %v6114 = vpack.c.b16 %v5150, %v5146
    %v6115 = vpack.c.b16 %v5155, %v5151
    %v6116 = vpack.c.b16 %v5156, %v5152
    %v6117 = vpack.c.b16 %v5157, %v5153
    %v6118 = vpack.c.b16 %v5158, %v5154
    %v6119 = vpack.c.b16 %v5163, %v5159
    %v6120 = vpack.c.b16 %v5164, %v5160
    %v6121 = vpack.c.b16 %v5165, %v5161
    %v6122 = vpack.c.b16 %v5166, %v5162
    %v6123 = vpack.c.b16 %v5171, %v5167
    %v6124 = vpack.c.b16 %v5172, %v5168
    %v6125 = vpack.c.b16 %v5173, %v5169
    %v6126 = vpack.c.b16 %v5174, %v5170
    %v6127 = vpack.c.b16 %v5179, %v5175
    %v6128 = vpack.c.b16 %v5180, %v5176
    %v6129 = vpack.c.b16 %v5181, %v5177
    %v6130 = vpack.c.b16 %v5182, %v5178
    %v6131 = vpack.c.b16 %v5187, %v5183
    %v6132 = vpack.c.b16 %v5188, %v5184
    %v6133 = vpack.c.b16 %v5189, %v5185
    %v6134 = vpack.c.b16 %v5190, %v5186
    %v6135 = vpack.c.b16 %v5195, %v5191
    %v6136 = vpack.c.b16 %v5196, %v5192
    %v6137 = vpack.c.b16 %v5197, %v5193
    %v6138 = vpack.c.b16 %v5198, %v5194
    %v6139 = vpack.c.b16 %v5203, %v5199
    %v6140 = vpack.c.b16 %v5204, %v5200
    %v6141 = vpack.c.b16 %v5205, %v5201
    %v6142 = vpack.c.b16 %v5206, %v5202
    %v6143 = vpack.c.b16 %v5211, %v5207
    %v6144 = vpack.c.b16 %v5212, %v5208
    %v6145 = vpack.c.b16 %v5213, %v5209
    %v6146 = vpack.c.b16 %v5214, %v5210
    %v6147 = vpack.c.b16 %v5219, %v5215
    %v6148 = vpack.c.b16 %v5220, %v5216
    %v6149 = vpack.c.b16 %v5221, %v5217
    %v6150 = vpack.c.b16 %v5222, %v5218
    %v6151 = vpack.c.b16 %v5227, %v5223
    %v6152 = vpack.c.b16 %v5228, %v5224
    %v6153 = vpack.c.b16 %v5229, %v5225
    %v6154 = vpack.c.b16 %v5230, %v5226
    %v6155 = vpack.c.b16 %v5235, %v5231
    %v6156 = vpack.c.b16 %v5236, %v5232
    %v6157 = vpack.c.b16 %v5237, %v5233
    %v6158 = vpack.c.b16 %v5238, %v5234
    %v6159 = vpack.c.b16 %v5243, %v5239
    %v6160 = vpack.c.b16 %v5244, %v5240
    %v6161 = vpack.c.b16 %v5245, %v5241
    %v6162 = vpack.c.b16 %v5246, %v5242
    %v6163 = vpack.c.b16 %v5251, %v5247
    %v6164 = vpack.c.b16 %v5252, %v5248
    %v6165 = vpack.c.b16 %v5253, %v5249
    %v6166 = vpack.c.b16 %v5254, %v5250
    %v6167 = vpack.c.b16 %v5259, %v5255
    %v6168 = vpack.c.b16 %v5260, %v5256
    %v6169 = vpack.c.b16 %v5261, %v5257
    %v6170 = vpack.c.b16 %v5262, %v5258
    %v6171 = vpack.c.b16 %v5267, %v5263
    %v6172 = vpack.c.b16 %v5268, %v5264
    %v6173 = vpack.c.b16 %v5269, %v5265
    %v6174 = vpack.c.b16 %v5270, %v5266
    %v6175 = vpack.c.b16 %v5275, %v5271
    %v6176 = vpack.c.b16 %v5276, %v5272
    %v6177 = vpack.c.b16 %v5277, %v5273
    %v6178 = vpack.c.b16 %v5278, %v5274
    %v6179 = vpack.c.b16 %v5283, %v5279
    %v6180 = vpack.c.b16 %v5284, %v5280
    %v6181 = vpack.c.b16 %v5285, %v5281
    %v6182 = vpack.c.b16 %v5286, %v5282
    %v6183 = vpack.c.b16 %v5291, %v5287
    %v6184 = vpack.c.b16 %v5292, %v5288
    %v6185 = vpack.c.b16 %v5293, %v5289
    %v6186 = vpack.c.b16 %v5294, %v5290
    %v6187 = vpack.c.b16 %v5299, %v5295
    %v6188 = vpack.c.b16 %v5300, %v5296
    %v6189 = vpack.c.b16 %v5301, %v5297
    %v6190 = vpack.c.b16 %v5302, %v5298
    %v6191 = vpack.c.b16 %v5307, %v5303
    %v6192 = vpack.c.b16 %v5308, %v5304
    %v6193 = vpack.c.b16 %v5309, %v5305
    %v6194 = vpack.c.b16 %v5310, %v5306
    %v6195 = vpack.c.b16 %v5315, %v5311
    %v6196 = vpack.c.b16 %v5316, %v5312
    %v6197 = vpack.c.b16 %v5317, %v5313
    %v6198 = vpack.c.b16 %v5318, %v5314
    %v6199 = vpack.c.b16 %v5323, %v5319
    %v6200 = vpack.c.b16 %v5324, %v5320
    %v6201 = vpack.c.b16 %v5325, %v5321
    %v6202 = vpack.c.b16 %v5326, %v5322
    %v6203 = vpack.c.b16 %v5331, %v5327
    %v6204 = vpack.c.b16 %v5332, %v5328
    %v6205 = vpack.c.b16 %v5333, %v5329
    %v6206 = vpack.c.b16 %v5334, %v5330
    %v6207 = vpack.c.b16 %v5339, %v5335
    %v6208 = vpack.c.b16 %v5340, %v5336
    %v6209 = vpack.c.b16 %v5341, %v5337
    %v6210 = vpack.c.b16 %v5342, %v5338
    %v6211 = vpack.c.b16 %v5347, %v5343
    %v6212 = vpack.c.b16 %v5348, %v5344
    %v6213 = vpack.c.b16 %v5349, %v5345
    %v6214 = vpack.c.b16 %v5350, %v5346
    %v6215 = vpack.c.b16 %v5355, %v5351
    %v6216 = vpack.c.b16 %v5356, %v5352
    %v6217 = vpack.c.b16 %v5357, %v5353
    %v6218 = vpack.c.b16 %v5358, %v5354
    %v6219 = vpack.c.b16 %v5363, %v5359
    %v6220 = vpack.c.b16 %v5364, %v5360
    %v6221 = vpack.c.b16 %v5365, %v5361
    %v6222 = vpack.c.b16 %v5366, %v5362
    %v6223 = vpack.c.b16 %v5371, %v5367
    %v6224 = vpack.c.b16 %v5372, %v5368
    %v6225 = vpack.c.b16 %v5373, %v5369
    %v6226 = vpack.c.b16 %v5374, %v5370
    %v6227 = vpack.c.b16 %v5379, %v5375
    %v6228 = vpack.c.b16 %v5380, %v5376
    %v6229 = vpack.c.b16 %v5381, %v5377
    %v6230 = vpack.c.b16 %v5382, %v5378
    %v6231 = vpack.c.b16 %v5387, %v5383
    %v6232 = vpack.c.b16 %v5388, %v5384
    %v6233 = vpack.c.b16 %v5389, %v5385
    %v6234 = vpack.c.b16 %v5390, %v5386
    %v6235 = vpack.c.b16 %v5395, %v5391
    %v6236 = vpack.c.b16 %v5396, %v5392
    %v6237 = vpack.c.b16 %v5397, %v5393
    %v6238 = vpack.c.b16 %v5398, %v5394
    %v6239 = vpack.c.b16 %v5403, %v5399
    %v6240 = vpack.c.b16 %v5404, %v5400
    %v6241 = vpack.c.b16 %v5405, %v5401
    %v6242 = vpack.c.b16 %v5406, %v5402
    %v6243 = vpack.c.b16 %v5411, %v5407
    %v6244 = vpack.c.b16 %v5412, %v5408
    %v6245 = vpack.c.b16 %v5413, %v5409
    %v6246 = vpack.c.b16 %v5414, %v5410
    %v6247 = vpack.c.b16 %v5419, %v5415
    %v6248 = vpack.c.b16 %v5420, %v5416
    %v6249 = vpack.c.b16 %v5421, %v5417
    %v6250 = vpack.c.b16 %v5422, %v5418
    %v6251 = vpack.c.b16 %v5427, %v5423
    %v6252 = vpack.c.b16 %v5428, %v5424
    %v6253 = vpack.c.b16 %v5429, %v5425
    %v6254 = vpack.c.b16 %v5430, %v5426
    %v6255 = vpack.c.b16 %v5435, %v5431
    %v6256 = vpack.c.b16 %v5436, %v5432
    %v6257 = vpack.c.b16 %v5437, %v5433
    %v6258 = vpack.c.b16 %v5438, %v5434
    %v6259 = vpack.c.b16 %v5443, %v5439
    %v6260 = vpack.c.b16 %v5444, %v5440
    %v6261 = vpack.c.b16 %v5445, %v5441
    %v6262 = vpack.c.b16 %v5446, %v5442
    %v6263 = vpack.c.b16 %v5451, %v5447
    %v6264 = vpack.c.b16 %v5452, %v5448
    %v6265 = vpack.c.b16 %v5453, %v5449
    %v6266 = vpack.c.b16 %v5454, %v5450
    %v6267 = vpack.c.b16 %v5459, %v5455
    %v6268 = vpack.c.b16 %v5460, %v5456
    %v6269 = vpack.c.b16 %v5461, %v5457
    %v6270 = vpack.c.b16 %v5462, %v5458
    %v6271 = vpack.c.b16 %v5467, %v5463
    %v6272 = vpack.c.b16 %v5468, %v5464
    %v6273 = vpack.c.b16 %v5469, %v5465
    %v6274 = vpack.c.b16 %v5470, %v5466
    %v6275 = vpack.c.b16 %v5475, %v5471
    %v6276 = vpack.c.b16 %v5476, %v5472
    %v6277 = vpack.c.b16 %v5477, %v5473
    %v6278 = vpack.c.b16 %v5478, %v5474
    %v6279 = vpack.c.b16 %v5483, %v5479
    %v6280 = vpack.c.b16 %v5484, %v5480
    %v6281 = vpack.c.b16 %v5485, %v5481
    %v6282 = vpack.c.b16 %v5486, %v5482
    %v6283 = vpack.c.b16 %v5491, %v5487
    %v6284 = vpack.c.b16 %v5492, %v5488
    %v6285 = vpack.c.b16 %v5493, %v5489
    %v6286 = vpack.c.b16 %v5494, %v5490
    %v6287 = vpack.c.b16 %v5499, %v5495
    %v6288 = vpack.c.b16 %v5500, %v5496
    %v6289 = vpack.c.b16 %v5501, %v5497
    %v6290 = vpack.c.b16 %v5502, %v5498
    %v6291 = vpack.c.b16 %v5507, %v5503
    %v6292 = vpack.c.b16 %v5508, %v5504
    %v6293 = vpack.c.b16 %v5509, %v5505
    %v6294 = vpack.c.b16 %v5510, %v5506
    %v6295 = vpack.c.b16 %v5515, %v5511
    %v6296 = vpack.c.b16 %v5516, %v5512
    %v6297 = vpack.c.b16 %v5517, %v5513
    %v6298 = vpack.c.b16 %v5518, %v5514
    %v6299 = vpack.c.b16 %v5523, %v5519
    %v6300 = vpack.c.b16 %v5524, %v5520
    %v6301 = vpack.c.b16 %v5525, %v5521
    %v6302 = vpack.c.b16 %v5526, %v5522
    %v6303 = vpack.c.b16 %v5531, %v5527
    %v6304 = vpack.c.b16 %v5532, %v5528
    %v6305 = vpack.c.b16 %v5533, %v5529
    %v6306 = vpack.c.b16 %v5534, %v5530
    %v6307 = vpack.c.b16 %v5539, %v5535
    %v6308 = vpack.c.b16 %v5540, %v5536
    %v6309 = vpack.c.b16 %v5541, %v5537
    %v6310 = vpack.c.b16 %v5542, %v5538
    %v6311 = vpack.c.b16 %v5547, %v5543
    %v6312 = vpack.c.b16 %v5548, %v5544
    %v6313 = vpack.c.b16 %v5549, %v5545
    %v6314 = vpack.c.b16 %v5550, %v5546
    %v6315 = vpack.c.b16 %v5555, %v5551
    %v6316 = vpack.c.b16 %v5556, %v5552
    %v6317 = vpack.c.b16 %v5557, %v5553
    %v6318 = vpack.c.b16 %v5558, %v5554
    %v6319 = vpack.c.b16 %v5563, %v5559
    %v6320 = vpack.c.b16 %v5564, %v5560
    %v6321 = vpack.c.b16 %v5565, %v5561
    %v6322 = vpack.c.b16 %v5566, %v5562
    %v6323 = vpack.c.b16 %v5571, %v5567
    %v6324 = vpack.c.b16 %v5572, %v5568
    %v6325 = vpack.c.b16 %v5573, %v5569
    %v6326 = vpack.c.b16 %v5574, %v5570
    %v6327 = vpack.c.b16 %v5579, %v5575
    %v6328 = vpack.c.b16 %v5580, %v5576
    %v6329 = vpack.c.b16 %v5581, %v5577
    %v6330 = vpack.c.b16 %v5582, %v5578
    %v6331 = vpack.c.b16 %v5587, %v5583
    %v6332 = vpack.c.b16 %v5588, %v5584
    %v6333 = vpack.c.b16 %v5589, %v5585
    %v6334 = vpack.c.b16 %v5590, %v5586
    %v6335 = vpack.c.b16 %v5595, %v5591
    %v6336 = vpack.c.b16 %v5596, %v5592
    %v6337 = vpack.c.b16 %v5597, %v5593
    %v6338 = vpack.c.b16 %v5598, %v5594
    %v6339 = vpack.c.b16 %v5603, %v5599
    %v6340 = vpack.c.b16 %v5604, %v5600
    %v6341 = vpack.c.b16 %v5605, %v5601
    %v6342 = vpack.c.b16 %v5606, %v5602
    %v6343 = vpack.c.b16 %v5611, %v5607
    %v6344 = vpack.c.b16 %v5612, %v5608
    %v6345 = vpack.c.b16 %v5613, %v5609
    %v6346 = vpack.c.b16 %v5614, %v5610
    %v6347 = vpack.c.b16 %v5619, %v5615
    %v6348 = vpack.c.b16 %v5620, %v5616
    %v6349 = vpack.c.b16 %v5621, %v5617
    %v6350 = vpack.c.b16 %v5622, %v5618
    %v6351 = vpack.c.b16 %v5627, %v5623
    %v6352 = vpack.c.b16 %v5628, %v5624
    %v6353 = vpack.c.b16 %v5629, %v5625
    %v6354 = vpack.c.b16 %v5630, %v5626
    %v6355 = vpack.c.b16 %v5635, %v5631
    %v6356 = vpack.c.b16 %v5636, %v5632
    %v6357 = vpack.c.b16 %v5637, %v5633
    %v6358 = vpack.c.b16 %v5638, %v5634
    %v6359 = vpack.c.b16 %v5643, %v5639
    %v6360 = vpack.c.b16 %v5644, %v5640
    %v6361 = vpack.c.b16 %v5645, %v5641
    %v6362 = vpack.c.b16 %v5646, %v5642
    %v6363 = vpack.c.b16 %v5651, %v5647
    %v6364 = vpack.c.b16 %v5652, %v5648
    %v6365 = vpack.c.b16 %v5653, %v5649
    %v6366 = vpack.c.b16 %v5654, %v5650
    %v6367 = vpack.c.b16 %v5659, %v5655
    %v6368 = vpack.c.b16 %v5660, %v5656
    %v6369 = vpack.c.b16 %v5661, %v5657
    %v6370 = vpack.c.b16 %v5662, %v5658
    %v6371 = vpack.c.b16 %v5667, %v5663
    %v6372 = vpack.c.b16 %v5668, %v5664
    %v6373 = vpack.c.b16 %v5669, %v5665
    %v6374 = vpack.c.b16 %v5670, %v5666
    %v6375 = vpack.c.b16 %v5675, %v5671
    %v6376 = vpack.c.b16 %v5676, %v5672
    %v6377 = vpack.c.b16 %v5677, %v5673
    %v6378 = vpack.c.b16 %v5678, %v5674
    %v6379 = vpack.c.b16 %v5683, %v5679
    %v6380 = vpack.c.b16 %v5684, %v5680
    %v6381 = vpack.c.b16 %v5685, %v5681
    %v6382 = vpack.c.b16 %v5686, %v5682
    %v6383 = vpack.c.b16 %v5691, %v5687
    %v6384 = vpack.c.b16 %v5692, %v5688
    %v6385 = vpack.c.b16 %v5693, %v5689
    %v6386 = vpack.c.b16 %v5694, %v5690
    %v6387 = vpack.c.b16 %v5699, %v5695
    %v6388 = vpack.c.b16 %v5700, %v5696
    %v6389 = vpack.c.b16 %v5701, %v5697
    %v6390 = vpack.c.b16 %v5702, %v5698
    %v6391 = vpack.c.b16 %v5707, %v5703
    %v6392 = vpack.c.b16 %v5708, %v5704
    %v6393 = vpack.c.b16 %v5709, %v5705
    %v6394 = vpack.c.b16 %v5710, %v5706
    %v6395 = vpack.c.b16 %v5715, %v5711
    %v6396 = vpack.c.b16 %v5716, %v5712
    %v6397 = vpack.c.b16 %v5717, %v5713
    %v6398 = vpack.c.b16 %v5718, %v5714
    %v6399 = vpack.c.b16 %v5723, %v5719
    %v6400 = vpack.c.b16 %v5724, %v5720
    %v6401 = vpack.c.b16 %v5725, %v5721
    %v6402 = vpack.c.b16 %v5726, %v5722
    %v6403 = vpack.c.b16 %v5731, %v5727
    %v6404 = vpack.c.b16 %v5732, %v5728
    %v6405 = vpack.c.b16 %v5733, %v5729
    %v6406 = vpack.c.b16 %v5734, %v5730
    %v6407 = vpack.c.b16 %v5739, %v5735
    %v6408 = vpack.c.b16 %v5740, %v5736
    %v6409 = vpack.c.b16 %v5741, %v5737
    %v6410 = vpack.c.b16 %v5742, %v5738
    %v6411 = vpack.c.b16 %v5747, %v5743
    %v6412 = vpack.c.b16 %v5748, %v5744
    %v6413 = vpack.c.b16 %v5749, %v5745
    %v6414 = vpack.c.b16 %v5750, %v5746
    %v6415 = vpack.c.b16 %v5755, %v5751
    %v6416 = vpack.c.b16 %v5756, %v5752
    %v6417 = vpack.c.b16 %v5757, %v5753
    %v6418 = vpack.c.b16 %v5758, %v5754
    %v6419 = vpack.c.b16 %v5763, %v5759
    %v6420 = vpack.c.b16 %v5764, %v5760
    %v6421 = vpack.c.b16 %v5765, %v5761
    %v6422 = vpack.c.b16 %v5766, %v5762
    %v6423 = vpack.c.b16 %v5771, %v5767
    %v6424 = vpack.c.b16 %v5772, %v5768
    %v6425 = vpack.c.b16 %v5773, %v5769
    %v6426 = vpack.c.b16 %v5774, %v5770
    %v6427 = vpack.c.b16 %v5779, %v5775
    %v6428 = vpack.c.b16 %v5780, %v5776
    %v6429 = vpack.c.b16 %v5781, %v5777
    %v6430 = vpack.c.b16 %v5782, %v5778
    %v6431 = vpack.c.b16 %v5787, %v5783
    %v6432 = vpack.c.b16 %v5788, %v5784
    %v6433 = vpack.c.b16 %v5789, %v5785
    %v6434 = vpack.c.b16 %v5790, %v5786
    %v6435 = vpack.c.b16 %v5795, %v5791
    %v6436 = vpack.c.b16 %v5796, %v5792
    %v6437 = vpack.c.b16 %v5797, %v5793
    %v6438 = vpack.c.b16 %v5798, %v5794
    %v6439 = vpack.c.b16 %v5803, %v5799
    %v6440 = vpack.c.b16 %v5804, %v5800
    %v6441 = vpack.c.b16 %v5805, %v5801
    %v6442 = vpack.c.b16 %v5806, %v5802
    %v6443 = vpack.c.b16 %v5811, %v5807
    %v6444 = vpack.c.b16 %v5812, %v5808
    %v6445 = vpack.c.b16 %v5813, %v5809
    %v6446 = vpack.c.b16 %v5814, %v5810
    %v6447 = vpack.c.b16 %v5819, %v5815
    %v6448 = vpack.c.b16 %v5820, %v5816
    %v6449 = vpack.c.b16 %v5821, %v5817
    %v6450 = vpack.c.b16 %v5822, %v5818
    %v6451 = vpack.c.b16 %v5827, %v5823
    %v6452 = vpack.c.b16 %v5828, %v5824
    %v6453 = vpack.c.b16 %v5829, %v5825
    %v6454 = vpack.c.b16 %v5830, %v5826
    %v6455 = vpack.c.b16 %v5835, %v5831
    %v6456 = vpack.c.b16 %v5836, %v5832
    %v6457 = vpack.c.b16 %v5837, %v5833
    %v6458 = vpack.c.b16 %v5838, %v5834
    %v6459 = vpack.c.b16 %v5843, %v5839
    %v6460 = vpack.c.b16 %v5844, %v5840
    %v6461 = vpack.c.b16 %v5845, %v5841
    %v6462 = vpack.c.b16 %v5846, %v5842
    %v6463 = vpack.c.b16 %v5851, %v5847
    %v6464 = vpack.c.b16 %v5852, %v5848
    %v6465 = vpack.c.b16 %v5853, %v5849
    %v6466 = vpack.c.b16 %v5854, %v5850
    %v6467 = vpack.c.b16 %v5859, %v5855
    %v6468 = vpack.c.b16 %v5860, %v5856
    %v6469 = vpack.c.b16 %v5861, %v5857
    %v6470 = vpack.c.b16 %v5862, %v5858
    %v6471 = vpack.c.b16 %v5867, %v5863
    %v6472 = vpack.c.b16 %v5868, %v5864
    %v6473 = vpack.c.b16 %v5869, %v5865
    %v6474 = vpack.c.b16 %v5870, %v5866
    %v6475 = vpack.c.b16 %v5875, %v5871
    %v6476 = vpack.c.b16 %v5876, %v5872
    %v6477 = vpack.c.b16 %v5877, %v5873
    %v6478 = vpack.c.b16 %v5878, %v5874
    %v6479 = vpack.c.b16 %v5883, %v5879
    %v6480 = vpack.c.b16 %v5884, %v5880
    %v6481 = vpack.c.b16 %v5885, %v5881
    %v6482 = vpack.c.b16 %v5886, %v5882
    %v6483 = vpack.c.b16 %v5891, %v5887
    %v6484 = vpack.c.b16 %v5892, %v5888
    %v6485 = vpack.c.b16 %v5893, %v5889
    %v6486 = vpack.c.b16 %v5894, %v5890
    %v6487 = vpack.c.b16 %v5899, %v5895
    %v6488 = vpack.c.b16 %v5900, %v5896
    %v6489 = vpack.c.b16 %v5901, %v5897
    %v6490 = vpack.c.b16 %v5902, %v5898
    %v6491 = vpack.c.b16 %v5907, %v5903
    %v6492 = vpack.c.b16 %v5908, %v5904
    %v6493 = vpack.c.b16 %v5909, %v5905
    %v6494 = vpack.c.b16 %v5910, %v5906
    %v6495 = vpack.c.b16 %v5915, %v5911
    %v6496 = vpack.c.b16 %v5916, %v5912
    %v6497 = vpack.c.b16 %v5917, %v5913
    %v6498 = vpack.c.b16 %v5918, %v5914
    %v6499 = vpack.c.b16 %v5923, %v5919
    %v6500 = vpack.c.b16 %v5924, %v5920
    %v6501 = vpack.c.b16 %v5925, %v5921
    %v6502 = vpack.c.b16 %v5926, %v5922
    %v6503 = vpack.c.b16 %v5931, %v5927
    %v6504 = vpack.c.b16 %v5932, %v5928
    %v6505 = vpack.c.b16 %v5933, %v5929
    %v6506 = vpack.c.b16 %v5934, %v5930
    %v6507 = vpack.c.b16 %v5939, %v5935
    %v6508 = vpack.c.b16 %v5940, %v5936
    %v6509 = vpack.c.b16 %v5941, %v5937
    %v6510 = vpack.c.b16 %v5942, %v5938
    %v6511 = vpack.c.b16 %v5947, %v5943
    %v6512 = vpack.c.b16 %v5948, %v5944
    %v6513 = vpack.c.b16 %v5949, %v5945
    %v6514 = vpack.c.b16 %v5950, %v5946
    %v6515 = vpack.c.b16 %v5955, %v5951
    %v6516 = vpack.c.b16 %v5956, %v5952
    %v6517 = vpack.c.b16 %v5957, %v5953
    %v6518 = vpack.c.b16 %v5958, %v5954
    %v6519 = vpack.c.b16 %v5963, %v5959
    %v6520 = vpack.c.b16 %v5964, %v5960
    %v6521 = vpack.c.b16 %v5965, %v5961
    %v6522 = vpack.c.b16 %v5966, %v5962
    %v6523 = vpack.c.b16 %v5971, %v5967
    %v6524 = vpack.c.b16 %v5972, %v5968
    %v6525 = vpack.c.b16 %v5973, %v5969
    %v6526 = vpack.c.b16 %v5974, %v5970
    %v6527 = vpack.c.b16 %v5979, %v5975
    %v6528 = vpack.c.b16 %v5980, %v5976
    %v6529 = vpack.c.b16 %v5981, %v5977
    %v6530 = vpack.c.b16 %v5982, %v5978
    %v6531 = vpack.c.b16 %v5987, %v5983
    %v6532 = vpack.c.b16 %v5988, %v5984
    %v6533 = vpack.c.b16 %v5989, %v5985
    %v6534 = vpack.c.b16 %v5990, %v5986
    %v6535 = vpack.c.b16 %v5995, %v5991
    %v6536 = vpack.c.b16 %v5996, %v5992
    %v6537 = vpack.c.b16 %v5997, %v5993
    %v6538 = vpack.c.b16 %v5998, %v5994
    %v6539 = vpack.c.b16 %v6003, %v5999
    %v6540 = vpack.c.b16 %v6004, %v6000
    %v6541 = vpack.c.b16 %v6005, %v6001
    %v6542 = vpack.c.b16 %v6006, %v6002
    %v6543 = vpack.c.b16 %v6011, %v6007
    %v6544 = vpack.c.b16 %v6012, %v6008
    %v6545 = vpack.c.b16 %v6013, %v6009
    %v6546 = vpack.c.b16 %v6014, %v6010
    %v6547 = vpack.c.b16 %v6019, %v6015
    %v6548 = vpack.c.b16 %v6020, %v6016
    %v6549 = vpack.c.b16 %v6021, %v6017
    %v6550 = vpack.c.b16 %v6022, %v6018
    %v6551 = vpack.c.b16 %v6027, %v6023
    %v6552 = vpack.c.b16 %v6028, %v6024
    %v6553 = vpack.c.b16 %v6029, %v6025
    %v6554 = vpack.c.b16 %v6030, %v6026
    %v6555 = vpack.c.b16 %v6035, %v6031
    %v6556 = vpack.c.b16 %v6036, %v6032
    %v6557 = vpack.c.b16 %v6037, %v6033
    %v6558 = vpack.c.b16 %v6038, %v6034
    %v6559 = vpack.c.b16 %v6043, %v6039
    %v6560 = vpack.c.b16 %v6044, %v6040
    %v6561 = vpack.c.b16 %v6045, %v6041
    %v6562 = vpack.c.b16 %v6046, %v6042
    %v6563 = vpack.c.b16 %v6051, %v6047
    %v6564 = vpack.c.b16 %v6052, %v6048
    %v6565 = vpack.c.b16 %v6053, %v6049
    %v6566 = vpack.c.b16 %v6054, %v6050
    %7079 = vmatprep.subr.bf16.mxu0 %v6084
    %7080 = vmatpush1.bf16.msra.mxu0 %v6083
    %7081 = vmatprep.subr.bf16.mxu0 %v6080
    %7082 = vmatpush1.bf16.msra.mxu0 %v6079
    %7083 = vmatprep.subr.bf16.mxu0 %v6076
    %7084 = vmatpush1.bf16.msra.mxu0 %v6075
    %7085 = vmatprep.subr.bf16.mxu0 %v6072
    %7086 = vmatpush1.bf16.msra.mxu0 %v6071
    %7087 = vmatprep.subr.bf16.mxu0 %v6068
    %7088 = vmatpush1.bf16.msra.mxu0 %v6067
    %7089 = vmatprep.subr.bf16.mxu0 %v6064
    %7090 = vmatpush1.bf16.msra.mxu0 %v6063
    %7091 = vmatprep.subr.bf16.mxu0 %v6060
    %7092 = vmatpush1.bf16.msra.mxu0 %v6059
    %7093 = vmatprep.subr.bf16.mxu0 %v6056
    %7094 = vmatpush1.bf16.msra.mxu0 %v6055
    %7095 = vmatprep.subr.bf16.mxu0 %v6116
    %7096 = vmatpush2.bf16.msra.mxu0 %v6115
    %7097 = vmatprep.subr.bf16.mxu0 %v6112
    %7098 = vmatpush2.bf16.msra.mxu0 %v6111
    %7099 = vmatprep.subr.bf16.mxu0 %v6108
    %7100 = vmatpush2.bf16.msra.mxu0 %v6107
    %7101 = vmatprep.subr.bf16.mxu0 %v6104
    %7102 = vmatpush2.bf16.msra.mxu0 %v6103
    %7103 = vmatprep.subr.bf16.mxu0 %v6100
    %7104 = vmatpush2.bf16.msra.mxu0 %v6099
    %7105 = vmatprep.subr.bf16.mxu0 %v6096
    %7106 = vmatpush2.bf16.msra.mxu0 %v6095
    %7107 = vmatprep.subr.bf16.mxu0 %v6092
    %7108 = vmatpush2.bf16.msra.mxu0 %v6091
    %7109 = vmatprep.subr.bf16.mxu0 %v6088
    %7110 = vmatpush2.bf16.msra.mxu0 %v6087
    %7111 = vmatprep.mubr.bf16.mxu0 %v3970
    %7112 = vmatmul.mubr.bf16.gmra.mxu0 %v3969
    %v7113 = vpop.f32.mrf.mxu0
    %v7114 = vadd.f32 %v4502, %v7113
    %v7115 = vpop.f32.mrf.mxu0
    %v7116 = vadd.f32 %v4506, %v7115
    %v7117 = vpop.f32.mrf.mxu0
    %v7118 = vadd.f32 %v4502, %v7117
    %v7119 = vpop.f32.mrf.mxu0
    %v7120 = vadd.f32 %v4506, %v7119
    %7121 = vdwg.mxu0
    %7122 = vmatprep.subr.bf16.mxu0 %v6148
    %7123 = vmatpush1.bf16.msra.mxu0 %v6147
    %7124 = vmatprep.subr.bf16.mxu0 %v6144
    %7125 = vmatpush1.bf16.msra.mxu0 %v6143
    %7126 = vmatprep.subr.bf16.mxu0 %v6140
    %7127 = vmatpush1.bf16.msra.mxu0 %v6139
    %7128 = vmatprep.subr.bf16.mxu0 %v6136
    %7129 = vmatpush1.bf16.msra.mxu0 %v6135
    %7130 = vmatprep.subr.bf16.mxu0 %v6132
    %7131 = vmatpush1.bf16.msra.mxu0 %v6131
    %7132 = vmatprep.subr.bf16.mxu0 %v6128
    %7133 = vmatpush1.bf16.msra.mxu0 %v6127
    %7134 = vmatprep.subr.bf16.mxu0 %v6124
    %7135 = vmatpush1.bf16.msra.mxu0 %v6123
    %7136 = vmatprep.subr.bf16.mxu0 %v6120
    %7137 = vmatpush1.bf16.msra.mxu0 %v6119
    %7138 = vmatprep.subr.bf16.mxu0 %v6180
    %7139 = vmatpush2.bf16.msra.mxu0 %v6179
    %7140 = vmatprep.subr.bf16.mxu0 %v6176
    %7141 = vmatpush2.bf16.msra.mxu0 %v6175
    %7142 = vmatprep.subr.bf16.mxu0 %v6172
    %7143 = vmatpush2.bf16.msra.mxu0 %v6171
    %7144 = vmatprep.subr.bf16.mxu0 %v6168
    %7145 = vmatpush2.bf16.msra.mxu0 %v6167
    %7146 = vmatprep.subr.bf16.mxu0 %v6164
    %7147 = vmatpush2.bf16.msra.mxu0 %v6163
    %7148 = vmatprep.subr.bf16.mxu0 %v6160
    %7149 = vmatpush2.bf16.msra.mxu0 %v6159
    %7150 = vmatprep.subr.bf16.mxu0 %v6156
    %7151 = vmatpush2.bf16.msra.mxu0 %v6155
    %7152 = vmatprep.subr.bf16.mxu0 %v6152
    %7153 = vmatpush2.bf16.msra.mxu0 %v6151
    %7154 = vmatprep.mubr.bf16.mxu0 %v3972
    %7155 = vmatmul.mubr.bf16.gmra.mxu0 %v3971
    %v7156 = vpop.f32.mrf.mxu0
    %v7157 = vadd.f32 %v7114, %v7156
    %v7158 = vpop.f32.mrf.mxu0
    %v7159 = vadd.f32 %v7116, %v7158
    %v7160 = vpop.f32.mrf.mxu0
    %v7161 = vadd.f32 %v7118, %v7160
    %v7162 = vpop.f32.mrf.mxu0
    %v7163 = vadd.f32 %v7120, %v7162
    %7164 = vdwg.mxu0
    %7165 = vmatprep.subr.bf16.mxu0 %v6212
    %7166 = vmatpush1.bf16.msra.mxu0 %v6211
    %7167 = vmatprep.subr.bf16.mxu0 %v6208
    %7168 = vmatpush1.bf16.msra.mxu0 %v6207
    %7169 = vmatprep.subr.bf16.mxu0 %v6204
    %7170 = vmatpush1.bf16.msra.mxu0 %v6203
    %7171 = vmatprep.subr.bf16.mxu0 %v6200
    %7172 = vmatpush1.bf16.msra.mxu0 %v6199
    %7173 = vmatprep.subr.bf16.mxu0 %v6196
    %7174 = vmatpush1.bf16.msra.mxu0 %v6195
    %7175 = vmatprep.subr.bf16.mxu0 %v6192
    %7176 = vmatpush1.bf16.msra.mxu0 %v6191
    %7177 = vmatprep.subr.bf16.mxu0 %v6188
    %7178 = vmatpush1.bf16.msra.mxu0 %v6187
    %7179 = vmatprep.subr.bf16.mxu0 %v6184
    %7180 = vmatpush1.bf16.msra.mxu0 %v6183
    %7181 = vmatprep.subr.bf16.mxu0 %v6244
    %7182 = vmatpush2.bf16.msra.mxu0 %v6243
    %7183 = vmatprep.subr.bf16.mxu0 %v6240
    %7184 = vmatpush2.bf16.msra.mxu0 %v6239
    %7185 = vmatprep.subr.bf16.mxu0 %v6236
    %7186 = vmatpush2.bf16.msra.mxu0 %v6235
    %7187 = vmatprep.subr.bf16.mxu0 %v6232
    %7188 = vmatpush2.bf16.msra.mxu0 %v6231
    %7189 = vmatprep.subr.bf16.mxu0 %v6228
    %7190 = vmatpush2.bf16.msra.mxu0 %v6227
    %7191 = vmatprep.subr.bf16.mxu0 %v6224
    %7192 = vmatpush2.bf16.msra.mxu0 %v6223
    %7193 = vmatprep.subr.bf16.mxu0 %v6220
    %7194 = vmatpush2.bf16.msra.mxu0 %v6219
    %7195 = vmatprep.subr.bf16.mxu0 %v6216
    %7196 = vmatpush2.bf16.msra.mxu0 %v6215
    %7197 = vmatprep.mubr.bf16.mxu0 %v3974
    %7198 = vmatmul.mubr.bf16.gmra.mxu0 %v3973
    %v7199 = vpop.f32.mrf.mxu0
    %v7200 = vadd.f32 %v7157, %v7199
    %v7201 = vpop.f32.mrf.mxu0
    %v7202 = vadd.f32 %v7159, %v7201
    %v7203 = vpop.f32.mrf.mxu0
    %v7204 = vadd.f32 %v7161, %v7203
    %v7205 = vpop.f32.mrf.mxu0
    %v7206 = vadd.f32 %v7163, %v7205
    %7207 = vdwg.mxu0
    %7208 = vmatprep.subr.bf16.mxu0 %v6276
    %7209 = vmatpush1.bf16.msra.mxu0 %v6275
    %7210 = vmatprep.subr.bf16.mxu0 %v6272
    %7211 = vmatpush1.bf16.msra.mxu0 %v6271
    %7212 = vmatprep.subr.bf16.mxu0 %v6268
    %7213 = vmatpush1.bf16.msra.mxu0 %v6267
    %7214 = vmatprep.subr.bf16.mxu0 %v6264
    %7215 = vmatpush1.bf16.msra.mxu0 %v6263
    %7216 = vmatprep.subr.bf16.mxu0 %v6260
    %7217 = vmatpush1.bf16.msra.mxu0 %v6259
    %7218 = vmatprep.subr.bf16.mxu0 %v6256
    %7219 = vmatpush1.bf16.msra.mxu0 %v6255
    %7220 = vmatprep.subr.bf16.mxu0 %v6252
    %7221 = vmatpush1.bf16.msra.mxu0 %v6251
    %7222 = vmatprep.subr.bf16.mxu0 %v6248
    %7223 = vmatpush1.bf16.msra.mxu0 %v6247
    %7224 = vmatprep.subr.bf16.mxu0 %v6308
    %7225 = vmatpush2.bf16.msra.mxu0 %v6307
    %7226 = vmatprep.subr.bf16.mxu0 %v6304
    %7227 = vmatpush2.bf16.msra.mxu0 %v6303
    %7228 = vmatprep.subr.bf16.mxu0 %v6300
    %7229 = vmatpush2.bf16.msra.mxu0 %v6299
    %7230 = vmatprep.subr.bf16.mxu0 %v6296
    %7231 = vmatpush2.bf16.msra.mxu0 %v6295
    %7232 = vmatprep.subr.bf16.mxu0 %v6292
    %7233 = vmatpush2.bf16.msra.mxu0 %v6291
    %7234 = vmatprep.subr.bf16.mxu0 %v6288
    %7235 = vmatpush2.bf16.msra.mxu0 %v6287
    %7236 = vmatprep.subr.bf16.mxu0 %v6284
    %7237 = vmatpush2.bf16.msra.mxu0 %v6283
    %7238 = vmatprep.subr.bf16.mxu0 %v6280
    %7239 = vmatpush2.bf16.msra.mxu0 %v6279
    %7240 = vmatprep.mubr.bf16.mxu0 %v3976
    %7241 = vmatmul.mubr.bf16.gmra.mxu0 %v3975
    %v7242 = vpop.f32.mrf.mxu0
    %v7243 = vadd.f32 %v7200, %v7242
    %v7244 = vpop.f32.mrf.mxu0
    %v7245 = vadd.f32 %v7202, %v7244
    %v7246 = vpop.f32.mrf.mxu0
    %v7247 = vadd.f32 %v7204, %v7246
    %v7248 = vpop.f32.mrf.mxu0
    %v7249 = vadd.f32 %v7206, %v7248
    %7250 = vdwg.mxu0
    %7251 = vmatprep.subr.bf16.mxu0 %v6340
    %7252 = vmatpush1.bf16.msra.mxu0 %v6339
    %7253 = vmatprep.subr.bf16.mxu0 %v6336
    %7254 = vmatpush1.bf16.msra.mxu0 %v6335
    %7255 = vmatprep.subr.bf16.mxu0 %v6332
    %7256 = vmatpush1.bf16.msra.mxu0 %v6331
    %7257 = vmatprep.subr.bf16.mxu0 %v6328
    %7258 = vmatpush1.bf16.msra.mxu0 %v6327
    %7259 = vmatprep.subr.bf16.mxu0 %v6324
    %7260 = vmatpush1.bf16.msra.mxu0 %v6323
    %7261 = vmatprep.subr.bf16.mxu0 %v6320
    %7262 = vmatpush1.bf16.msra.mxu0 %v6319
    %7263 = vmatprep.subr.bf16.mxu0 %v6316
    %7264 = vmatpush1.bf16.msra.mxu0 %v6315
    %7265 = vmatprep.subr.bf16.mxu0 %v6312
    %7266 = vmatpush1.bf16.msra.mxu0 %v6311
    %7267 = vmatprep.subr.bf16.mxu0 %v6372
    %7268 = vmatpush2.bf16.msra.mxu0 %v6371
    %7269 = vmatprep.subr.bf16.mxu0 %v6368
    %7270 = vmatpush2.bf16.msra.mxu0 %v6367
    %7271 = vmatprep.subr.bf16.mxu0 %v6364
    %7272 = vmatpush2.bf16.msra.mxu0 %v6363
    %7273 = vmatprep.subr.bf16.mxu0 %v6360
    %7274 = vmatpush2.bf16.msra.mxu0 %v6359
    %7275 = vmatprep.subr.bf16.mxu0 %v6356
    %7276 = vmatpush2.bf16.msra.mxu0 %v6355
    %7277 = vmatprep.subr.bf16.mxu0 %v6352
    %7278 = vmatpush2.bf16.msra.mxu0 %v6351
    %7279 = vmatprep.subr.bf16.mxu0 %v6348
    %7280 = vmatpush2.bf16.msra.mxu0 %v6347
    %7281 = vmatprep.subr.bf16.mxu0 %v6344
    %7282 = vmatpush2.bf16.msra.mxu0 %v6343
    %7283 = vmatprep.mubr.bf16.mxu0 %v3978
    %7284 = vmatmul.mubr.bf16.gmra.mxu0 %v3977
    %v7285 = vpop.f32.mrf.mxu0
    %v7286 = vadd.f32 %v7243, %v7285
    %v7287 = vpop.f32.mrf.mxu0
    %v7288 = vadd.f32 %v7245, %v7287
    %v7289 = vpop.f32.mrf.mxu0
    %v7290 = vadd.f32 %v7247, %v7289
    %v7291 = vpop.f32.mrf.mxu0
    %v7292 = vadd.f32 %v7249, %v7291
    %7293 = vdwg.mxu0
    %7294 = vmatprep.subr.bf16.mxu0 %v6404
    %7295 = vmatpush1.bf16.msra.mxu0 %v6403
    %7296 = vmatprep.subr.bf16.mxu0 %v6400
    %7297 = vmatpush1.bf16.msra.mxu0 %v6399
    %7298 = vmatprep.subr.bf16.mxu0 %v6396
    %7299 = vmatpush1.bf16.msra.mxu0 %v6395
    %7300 = vmatprep.subr.bf16.mxu0 %v6392
    %7301 = vmatpush1.bf16.msra.mxu0 %v6391
    %7302 = vmatprep.subr.bf16.mxu0 %v6388
    %7303 = vmatpush1.bf16.msra.mxu0 %v6387
    %7304 = vmatprep.subr.bf16.mxu0 %v6384
    %7305 = vmatpush1.bf16.msra.mxu0 %v6383
    %7306 = vmatprep.subr.bf16.mxu0 %v6380
    %7307 = vmatpush1.bf16.msra.mxu0 %v6379
    %7308 = vmatprep.subr.bf16.mxu0 %v6376
    %7309 = vmatpush1.bf16.msra.mxu0 %v6375
    %7310 = vmatprep.subr.bf16.mxu0 %v6436
    %7311 = vmatpush2.bf16.msra.mxu0 %v6435
    %7312 = vmatprep.subr.bf16.mxu0 %v6432
    %7313 = vmatpush2.bf16.msra.mxu0 %v6431
    %7314 = vmatprep.subr.bf16.mxu0 %v6428
    %7315 = vmatpush2.bf16.msra.mxu0 %v6427
    %7316 = vmatprep.subr.bf16.mxu0 %v6424
    %7317 = vmatpush2.bf16.msra.mxu0 %v6423
    %7318 = vmatprep.subr.bf16.mxu0 %v6420
    %7319 = vmatpush2.bf16.msra.mxu0 %v6419
    %7320 = vmatprep.subr.bf16.mxu0 %v6416
    %7321 = vmatpush2.bf16.msra.mxu0 %v6415
    %7322 = vmatprep.subr.bf16.mxu0 %v6412
    %7323 = vmatpush2.bf16.msra.mxu0 %v6411
    %7324 = vmatprep.subr.bf16.mxu0 %v6408
    %7325 = vmatpush2.bf16.msra.mxu0 %v6407
    %7326 = vmatprep.mubr.bf16.mxu0 %v3980
    %7327 = vmatmul.mubr.bf16.gmra.mxu0 %v3979
    %v7328 = vpop.f32.mrf.mxu0
    %v7329 = vadd.f32 %v7286, %v7328
    %v7330 = vpop.f32.mrf.mxu0
    %v7331 = vadd.f32 %v7288, %v7330
    %v7332 = vpop.f32.mrf.mxu0
    %v7333 = vadd.f32 %v7290, %v7332
    %v7334 = vpop.f32.mrf.mxu0
    %v7335 = vadd.f32 %v7292, %v7334
    %7336 = vdwg.mxu0
    %7337 = vmatprep.subr.bf16.mxu0 %v6468
    %7338 = vmatpush1.bf16.msra.mxu0 %v6467
    %7339 = vmatprep.subr.bf16.mxu0 %v6464
    %7340 = vmatpush1.bf16.msra.mxu0 %v6463
    %7341 = vmatprep.subr.bf16.mxu0 %v6460
    %7342 = vmatpush1.bf16.msra.mxu0 %v6459
    %7343 = vmatprep.subr.bf16.mxu0 %v6456
    %7344 = vmatpush1.bf16.msra.mxu0 %v6455
    %7345 = vmatprep.subr.bf16.mxu0 %v6452
    %7346 = vmatpush1.bf16.msra.mxu0 %v6451
    %7347 = vmatprep.subr.bf16.mxu0 %v6448
    %7348 = vmatpush1.bf16.msra.mxu0 %v6447
    %7349 = vmatprep.subr.bf16.mxu0 %v6444
    %7350 = vmatpush1.bf16.msra.mxu0 %v6443
    %7351 = vmatprep.subr.bf16.mxu0 %v6440
    %7352 = vmatpush1.bf16.msra.mxu0 %v6439
    %7353 = vmatprep.subr.bf16.mxu0 %v6500
    %7354 = vmatpush2.bf16.msra.mxu0 %v6499
    %7355 = vmatprep.subr.bf16.mxu0 %v6496
    %7356 = vmatpush2.bf16.msra.mxu0 %v6495
    %7357 = vmatprep.subr.bf16.mxu0 %v6492
    %7358 = vmatpush2.bf16.msra.mxu0 %v6491
    %7359 = vmatprep.subr.bf16.mxu0 %v6488
    %7360 = vmatpush2.bf16.msra.mxu0 %v6487
    %7361 = vmatprep.subr.bf16.mxu0 %v6484
    %7362 = vmatpush2.bf16.msra.mxu0 %v6483
    %7363 = vmatprep.subr.bf16.mxu0 %v6480
    %7364 = vmatpush2.bf16.msra.mxu0 %v6479
    %7365 = vmatprep.subr.bf16.mxu0 %v6476
    %7366 = vmatpush2.bf16.msra.mxu0 %v6475
    %7367 = vmatprep.subr.bf16.mxu0 %v6472
    %7368 = vmatpush2.bf16.msra.mxu0 %v6471
    %7369 = vmatprep.mubr.bf16.mxu0 %v3982
    %7370 = vmatmul.mubr.bf16.gmra.mxu0 %v3981
    %v7371 = vpop.f32.mrf.mxu0
    %v7372 = vadd.f32 %v7329, %v7371
    %v7373 = vpop.f32.mrf.mxu0
    %v7374 = vadd.f32 %v7331, %v7373
    %v7375 = vpop.f32.mrf.mxu0
    %v7376 = vadd.f32 %v7333, %v7375
    %v7377 = vpop.f32.mrf.mxu0
    %v7378 = vadd.f32 %v7335, %v7377
    %7379 = vdwg.mxu0
    %7380 = vmatprep.subr.bf16.mxu0 %v6532
    %7381 = vmatpush1.bf16.msra.mxu0 %v6531
    %7382 = vmatprep.subr.bf16.mxu0 %v6528
    %7383 = vmatpush1.bf16.msra.mxu0 %v6527
    %7384 = vmatprep.subr.bf16.mxu0 %v6524
    %7385 = vmatpush1.bf16.msra.mxu0 %v6523
    %7386 = vmatprep.subr.bf16.mxu0 %v6520
    %7387 = vmatpush1.bf16.msra.mxu0 %v6519
    %7388 = vmatprep.subr.bf16.mxu0 %v6516
    %7389 = vmatpush1.bf16.msra.mxu0 %v6515
    %7390 = vmatprep.subr.bf16.mxu0 %v6512
    %7391 = vmatpush1.bf16.msra.mxu0 %v6511
    %7392 = vmatprep.subr.bf16.mxu0 %v6508
    %7393 = vmatpush1.bf16.msra.mxu0 %v6507
    %7394 = vmatprep.subr.bf16.mxu0 %v6504
    %7395 = vmatpush1.bf16.msra.mxu0 %v6503
    %7396 = vmatprep.subr.bf16.mxu0 %v6564
    %7397 = vmatpush2.bf16.msra.mxu0 %v6563
    %7398 = vmatprep.subr.bf16.mxu0 %v6560
    %7399 = vmatpush2.bf16.msra.mxu0 %v6559
    %7400 = vmatprep.subr.bf16.mxu0 %v6556
    %7401 = vmatpush2.bf16.msra.mxu0 %v6555
    %7402 = vmatprep.subr.bf16.mxu0 %v6552
    %7403 = vmatpush2.bf16.msra.mxu0 %v6551
    %7404 = vmatprep.subr.bf16.mxu0 %v6548
    %7405 = vmatpush2.bf16.msra.mxu0 %v6547
    %7406 = vmatprep.subr.bf16.mxu0 %v6544
    %7407 = vmatpush2.bf16.msra.mxu0 %v6543
    %7408 = vmatprep.subr.bf16.mxu0 %v6540
    %7409 = vmatpush2.bf16.msra.mxu0 %v6539
    %7410 = vmatprep.subr.bf16.mxu0 %v6536
    %7411 = vmatpush2.bf16.msra.mxu0 %v6535
    %7412 = vmatprep.mubr.bf16.mxu0 %v3984
    %7413 = vmatmul.mubr.bf16.gmra.mxu0 %v3983
    %v7414 = vpop.f32.mrf.mxu0
    %v7415 = vadd.f32 %v7372, %v7414
    %v7416 = vpop.f32.mrf.mxu0
    %v7417 = vadd.f32 %v7374, %v7416
    %v7418 = vpop.f32.mrf.mxu0
    %v7419 = vadd.f32 %v7376, %v7418
    %v7420 = vpop.f32.mrf.mxu0
    %v7421 = vadd.f32 %v7378, %v7420
    %7422 = vdwg.mxu0
    %7423 = vmatprep.subr.bf16.mxu0 %v6086
    %7424 = vmatpush1.bf16.msra.mxu0 %v6085
    %7425 = vmatprep.subr.bf16.mxu0 %v6082
    %7426 = vmatpush1.bf16.msra.mxu0 %v6081
    %7427 = vmatprep.subr.bf16.mxu0 %v6078
    %7428 = vmatpush1.bf16.msra.mxu0 %v6077
    %7429 = vmatprep.subr.bf16.mxu0 %v6074
    %7430 = vmatpush1.bf16.msra.mxu0 %v6073
    %7431 = vmatprep.subr.bf16.mxu0 %v6070
    %7432 = vmatpush1.bf16.msra.mxu0 %v6069
    %7433 = vmatprep.subr.bf16.mxu0 %v6066
    %7434 = vmatpush1.bf16.msra.mxu0 %v6065
    %7435 = vmatprep.subr.bf16.mxu0 %v6062
    %7436 = vmatpush1.bf16.msra.mxu0 %v6061
    %7437 = vmatprep.subr.bf16.mxu0 %v6058
    %7438 = vmatpush1.bf16.msra.mxu0 %v6057
    %7439 = vmatprep.subr.bf16.mxu0 %v6118
    %7440 = vmatpush2.bf16.msra.mxu0 %v6117
    %7441 = vmatprep.subr.bf16.mxu0 %v6114
    %7442 = vmatpush2.bf16.msra.mxu0 %v6113
    %7443 = vmatprep.subr.bf16.mxu0 %v6110
    %7444 = vmatpush2.bf16.msra.mxu0 %v6109
    %7445 = vmatprep.subr.bf16.mxu0 %v6106
    %7446 = vmatpush2.bf16.msra.mxu0 %v6105
    %7447 = vmatprep.subr.bf16.mxu0 %v6102
    %7448 = vmatpush2.bf16.msra.mxu0 %v6101
    %7449 = vmatprep.subr.bf16.mxu0 %v6098
    %7450 = vmatpush2.bf16.msra.mxu0 %v6097
    %7451 = vmatprep.subr.bf16.mxu0 %v6094
    %7452 = vmatpush2.bf16.msra.mxu0 %v6093
    %7453 = vmatprep.subr.bf16.mxu0 %v6090
    %7454 = vmatpush2.bf16.msra.mxu0 %v6089
    %7455 = vmatprep.mubr.bf16.mxu0 %v3970
    %7456 = vmatmul.mubr.bf16.gmra.mxu0 %v3969
    %v7457 = vpop.f32.mrf.mxu0
    %v7458 = vadd.f32 %v4510, %v7457
    %v7459 = vpop.f32.mrf.mxu0
    %v7460 = vadd.f32 %v4514, %v7459
    %v7461 = vpop.f32.mrf.mxu0
    %v7462 = vadd.f32 %v4510, %v7461
    %v7463 = vpop.f32.mrf.mxu0
    %v7464 = vadd.f32 %v4514, %v7463
    %7465 = vdwg.mxu0
    %7466 = vmatprep.subr.bf16.mxu0 %v6150
    %7467 = vmatpush1.bf16.msra.mxu0 %v6149
    %7468 = vmatprep.subr.bf16.mxu0 %v6146
    %7469 = vmatpush1.bf16.msra.mxu0 %v6145
    %7470 = vmatprep.subr.bf16.mxu0 %v6142
    %7471 = vmatpush1.bf16.msra.mxu0 %v6141
    %7472 = vmatprep.subr.bf16.mxu0 %v6138
    %7473 = vmatpush1.bf16.msra.mxu0 %v6137
    %7474 = vmatprep.subr.bf16.mxu0 %v6134
    %7475 = vmatpush1.bf16.msra.mxu0 %v6133
    %7476 = vmatprep.subr.bf16.mxu0 %v6130
    %7477 = vmatpush1.bf16.msra.mxu0 %v6129
    %7478 = vmatprep.subr.bf16.mxu0 %v6126
    %7479 = vmatpush1.bf16.msra.mxu0 %v6125
    %7480 = vmatprep.subr.bf16.mxu0 %v6122
    %7481 = vmatpush1.bf16.msra.mxu0 %v6121
    %7482 = vmatprep.subr.bf16.mxu0 %v6182
    %7483 = vmatpush2.bf16.msra.mxu0 %v6181
    %7484 = vmatprep.subr.bf16.mxu0 %v6178
    %7485 = vmatpush2.bf16.msra.mxu0 %v6177
    %7486 = vmatprep.subr.bf16.mxu0 %v6174
    %7487 = vmatpush2.bf16.msra.mxu0 %v6173
    %7488 = vmatprep.subr.bf16.mxu0 %v6170
    %7489 = vmatpush2.bf16.msra.mxu0 %v6169
    %7490 = vmatprep.subr.bf16.mxu0 %v6166
    %7491 = vmatpush2.bf16.msra.mxu0 %v6165
    %7492 = vmatprep.subr.bf16.mxu0 %v6162
    %7493 = vmatpush2.bf16.msra.mxu0 %v6161
    %7494 = vmatprep.subr.bf16.mxu0 %v6158
    %7495 = vmatpush2.bf16.msra.mxu0 %v6157
    %7496 = vmatprep.subr.bf16.mxu0 %v6154
    %7497 = vmatpush2.bf16.msra.mxu0 %v6153
    %7498 = vmatprep.mubr.bf16.mxu0 %v3972
    %7499 = vmatmul.mubr.bf16.gmra.mxu0 %v3971
    %v7500 = vpop.f32.mrf.mxu0
    %v7501 = vadd.f32 %v7458, %v7500
    %v7502 = vpop.f32.mrf.mxu0
    %v7503 = vadd.f32 %v7460, %v7502
    %v7504 = vpop.f32.mrf.mxu0
    %v7505 = vadd.f32 %v7462, %v7504
    %v7506 = vpop.f32.mrf.mxu0
    %v7507 = vadd.f32 %v7464, %v7506
    %7508 = vdwg.mxu0
    %7509 = vmatprep.subr.bf16.mxu0 %v6214
    %7510 = vmatpush1.bf16.msra.mxu0 %v6213
    %7511 = vmatprep.subr.bf16.mxu0 %v6210
    %7512 = vmatpush1.bf16.msra.mxu0 %v6209
    %7513 = vmatprep.subr.bf16.mxu0 %v6206
    %7514 = vmatpush1.bf16.msra.mxu0 %v6205
    %7515 = vmatprep.subr.bf16.mxu0 %v6202
    %7516 = vmatpush1.bf16.msra.mxu0 %v6201
    %7517 = vmatprep.subr.bf16.mxu0 %v6198
    %7518 = vmatpush1.bf16.msra.mxu0 %v6197
    %7519 = vmatprep.subr.bf16.mxu0 %v6194
    %7520 = vmatpush1.bf16.msra.mxu0 %v6193
    %7521 = vmatprep.subr.bf16.mxu0 %v6190
    %7522 = vmatpush1.bf16.msra.mxu0 %v6189
    %7523 = vmatprep.subr.bf16.mxu0 %v6186
    %7524 = vmatpush1.bf16.msra.mxu0 %v6185
    %7525 = vmatprep.subr.bf16.mxu0 %v6246
    %7526 = vmatpush2.bf16.msra.mxu0 %v6245
    %7527 = vmatprep.subr.bf16.mxu0 %v6242
    %7528 = vmatpush2.bf16.msra.mxu0 %v6241
    %7529 = vmatprep.subr.bf16.mxu0 %v6238
    %7530 = vmatpush2.bf16.msra.mxu0 %v6237
    %7531 = vmatprep.subr.bf16.mxu0 %v6234
    %7532 = vmatpush2.bf16.msra.mxu0 %v6233
    %7533 = vmatprep.subr.bf16.mxu0 %v6230
    %7534 = vmatpush2.bf16.msra.mxu0 %v6229
    %7535 = vmatprep.subr.bf16.mxu0 %v6226
    %7536 = vmatpush2.bf16.msra.mxu0 %v6225
    %7537 = vmatprep.subr.bf16.mxu0 %v6222
    %7538 = vmatpush2.bf16.msra.mxu0 %v6221
    %7539 = vmatprep.subr.bf16.mxu0 %v6218
    %7540 = vmatpush2.bf16.msra.mxu0 %v6217
    %7541 = vmatprep.mubr.bf16.mxu0 %v3974
    %7542 = vmatmul.mubr.bf16.gmra.mxu0 %v3973
    %v7543 = vpop.f32.mrf.mxu0
    %v7544 = vadd.f32 %v7501, %v7543
    %v7545 = vpop.f32.mrf.mxu0
    %v7546 = vadd.f32 %v7503, %v7545
    %v7547 = vpop.f32.mrf.mxu0
    %v7548 = vadd.f32 %v7505, %v7547
    %v7549 = vpop.f32.mrf.mxu0
    %v7550 = vadd.f32 %v7507, %v7549
    %7551 = vdwg.mxu0
    %7552 = vmatprep.subr.bf16.mxu0 %v6278
    %7553 = vmatpush1.bf16.msra.mxu0 %v6277
    %7554 = vmatprep.subr.bf16.mxu0 %v6274
    %7555 = vmatpush1.bf16.msra.mxu0 %v6273
    %7556 = vmatprep.subr.bf16.mxu0 %v6270
    %7557 = vmatpush1.bf16.msra.mxu0 %v6269
    %7558 = vmatprep.subr.bf16.mxu0 %v6266
    %7559 = vmatpush1.bf16.msra.mxu0 %v6265
    %7560 = vmatprep.subr.bf16.mxu0 %v6262
    %7561 = vmatpush1.bf16.msra.mxu0 %v6261
    %7562 = vmatprep.subr.bf16.mxu0 %v6258
    %7563 = vmatpush1.bf16.msra.mxu0 %v6257
    %7564 = vmatprep.subr.bf16.mxu0 %v6254
    %7565 = vmatpush1.bf16.msra.mxu0 %v6253
    %7566 = vmatprep.subr.bf16.mxu0 %v6250
    %7567 = vmatpush1.bf16.msra.mxu0 %v6249
    %7568 = vmatprep.subr.bf16.mxu0 %v6310
    %7569 = vmatpush2.bf16.msra.mxu0 %v6309
    %7570 = vmatprep.subr.bf16.mxu0 %v6306
    %7571 = vmatpush2.bf16.msra.mxu0 %v6305
    %7572 = vmatprep.subr.bf16.mxu0 %v6302
    %7573 = vmatpush2.bf16.msra.mxu0 %v6301
    %7574 = vmatprep.subr.bf16.mxu0 %v6298
    %7575 = vmatpush2.bf16.msra.mxu0 %v6297
    %7576 = vmatprep.subr.bf16.mxu0 %v6294
    %7577 = vmatpush2.bf16.msra.mxu0 %v6293
    %7578 = vmatprep.subr.bf16.mxu0 %v6290
    %7579 = vmatpush2.bf16.msra.mxu0 %v6289
    %7580 = vmatprep.subr.bf16.mxu0 %v6286
    %7581 = vmatpush2.bf16.msra.mxu0 %v6285
    %7582 = vmatprep.subr.bf16.mxu0 %v6282
    %7583 = vmatpush2.bf16.msra.mxu0 %v6281
    %7584 = vmatprep.mubr.bf16.mxu0 %v3976
    %7585 = vmatmul.mubr.bf16.gmra.mxu0 %v3975
    %v7586 = vpop.f32.mrf.mxu0
    %v7587 = vadd.f32 %v7544, %v7586
    %v7588 = vpop.f32.mrf.mxu0
    %v7589 = vadd.f32 %v7546, %v7588
    %v7590 = vpop.f32.mrf.mxu0
    %v7591 = vadd.f32 %v7548, %v7590
    %v7592 = vpop.f32.mrf.mxu0
    %v7593 = vadd.f32 %v7550, %v7592
    %7594 = vdwg.mxu0
    %7595 = vmatprep.subr.bf16.mxu0 %v6342
    %7596 = vmatpush1.bf16.msra.mxu0 %v6341
    %7597 = vmatprep.subr.bf16.mxu0 %v6338
    %7598 = vmatpush1.bf16.msra.mxu0 %v6337
    %7599 = vmatprep.subr.bf16.mxu0 %v6334
    %7600 = vmatpush1.bf16.msra.mxu0 %v6333
    %7601 = vmatprep.subr.bf16.mxu0 %v6330
    %7602 = vmatpush1.bf16.msra.mxu0 %v6329
    %7603 = vmatprep.subr.bf16.mxu0 %v6326
    %7604 = vmatpush1.bf16.msra.mxu0 %v6325
    %7605 = vmatprep.subr.bf16.mxu0 %v6322
    %7606 = vmatpush1.bf16.msra.mxu0 %v6321
    %7607 = vmatprep.subr.bf16.mxu0 %v6318
    %7608 = vmatpush1.bf16.msra.mxu0 %v6317
    %7609 = vmatprep.subr.bf16.mxu0 %v6314
    %7610 = vmatpush1.bf16.msra.mxu0 %v6313
    %7611 = vmatprep.subr.bf16.mxu0 %v6374
    %7612 = vmatpush2.bf16.msra.mxu0 %v6373
    %7613 = vmatprep.subr.bf16.mxu0 %v6370
    %7614 = vmatpush2.bf16.msra.mxu0 %v6369
    %7615 = vmatprep.subr.bf16.mxu0 %v6366
    %7616 = vmatpush2.bf16.msra.mxu0 %v6365
    %7617 = vmatprep.subr.bf16.mxu0 %v6362
    %7618 = vmatpush2.bf16.msra.mxu0 %v6361
    %7619 = vmatprep.subr.bf16.mxu0 %v6358
    %7620 = vmatpush2.bf16.msra.mxu0 %v6357
    %7621 = vmatprep.subr.bf16.mxu0 %v6354
    %7622 = vmatpush2.bf16.msra.mxu0 %v6353
    %7623 = vmatprep.subr.bf16.mxu0 %v6350
    %7624 = vmatpush2.bf16.msra.mxu0 %v6349
    %7625 = vmatprep.subr.bf16.mxu0 %v6346
    %7626 = vmatpush2.bf16.msra.mxu0 %v6345
    %7627 = vmatprep.mubr.bf16.mxu0 %v3978
    %7628 = vmatmul.mubr.bf16.gmra.mxu0 %v3977
    %v7629 = vpop.f32.mrf.mxu0
    %v7630 = vadd.f32 %v7587, %v7629
    %v7631 = vpop.f32.mrf.mxu0
    %v7632 = vadd.f32 %v7589, %v7631
    %v7633 = vpop.f32.mrf.mxu0
    %v7634 = vadd.f32 %v7591, %v7633
    %v7635 = vpop.f32.mrf.mxu0
    %v7636 = vadd.f32 %v7593, %v7635
    %7637 = vdwg.mxu0
    %7638 = vmatprep.subr.bf16.mxu0 %v6406
    %7639 = vmatpush1.bf16.msra.mxu0 %v6405
    %7640 = vmatprep.subr.bf16.mxu0 %v6402
    %7641 = vmatpush1.bf16.msra.mxu0 %v6401
    %7642 = vmatprep.subr.bf16.mxu0 %v6398
    %7643 = vmatpush1.bf16.msra.mxu0 %v6397
    %7644 = vmatprep.subr.bf16.mxu0 %v6394
    %7645 = vmatpush1.bf16.msra.mxu0 %v6393
    %7646 = vmatprep.subr.bf16.mxu0 %v6390
    %7647 = vmatpush1.bf16.msra.mxu0 %v6389
    %7648 = vmatprep.subr.bf16.mxu0 %v6386
    %7649 = vmatpush1.bf16.msra.mxu0 %v6385
    %7650 = vmatprep.subr.bf16.mxu0 %v6382
    %7651 = vmatpush1.bf16.msra.mxu0 %v6381
    %7652 = vmatprep.subr.bf16.mxu0 %v6378
    %7653 = vmatpush1.bf16.msra.mxu0 %v6377
    %7654 = vmatprep.subr.bf16.mxu0 %v6438
    %7655 = vmatpush2.bf16.msra.mxu0 %v6437
    %7656 = vmatprep.subr.bf16.mxu0 %v6434
    %7657 = vmatpush2.bf16.msra.mxu0 %v6433
    %7658 = vmatprep.subr.bf16.mxu0 %v6430
    %7659 = vmatpush2.bf16.msra.mxu0 %v6429
    %7660 = vmatprep.subr.bf16.mxu0 %v6426
    %7661 = vmatpush2.bf16.msra.mxu0 %v6425
    %7662 = vmatprep.subr.bf16.mxu0 %v6422
    %7663 = vmatpush2.bf16.msra.mxu0 %v6421
    %7664 = vmatprep.subr.bf16.mxu0 %v6418
    %7665 = vmatpush2.bf16.msra.mxu0 %v6417
    %7666 = vmatprep.subr.bf16.mxu0 %v6414
    %7667 = vmatpush2.bf16.msra.mxu0 %v6413
    %7668 = vmatprep.subr.bf16.mxu0 %v6410
    %7669 = vmatpush2.bf16.msra.mxu0 %v6409
    %7670 = vmatprep.mubr.bf16.mxu0 %v3980
    %7671 = vmatmul.mubr.bf16.gmra.mxu0 %v3979
    %v7672 = vpop.f32.mrf.mxu0
    %v7673 = vadd.f32 %v7630, %v7672
    %v7674 = vpop.f32.mrf.mxu0
    %v7675 = vadd.f32 %v7632, %v7674
    %v7676 = vpop.f32.mrf.mxu0
    %v7677 = vadd.f32 %v7634, %v7676
    %v7678 = vpop.f32.mrf.mxu0
    %v7679 = vadd.f32 %v7636, %v7678
    %7680 = vdwg.mxu0
    %7681 = vmatprep.subr.bf16.mxu0 %v6470
    %7682 = vmatpush1.bf16.msra.mxu0 %v6469
    %7683 = vmatprep.subr.bf16.mxu0 %v6466
    %7684 = vmatpush1.bf16.msra.mxu0 %v6465
    %7685 = vmatprep.subr.bf16.mxu0 %v6462
    %7686 = vmatpush1.bf16.msra.mxu0 %v6461
    %7687 = vmatprep.subr.bf16.mxu0 %v6458
    %7688 = vmatpush1.bf16.msra.mxu0 %v6457
    %7689 = vmatprep.subr.bf16.mxu0 %v6454
    %7690 = vmatpush1.bf16.msra.mxu0 %v6453
    %7691 = vmatprep.subr.bf16.mxu0 %v6450
    %7692 = vmatpush1.bf16.msra.mxu0 %v6449
    %7693 = vmatprep.subr.bf16.mxu0 %v6446
    %7694 = vmatpush1.bf16.msra.mxu0 %v6445
    %7695 = vmatprep.subr.bf16.mxu0 %v6442
    %7696 = vmatpush1.bf16.msra.mxu0 %v6441
    %7697 = vmatprep.subr.bf16.mxu0 %v6502
    %7698 = vmatpush2.bf16.msra.mxu0 %v6501
    %7699 = vmatprep.subr.bf16.mxu0 %v6498
    %7700 = vmatpush2.bf16.msra.mxu0 %v6497
    %7701 = vmatprep.subr.bf16.mxu0 %v6494
    %7702 = vmatpush2.bf16.msra.mxu0 %v6493
    %7703 = vmatprep.subr.bf16.mxu0 %v6490
    %7704 = vmatpush2.bf16.msra.mxu0 %v6489
    %7705 = vmatprep.subr.bf16.mxu0 %v6486
    %7706 = vmatpush2.bf16.msra.mxu0 %v6485
    %7707 = vmatprep.subr.bf16.mxu0 %v6482
    %7708 = vmatpush2.bf16.msra.mxu0 %v6481
    %7709 = vmatprep.subr.bf16.mxu0 %v6478
    %7710 = vmatpush2.bf16.msra.mxu0 %v6477
    %7711 = vmatprep.subr.bf16.mxu0 %v6474
    %7712 = vmatpush2.bf16.msra.mxu0 %v6473
    %7713 = vmatprep.mubr.bf16.mxu0 %v3982
    %7714 = vmatmul.mubr.bf16.gmra.mxu0 %v3981
    %v7715 = vpop.f32.mrf.mxu0
    %v7716 = vadd.f32 %v7673, %v7715
    %v7717 = vpop.f32.mrf.mxu0
    %v7718 = vadd.f32 %v7675, %v7717
    %v7719 = vpop.f32.mrf.mxu0
    %v7720 = vadd.f32 %v7677, %v7719
    %v7721 = vpop.f32.mrf.mxu0
    %v7722 = vadd.f32 %v7679, %v7721
    %7723 = vdwg.mxu0
    %7724 = vmatprep.subr.bf16.mxu0 %v6534
    %7725 = vmatpush1.bf16.msra.mxu0 %v6533
    %7726 = vmatprep.subr.bf16.mxu0 %v6530
    %7727 = vmatpush1.bf16.msra.mxu0 %v6529
    %7728 = vmatprep.subr.bf16.mxu0 %v6526
    %7729 = vmatpush1.bf16.msra.mxu0 %v6525
    %7730 = vmatprep.subr.bf16.mxu0 %v6522
    %7731 = vmatpush1.bf16.msra.mxu0 %v6521
    %7732 = vmatprep.subr.bf16.mxu0 %v6518
    %7733 = vmatpush1.bf16.msra.mxu0 %v6517
    %7734 = vmatprep.subr.bf16.mxu0 %v6514
    %7735 = vmatpush1.bf16.msra.mxu0 %v6513
    %7736 = vmatprep.subr.bf16.mxu0 %v6510
    %7737 = vmatpush1.bf16.msra.mxu0 %v6509
    %7738 = vmatprep.subr.bf16.mxu0 %v6506
    %7739 = vmatpush1.bf16.msra.mxu0 %v6505
    %7740 = vmatprep.subr.bf16.mxu0 %v6566
    %7741 = vmatpush2.bf16.msra.mxu0 %v6565
    %7742 = vmatprep.subr.bf16.mxu0 %v6562
    %7743 = vmatpush2.bf16.msra.mxu0 %v6561
    %7744 = vmatprep.subr.bf16.mxu0 %v6558
    %7745 = vmatpush2.bf16.msra.mxu0 %v6557
    %7746 = vmatprep.subr.bf16.mxu0 %v6554
    %7747 = vmatpush2.bf16.msra.mxu0 %v6553
    %7748 = vmatprep.subr.bf16.mxu0 %v6550
    %7749 = vmatpush2.bf16.msra.mxu0 %v6549
    %7750 = vmatprep.subr.bf16.mxu0 %v6546
    %7751 = vmatpush2.bf16.msra.mxu0 %v6545
    %7752 = vmatprep.subr.bf16.mxu0 %v6542
    %7753 = vmatpush2.bf16.msra.mxu0 %v6541
    %7754 = vmatprep.subr.bf16.mxu0 %v6538
    %7755 = vmatpush2.bf16.msra.mxu0 %v6537
    %7756 = vmatprep.mubr.bf16.mxu0 %v3984
    %7757 = vmatmul.mubr.bf16.gmra.mxu0 %v3983
    %v7758 = vpop.f32.mrf.mxu0
    %v7759 = vadd.f32 %v7716, %v7758
    %v7760 = vpop.f32.mrf.mxu0
    %v7761 = vadd.f32 %v7718, %v7760
    %v7762 = vpop.f32.mrf.mxu0
    %v7763 = vadd.f32 %v7720, %v7762
    %v7764 = vpop.f32.mrf.mxu0
    %v7765 = vadd.f32 %v7722, %v7764
    %7766 = vdwg.mxu0
    %v7767 = vld [vmem:[#allocation16] sm:$0xf]
    %vm7768 = vcmp.ge.f32.partialorder %v7415, 0.0
    %vm7769 = vcmp.ge.f32.partialorder %v7417, 0.0
    %vm7770 = vcmp.ge.f32.partialorder %v7759, 0.0
    %vm7771 = vcmp.ge.f32.partialorder %v7761, 0.0
    %vm7772 = vcmp.ge.f32.partialorder %v7419, 0.0
    %vm7773 = vcmp.ge.f32.partialorder %v7421, 0.0
    %vm7774 = vcmp.ge.f32.partialorder %v7763, 0.0
    %vm7775 = vcmp.ge.f32.partialorder %v7765, 0.0
    %v7777 = vlaneseq
    %v7778 = vshrl.u32 %v7777, 7
    %v7779 = vsub.s32 0, %v7778
    %v7780 = vrot.slane %v7767, %v7779
    %v7781 = vlaneseq
    %v7782 = vshrl.u32 %v7781, 7
    %v7783 = vsub.s32 1, %v7782
    %v7784 = vrot.slane %v7767, %v7783
    %v7785 = vlaneseq
    %v7786 = vshrl.u32 %v7785, 7
    %v7787 = vsub.s32 2, %v7786
    %v7788 = vrot.slane %v7767, %v7787
    %v7789 = vlaneseq
    %v7790 = vshrl.u32 %v7789, 7
    %v7791 = vsub.s32 3, %v7790
    %v7792 = vrot.slane %v7767, %v7791
    %v7797 = vmul.f32 %v7780, %v7415
    %v7798 = vmul.f32 %v7784, %v7417
    %v7799 = vmul.f32 %v7788, %v7759
    %v7800 = vmul.f32 %v7792, %v7761
    %v7801 = vmul.f32 %v7780, %v7419
    %v7802 = vmul.f32 %v7784, %v7421
    %v7803 = vmul.f32 %v7788, %v7763
    %v7804 = vmul.f32 %v7792, %v7765
    %v7805 = vsel %vm7768, %v7415, %v7797
    %v7806 = vsel %vm7769, %v7417, %v7798
    %v7807 = vsel %vm7770, %v7759, %v7799
    %v7808 = vsel %vm7771, %v7761, %v7800
    %v7809 = vsel %vm7772, %v7419, %v7801
    %v7810 = vsel %vm7773, %v7421, %v7802
    %v7811 = vsel %vm7774, %v7763, %v7803
    %v7812 = vsel %vm7775, %v7765, %v7804
    %v7813 = vld [vmem:[#allocation17] sm:$0xf]
    %v7814 = vld [vmem:[#allocation19] sm:$0xf]
    %v7815 = vadd.f32 %v7805, %v7806
    %v7816 = vadd.f32 %v7815, %v7807
    %v7817 = vadd.f32 %v7816, %v7808
    %7818 = vadd.xlane.f32.xlu0 %v7817
    %v7819 = vpop.xlane.xlu0 %7818
    %v7820 = vadd.f32 %v7809, %v7810
    %v7821 = vadd.f32 %v7820, %v7811
    %v7822 = vadd.f32 %v7821, %v7812
    %7823 = vadd.xlane.f32.xlu0 %v7822
    %v7824 = vpop.xlane.xlu0 %7823
    %v7825 = vrcp.pop 512.0
    %v7826 = vmul.f32 %v7819, %v7825
    %v7827 = vmul.f32 %v7824, %v7825
    %v7828 = vsub.f32 %v7805, %v7826
    %v7829 = vsub.f32 %v7806, %v7826
    %v7830 = vsub.f32 %v7807, %v7826
    %v7831 = vsub.f32 %v7808, %v7826
    %v7832 = vsub.f32 %v7809, %v7827
    %v7833 = vsub.f32 %v7810, %v7827
    %v7834 = vsub.f32 %v7811, %v7827
    %v7835 = vsub.f32 %v7812, %v7827
    %v7836 = vmul.f32 %v7828, %v7828
    %v7837 = vmul.f32 %v7829, %v7829
    %v7838 = vmul.f32 %v7830, %v7830
    %v7839 = vmul.f32 %v7831, %v7831
    %v7840 = vmul.f32 %v7832, %v7832
    %v7841 = vmul.f32 %v7833, %v7833
    %v7842 = vmul.f32 %v7834, %v7834
    %v7843 = vmul.f32 %v7835, %v7835
    %v7844 = vadd.f32 %v7836, %v7837
    %v7845 = vadd.f32 %v7844, %v7838
    %v7846 = vadd.f32 %v7845, %v7839
    %7847 = vadd.xlane.f32.xlu0 %v7846
    %v7848 = vpop.xlane.xlu0 %7847
    %v7849 = vadd.f32 %v7840, %v7841
    %v7850 = vadd.f32 %v7849, %v7842
    %v7851 = vadd.f32 %v7850, %v7843
    %7852 = vadd.xlane.f32.xlu0 %v7851
    %v7853 = vpop.xlane.xlu0 %7852
    %v7854 = vmul.f32 %v7848, %v7825
    %v7855 = vmul.f32 %v7853, %v7825
    %v7856 = vadd.f32 %v7854, 1e-05
    %v7857 = vadd.f32 %v7855, 1e-05
    %v7858 = vrsqrt.pop %v7856
    %v7859 = vrsqrt.pop %v7857
    %v7860 = vmul.f32 %v7828, %v7858
    %v7861 = vmul.f32 %v7829, %v7858
    %v7862 = vmul.f32 %v7830, %v7858
    %v7863 = vmul.f32 %v7831, %v7858
    %v7864 = vmul.f32 %v7832, %v7859
    %v7865 = vmul.f32 %v7833, %v7859
    %v7866 = vmul.f32 %v7834, %v7859
    %v7867 = vmul.f32 %v7835, %v7859
    %v7869 = vlaneseq
    %v7870 = vshrl.u32 %v7869, 7
    %v7871 = vsub.s32 0, %v7870
    %v7872 = vrot.slane %v7813, %v7871
    %v7873 = vlaneseq
    %v7874 = vshrl.u32 %v7873, 7
    %v7875 = vsub.s32 1, %v7874
    %v7876 = vrot.slane %v7813, %v7875
    %v7877 = vlaneseq
    %v7878 = vshrl.u32 %v7877, 7
    %v7879 = vsub.s32 2, %v7878
    %v7880 = vrot.slane %v7813, %v7879
    %v7881 = vlaneseq
    %v7882 = vshrl.u32 %v7881, 7
    %v7883 = vsub.s32 3, %v7882
    %v7884 = vrot.slane %v7813, %v7883
    %v7889 = vmul.f32 %v7860, %v7872
    %v7890 = vmul.f32 %v7861, %v7876
    %v7891 = vmul.f32 %v7862, %v7880
    %v7892 = vmul.f32 %v7863, %v7884
    %v7893 = vmul.f32 %v7864, %v7872
    %v7894 = vmul.f32 %v7865, %v7876
    %v7895 = vmul.f32 %v7866, %v7880
    %v7896 = vmul.f32 %v7867, %v7884
    %v7898 = vlaneseq
    %v7899 = vshrl.u32 %v7898, 7
    %v7900 = vsub.s32 0, %v7899
    %v7901 = vrot.slane %v7814, %v7900
    %v7902 = vlaneseq
    %v7903 = vshrl.u32 %v7902, 7
    %v7904 = vsub.s32 1, %v7903
    %v7905 = vrot.slane %v7814, %v7904
    %v7906 = vlaneseq
    %v7907 = vshrl.u32 %v7906, 7
    %v7908 = vsub.s32 2, %v7907
    %v7909 = vrot.slane %v7814, %v7908
    %v7910 = vlaneseq
    %v7911 = vshrl.u32 %v7910, 7
    %v7912 = vsub.s32 3, %v7911
    %v7913 = vrot.slane %v7814, %v7912
    %v7918 = vadd.f32 %v7889, %v7901
    %v7919 = vadd.f32 %v7890, %v7905
    %v7920 = vadd.f32 %v7891, %v7909
    %v7921 = vadd.f32 %v7892, %v7913
    %v7922 = vadd.f32 %v7893, %v7901
    %v7923 = vadd.f32 %v7894, %v7905
    %v7924 = vadd.f32 %v7895, %v7909
    %v7925 = vadd.f32 %v7896, %v7913
    %v7926 = vpack.c.bf16 %v7922, %v7918
    %v7927 = vpack.c.bf16 %v7923, %v7919
    %v7928 = vpack.c.bf16 %v7924, %v7920
    %v7929 = vpack.c.bf16 %v7925, %v7921
    %v7934 = vunpack.c.l.b16 %v7926
    %v7935 = vunpack.c.l.b16 %v7927
    %v7936 = vunpack.c.l.b16 %v7928
    %v7937 = vunpack.c.l.b16 %v7929
    %v7938 = vunpack.c.h.b16 %v7926
    %v7939 = vunpack.c.h.b16 %v7927
    %v7940 = vunpack.c.h.b16 %v7928
    %v7941 = vunpack.c.h.b16 %v7929
    %v7942 = vpack.c.b16 %v7935, %v7934
    %v7943 = vpack.c.b16 %v7937, %v7936
    %v7944 = vpack.c.b16 %v7939, %v7938
    %v7945 = vpack.c.b16 %v7941, %v7940
    %7950 = vst [vmem:[#allocation21] sm:$0xff] %v7942
    %7951 = vst [vmem:[#allocation21 + $0x8] sm:$0xff] %v7943
    %7952 = vst [vmem:[#allocation21 + $0x10] sm:$0xff] %v7944
    %7953 = vst [vmem:[#allocation21 + $0x18] sm:$0xff] %v7945
    // Predicated region
    $region90: #{tpu_custom_call.1} parent=1 // pred_check
      _
    $region91: #{tpu_custom_call.1} parent=1 // pred_check_branch
      %7955 = sbr.rel (0) target = $region93
    $region92: #{tpu_custom_call.1} parent=1 // pred_region
      %s7957 = ssub.s32 2048, 2048
      %7958 = vsyncadd [#allocation4], %s7957
      %s7959 = sshll.u32 [#allocation20], 4
      %s7960 = int_to_ptr.vmem [resolvable:$true] %s7959
      %7965 = dma.vmem_to_hbm [thread:$0]  %s7960, 2048, %s11, [#allocation4], 1024, 1024, 64
    $region93: #{tpu_custom_call.1} parent=1 // pred_fallthru
      _
    // Predicated region
    $region94: #{tpu_custom_call.1} parent=1 // pred_check
      _
    $region95: #{tpu_custom_call.1} parent=1 // pred_check_branch
      %7967 = sbr.rel (0) target = $region97
    $region96: #{tpu_custom_call.1} parent=1 // pred_region
      %s7969 = ssub.s32 512, 512
      %7970 = vsyncadd [#allocation22], %s7969
      %s7971 = sshll.u32 [#allocation21], 4
      %s7972 = int_to_ptr.vmem [resolvable:$true] %s7971
      %7977 = dma.vmem_to_hbm [thread:$0]  %s7972, 512, %s12, [#allocation22], 256, 256, 16
    $region97: #{tpu_custom_call.1} parent=1 // pred_fallthru
      _
    // Predicated region
    $region98: #{tpu_custom_call.1} parent=1 // pred_check
      _
    $region99: #{tpu_custom_call.1} parent=1 // pred_check_branch
      %7979 = sbr.rel (0) target = $region101
    $region100: #{tpu_custom_call.1} parent=1 // pred_region
      %7980 = dma.done [#allocation4], 2048
    $region101: #{tpu_custom_call.1} parent=1 // pred_fallthru
      _
    // Predicated region
    $region102: #{tpu_custom_call.1} parent=1 // pred_check
      _
    $region103: #{tpu_custom_call.1} parent=1 // pred_check_branch
      %7982 = sbr.rel (0) target = $region105
    $region104: #{tpu_custom_call.1} parent=1 // pred_region
      %7983 = dma.done [#allocation22], 512
    $region105: #{tpu_custom_call.1} parent=1 // pred_fallthru
      _
    %7984 = vsyncpa [#allocation3], 1
    %7985 = vsyncpa [#allocation6], 1
    %7986 = vsyncpa [#allocation9], 1
    %7987 = vsyncpa [#allocation12], 1
    %7988 = vsyncpa [#allocation15], 1
    %7989 = vsyncpa [#allocation18], 1
    %7990 = vsyncpa [#allocation4], 1
    %7991 = vsyncpa [#allocation22], 1

</llo_original>
